<compile_context>
chip_gen: v7x
topology: tpu7x:2x2x1
jax: 0.10.0
libtpu: 0.0.40
codegen_flags: <defaults>
</compile_context>

<pallas_src>
import functools

import jax
import jax.numpy as jnp
from jax.experimental import pallas as pl
from jax.experimental.pallas import tpu as pltpu

LANE = 128
DIM1, DIM2, DIM3 = 32, 32, 16      # module hyper-params (small)
D_ENC = 128                        # encoder flatten numel for 3x64x64 input


def _round_up(x, m):
    return (x + m - 1) // m * m


def _pad_lanes(a, mult=LANE):
    n = a.shape[-1]
    npad = _round_up(n, mult)
    if npad != n:
        a = jnp.pad(a, [(0, 0)] * (a.ndim - 1) + [(0, npad - n)])
    return a


def _pick_tm(M, tm_max=2048, single_step_max=256):
    """Row tile: single step for tiny layers, >=2 big steps for big-M layers."""
    m8 = _round_up(M, 8)
    if m8 <= single_step_max:
        return m8
    n_steps = max(2, pl.cdiv(m8, tm_max))
    return _round_up(pl.cdiv(M, n_steps), 8)


# ---------------------------------------------------------------------------
# Pallas kernel: fused  X @ W + b  (optional ReLU), lane-dense output
# ---------------------------------------------------------------------------
def _gemm_bias_act_kernel(x_ref, w_ref, b_ref, o_ref, *, relu):
    acc = jnp.dot(x_ref[...], w_ref[...], preferred_element_type=jnp.float32)
    acc = acc + b_ref[...]
    if relu:
        acc = jnp.maximum(acc, 0.0)
    o_ref[...] = acc.astype(o_ref.dtype)


def matmul_bias_act(x, w, b_row, *, relu, tm_max=2048):
    """x: (M, K) f32, w: (K, Npad) f32 with Npad % 128 == 0, b_row: (1, Npad)."""
    M, K = x.shape
    K2, Npad = w.shape
    assert K == K2 and Npad % LANE == 0
    tm = _pick_tm(M, tm_max)
    M_pad = _round_up(M, tm)
    if M_pad != M:
        x = jnp.pad(x, ((0, M_pad - M), (0, 0)))
    grid = M_pad // tm
    cost = pl.CostEstimate(
        flops=2 * M_pad * K * Npad,
        transcendentals=0,
        bytes_accessed=4 * (M_pad * K + K * Npad + M_pad * Npad))
    out = pl.pallas_call(
        functools.partial(_gemm_bias_act_kernel, relu=relu),
        out_shape=jax.ShapeDtypeStruct((M_pad, Npad), jnp.float32),
        grid=(grid,),
        in_specs=[
            pl.BlockSpec((tm, K), lambda i: (i, 0)),     # row tile of X
            pl.BlockSpec((K, Npad), lambda i: (0, 0)),   # whole (small) W
            pl.BlockSpec((1, Npad), lambda i: (0, 0)),   # bias row
        ],
        out_specs=pl.BlockSpec((tm, Npad), lambda i: (i, 0)),
        compiler_params=pltpu.CompilerParams(dimension_semantics=("parallel",)),
        cost_estimate=cost,
    )(x, w, b_row)
    return out[:M]


# ---------------------------------------------------------------------------
# Pallas kernel: fused bottleneck
#   conv3(enc1), conv3(enc2), dense1, dense2, dense3, t1 (ConvTranspose on 1x1)
# All weights resident in VMEM; grid-less (M = padded batch rows).
# ---------------------------------------------------------------------------
def _bottleneck_kernel(e1_ref, e2_ref, wc1_ref, bc1_ref, wc2_ref, bc2_ref,
                       wd1_ref, bd1_ref, wd2_ref, bd2_ref,
                       wd3a_ref, wd3b_ref, bd3_ref, wt1_ref, bt1_ref,
                       o_ref, *, g1, g2):
    f32 = jnp.float32
    f1 = jnp.maximum(
        jnp.dot(e1_ref[...], wc1_ref[...], preferred_element_type=f32) + bc1_ref[...], 0.0)
    f2 = jnp.maximum(
        jnp.dot(e2_ref[...], wc2_ref[...], preferred_element_type=f32) + bc2_ref[...], 0.0)
    y1 = jnp.maximum(
        jnp.dot(f1, wd1_ref[...], preferred_element_type=f32) + bd1_ref[...], 0.0) * g1
    y2 = jnp.maximum(
        jnp.dot(f2, wd2_ref[...], preferred_element_type=f32) + bd2_ref[...], 0.0) * g2
    z = (jnp.dot(y1, wd3a_ref[...], preferred_element_type=f32)
         + jnp.dot(y2, wd3b_ref[...], preferred_element_type=f32) + bd3_ref[...])
    o_ref[...] = jnp.maximum(
        jnp.dot(z, wt1_ref[...], preferred_element_type=f32) + bt1_ref[...], 0.0)


def bottleneck_fused(e1, e2, p, *, g1, g2):
    B, K1 = e1.shape
    rows = _round_up(B, 8)
    e1p = jnp.pad(e1, ((0, rows - B), (0, 0)))
    e2p = jnp.pad(e2, ((0, rows - B), (0, 0)))
    n_t1 = p["t1_wm"].shape[1]
    cost = pl.CostEstimate(
        flops=2 * rows * (2 * K1 * LANE + 4 * LANE * LANE + LANE * n_t1),
        transcendentals=0,
        bytes_accessed=4 * (2 * rows * K1 + 2 * K1 * LANE + 4 * LANE * LANE
                            + LANE * n_t1 + rows * n_t1))
    out = pl.pallas_call(
        functools.partial(_bottleneck_kernel, g1=g1, g2=g2),
        out_shape=jax.ShapeDtypeStruct((rows, n_t1), jnp.float32),
        cost_estimate=cost,
    )(e1p, e2p, p["e1_c3_wm"], p["e1_c3_bm"], p["e2_c3_wm"], p["e2_c3_bm"],
      p["d1_wm"], p["d1_bm"], p["d2_wm"], p["d2_bm"],
      p["d3a_wm"], p["d3b_wm"], p["d3_bm"], p["t1_wm"], p["t1_bm"])
    return out[:B]


# ---------------------------------------------------------------------------
# Layout glue (im2col / sub-pixel col2im) — data movement only, no FLOPs
# ---------------------------------------------------------------------------
def _im2col(x_nhwc, k, s):
    """Strided conv patches, feature order (kh, kw, ci)."""
    B, H, W, C = x_nhwc.shape
    Ho = (H - k) // s + 1
    Wo = (W - k) // s + 1
    cols = []
    for kh in range(k):
        for kw in range(k):
            cols.append(x_nhwc[:, kh:kh + (Ho - 1) * s + 1:s,
                               kw:kw + (Wo - 1) * s + 1:s, :])
    p = jnp.stack(cols, axis=3)                       # (B, Ho, Wo, k*k, C)
    return p.reshape(B * Ho * Wo, k * k * C), (B, Ho, Wo)


def conv_transpose_gemm(x_nhwc, wmat, b_row, b_raw, *, k, s, out_pad, relu):
    """ConvTranspose2d with k % s == 0 as a sub-pixel phase GEMM (NHWC in/out)."""
    B, H, W, C = x_nhwc.shape
    r = k // s
    assert r * s == k
    Cout = b_raw.shape[0]
    if r == 1:                                         # kernel == stride
        patches = x_nhwc.reshape(B * H * W, C)
        Qh, Qw = H, W
    else:                                              # kernel = r * stride
        Qh, Qw = H + r - 1, W + r - 1
        xp = jnp.pad(x_nhwc, ((0, 0), (r - 1, r - 1), (r - 1, r - 1), (0, 0)))
        cols = []
        for dh in range(r):
            for dw in range(r):
                cols.append(xp[:, r - 1 - dh:r - 1 - dh + Qh,
                               r - 1 - dw:r - 1 - dw + Qw, :])
        patches = jnp.stack(cols, axis=3).reshape(B * Qh * Qw, r * r * C)

    out = matmul_bias_act(patches, wmat, b_row, relu=relu)
    out = out[:, :s * s * Cout].reshape(B, Qh, Qw, s, s, Cout)
    out = out.transpose(0, 1, 3, 2, 4, 5).reshape(B, Qh * s, Qw * s, Cout)

    oph, opw = out_pad                                 # output_padding region = bias
    if oph or opw:
        pad_val = jnp.maximum(b_raw, 0.0) if relu else b_raw
        if oph:
            out = jnp.concatenate(
                [out, jnp.broadcast_to(pad_val, (B, oph, out.shape[2], Cout))], axis=1)
        if opw:
            out = jnp.concatenate(
                [out, jnp.broadcast_to(pad_val, (B, out.shape[1], opw, Cout))], axis=2)
    return out


def _encoder_trunk(x_nhwc, wm1, bm1, wm2, bm2):
    """conv1 (8,s4) + ReLU, conv2 (6,s3) + ReLU; returns conv3's im2col rows."""
    pt, (B, Ho, Wo) = _im2col(x_nhwc, 8, 4)
    h = matmul_bias_act(pt, wm1, bm1, relu=True)[:, :32].reshape(B, Ho, Wo, 32)
    pt, (B, Ho, Wo) = _im2col(h, 6, 3)
    h = matmul_bias_act(pt, wm2, bm2, relu=True)[:, :64].reshape(B, Ho, Wo, 64)
    # conv3 kernel (4x4, s2) covers the whole 4x4 map -> its single im2col row
    # per image is exactly the NHWC flatten (kh, kw, ci) of the conv2 output.
    return h.reshape(B, Ho * Wo * 64)                  # (B, 1024)


# ---------------------------------------------------------------------------
# Full forward pass (out=0: both branches active, like PyTorch forward default)
# ---------------------------------------------------------------------------
def forward(p, X0, X1, out=0):
    B = X0.shape[0]
    x0 = jnp.transpose(X0, (0, 2, 3, 1))               # NHWC
    x1 = jnp.transpose(X1, (0, 2, 3, 1))
    x2 = jnp.concatenate([x0, x1], axis=-1)            # cat along channels

    e1 = _encoder_trunk(x0, p["e1_c1_wm"], p["e1_c1_bm"],
                        p["e1_c2_wm"], p["e1_c2_bm"])  # (B, 1024)
    e2 = _encoder_trunk(x2, p["e2_c1_wm"], p["e2_c1_bm"],
                        p["e2_c2_wm"], p["e2_c2_bm"])  # (B, 1024)

    g1 = 0.0 if out == 2 else 1.0
    g2 = 0.0 if out == 1 else 1.0
    t1 = bottleneck_fused(e1, e2, p, g1=g1, g2=g2)     # (B, 3*4*256)
    d = t1.reshape(B, 3, 4, 256)                       # NHWC, output of t1+ReLU

    d = conv_transpose_gemm(d, p["t2_wm"], p["t2_bm"], p["t2_b"],
                            k=3, s=3, out_pad=(0, 0), relu=True)   # (B, 9, 12, 128)
    d = conv_transpose_gemm(d, p["t3_wm"], p["t3_bm"], p["t3_b"],
                            k=3, s=3, out_pad=(1, 2), relu=True)   # (B, 28, 38, 64)
    d = conv_transpose_gemm(d, p["t4_wm"], p["t4_bm"], p["t4_b"],
                            k=4, s=2, out_pad=(1, 1), relu=True)   # (B, 59, 79, 32)
    d = conv_transpose_gemm(d, p["t5_wm"], p["t5_bm"], p["t5_b"],
                            k=8, s=4, out_pad=(0, 0), relu=False)  # (B, 240, 320, 3)
    return jnp.transpose(d, (0, 3, 1, 2))              # NCHW (B, 3, 240, 320)


# ---------------------------------------------------------------------------
# Parameters: raw (PyTorch layouts) + one-time GEMM prep (reshape/pad to 128)
# ---------------------------------------------------------------------------
def _conv_wmat(w):
    Cout, Cin, kh, kw = w.shape
    m = jnp.transpose(w, (2, 3, 1, 0)).reshape(kh * kw * Cin, Cout)
    return _pad_lanes(m)


def _deconv_wmat(w, s):
    Cin, Cout, kh, kw = w.shape
    r = kh // s
    w6 = w.reshape(Cin, Cout, r, s, r, s)
    m = jnp.transpose(w6, (2, 4, 0, 3, 5, 1)).reshape(r * r * Cin, s * s * Cout)
    return _pad_lanes(m)


def _bias_row(b):
    return _pad_lanes(b.reshape(1, -1))


def _deconv_bias_row(b, s):
    Cout = b.shape[0]
    return _pad_lanes(jnp.broadcast_to(b, (s, s, Cout)).reshape(1, s * s * Cout))


def init_params(key):
    ks = iter(jax.random.split(key, 32))

    def kaiming(shape, fan_in):
        return jax.random.normal(next(ks), shape, jnp.float32) * jnp.sqrt(2.0 / fan_in)

    def bias(n, scale=0.01):
        return scale * jax.random.normal(next(ks), (n,), jnp.float32)

    return {
        # encoder1: Conv2d(3,32,8,s4) / Conv2d(32,64,6,s3) / Conv2d(64,128,4,s2)
        "e1_c1_w": kaiming((32, 3, 8, 8), 3 * 64),    "e1_c1_b": bias(32),
        "e1_c2_w": kaiming((64, 32, 6, 6), 32 * 36),  "e1_c2_b": bias(64),
        "e1_c3_w": kaiming((128, 64, 4, 4), 64 * 16), "e1_c3_b": bias(128),
        # encoder2: same, 6 input channels
        "e2_c1_w": kaiming((32, 6, 8, 8), 6 * 64),    "e2_c1_b": bias(32),
        "e2_c2_w": kaiming((64, 32, 6, 6), 32 * 36),  "e2_c2_b": bias(64),
        "e2_c3_w": kaiming((128, 64, 4, 4), 64 * 16), "e2_c3_b": bias(128),
        # dense1 / dense2 / dense3 (PyTorch Linear layout: (out, in))
        "d1_w": kaiming((DIM1, D_ENC), D_ENC),              "d1_b": bias(DIM1),
        "d2_w": kaiming((DIM2, D_ENC), D_ENC),              "d2_b": bias(DIM2),
        "d3_w": kaiming((DIM3, DIM1 + DIM2), DIM1 + DIM2),  "d3_b": bias(DIM3),
        # decoder ConvTranspose2d weights: (Cin, Cout, kh, kw)
        "t1_w": kaiming((DIM3, 256, 3, 4), DIM3 * 12), "t1_b": bias(256),
        "t2_w": kaiming((256, 128, 3, 3), 256 * 9),    "t2_b": bias(128),
        "t3_w": kaiming((128, 64, 3, 3), 128 * 9),     "t3_b": bias(64),
        "t4_w": kaiming((64, 32, 4, 4), 64 * 16),      "t4_b": bias(32),
        "t5_w": kaiming((32, 3, 8, 8), 32 * 64),       "t5_b": bias(3),
    }


def prepare_params(raw):
    p = {}
    for e in ("e1", "e2"):
        for c in ("c1", "c2", "c3"):
            p[f"{e}_{c}_wm"] = _conv_wmat(raw[f"{e}_{c}_w"])
            p[f"{e}_{c}_bm"] = _bias_row(raw[f"{e}_{c}_b"])
    # bottleneck dense weights zero-padded to 128x128 (exact: pads are zeros)
    p["d1_wm"] = _pad_lanes(raw["d1_w"].T)
    p["d1_bm"] = _bias_row(raw["d1_b"])
    p["d2_wm"] = _pad_lanes(raw["d2_w"].T)
    p["d2_bm"] = _bias_row(raw["d2_b"])
    wd3 = raw["d3_w"].T                                # (dim1+dim2, dim3)
    p["d3a_wm"] = jnp.pad(wd3[:DIM1], ((0, LANE - DIM1), (0, LANE - DIM3)))
    p["d3b_wm"] = jnp.pad(wd3[DIM1:], ((0, LANE - DIM2), (0, LANE - DIM3)))
    p["d3_bm"] = _bias_row(raw["d3_b"])
    # t1: ConvTranspose on a 1x1 input == linear; columns in NHWC (kh, kw, co)
    t1 = jnp.transpose(raw["t1_w"], (0, 2, 3, 1)).reshape(DIM3, 3 * 4 * 256)
    p["t1_wm"] = jnp.pad(t1, ((0, LANE - DIM3), (0, 0)))        # (128, 3072)
    p["t1_bm"] = jnp.broadcast_to(raw["t1_b"], (3, 4, 256)).reshape(1, 3 * 4 * 256)
    # decoder sub-pixel GEMM weights
    for name, s in (("t2", 3), ("t3", 3), ("t4", 2), ("t5", 4)):
        p[f"{name}_wm"] = _deconv_wmat(raw[f"{name}_w"], s)
        p[f"{name}_bm"] = _deconv_bias_row(raw[f"{name}_b"], s)
        p[f"{name}_b"] = raw[f"{name}_b"]
    return p


if __name__ == "__main__":
    key = jax.random.PRNGKey(0)
    pkey, k0, k1 = jax.random.split(key, 3)
    raw = init_params(pkey)
    params = prepare_params(raw)

    B = 2
    X0 = jax.random.normal(k0, (B, 3, 64, 64), jnp.float32)
    X1 = jax.random.normal(k1, (B, 3, 64, 64), jnp.float32)

    fwd = jax.jit(forward, static_argnames=("out",))
    Y = jax.block_until_ready(fwd(params, X0, X1))

    assert Y.shape == (B, 3, 240, 320), Y.shape
    assert Y.dtype == jnp.float32
    assert bool(jnp.all(jnp.isfinite(Y)))
    print("KERNEL_OK")
</pallas_src>

<mosaic_0001>
module attributes {stable_mosaic.version = 11 : i64} {
  func.func @_gemm_bias_act_kernel(%arg0: i32, %arg1: memref<232x192xf32, #tpu.memory_space<vmem>>, %arg2: memref<192x128xf32, #tpu.memory_space<vmem>>, %arg3: memref<1x128xf32, #tpu.memory_space<vmem>>, %arg4: memref<232x128xf32, #tpu.memory_space<vmem>>) attributes {dimension_semantics = [#tpu.dimension_semantics<parallel>], iteration_bounds = array<i64: 2>, scalar_prefetch = 0 : i64, scratch_operands = 0 : i64, tpu.core_type = #tpu.core_type<tc>, window_params = [{transform_indices = @transform_0, window_bounds = array<i64: 232, 192>}, {pipeline_mode = #tpu.pipeline_mode<synchronous>, transform_indices = @transform_1, window_bounds = array<i64: 192, 128>}, {pipeline_mode = #tpu.pipeline_mode<synchronous>, transform_indices = @transform_2, window_bounds = array<i64: 1, 128>}, {transform_indices = @transform_3, window_bounds = array<i64: 232, 128>}]} {
    %c0 = arith.constant 0 : index
    %c0_0 = arith.constant 0 : index
    %0 = vector.load %arg1[%c0, %c0_0] : memref<232x192xf32, #tpu.memory_space<vmem>>, vector<232x192xf32>
    %c0_1 = arith.constant 0 : index
    %c0_2 = arith.constant 0 : index
    %1 = vector.load %arg2[%c0_1, %c0_2] : memref<192x128xf32, #tpu.memory_space<vmem>>, vector<192x128xf32>
    %cst = arith.constant dense<0.000000e+00> : vector<232x128xf32>
    %2 = tpu.matmul %0, %1, %cst {dimension_numbers = #tpu.dot_dimension_numbers<[1], [0], [0], [1], [0, 0, 1, 1], [], []>} : vector<232x192xf32>, vector<192x128xf32>, vector<232x128xf32> -> vector<232x128xf32>
    %c0_3 = arith.constant 0 : index
    %c0_4 = arith.constant 0 : index
    %3 = vector.load %arg3[%c0_3, %c0_4] : memref<1x128xf32, #tpu.memory_space<vmem>>, vector<1x128xf32>
    %4 = vector.broadcast %3 : vector<1x128xf32> to vector<232x128xf32>
    %5 = arith.addf %2, %4 : vector<232x128xf32>
    %cst_5 = arith.constant 0.000000e+00 : f32
    %6 = vector.broadcast %cst_5 : f32 to vector<232x128xf32>
    %7 = arith.maximumf %5, %6 : vector<232x128xf32>
    %c0_6 = arith.constant 0 : index
    %c0_7 = arith.constant 0 : index
    %8 = vector.load %arg4[%c0_6, %c0_7] : memref<232x128xf32, #tpu.memory_space<vmem>>, vector<232x128xf32>
    tpu.vector_store %arg4[%c0_6, %c0_7], %7 {strides = array<i32>} : memref<232x128xf32, #tpu.memory_space<vmem>>, vector<232x128xf32>,
    return
  }
  func.func @transform_0(%arg0: i32) -> (i32, i32) {
    %c0_i32 = arith.constant 0 : i32
    %c0_i32_0 = arith.constant 0 : i32
    return %arg0, %c0_i32 : i32, i32
  }
  func.func @transform_1(%arg0: i32) -> (i32, i32) {
    %c0_i32 = arith.constant 0 : i32
    %c0_i32_0 = arith.constant 0 : i32
    %c0_i32_1 = arith.constant 0 : i32
    return %c0_i32, %c0_i32_0 : i32, i32
  }
  func.func @transform_2(%arg0: i32) -> (i32, i32) {
    %c0_i32 = arith.constant 0 : i32
    %c0_i32_0 = arith.constant 0 : i32
    %c0_i32_1 = arith.constant 0 : i32
    return %c0_i32, %c0_i32_0 : i32, i32
  }
  func.func @transform_3(%arg0: i32) -> (i32, i32) {
    %c0_i32 = arith.constant 0 : i32
    %c0_i32_0 = arith.constant 0 : i32
    return %arg0, %c0_i32 : i32, i32
  }
}

module attributes {stable_mosaic.version = 11 : i64} {
  func.func @_gemm_bias_act_kernel(%arg0: i32, %arg1: memref<32x1152xf32, #tpu.memory_space<vmem>>, %arg2: memref<1152x128xf32, #tpu.memory_space<vmem>>, %arg3: memref<1x128xf32, #tpu.memory_space<vmem>>, %arg4: memref<32x128xf32, #tpu.memory_space<vmem>>) attributes {dimension_semantics = [#tpu.dimension_semantics<parallel>], iteration_bounds = array<i64: 1>, scalar_prefetch = 0 : i64, scratch_operands = 0 : i64, tpu.core_type = #tpu.core_type<tc>, window_params = [{transform_indices = @transform_0, window_bounds = array<i64: 32, 1152>}, {pipeline_mode = #tpu.pipeline_mode<synchronous>, transform_indices = @transform_1, window_bounds = array<i64: 1152, 128>}, {pipeline_mode = #tpu.pipeline_mode<synchronous>, transform_indices = @transform_2, window_bounds = array<i64: 1, 128>}, {transform_indices = @transform_3, window_bounds = array<i64: 32, 128>}]} {
    %c0 = arith.constant 0 : index
    %c0_0 = arith.constant 0 : index
    %0 = vector.load %arg1[%c0, %c0_0] : memref<32x1152xf32, #tpu.memory_space<vmem>>, vector<32x1152xf32>
    %c0_1 = arith.constant 0 : index
    %c0_2 = arith.constant 0 : index
    %1 = vector.load %arg2[%c0_1, %c0_2] : memref<1152x128xf32, #tpu.memory_space<vmem>>, vector<1152x128xf32>
    %cst = arith.constant dense<0.000000e+00> : vector<32x128xf32>
    %2 = tpu.matmul %0, %1, %cst {dimension_numbers = #tpu.dot_dimension_numbers<[1], [0], [0], [1], [0, 0, 1, 1], [], []>} : vector<32x1152xf32>, vector<1152x128xf32>, vector<32x128xf32> -> vector<32x128xf32>
    %c0_3 = arith.constant 0 : index
    %c0_4 = arith.constant 0 : index
    %3 = vector.load %arg3[%c0_3, %c0_4] : memref<1x128xf32, #tpu.memory_space<vmem>>, vector<1x128xf32>
    %4 = vector.broadcast %3 : vector<1x128xf32> to vector<32x128xf32>
    %5 = arith.addf %2, %4 : vector<32x128xf32>
    %cst_5 = arith.constant 0.000000e+00 : f32
    %6 = vector.broadcast %cst_5 : f32 to vector<32x128xf32>
    %7 = arith.maximumf %5, %6 : vector<32x128xf32>
    %c0_6 = arith.constant 0 : index
    %c0_7 = arith.constant 0 : index
    %8 = vector.load %arg4[%c0_6, %c0_7] : memref<32x128xf32, #tpu.memory_space<vmem>>, vector<32x128xf32>
    tpu.vector_store %arg4[%c0_6, %c0_7], %7 {strides = array<i32>} : memref<32x128xf32, #tpu.memory_space<vmem>>, vector<32x128xf32>,
    return
  }
  func.func @transform_0(%arg0: i32) -> (i32, i32) {
    %c0_i32 = arith.constant 0 : i32
    %c0_i32_0 = arith.constant 0 : i32
    return %arg0, %c0_i32 : i32, i32
  }
  func.func @transform_1(%arg0: i32) -> (i32, i32) {
    %c0_i32 = arith.constant 0 : i32
    %c0_i32_0 = arith.constant 0 : i32
    %c0_i32_1 = arith.constant 0 : i32
    return %c0_i32, %c0_i32_0 : i32, i32
  }
  func.func @transform_2(%arg0: i32) -> (i32, i32) {
    %c0_i32 = arith.constant 0 : i32
    %c0_i32_0 = arith.constant 0 : i32
    %c0_i32_1 = arith.constant 0 : i32
    return %c0_i32, %c0_i32_0 : i32, i32
  }
  func.func @transform_3(%arg0: i32) -> (i32, i32) {
    %c0_i32 = arith.constant 0 : i32
    %c0_i32_0 = arith.constant 0 : i32
    return %arg0, %c0_i32 : i32, i32
  }
}

module attributes {stable_mosaic.version = 11 : i64} {
  func.func @_gemm_bias_act_kernel(%arg0: i32, %arg1: memref<232x384xf32, #tpu.memory_space<vmem>>, %arg2: memref<384x128xf32, #tpu.memory_space<vmem>>, %arg3: memref<1x128xf32, #tpu.memory_space<vmem>>, %arg4: memref<232x128xf32, #tpu.memory_space<vmem>>) attributes {dimension_semantics = [#tpu.dimension_semantics<parallel>], iteration_bounds = array<i64: 2>, scalar_prefetch = 0 : i64, scratch_operands = 0 : i64, tpu.core_type = #tpu.core_type<tc>, window_params = [{transform_indices = @transform_0, window_bounds = array<i64: 232, 384>}, {pipeline_mode = #tpu.pipeline_mode<synchronous>, transform_indices = @transform_1, window_bounds = array<i64: 384, 128>}, {pipeline_mode = #tpu.pipeline_mode<synchronous>, transform_indices = @transform_2, window_bounds = array<i64: 1, 128>}, {transform_indices = @transform_3, window_bounds = array<i64: 232, 128>}]} {
    %c0 = arith.constant 0 : index
    %c0_0 = arith.constant 0 : index
    %0 = vector.load %arg1[%c0, %c0_0] : memref<232x384xf32, #tpu.memory_space<vmem>>, vector<232x384xf32>
    %c0_1 = arith.constant 0 : index
    %c0_2 = arith.constant 0 : index
    %1 = vector.load %arg2[%c0_1, %c0_2] : memref<384x128xf32, #tpu.memory_space<vmem>>, vector<384x128xf32>
    %cst = arith.constant dense<0.000000e+00> : vector<232x128xf32>
    %2 = tpu.matmul %0, %1, %cst {dimension_numbers = #tpu.dot_dimension_numbers<[1], [0], [0], [1], [0, 0, 1, 1], [], []>} : vector<232x384xf32>, vector<384x128xf32>, vector<232x128xf32> -> vector<232x128xf32>
    %c0_3 = arith.constant 0 : index
    %c0_4 = arith.constant 0 : index
    %3 = vector.load %arg3[%c0_3, %c0_4] : memref<1x128xf32, #tpu.memory_space<vmem>>, vector<1x128xf32>
    %4 = vector.broadcast %3 : vector<1x128xf32> to vector<232x128xf32>
    %5 = arith.addf %2, %4 : vector<232x128xf32>
    %cst_5 = arith.constant 0.000000e+00 : f32
    %6 = vector.broadcast %cst_5 : f32 to vector<232x128xf32>
    %7 = arith.maximumf %5, %6 : vector<232x128xf32>
    %c0_6 = arith.constant 0 : index
    %c0_7 = arith.constant 0 : index
    %8 = vector.load %arg4[%c0_6, %c0_7] : memref<232x128xf32, #tpu.memory_space<vmem>>, vector<232x128xf32>
    tpu.vector_store %arg4[%c0_6, %c0_7], %7 {strides = array<i32>} : memref<232x128xf32, #tpu.memory_space<vmem>>, vector<232x128xf32>,
    return
  }
  func.func @transform_0(%arg0: i32) -> (i32, i32) {
    %c0_i32 = arith.constant 0 : i32
    %c0_i32_0 = arith.constant 0 : i32
    return %arg0, %c0_i32 : i32, i32
  }
  func.func @transform_1(%arg0: i32) -> (i32, i32) {
    %c0_i32 = arith.constant 0 : i32
    %c0_i32_0 = arith.constant 0 : i32
    %c0_i32_1 = arith.constant 0 : i32
    return %c0_i32, %c0_i32_0 : i32, i32
  }
  func.func @transform_2(%arg0: i32) -> (i32, i32) {
    %c0_i32 = arith.constant 0 : i32
    %c0_i32_0 = arith.constant 0 : i32
    %c0_i32_1 = arith.constant 0 : i32
    return %c0_i32, %c0_i32_0 : i32, i32
  }
  func.func @transform_3(%arg0: i32) -> (i32, i32) {
    %c0_i32 = arith.constant 0 : i32
    %c0_i32_0 = arith.constant 0 : i32
    return %arg0, %c0_i32 : i32, i32
  }
}

module attributes {stable_mosaic.version = 11 : i64} {
  func.func @_bottleneck_kernel(%arg0: memref<8x1024xf32, #tpu.memory_space<vmem>>, %arg1: memref<8x1024xf32, #tpu.memory_space<vmem>>, %arg2: memref<1024x128xf32, #tpu.memory_space<vmem>>, %arg3: memref<1x128xf32, #tpu.memory_space<vmem>>, %arg4: memref<1024x128xf32, #tpu.memory_space<vmem>>, %arg5: memref<1x128xf32, #tpu.memory_space<vmem>>, %arg6: memref<128x128xf32, #tpu.memory_space<vmem>>, %arg7: memref<1x128xf32, #tpu.memory_space<vmem>>, %arg8: memref<128x128xf32, #tpu.memory_space<vmem>>, %arg9: memref<1x128xf32, #tpu.memory_space<vmem>>, %arg10: memref<128x128xf32, #tpu.memory_space<vmem>>, %arg11: memref<128x128xf32, #tpu.memory_space<vmem>>, %arg12: memref<1x128xf32, #tpu.memory_space<vmem>>, %arg13: memref<128x3072xf32, #tpu.memory_space<vmem>>, %arg14: memref<1x3072xf32, #tpu.memory_space<vmem>>, %arg15: memref<8x3072xf32, #tpu.memory_space<vmem>>) attributes {dimension_semantics = [], scalar_prefetch = 0 : i64, scratch_operands = 0 : i64, tpu.core_type = #tpu.core_type<tc>} {
    %c0 = arith.constant 0 : index
    %c0_0 = arith.constant 0 : index
    %0 = vector.load %arg0[%c0, %c0_0] : memref<8x1024xf32, #tpu.memory_space<vmem>>, vector<8x1024xf32>
    %c0_1 = arith.constant 0 : index
    %c0_2 = arith.constant 0 : index
    %1 = vector.load %arg2[%c0_1, %c0_2] : memref<1024x128xf32, #tpu.memory_space<vmem>>, vector<1024x128xf32>
    %cst = arith.constant dense<0.000000e+00> : vector<8x128xf32>
    %2 = tpu.matmul %0, %1, %cst {dimension_numbers = #tpu.dot_dimension_numbers<[1], [0], [0], [1], [0, 0, 1, 1], [], []>} : vector<8x1024xf32>, vector<1024x128xf32>, vector<8x128xf32> -> vector<8x128xf32>
    %c0_3 = arith.constant 0 : index
    %c0_4 = arith.constant 0 : index
    %3 = vector.load %arg3[%c0_3, %c0_4] : memref<1x128xf32, #tpu.memory_space<vmem>>, vector<1x128xf32>
    %4 = vector.broadcast %3 : vector<1x128xf32> to vector<8x128xf32>
    %5 = arith.addf %2, %4 : vector<8x128xf32>
    %cst_5 = arith.constant 0.000000e+00 : f32
    %6 = vector.broadcast %cst_5 : f32 to vector<8x128xf32>
    %7 = arith.maximumf %5, %6 : vector<8x128xf32>
    %c0_6 = arith.constant 0 : index
    %c0_7 = arith.constant 0 : index
    %8 = vector.load %arg1[%c0_6, %c0_7] : memref<8x1024xf32, #tpu.memory_space<vmem>>, vector<8x1024xf32>
    %c0_8 = arith.constant 0 : index
    %c0_9 = arith.constant 0 : index
    %9 = vector.load %arg4[%c0_8, %c0_9] : memref<1024x128xf32, #tpu.memory_space<vmem>>, vector<1024x128xf32>
    %cst_10 = arith.constant dense<0.000000e+00> : vector<8x128xf32>
    %10 = tpu.matmul %8, %9, %cst_10 {dimension_numbers = #tpu.dot_dimension_numbers<[1], [0], [0], [1], [0, 0, 1, 1], [], []>} : vector<8x1024xf32>, vector<1024x128xf32>, vector<8x128xf32> -> vector<8x128xf32>
    %c0_11 = arith.constant 0 : index
    %c0_12 = arith.constant 0 : index
    %11 = vector.load %arg5[%c0_11, %c0_12] : memref<1x128xf32, #tpu.memory_space<vmem>>, vector<1x128xf32>
    %12 = vector.broadcast %11 : vector<1x128xf32> to vector<8x128xf32>
    %13 = arith.addf %10, %12 : vector<8x128xf32>
    %cst_13 = arith.constant 0.000000e+00 : f32
    %14 = vector.broadcast %cst_13 : f32 to vector<8x128xf32>
    %15 = arith.maximumf %13, %14 : vector<8x128xf32>
    %c0_14 = arith.constant 0 : index
    %c0_15 = arith.constant 0 : index
    %16 = vector.load %arg6[%c0_14, %c0_15] : memref<128x128xf32, #tpu.memory_space<vmem>>, vector<128x128xf32>
    %cst_16 = arith.constant dense<0.000000e+00> : vector<8x128xf32>
    %17 = tpu.matmul %7, %16, %cst_16 {dimension_numbers = #tpu.dot_dimension_numbers<[1], [0], [0], [1], [0, 0, 1, 1], [], []>} : vector<8x128xf32>, vector<128x128xf32>, vector<8x128xf32> -> vector<8x128xf32>
    %c0_17 = arith.constant 0 : index
    %c0_18 = arith.constant 0 : index
    %18 = vector.load %arg7[%c0_17, %c0_18] : memref<1x128xf32, #tpu.memory_space<vmem>>, vector<1x128xf32>
    %19 = vector.broadcast %18 : vector<1x128xf32> to vector<8x128xf32>
    %20 = arith.addf %17, %19 : vector<8x128xf32>
    %cst_19 = arith.constant 0.000000e+00 : f32
    %21 = vector.broadcast %cst_19 : f32 to vector<8x128xf32>
    %22 = arith.maximumf %20, %21 : vector<8x128xf32>
    %cst_20 = arith.constant 1.000000e+00 : f32
    %23 = vector.broadcast %cst_20 : f32 to vector<8x128xf32>
    %24 = arith.mulf %22, %23 : vector<8x128xf32>
    %c0_21 = arith.constant 0 : index
    %c0_22 = arith.constant 0 : index
    %25 = vector.load %arg8[%c0_21, %c0_22] : memref<128x128xf32, #tpu.memory_space<vmem>>, vector<128x128xf32>
    %cst_23 = arith.constant dense<0.000000e+00> : vector<8x128xf32>
    %26 = tpu.matmul %15, %25, %cst_23 {dimension_numbers = #tpu.dot_dimension_numbers<[1], [0], [0], [1], [0, 0, 1, 1], [], []>} : vector<8x128xf32>, vector<128x128xf32>, vector<8x128xf32> -> vector<8x128xf32>
    %c0_24 = arith.constant 0 : index
    %c0_25 = arith.constant 0 : index
    %27 = vector.load %arg9[%c0_24, %c0_25] : memref<1x128xf32, #tpu.memory_space<vmem>>, vector<1x128xf32>
    %28 = vector.broadcast %27 : vector<1x128xf32> to vector<8x128xf32>
    %29 = arith.addf %26, %28 : vector<8x128xf32>
    %cst_26 = arith.constant 0.000000e+00 : f32
    %30 = vector.broadcast %cst_26 : f32 to vector<8x128xf32>
    %31 = arith.maximumf %29, %30 : vector<8x128xf32>
    %cst_27 = arith.constant 1.000000e+00 : f32
    %32 = vector.broadcast %cst_27 : f32 to vector<8x128xf32>
    %33 = arith.mulf %31, %32 : vector<8x128xf32>
    %c0_28 = arith.constant 0 : index
    %c0_29 = arith.constant 0 : index
    %34 = vector.load %arg10[%c0_28, %c0_29] : memref<128x128xf32, #tpu.memory_space<vmem>>, vector<128x128xf32>
    %cst_30 = arith.constant dense<0.000000e+00> : vector<8x128xf32>
    %35 = tpu.matmul %24, %34, %cst_30 {dimension_numbers = #tpu.dot_dimension_numbers<[1], [0], [0], [1], [0, 0, 1, 1], [], []>} : vector<8x128xf32>, vector<128x128xf32>, vector<8x128xf32> -> vector<8x128xf32>
    %c0_31 = arith.constant 0 : index
    %c0_32 = arith.constant 0 : index
    %36 = vector.load %arg11[%c0_31, %c0_32] : memref<128x128xf32, #tpu.memory_space<vmem>>, vector<128x128xf32>
    %cst_33 = arith.constant dense<0.000000e+00> : vector<8x128xf32>
    %37 = tpu.matmul %33, %36, %cst_33 {dimension_numbers = #tpu.dot_dimension_numbers<[1], [0], [0], [1], [0, 0, 1, 1], [], []>} : vector<8x128xf32>, vector<128x128xf32>, vector<8x128xf32> -> vector<8x128xf32>
    %38 = arith.addf %35, %37 : vector<8x128xf32>
    %c0_34 = arith.constant 0 : index
    %c0_35 = arith.constant 0 : index
    %39 = vector.load %arg12[%c0_34, %c0_35] : memref<1x128xf32, #tpu.memory_space<vmem>>, vector<1x128xf32>
    %40 = vector.broadcast %39 : vector<1x128xf32> to vector<8x128xf32>
    %41 = arith.addf %38, %40 : vector<8x128xf32>
    %c0_36 = arith.constant 0 : index
    %c0_37 = arith.constant 0 : index
    %42 = vector.load %arg13[%c0_36, %c0_37] : memref<128x3072xf32, #tpu.memory_space<vmem>>, vector<128x3072xf32>
    %cst_38 = arith.constant dense<0.000000e+00> : vector<8x3072xf32>
    %43 = tpu.matmul %41, %42, %cst_38 {dimension_numbers = #tpu.dot_dimension_numbers<[1], [0], [0], [1], [0, 0, 1, 1], [], []>} : vector<8x128xf32>, vector<128x3072xf32>, vector<8x3072xf32> -> vector<8x3072xf32>
    %c0_39 = arith.constant 0 : index
    %c0_40 = arith.constant 0 : index
    %44 = vector.load %arg14[%c0_39, %c0_40] : memref<1x3072xf32, #tpu.memory_space<vmem>>, vector<1x3072xf32>
    %45 = vector.broadcast %44 : vector<1x3072xf32> to vector<8x3072xf32>
    %46 = arith.addf %43, %45 : vector<8x3072xf32>
    %cst_41 = arith.constant 0.000000e+00 : f32
    %47 = vector.broadcast %cst_41 : f32 to vector<8x3072xf32>
    %48 = arith.maximumf %46, %47 : vector<8x3072xf32>
    %c0_42 = arith.constant 0 : index
    %c0_43 = arith.constant 0 : index
    %49 = vector.load %arg15[%c0_42, %c0_43] : memref<8x3072xf32, #tpu.memory_space<vmem>>, vector<8x3072xf32>
    tpu.vector_store %arg15[%c0_42, %c0_43], %48 {strides = array<i32>} : memref<8x3072xf32, #tpu.memory_space<vmem>>, vector<8x3072xf32>,
    return
  }
}

module attributes {stable_mosaic.version = 11 : i64} {
  func.func @_gemm_bias_act_kernel(%arg0: i32, %arg1: memref<24x256xf32, #tpu.memory_space<vmem>>, %arg2: memref<256x1152xf32, #tpu.memory_space<vmem>>, %arg3: memref<1x1152xf32, #tpu.memory_space<vmem>>, %arg4: memref<24x1152xf32, #tpu.memory_space<vmem>>) attributes {dimension_semantics = [#tpu.dimension_semantics<parallel>], iteration_bounds = array<i64: 1>, scalar_prefetch = 0 : i64, scratch_operands = 0 : i64, tpu.core_type = #tpu.core_type<tc>, window_params = [{transform_indices = @transform_0, window_bounds = array<i64: 24, 256>}, {pipeline_mode = #tpu.pipeline_mode<synchronous>, transform_indices = @transform_1, window_bounds = array<i64: 256, 1152>}, {pipeline_mode = #tpu.pipeline_mode<synchronous>, transform_indices = @transform_2, window_bounds = array<i64: 1, 1152>}, {transform_indices = @transform_3, window_bounds = array<i64: 24, 1152>}]} {
    %c0 = arith.constant 0 : index
    %c0_0 = arith.constant 0 : index
    %0 = vector.load %arg1[%c0, %c0_0] : memref<24x256xf32, #tpu.memory_space<vmem>>, vector<24x256xf32>
    %c0_1 = arith.constant 0 : index
    %c0_2 = arith.constant 0 : index
    %1 = vector.load %arg2[%c0_1, %c0_2] : memref<256x1152xf32, #tpu.memory_space<vmem>>, vector<256x1152xf32>
    %cst = arith.constant dense<0.000000e+00> : vector<24x1152xf32>
    %2 = tpu.matmul %0, %1, %cst {dimension_numbers = #tpu.dot_dimension_numbers<[1], [0], [0], [1], [0, 0, 1, 1], [], []>} : vector<24x256xf32>, vector<256x1152xf32>, vector<24x1152xf32> -> vector<24x1152xf32>
    %c0_3 = arith.constant 0 : index
    %c0_4 = arith.constant 0 : index
    %3 = vector.load %arg3[%c0_3, %c0_4] : memref<1x1152xf32, #tpu.memory_space<vmem>>, vector<1x1152xf32>
    %4 = vector.broadcast %3 : vector<1x1152xf32> to vector<24x1152xf32>
    %5 = arith.addf %2, %4 : vector<24x1152xf32>
    %cst_5 = arith.constant 0.000000e+00 : f32
    %6 = vector.broadcast %cst_5 : f32 to vector<24x1152xf32>
    %7 = arith.maximumf %5, %6 : vector<24x1152xf32>
    %c0_6 = arith.constant 0 : index
    %c0_7 = arith.constant 0 : index
    %8 = vector.load %arg4[%c0_6, %c0_7] : memref<24x1152xf32, #tpu.memory_space<vmem>>, vector<24x1152xf32>
    tpu.vector_store %arg4[%c0_6, %c0_7], %7 {strides = array<i32>} : memref<24x1152xf32, #tpu.memory_space<vmem>>, vector<24x1152xf32>,
    return
  }
  func.func @transform_0(%arg0: i32) -> (i32, i32) {
    %c0_i32 = arith.constant 0 : i32
    %c0_i32_0 = arith.constant 0 : i32
    return %arg0, %c0_i32 : i32, i32
  }
  func.func @transform_1(%arg0: i32) -> (i32, i32) {
    %c0_i32 = arith.constant 0 : i32
    %c0_i32_0 = arith.constant 0 : i32
    %c0_i32_1 = arith.constant 0 : i32
    return %c0_i32, %c0_i32_0 : i32, i32
  }
  func.func @transform_2(%arg0: i32) -> (i32, i32) {
    %c0_i32 = arith.constant 0 : i32
    %c0_i32_0 = arith.constant 0 : i32
    %c0_i32_1 = arith.constant 0 : i32
    return %c0_i32, %c0_i32_0 : i32, i32
  }
  func.func @transform_3(%arg0: i32) -> (i32, i32) {
    %c0_i32 = arith.constant 0 : i32
    %c0_i32_0 = arith.constant 0 : i32
    return %arg0, %c0_i32 : i32, i32
  }
}

module attributes {stable_mosaic.version = 11 : i64} {
  func.func @_gemm_bias_act_kernel(%arg0: i32, %arg1: memref<216x128xf32, #tpu.memory_space<vmem>>, %arg2: memref<128x640xf32, #tpu.memory_space<vmem>>, %arg3: memref<1x640xf32, #tpu.memory_space<vmem>>, %arg4: memref<216x640xf32, #tpu.memory_space<vmem>>) attributes {dimension_semantics = [#tpu.dimension_semantics<parallel>], iteration_bounds = array<i64: 1>, scalar_prefetch = 0 : i64, scratch_operands = 0 : i64, tpu.core_type = #tpu.core_type<tc>, window_params = [{transform_indices = @transform_0, window_bounds = array<i64: 216, 128>}, {pipeline_mode = #tpu.pipeline_mode<synchronous>, transform_indices = @transform_1, window_bounds = array<i64: 128, 640>}, {pipeline_mode = #tpu.pipeline_mode<synchronous>, transform_indices = @transform_2, window_bounds = array<i64: 1, 640>}, {transform_indices = @transform_3, window_bounds = array<i64: 216, 640>}]} {
    %c0 = arith.constant 0 : index
    %c0_0 = arith.constant 0 : index
    %0 = vector.load %arg1[%c0, %c0_0] : memref<216x128xf32, #tpu.memory_space<vmem>>, vector<216x128xf32>
    %c0_1 = arith.constant 0 : index
    %c0_2 = arith.constant 0 : index
    %1 = vector.load %arg2[%c0_1, %c0_2] : memref<128x640xf32, #tpu.memory_space<vmem>>, vector<128x640xf32>
    %cst = arith.constant dense<0.000000e+00> : vector<216x640xf32>
    %2 = tpu.matmul %0, %1, %cst {dimension_numbers = #tpu.dot_dimension_numbers<[1], [0], [0], [1], [0, 0, 1, 1], [], []>} : vector<216x128xf32>, vector<128x640xf32>, vector<216x640xf32> -> vector<216x640xf32>
    %c0_3 = arith.constant 0 : index
    %c0_4 = arith.constant 0 : index
    %3 = vector.load %arg3[%c0_3, %c0_4] : memref<1x640xf32, #tpu.memory_space<vmem>>, vector<1x640xf32>
    %4 = vector.broadcast %3 : vector<1x640xf32> to vector<216x640xf32>
    %5 = arith.addf %2, %4 : vector<216x640xf32>
    %cst_5 = arith.constant 0.000000e+00 : f32
    %6 = vector.broadcast %cst_5 : f32 to vector<216x640xf32>
    %7 = arith.maximumf %5, %6 : vector<216x640xf32>
    %c0_6 = arith.constant 0 : index
    %c0_7 = arith.constant 0 : index
    %8 = vector.load %arg4[%c0_6, %c0_7] : memref<216x640xf32, #tpu.memory_space<vmem>>, vector<216x640xf32>
    tpu.vector_store %arg4[%c0_6, %c0_7], %7 {strides = array<i32>} : memref<216x640xf32, #tpu.memory_space<vmem>>, vector<216x640xf32>,
    return
  }
  func.func @transform_0(%arg0: i32) -> (i32, i32) {
    %c0_i32 = arith.constant 0 : i32
    %c0_i32_0 = arith.constant 0 : i32
    return %arg0, %c0_i32 : i32, i32
  }
  func.func @transform_1(%arg0: i32) -> (i32, i32) {
    %c0_i32 = arith.constant 0 : i32
    %c0_i32_0 = arith.constant 0 : i32
    %c0_i32_1 = arith.constant 0 : i32
    return %c0_i32, %c0_i32_0 : i32, i32
  }
  func.func @transform_2(%arg0: i32) -> (i32, i32) {
    %c0_i32 = arith.constant 0 : i32
    %c0_i32_0 = arith.constant 0 : i32
    %c0_i32_1 = arith.constant 0 : i32
    return %c0_i32, %c0_i32_0 : i32, i32
  }
  func.func @transform_3(%arg0: i32) -> (i32, i32) {
    %c0_i32 = arith.constant 0 : i32
    %c0_i32_0 = arith.constant 0 : i32
    return %arg0, %c0_i32 : i32, i32
  }
}

module attributes {stable_mosaic.version = 11 : i64} {
  func.func @_gemm_bias_act_kernel(%arg0: i32, %arg1: memref<1136x256xf32, #tpu.memory_space<vmem>>, %arg2: memref<256x128xf32, #tpu.memory_space<vmem>>, %arg3: memref<1x128xf32, #tpu.memory_space<vmem>>, %arg4: memref<1136x128xf32, #tpu.memory_space<vmem>>) attributes {dimension_semantics = [#tpu.dimension_semantics<parallel>], iteration_bounds = array<i64: 2>, scalar_prefetch = 0 : i64, scratch_operands = 0 : i64, tpu.core_type = #tpu.core_type<tc>, window_params = [{transform_indices = @transform_0, window_bounds = array<i64: 1136, 256>}, {pipeline_mode = #tpu.pipeline_mode<synchronous>, transform_indices = @transform_1, window_bounds = array<i64: 256, 128>}, {pipeline_mode = #tpu.pipeline_mode<synchronous>, transform_indices = @transform_2, window_bounds = array<i64: 1, 128>}, {transform_indices = @transform_3, window_bounds = array<i64: 1136, 128>}]} {
    %c0 = arith.constant 0 : index
    %c0_0 = arith.constant 0 : index
    %0 = vector.load %arg1[%c0, %c0_0] : memref<1136x256xf32, #tpu.memory_space<vmem>>, vector<1136x256xf32>
    %c0_1 = arith.constant 0 : index
    %c0_2 = arith.constant 0 : index
    %1 = vector.load %arg2[%c0_1, %c0_2] : memref<256x128xf32, #tpu.memory_space<vmem>>, vector<256x128xf32>
    %cst = arith.constant dense<0.000000e+00> : vector<1136x128xf32>
    %2 = tpu.matmul %0, %1, %cst {dimension_numbers = #tpu.dot_dimension_numbers<[1], [0], [0], [1], [0, 0, 1, 1], [], []>} : vector<1136x256xf32>, vector<256x128xf32>, vector<1136x128xf32> -> vector<1136x128xf32>
    %c0_3 = arith.constant 0 : index
    %c0_4 = arith.constant 0 : index
    %3 = vector.load %arg3[%c0_3, %c0_4] : memref<1x128xf32, #tpu.memory_space<vmem>>, vector<1x128xf32>
    %4 = vector.broadcast %3 : vector<1x128xf32> to vector<1136x128xf32>
    %5 = arith.addf %2, %4 : vector<1136x128xf32>
    %cst_5 = arith.constant 0.000000e+00 : f32
    %6 = vector.broadcast %cst_5 : f32 to vector<1136x128xf32>
    %7 = arith.maximumf %5, %6 : vector<1136x128xf32>
    %c0_6 = arith.constant 0 : index
    %c0_7 = arith.constant 0 : index
    %8 = vector.load %arg4[%c0_6, %c0_7] : memref<1136x128xf32, #tpu.memory_space<vmem>>, vector<1136x128xf32>
    tpu.vector_store %arg4[%c0_6, %c0_7], %7 {strides = array<i32>} : memref<1136x128xf32, #tpu.memory_space<vmem>>, vector<1136x128xf32>,
    return
  }
  func.func @transform_0(%arg0: i32) -> (i32, i32) {
    %c0_i32 = arith.constant 0 : i32
    %c0_i32_0 = arith.constant 0 : i32
    return %arg0, %c0_i32 : i32, i32
  }
  func.func @transform_1(%arg0: i32) -> (i32, i32) {
    %c0_i32 = arith.constant 0 : i32
    %c0_i32_0 = arith.constant 0 : i32
    %c0_i32_1 = arith.constant 0 : i32
    return %c0_i32, %c0_i32_0 : i32, i32
  }
  func.func @transform_2(%arg0: i32) -> (i32, i32) {
    %c0_i32 = arith.constant 0 : i32
    %c0_i32_0 = arith.constant 0 : i32
    %c0_i32_1 = arith.constant 0 : i32
    return %c0_i32, %c0_i32_0 : i32, i32
  }
  func.func @transform_3(%arg0: i32) -> (i32, i32) {
    %c0_i32 = arith.constant 0 : i32
    %c0_i32_0 = arith.constant 0 : i32
    return %arg0, %c0_i32 : i32, i32
  }
}

module attributes {stable_mosaic.version = 11 : i64} {
  func.func @_gemm_bias_act_kernel(%arg0: i32, %arg1: memref<1920x128xf32, #tpu.memory_space<vmem>>, %arg2: memref<128x128xf32, #tpu.memory_space<vmem>>, %arg3: memref<1x128xf32, #tpu.memory_space<vmem>>, %arg4: memref<1920x128xf32, #tpu.memory_space<vmem>>) attributes {dimension_semantics = [#tpu.dimension_semantics<parallel>], iteration_bounds = array<i64: 5>, scalar_prefetch = 0 : i64, scratch_operands = 0 : i64, tpu.core_type = #tpu.core_type<tc>, window_params = [{transform_indices = @transform_0, window_bounds = array<i64: 1920, 128>}, {pipeline_mode = #tpu.pipeline_mode<synchronous>, transform_indices = @transform_1, window_bounds = array<i64: 128, 128>}, {pipeline_mode = #tpu.pipeline_mode<synchronous>, transform_indices = @transform_2, window_bounds = array<i64: 1, 128>}, {transform_indices = @transform_3, window_bounds = array<i64: 1920, 128>}]} {
    %c0 = arith.constant 0 : index
    %c0_0 = arith.constant 0 : index
    %0 = vector.load %arg1[%c0, %c0_0] : memref<1920x128xf32, #tpu.memory_space<vmem>>, vector<1920x128xf32>
    %c0_1 = arith.constant 0 : index
    %c0_2 = arith.constant 0 : index
    %1 = vector.load %arg2[%c0_1, %c0_2] : memref<128x128xf32, #tpu.memory_space<vmem>>, vector<128x128xf32>
    %cst = arith.constant dense<0.000000e+00> : vector<1920x128xf32>
    %2 = tpu.matmul %0, %1, %cst {dimension_numbers = #tpu.dot_dimension_numbers<[1], [0], [0], [1], [0, 0, 1, 1], [], []>} : vector<1920x128xf32>, vector<128x128xf32>, vector<1920x128xf32> -> vector<1920x128xf32>
    %c0_3 = arith.constant 0 : index
    %c0_4 = arith.constant 0 : index
    %3 = vector.load %arg3[%c0_3, %c0_4] : memref<1x128xf32, #tpu.memory_space<vmem>>, vector<1x128xf32>
    %4 = vector.broadcast %3 : vector<1x128xf32> to vector<1920x128xf32>
    %5 = arith.addf %2, %4 : vector<1920x128xf32>
    %c0_5 = arith.constant 0 : index
    %c0_6 = arith.constant 0 : index
    %6 = vector.load %arg4[%c0_5, %c0_6] : memref<1920x128xf32, #tpu.memory_space<vmem>>, vector<1920x128xf32>
    tpu.vector_store %arg4[%c0_5, %c0_6], %5 {strides = array<i32>} : memref<1920x128xf32, #tpu.memory_space<vmem>>, vector<1920x128xf32>,
    return
  }
  func.func @transform_0(%arg0: i32) -> (i32, i32) {
    %c0_i32 = arith.constant 0 : i32
    %c0_i32_0 = arith.constant 0 : i32
    return %arg0, %c0_i32 : i32, i32
  }
  func.func @transform_1(%arg0: i32) -> (i32, i32) {
    %c0_i32 = arith.constant 0 : i32
    %c0_i32_0 = arith.constant 0 : i32
    %c0_i32_1 = arith.constant 0 : i32
    return %c0_i32, %c0_i32_0 : i32, i32
  }
  func.func @transform_2(%arg0: i32) -> (i32, i32) {
    %c0_i32 = arith.constant 0 : i32
    %c0_i32_0 = arith.constant 0 : i32
    %c0_i32_1 = arith.constant 0 : i32
    return %c0_i32, %c0_i32_0 : i32, i32
  }
  func.func @transform_3(%arg0: i32) -> (i32, i32) {
    %c0_i32 = arith.constant 0 : i32
    %c0_i32_0 = arith.constant 0 : i32
    return %arg0, %c0_i32 : i32, i32
  }
}

</mosaic_0001>

<llo_original>
// kernel: forward.9
$region0: #{forward.9}
  #allocation0 [shape = 'u32[]', space=smem, size = 0x4, offset = 0x4, fixed_abs, tag = 'smem constant byte address 0x4 - core index']
  #allocation1 [shape = 'u32[144,128]{1,0:T(1,128)}', space=vmem, size = 0x12000, scoped, tag = 'internal scratch']
  %s0 = inlined_call_operand.vmem [shape: f32[464,192], index: 0, kind: input, shape index: {}]
  %s1 = inlined_call_operand.vmem [shape: f32[192,128], index: 1, kind: input, shape index: {}]
  %s2 = inlined_call_operand.vmem [shape: f32[1,128], index: 2, kind: input, shape index: {}]
  %s3 = inlined_call_operand.vmem [shape: f32[464,128], index: 3, kind: output, shape index: {}]
  %s4 = sld [smem:[#allocation0]]
  $region45: #{forward.9} parent=0
    _
  %s6 = ssub.s32 1, %s4
  %s7 = scalar_select 0, %s6, %s4
  loop: start=0, step=1, limit=4
  $region2: #{forward.9} parent=0 // loop_pre_header
    _
  $region3: #{forward.9} parent=0 // loop_header
    %s9 = sphi 0, %s13
    %p10 = scmp.ge.s32.totalorder %s9, 4
    %s19 = sphi 0, %s21
    %s22 = sphi 0, %s19
    %s23 = sphi 0, %s22
    %s39 = sphi 0, %s23
    %s43 = sphi 0, %s43
    %s45 = sphi 0, %s43
    %s46 = sphi 0, %s45
    %s60 = sphi 0, %s46
    %s64 = sphi 0, %s64
    %s66 = sphi 0, %s64
    %s67 = sphi 0, %s66
    %s81 = sphi 0, %s67
    %s87 = sphi 0, %s89
    %s90 = sphi 0, %s87
    %s91 = sphi 0, %s90
    %s107 = sphi 0, %s91
  $region4: #{forward.9} parent=0 // loop_header_branch
    %12 = sbr.rel (%p10) target = $region8
  $region5: #{forward.9} parent=0 // loop_body
    %s14 = ssub.s32 %s9, 1
    %s15 = ssub.s32 %s9, 2
    %s16 = sadd.s32 %s9, 1
    %s17 = ssub.s32 %s9, %s16
    %p18 = scmp.eq.s32.totalorder %s17, 0
    %s20 = sadd.s32 %s19, 1
    %s21 = scalar_select %p18, %s19, %s20
    %p24 = pneg %p18
    %p25 = scmp.eq.s32.totalorder %s9, 1
    %p26 = por %p24, %p25
    %p27 = scmp.ne.s32.totalorder %s19, %s22
    %p28 = scmp.eq.s32.totalorder %s9, 0
    %p29 = por %p27, %p28
    %p30 = scmp.ne.s32.totalorder %s19, %s22
    %p31 = scmp.eq.s32.totalorder %s14, 1
    %p32 = por %p30, %p31
    %p33 = scmp.ne.s32.totalorder %s22, %s23
    %p34 = scmp.eq.s32.totalorder %s14, 0
    %p35 = por %p33, %p34
    %p36 = scmp.ne.s32.totalorder %s22, %s23
    %p37 = scmp.eq.s32.totalorder %s15, 1
    %p38 = por %p36, %p37
    %p40 = scmp.ne.s32.totalorder %s23, %s39
    %p41 = scmp.eq.s32.totalorder %s15, 0
    %p42 = por %p40, %p41
    %s44 = sadd.s32 %s43, 1
    %p47 = scmp.eq.s32.totalorder %s9, 1
    %p48 = scmp.ne.s32.totalorder %s43, %s45
    %p49 = scmp.eq.s32.totalorder %s9, 0
    %p50 = por %p48, %p49
    %p51 = scmp.ne.s32.totalorder %s43, %s45
    %p52 = scmp.eq.s32.totalorder %s14, 1
    %p53 = por %p51, %p52
    %p54 = scmp.ne.s32.totalorder %s45, %s46
    %p55 = scmp.eq.s32.totalorder %s14, 0
    %p56 = por %p54, %p55
    %p57 = scmp.ne.s32.totalorder %s45, %s46
    %p58 = scmp.eq.s32.totalorder %s15, 1
    %p59 = por %p57, %p58
    %p61 = scmp.ne.s32.totalorder %s46, %s60
    %p62 = scmp.eq.s32.totalorder %s15, 0
    %p63 = por %p61, %p62
    %s65 = sadd.s32 %s64, 1
    %p68 = scmp.eq.s32.totalorder %s9, 1
    %p69 = scmp.ne.s32.totalorder %s64, %s66
    %p70 = scmp.eq.s32.totalorder %s9, 0
    %p71 = por %p69, %p70
    %p72 = scmp.ne.s32.totalorder %s64, %s66
    %p73 = scmp.eq.s32.totalorder %s14, 1
    %p74 = por %p72, %p73
    %p75 = scmp.ne.s32.totalorder %s66, %s67
    %p76 = scmp.eq.s32.totalorder %s14, 0
    %p77 = por %p75, %p76
    %p78 = scmp.ne.s32.totalorder %s66, %s67
    %p79 = scmp.eq.s32.totalorder %s15, 1
    %p80 = por %p78, %p79
    %p82 = scmp.ne.s32.totalorder %s67, %s81
    %p83 = scmp.eq.s32.totalorder %s15, 0
    %p84 = por %p82, %p83
    %s85 = ssub.s32 %s9, %s16
    %p86 = scmp.eq.s32.totalorder %s85, 0
    %s88 = sadd.s32 %s87, 1
    %s89 = scalar_select %p86, %s87, %s88
    %p92 = pneg %p86
    %p93 = scmp.eq.s32.totalorder %s9, 1
    %p94 = por %p92, %p93
    %p95 = scmp.ne.s32.totalorder %s87, %s90
    %p96 = scmp.eq.s32.totalorder %s9, 0
    %p97 = por %p95, %p96
    %p98 = scmp.ne.s32.totalorder %s87, %s90
    %p99 = scmp.eq.s32.totalorder %s14, 1
    %p100 = por %p98, %p99
    %p101 = scmp.ne.s32.totalorder %s90, %s91
    %p102 = scmp.eq.s32.totalorder %s14, 0
    %p103 = por %p101, %p102
    %p104 = scmp.ne.s32.totalorder %s90, %s91
    %p105 = scmp.eq.s32.totalorder %s15, 1
    %p106 = por %p104, %p105
    %p108 = scmp.ne.s32.totalorder %s91, %s107
    %p109 = scmp.eq.s32.totalorder %s15, 0
    %p110 = por %p108, %p109
    %p111 = scmp.le.s32.totalorder 1, %s9
    %p112 = scmp.lt.s32.totalorder %s9, 3
    %p113 = pnand %p111, %p112
    %p114 = pneg %p113
    // Predicated region
    $region9: #{forward.9} parent=5 // pred_check
      _
    $region10: #{forward.9} parent=5 // pred_check_branch
      %116 = sbr.rel (%p113) target = $region12
    $region11: #{forward.9} parent=5 // pred_region
      %s117 = ssub.s32 %s9, 1
      // Predicated region
      $region13: #{forward.9} parent=11 // pred_check
        %p118 = pneg %p56
      $region14: #{forward.9} parent=11 // pred_check_branch
        %120 = sbr.rel (%p118) target = $region16
      $region15: #{forward.9} parent=11 // pred_region
        _
      $region16: #{forward.9} parent=11 // pred_fallthru
        _
      // Predicated region
      $region17: #{forward.9} parent=11 // pred_check
        %p121 = pneg %p77
      $region18: #{forward.9} parent=11 // pred_check_branch
        %123 = sbr.rel (%p121) target = $region20
      $region19: #{forward.9} parent=11 // pred_region
        _
      $region20: #{forward.9} parent=11 // pred_fallthru
        _
    $region12: #{forward.9} parent=5 // pred_fallthru
      _
    %p124 = scmp.lt.s32.totalorder %s9, 2
    // Predicated region
    $region21: #{forward.9} parent=5 // pred_check
      %p125 = pneg %p124
    $region22: #{forward.9} parent=5 // pred_check_branch
      %127 = sbr.rel (%p125) target = $region24
    $region23: #{forward.9} parent=5 // pred_region
      // Predicated region
      $region25: #{forward.9} parent=23 // pred_check
        %p128 = pneg %p29
      $region26: #{forward.9} parent=23 // pred_check_branch
        %130 = sbr.rel (%p128) target = $region28
      $region27: #{forward.9} parent=23 // pred_region
        %s131 = smul.u32 29, %s9
        %p132 = scmp.lt.s32.totalorder %s131, 57
        %s133 = scalar_select %p132, %s131, 57
        %s134 = smul.addr %s133, 2
        %s135 = smul.addr %s134, 8
        %s136 = scalar_lea.vmem %s0, %s135
        %s137 = smul.u32 29, %s9
      $region28: #{forward.9} parent=23 // pred_fallthru
        _
    $region24: #{forward.9} parent=5 // pred_fallthru
      _
    %p138 = scmp.le.s32.totalorder 1, %s9
    %p139 = scmp.lt.s32.totalorder %s9, 3
    %p140 = pnand %p138, %p139
    %p141 = pneg %p140
    // Predicated region
    $region29: #{forward.9} parent=5 // pred_check
      _
    $region30: #{forward.9} parent=5 // pred_check_branch
      %143 = sbr.rel (%p140) target = $region32
    $region31: #{forward.9} parent=5 // pred_region
      %s144 = ssub.s32 %s9, 1
      %s145 = smul.u32 29, %s14
      %p146 = scmp.lt.s32.totalorder %s145, 57
      %s147 = scalar_select %p146, %s145, 57
      %s148 = smul.addr %s147, 2
      %s149 = smul.addr %s148, 8
      %s150 = scalar_lea.vmem %s0, %s149
      %p151 = pneg %p35
      %p152 = pneg %p32
      %p153 = pneg %p56
      %p154 = pneg %p53
      %p155 = pneg %p77
      %p156 = pneg %p74
      %p157 = pneg %p103
      %p158 = pneg %p100
      %s159 = smul.u32 29, %s14
      %p160 = scmp.lt.s32.totalorder %s159, 57
      %s161 = scalar_select %p160, %s159, 57
      %s162 = smul.addr %s161, 8
      %s163 = scalar_lea.vmem %s3, %s162
      %s164 = smul.u32 29, %s14
      %p165 = scmp.lt.s32.totalorder %s164, 57
      %s166 = scalar_select %p165, %s164, 57
      %s167 = smul.addr %s166, 2
      %s168 = smul.addr %s167, 8
      %s169 = scalar_lea.vmem %s0, %s168
      %s170 = smul.u32 29, %s14
      %s171 = smul.u32 29, %s14
      %p172 = scmp.lt.s32.totalorder %s171, 57
      %s173 = scalar_select %p172, %s171, 57
      %s174 = smul.addr %s173, 8
      %s175 = scalar_lea.vmem %s3, %s174
      %s176 = smul.u32 29, %s14
      %v177 = vld [vmem:[%s169] sm:$0xff]
      %v178 = vld [vmem:[%s169 + $0x8] sm:$0xff]
      %v179 = vld [vmem:[%s169 + $0x10] sm:$0xff]
      %v180 = vld [vmem:[%s169 + $0x18] sm:$0xff]
      %v181 = vld [vmem:[%s169 + $0x20] sm:$0xff]
      %v182 = vld [vmem:[%s169 + $0x28] sm:$0xff]
      %v183 = vld [vmem:[%s169 + $0x30] sm:$0xff]
      %v184 = vld [vmem:[%s169 + $0x38] sm:$0xff]
      %v185 = vld [vmem:[%s169 + $0x40] sm:$0xff]
      %v186 = vld [vmem:[%s169 + $0x48] sm:$0xff]
      %v187 = vld [vmem:[%s169 + $0x50] sm:$0xff]
      %v188 = vld [vmem:[%s169 + $0x58] sm:$0xff]
      %v189 = vld [vmem:[%s169 + $0x60] sm:$0xff]
      %v190 = vld [vmem:[%s169 + $0x68] sm:$0xff]
      %v191 = vld [vmem:[%s169 + $0x70] sm:$0xff]
      %v192 = vld [vmem:[%s169 + $0x78] sm:$0xff]
      %v193 = vld [vmem:[%s169 + $0x80] sm:$0xff]
      %v194 = vld [vmem:[%s169 + $0x88] sm:$0xff]
      %v195 = vld [vmem:[%s169 + $0x90] sm:$0xff]
      %v196 = vld [vmem:[%s169 + $0x98] sm:$0xff]
      %v197 = vld [vmem:[%s169 + $0xa0] sm:$0xff]
      %v198 = vld [vmem:[%s169 + $0xa8] sm:$0xff]
      %v199 = vld [vmem:[%s169 + $0xb0] sm:$0xff]
      %v200 = vld [vmem:[%s169 + $0xb8] sm:$0xff]
      %v201 = vld [vmem:[%s169 + $0xc0] sm:$0xff]
      %v202 = vld [vmem:[%s169 + $0xc8] sm:$0xff]
      %v203 = vld [vmem:[%s169 + $0xd0] sm:$0xff]
      %v204 = vld [vmem:[%s169 + $0xd8] sm:$0xff]
      %v205 = vld [vmem:[%s169 + $0xe0] sm:$0xff]
      %v206 = vld [vmem:[%s169 + $0xe8] sm:$0xff]
      %v207 = vld [vmem:[%s169 + $0xf0] sm:$0xff]
      %v208 = vld [vmem:[%s169 + $0xf8] sm:$0xff]
      %v209 = vld [vmem:[%s169 + $0x100] sm:$0xff]
      %v210 = vld [vmem:[%s169 + $0x108] sm:$0xff]
      %v211 = vld [vmem:[%s169 + $0x110] sm:$0xff]
      %v212 = vld [vmem:[%s169 + $0x118] sm:$0xff]
      %v213 = vld [vmem:[%s169 + $0x120] sm:$0xff]
      %v214 = vld [vmem:[%s169 + $0x128] sm:$0xff]
      %v215 = vld [vmem:[%s169 + $0x130] sm:$0xff]
      %v216 = vld [vmem:[%s169 + $0x138] sm:$0xff]
      %v217 = vld [vmem:[%s169 + $0x140] sm:$0xff]
      %v218 = vld [vmem:[%s169 + $0x148] sm:$0xff]
      %v219 = vld [vmem:[%s169 + $0x150] sm:$0xff]
      %v220 = vld [vmem:[%s169 + $0x158] sm:$0xff]
      %v221 = vld [vmem:[%s169 + $0x160] sm:$0xff]
      %v222 = vld [vmem:[%s169 + $0x168] sm:$0xff]
      %v223 = vld [vmem:[%s169 + $0x170] sm:$0xff]
      %v224 = vld [vmem:[%s169 + $0x178] sm:$0xff]
      %v225 = vld [vmem:[%s169 + $0x180] sm:$0xff]
      %v226 = vld [vmem:[%s169 + $0x188] sm:$0xff]
      %v227 = vld [vmem:[%s169 + $0x190] sm:$0xff]
      %v228 = vld [vmem:[%s169 + $0x198] sm:$0xff]
      %v229 = vld [vmem:[%s169 + $0x1a0] sm:$0xff]
      %v230 = vld [vmem:[%s169 + $0x1a8] sm:$0xff]
      %v231 = vld [vmem:[%s169 + $0x1b0] sm:$0xff]
      %v232 = vld [vmem:[%s169 + $0x1b8] sm:$0xff]
      %v233 = vld [vmem:[%s169 + $0x1c0] sm:$0xff]
      %v234 = vld [vmem:[%s169 + $0x1c8] sm:$0xff]
      %v235 = vld [vmem:[%s1] sm:$0xff]
      %v236 = vld [vmem:[%s1 + $0x8] sm:$0xff]
      %v237 = vld [vmem:[%s1 + $0x10] sm:$0xff]
      %v238 = vld [vmem:[%s1 + $0x18] sm:$0xff]
      %v239 = vld [vmem:[%s1 + $0x20] sm:$0xff]
      %v240 = vld [vmem:[%s1 + $0x28] sm:$0xff]
      %v241 = vld [vmem:[%s1 + $0x30] sm:$0xff]
      %v242 = vld [vmem:[%s1 + $0x38] sm:$0xff]
      %v243 = vld [vmem:[%s1 + $0x40] sm:$0xff]
      %v244 = vld [vmem:[%s1 + $0x48] sm:$0xff]
      %v245 = vld [vmem:[%s1 + $0x50] sm:$0xff]
      %v246 = vld [vmem:[%s1 + $0x58] sm:$0xff]
      %v247 = vld [vmem:[%s1 + $0x60] sm:$0xff]
      %v248 = vld [vmem:[%s1 + $0x68] sm:$0xff]
      %v249 = vld [vmem:[%s1 + $0x70] sm:$0xff]
      %v250 = vld [vmem:[%s1 + $0x78] sm:$0xff]
      %v251 = vld [vmem:[%s1 + $0x80] sm:$0xff]
      %v252 = vld [vmem:[%s1 + $0x88] sm:$0xff]
      %v253 = vld [vmem:[%s1 + $0x90] sm:$0xff]
      %v254 = vld [vmem:[%s1 + $0x98] sm:$0xff]
      %v255 = vld [vmem:[%s1 + $0xa0] sm:$0xff]
      %v256 = vld [vmem:[%s1 + $0xa8] sm:$0xff]
      %v257 = vld [vmem:[%s1 + $0xb0] sm:$0xff]
      %v258 = vld [vmem:[%s1 + $0xb8] sm:$0xff]
      %v259 = vld [vmem:[%s2] sm:$0x1]
      %v261 = vlaneseq
      %v262 = vshrl.u32 %v261, 7
      %v263 = vsub.s32 0, %v262
      %v264 = vrot.slane %v259, %v263
      %vm266 = vcmask 523264
      %v268 = vsel %vm266, %v178, 0
      %v271 = vsel %vm266, %v180, 0
      %v274 = vsel %vm266, %v182, 0
      %v277 = vsel %vm266, %v184, 0
      %v280 = vsel %vm266, %v186, 0
      %v283 = vsel %vm266, %v188, 0
      %v286 = vsel %vm266, %v190, 0
      %v289 = vsel %vm266, %v192, 0
      %v292 = vsel %vm266, %v194, 0
      %v295 = vsel %vm266, %v196, 0
      %v298 = vsel %vm266, %v198, 0
      %v301 = vsel %vm266, %v200, 0
      %v304 = vsel %vm266, %v202, 0
      %v307 = vsel %vm266, %v204, 0
      %v310 = vsel %vm266, %v206, 0
      %v313 = vsel %vm266, %v208, 0
      %v316 = vsel %vm266, %v210, 0
      %v319 = vsel %vm266, %v212, 0
      %v322 = vsel %vm266, %v214, 0
      %v325 = vsel %vm266, %v216, 0
      %v328 = vsel %vm266, %v218, 0
      %v331 = vsel %vm266, %v220, 0
      %v334 = vsel %vm266, %v222, 0
      %v337 = vsel %vm266, %v224, 0
      %v340 = vsel %vm266, %v226, 0
      %v343 = vsel %vm266, %v228, 0
      %v346 = vsel %vm266, %v230, 0
      %v349 = vsel %vm266, %v232, 0
      %v352 = vsel %vm266, %v234, 0
      %354 = vmatprep.subr.mxu0 0.0
      %355 = vmatpush1.msra.mxu0 %v235
      %356 = vmatprep.subr.mxu0 0.0
      %357 = vmatpush1.msra.mxu0 %v236
      %358 = vmatprep.subr.mxu0 0.0
      %359 = vmatpush1.msra.mxu0 %v237
      %360 = vmatprep.subr.mxu0 0.0
      %361 = vmatpush1.msra.mxu0 %v238
      %362 = vmatprep.subr.mxu0 0.0
      %363 = vmatpush1.msra.mxu0 %v239
      %364 = vmatprep.subr.mxu0 0.0
      %365 = vmatpush1.msra.mxu0 %v240
      %366 = vmatprep.subr.mxu0 0.0
      %367 = vmatpush1.msra.mxu0 %v241
      %368 = vmatprep.subr.mxu0 0.0
      %369 = vmatpush1.msra.mxu0 %v242
      %370 = vmatprep.subr.mxu0 0.0
      %371 = vmatpush1.msra.mxu0 %v243
      %372 = vmatprep.subr.mxu0 0.0
      %373 = vmatpush1.msra.mxu0 %v244
      %374 = vmatprep.subr.mxu0 0.0
      %375 = vmatpush1.msra.mxu0 %v245
      %376 = vmatprep.subr.mxu0 0.0
      %377 = vmatpush1.msra.mxu0 %v246
      %378 = vmatprep.subr.mxu0 0.0
      %379 = vmatpush1.msra.mxu0 %v247
      %380 = vmatprep.subr.mxu0 0.0
      %381 = vmatpush1.msra.mxu0 %v248
      %382 = vmatprep.subr.mxu0 0.0
      %383 = vmatpush1.msra.mxu0 %v249
      %384 = vmatprep.subr.mxu0 0.0
      %385 = vmatpush1.msra.mxu0 %v250
      %386 = vmatprep.subr.mxu0 0.0
      %387 = vmatpush1.msra.mxu0 %v251
      %388 = vmatprep.subr.mxu0 0.0
      %389 = vmatpush1.msra.mxu0 %v252
      %390 = vmatprep.subr.mxu0 0.0
      %391 = vmatpush1.msra.mxu0 %v253
      %392 = vmatprep.subr.mxu0 0.0
      %393 = vmatpush1.msra.mxu0 %v254
      %394 = vmatprep.subr.mxu0 0.0
      %395 = vmatpush1.msra.mxu0 %v255
      %396 = vmatprep.subr.mxu0 0.0
      %397 = vmatpush1.msra.mxu0 %v256
      %398 = vmatprep.subr.mxu0 0.0
      %399 = vmatpush1.msra.mxu0 %v257
      %400 = vmatprep.subr.mxu0 0.0
      %401 = vmatpush1.msra.mxu0 %v258
      %402 = vmatprep.subr.mxu0 0.0
      %403 = vmatpush1.msra.mxu0 0.0
      %404 = vmatprep.subr.mxu0 0.0
      %405 = vmatpush1.msra.mxu0 0.0
      %406 = vmatprep.subr.mxu0 0.0
      %407 = vmatpush1.msra.mxu0 0.0
      %408 = vmatprep.subr.mxu0 0.0
      %409 = vmatpush1.msra.mxu0 0.0
      %410 = vmatprep.subr.mxu0 0.0
      %411 = vmatpush1.msra.mxu0 0.0
      %412 = vmatprep.subr.mxu0 0.0
      %413 = vmatpush1.msra.mxu0 0.0
      %414 = vmatprep.subr.mxu0 0.0
      %415 = vmatpush1.msra.mxu0 0.0
      %416 = vmatprep.subr.mxu0 0.0
      %417 = vmatpush1.msra.mxu0 0.0
      %418 = vmatprep.mubr.f32.mxu0 %v268
      %419 = vmatmul.mubr.f32.gmra.mrb[0].mxu0 %v177
      %v420 = vpop.f32.mrb[0].mxu0
      %v421 = vadd.f32 %v264, %v420
      %v422 = vpop.f32.mrb[0].mxu0
      %423 = vmatprep.mubr.f32.mxu0 %v271
      %424 = vmatmul.mubr.f32.gmra.mrb[0].mxu0 %v179
      %v425 = vpop.f32.mrb[0].mxu0
      %v426 = vadd.f32 %v264, %v425
      %v427 = vpop.f32.mrb[0].mxu0
      %428 = vmatprep.mubr.f32.mxu0 %v274
      %429 = vmatmul.mubr.f32.gmra.mrb[0].mxu0 %v181
      %v430 = vpop.f32.mrb[0].mxu0
      %v431 = vadd.f32 %v264, %v430
      %v432 = vpop.f32.mrb[0].mxu0
      %433 = vmatprep.mubr.f32.mxu0 %v277
      %434 = vmatmul.mubr.f32.gmra.mrb[0].mxu0 %v183
      %v435 = vpop.f32.mrb[0].mxu0
      %v436 = vadd.f32 %v264, %v435
      %v437 = vpop.f32.mrb[0].mxu0
      %438 = vmatprep.mubr.f32.mxu0 %v280
      %439 = vmatmul.mubr.f32.gmra.mrb[0].mxu0 %v185
      %v440 = vpop.f32.mrb[0].mxu0
      %v441 = vadd.f32 %v264, %v440
      %v442 = vpop.f32.mrb[0].mxu0
      %443 = vmatprep.mubr.f32.mxu0 %v283
      %444 = vmatmul.mubr.f32.gmra.mrb[0].mxu0 %v187
      %v445 = vpop.f32.mrb[0].mxu0
      %v446 = vadd.f32 %v264, %v445
      %v447 = vpop.f32.mrb[0].mxu0
      %448 = vmatprep.mubr.f32.mxu0 %v286
      %449 = vmatmul.mubr.f32.gmra.mrb[0].mxu0 %v189
      %v450 = vpop.f32.mrb[0].mxu0
      %v451 = vadd.f32 %v264, %v450
      %v452 = vpop.f32.mrb[0].mxu0
      %453 = vmatprep.mubr.f32.mxu0 %v289
      %454 = vmatmul.mubr.f32.gmra.mrb[0].mxu0 %v191
      %v455 = vpop.f32.mrb[0].mxu0
      %v456 = vadd.f32 %v264, %v455
      %v457 = vpop.f32.mrb[0].mxu0
      %458 = vmatprep.mubr.f32.mxu0 %v292
      %459 = vmatmul.mubr.f32.gmra.mrb[0].mxu0 %v193
      %v460 = vpop.f32.mrb[0].mxu0
      %v461 = vadd.f32 %v264, %v460
      %v462 = vpop.f32.mrb[0].mxu0
      %463 = vmatprep.mubr.f32.mxu0 %v295
      %464 = vmatmul.mubr.f32.gmra.mrb[0].mxu0 %v195
      %v465 = vpop.f32.mrb[0].mxu0
      %v466 = vadd.f32 %v264, %v465
      %v467 = vpop.f32.mrb[0].mxu0
      %468 = vmatprep.mubr.f32.mxu0 %v298
      %469 = vmatmul.mubr.f32.gmra.mrb[0].mxu0 %v197
      %v470 = vpop.f32.mrb[0].mxu0
      %v471 = vadd.f32 %v264, %v470
      %v472 = vpop.f32.mrb[0].mxu0
      %473 = vmatprep.mubr.f32.mxu0 %v301
      %474 = vmatmul.mubr.f32.gmra.mrb[0].mxu0 %v199
      %v475 = vpop.f32.mrb[0].mxu0
      %v476 = vadd.f32 %v264, %v475
      %v477 = vpop.f32.mrb[0].mxu0
      %478 = vmatprep.mubr.f32.mxu0 %v304
      %479 = vmatmul.mubr.f32.gmra.mrb[0].mxu0 %v201
      %v480 = vpop.f32.mrb[0].mxu0
      %v481 = vadd.f32 %v264, %v480
      %v482 = vpop.f32.mrb[0].mxu0
      %483 = vmatprep.mubr.f32.mxu0 %v307
      %484 = vmatmul.mubr.f32.gmra.mrb[0].mxu0 %v203
      %v485 = vpop.f32.mrb[0].mxu0
      %v486 = vadd.f32 %v264, %v485
      %v487 = vpop.f32.mrb[0].mxu0
      %488 = vmatprep.mubr.f32.mxu0 %v310
      %489 = vmatmul.mubr.f32.gmra.mrb[0].mxu0 %v205
      %v490 = vpop.f32.mrb[0].mxu0
      %v491 = vadd.f32 %v264, %v490
      %v492 = vpop.f32.mrb[0].mxu0
      %493 = vmatprep.mubr.f32.mxu0 %v313
      %494 = vmatmul.mubr.f32.gmra.mrb[0].mxu0 %v207
      %v495 = vpop.f32.mrb[0].mxu0
      %v496 = vadd.f32 %v264, %v495
      %v497 = vpop.f32.mrb[0].mxu0
      %498 = vmatprep.mubr.f32.mxu0 %v316
      %499 = vmatmul.mubr.f32.gmra.mrb[0].mxu0 %v209
      %v500 = vpop.f32.mrb[0].mxu0
      %v501 = vadd.f32 %v264, %v500
      %v502 = vpop.f32.mrb[0].mxu0
      %503 = vmatprep.mubr.f32.mxu0 %v319
      %504 = vmatmul.mubr.f32.gmra.mrb[0].mxu0 %v211
      %v505 = vpop.f32.mrb[0].mxu0
      %v506 = vadd.f32 %v264, %v505
      %v507 = vpop.f32.mrb[0].mxu0
      %508 = vmatprep.mubr.f32.mxu0 %v322
      %509 = vmatmul.mubr.f32.gmra.mrb[0].mxu0 %v213
      %v510 = vpop.f32.mrb[0].mxu0
      %v511 = vadd.f32 %v264, %v510
      %v512 = vpop.f32.mrb[0].mxu0
      %513 = vmatprep.mubr.f32.mxu0 %v325
      %514 = vmatmul.mubr.f32.gmra.mrb[0].mxu0 %v215
      %v515 = vpop.f32.mrb[0].mxu0
      %v516 = vadd.f32 %v264, %v515
      %v517 = vpop.f32.mrb[0].mxu0
      %518 = vmatprep.mubr.f32.mxu0 %v328
      %519 = vmatmul.mubr.f32.gmra.mrb[0].mxu0 %v217
      %v520 = vpop.f32.mrb[0].mxu0
      %v521 = vadd.f32 %v264, %v520
      %v522 = vpop.f32.mrb[0].mxu0
      %523 = vmatprep.mubr.f32.mxu0 %v331
      %524 = vmatmul.mubr.f32.gmra.mrb[0].mxu0 %v219
      %v525 = vpop.f32.mrb[0].mxu0
      %v526 = vadd.f32 %v264, %v525
      %v527 = vpop.f32.mrb[0].mxu0
      %528 = vmatprep.mubr.f32.mxu0 %v334
      %529 = vmatmul.mubr.f32.gmra.mrb[0].mxu0 %v221
      %v530 = vpop.f32.mrb[0].mxu0
      %v531 = vadd.f32 %v264, %v530
      %v532 = vpop.f32.mrb[0].mxu0
      %533 = vmatprep.mubr.f32.mxu0 %v337
      %534 = vmatmul.mubr.f32.gmra.mrb[0].mxu0 %v223
      %v535 = vpop.f32.mrb[0].mxu0
      %v536 = vadd.f32 %v264, %v535
      %v537 = vpop.f32.mrb[0].mxu0
      %538 = vmatprep.mubr.f32.mxu0 %v340
      %539 = vmatmul.mubr.f32.gmra.mrb[0].mxu0 %v225
      %v540 = vpop.f32.mrb[0].mxu0
      %v541 = vadd.f32 %v264, %v540
      %v542 = vpop.f32.mrb[0].mxu0
      %543 = vmatprep.mubr.f32.mxu0 %v343
      %544 = vmatmul.mubr.f32.gmra.mrb[0].mxu0 %v227
      %v545 = vpop.f32.mrb[0].mxu0
      %v546 = vadd.f32 %v264, %v545
      %v547 = vpop.f32.mrb[0].mxu0
      %548 = vmatprep.mubr.f32.mxu0 %v346
      %549 = vmatmul.mubr.f32.gmra.mrb[0].mxu0 %v229
      %v550 = vpop.f32.mrb[0].mxu0
      %v551 = vadd.f32 %v264, %v550
      %v552 = vpop.f32.mrb[0].mxu0
      %553 = vmatprep.mubr.f32.mxu0 %v349
      %554 = vmatmul.mubr.f32.gmra.mrb[0].mxu0 %v231
      %v555 = vpop.f32.mrb[0].mxu0
      %v556 = vadd.f32 %v264, %v555
      %v557 = vpop.f32.mrb[0].mxu0
      %558 = vmatprep.mubr.f32.mxu0 %v352
      %559 = vmatmul.mubr.f32.gmra.mrb[0].mxu0 %v233
      %v560 = vpop.f32.mrb[0].mxu0
      %v561 = vadd.f32 %v264, %v560
      %v562 = vpop.f32.mrb[0].mxu0
      %563 = vdwg.mxu0
      %v564 = vmax.f32 %v421, 0.0
      %v565 = vmax.f32 %v426, 0.0
      %v566 = vmax.f32 %v431, 0.0
      %v567 = vmax.f32 %v436, 0.0
      %v568 = vmax.f32 %v441, 0.0
      %v569 = vmax.f32 %v446, 0.0
      %v570 = vmax.f32 %v451, 0.0
      %v571 = vmax.f32 %v456, 0.0
      %v572 = vmax.f32 %v461, 0.0
      %v573 = vmax.f32 %v466, 0.0
      %v574 = vmax.f32 %v471, 0.0
      %v575 = vmax.f32 %v476, 0.0
      %v576 = vmax.f32 %v481, 0.0
      %v577 = vmax.f32 %v486, 0.0
      %v578 = vmax.f32 %v491, 0.0
      %v579 = vmax.f32 %v496, 0.0
      %v580 = vmax.f32 %v501, 0.0
      %v581 = vmax.f32 %v506, 0.0
      %v582 = vmax.f32 %v511, 0.0
      %v583 = vmax.f32 %v516, 0.0
      %v584 = vmax.f32 %v521, 0.0
      %v585 = vmax.f32 %v526, 0.0
      %v586 = vmax.f32 %v531, 0.0
      %v587 = vmax.f32 %v536, 0.0
      %v588 = vmax.f32 %v541, 0.0
      %v589 = vmax.f32 %v546, 0.0
      %v590 = vmax.f32 %v551, 0.0
      %v591 = vmax.f32 %v556, 0.0
      %v592 = vmax.f32 %v561, 0.0
      %593 = vst [vmem:[%s175] sm:$0xff] %v564
      %594 = vst [vmem:[%s175 + $0x8] sm:$0xff] %v565
      %595 = vst [vmem:[%s175 + $0x10] sm:$0xff] %v566
      %596 = vst [vmem:[%s175 + $0x18] sm:$0xff] %v567
      %597 = vst [vmem:[%s175 + $0x20] sm:$0xff] %v568
      %598 = vst [vmem:[%s175 + $0x28] sm:$0xff] %v569
      %599 = vst [vmem:[%s175 + $0x30] sm:$0xff] %v570
      %600 = vst [vmem:[%s175 + $0x38] sm:$0xff] %v571
      %601 = vst [vmem:[%s175 + $0x40] sm:$0xff] %v572
      %602 = vst [vmem:[%s175 + $0x48] sm:$0xff] %v573
      %603 = vst [vmem:[%s175 + $0x50] sm:$0xff] %v574
      %604 = vst [vmem:[%s175 + $0x58] sm:$0xff] %v575
      %605 = vst [vmem:[%s175 + $0x60] sm:$0xff] %v576
      %606 = vst [vmem:[%s175 + $0x68] sm:$0xff] %v577
      %607 = vst [vmem:[%s175 + $0x70] sm:$0xff] %v578
      %608 = vst [vmem:[%s175 + $0x78] sm:$0xff] %v579
      %609 = vst [vmem:[%s175 + $0x80] sm:$0xff] %v580
      %610 = vst [vmem:[%s175 + $0x88] sm:$0xff] %v581
      %611 = vst [vmem:[%s175 + $0x90] sm:$0xff] %v582
      %612 = vst [vmem:[%s175 + $0x98] sm:$0xff] %v583
      %613 = vst [vmem:[%s175 + $0xa0] sm:$0xff] %v584
      %614 = vst [vmem:[%s175 + $0xa8] sm:$0xff] %v585
      %615 = vst [vmem:[%s175 + $0xb0] sm:$0xff] %v586
      %616 = vst [vmem:[%s175 + $0xb8] sm:$0xff] %v587
      %617 = vst [vmem:[%s175 + $0xc0] sm:$0xff] %v588
      %618 = vst [vmem:[%s175 + $0xc8] sm:$0xff] %v589
      %619 = vst [vmem:[%s175 + $0xd0] sm:$0xff] %v590
      %620 = vst [vmem:[%s175 + $0xd8] sm:$0xff] %v591
      %621 = vst [vmem:[%s175 + $0xe0] sm:$0xff] %v592
      %s622 = smul.u32 29, %s14
      %p623 = scmp.lt.s32.totalorder %s622, 57
      %s624 = scalar_select %p623, %s622, 57
      %s625 = smul.addr %s624, 8
      %s626 = scalar_lea.vmem %s3, %s625
      // Predicated region
      $region33: #{forward.9} parent=31 // pred_check
        %p627 = pneg %p100
      $region34: #{forward.9} parent=31 // pred_check_branch
        %629 = sbr.rel (%p627) target = $region36
      $region35: #{forward.9} parent=31 // pred_region
        %s630 = smul.u32 29, %s14
      $region36: #{forward.9} parent=31 // pred_fallthru
        _
    $region32: #{forward.9} parent=5 // pred_fallthru
      _
    %p631 = scmp.le.s32.totalorder 2, %s9
    // Predicated region
    $region37: #{forward.9} parent=5 // pred_check
      %p632 = pneg %p631
    $region38: #{forward.9} parent=5 // pred_check_branch
      %634 = sbr.rel (%p632) target = $region40
    $region39: #{forward.9} parent=5 // pred_region
      %s635 = ssub.s32 %s9, 2
      // Predicated region
      $region41: #{forward.9} parent=39 // pred_check
        %p636 = pneg %p106
      $region42: #{forward.9} parent=39 // pred_check_branch
        %638 = sbr.rel (%p636) target = $region44
      $region43: #{forward.9} parent=39 // pred_region
        %s639 = smul.u32 29, %s15
        %p640 = scmp.lt.s32.totalorder %s639, 57
        %s641 = scalar_select %p640, %s639, 57
        %s642 = smul.addr %s641, 8
        %s643 = scalar_lea.vmem %s3, %s642
      $region44: #{forward.9} parent=39 // pred_fallthru
        _
    $region40: #{forward.9} parent=5 // pred_fallthru
      _
  $region6: #{forward.9} parent=0 // loop_footer
    %s13 = sadd.s32 1, %s9
  $region7: #{forward.9} parent=0 // loop_footer_branch
    %8 = sbr.rel target = $region3
  $region8: #{forward.9} parent=0 // loop_exit
    _

// kernel: forward.10
$region0: #{forward.10}
  #allocation0 [shape = 'u32[]', space=smem, size = 0x4, offset = 0x4, fixed_abs, tag = 'smem constant byte address 0x4 - core index']
  #allocation1 [shape = 'u32[144,128]{1,0:T(1,128)}', space=vmem, size = 0x12000, scoped, tag = 'internal scratch']
  %s0 = inlined_call_operand.vmem [shape: f32[32,1152], index: 0, kind: input, shape index: {}]
  %s1 = inlined_call_operand.vmem [shape: f32[1152,128], index: 1, kind: input, shape index: {}]
  %s2 = inlined_call_operand.vmem [shape: f32[1,128], index: 2, kind: input, shape index: {}]
  %s3 = inlined_call_operand.vmem [shape: f32[32,128], index: 3, kind: output, shape index: {}]
  %s4 = sld [smem:[#allocation0]]
  $region22: #{forward.10} parent=0
    _
  %s6 = ssub.s32 1, %s4
  %s7 = scalar_select 0, %s6, %s4
  // Predicated region
  $region2: #{forward.10} parent=0 // pred_check
    _
  $region3: #{forward.10} parent=0 // pred_check_branch
    %9 = sbr.rel (0) target = $region5
  $region4: #{forward.10} parent=0 // pred_region
    _
  $region5: #{forward.10} parent=0 // pred_fallthru
    _
  // Predicated region
  $region6: #{forward.10} parent=0 // pred_check
    _
  $region7: #{forward.10} parent=0 // pred_check_branch
    %11 = sbr.rel (0) target = $region9
  $region8: #{forward.10} parent=0 // pred_region
    _
  $region9: #{forward.10} parent=0 // pred_fallthru
    _
  // Predicated region
  $region10: #{forward.10} parent=0 // pred_check
    _
  $region11: #{forward.10} parent=0 // pred_check_branch
    %13 = sbr.rel (0) target = $region13
  $region12: #{forward.10} parent=0 // pred_region
    _
  $region13: #{forward.10} parent=0 // pred_fallthru
    _
  %v14 = vld [vmem:[%s0] sm:$0xff]
  %v15 = vld [vmem:[%s0 + $0x8] sm:$0xff]
  %v16 = vld [vmem:[%s0 + $0x10] sm:$0xff]
  %v17 = vld [vmem:[%s0 + $0x18] sm:$0xff]
  %v18 = vld [vmem:[%s0 + $0x20] sm:$0xff]
  %v19 = vld [vmem:[%s0 + $0x28] sm:$0xff]
  %v20 = vld [vmem:[%s0 + $0x30] sm:$0xff]
  %v21 = vld [vmem:[%s0 + $0x38] sm:$0xff]
  %v22 = vld [vmem:[%s0 + $0x40] sm:$0xff]
  %v23 = vld [vmem:[%s0 + $0x48] sm:$0xff]
  %v24 = vld [vmem:[%s0 + $0x50] sm:$0xff]
  %v25 = vld [vmem:[%s0 + $0x58] sm:$0xff]
  %v26 = vld [vmem:[%s0 + $0x60] sm:$0xff]
  %v27 = vld [vmem:[%s0 + $0x68] sm:$0xff]
  %v28 = vld [vmem:[%s0 + $0x70] sm:$0xff]
  %v29 = vld [vmem:[%s0 + $0x78] sm:$0xff]
  %v30 = vld [vmem:[%s0 + $0x80] sm:$0xff]
  %v31 = vld [vmem:[%s0 + $0x88] sm:$0xff]
  %v32 = vld [vmem:[%s0 + $0x90] sm:$0xff]
  %v33 = vld [vmem:[%s0 + $0x98] sm:$0xff]
  %v34 = vld [vmem:[%s0 + $0xa0] sm:$0xff]
  %v35 = vld [vmem:[%s0 + $0xa8] sm:$0xff]
  %v36 = vld [vmem:[%s0 + $0xb0] sm:$0xff]
  %v37 = vld [vmem:[%s0 + $0xb8] sm:$0xff]
  %v38 = vld [vmem:[%s0 + $0xc0] sm:$0xff]
  %v39 = vld [vmem:[%s0 + $0xc8] sm:$0xff]
  %v40 = vld [vmem:[%s0 + $0xd0] sm:$0xff]
  %v41 = vld [vmem:[%s0 + $0xd8] sm:$0xff]
  %v42 = vld [vmem:[%s0 + $0xe0] sm:$0xff]
  %v43 = vld [vmem:[%s0 + $0xe8] sm:$0xff]
  %v44 = vld [vmem:[%s0 + $0xf0] sm:$0xff]
  %v45 = vld [vmem:[%s0 + $0xf8] sm:$0xff]
  %v46 = vld [vmem:[%s0 + $0x100] sm:$0xff]
  %v47 = vld [vmem:[%s0 + $0x108] sm:$0xff]
  %v48 = vld [vmem:[%s0 + $0x110] sm:$0xff]
  %v49 = vld [vmem:[%s0 + $0x118] sm:$0xff]
  %v50 = vld [vmem:[%s1] sm:$0xff]
  %v51 = vld [vmem:[%s1 + $0x8] sm:$0xff]
  %v52 = vld [vmem:[%s1 + $0x10] sm:$0xff]
  %v53 = vld [vmem:[%s1 + $0x18] sm:$0xff]
  %v54 = vld [vmem:[%s1 + $0x20] sm:$0xff]
  %v55 = vld [vmem:[%s1 + $0x28] sm:$0xff]
  %v56 = vld [vmem:[%s1 + $0x30] sm:$0xff]
  %v57 = vld [vmem:[%s1 + $0x38] sm:$0xff]
  %v58 = vld [vmem:[%s1 + $0x40] sm:$0xff]
  %v59 = vld [vmem:[%s1 + $0x48] sm:$0xff]
  %v60 = vld [vmem:[%s1 + $0x50] sm:$0xff]
  %v61 = vld [vmem:[%s1 + $0x58] sm:$0xff]
  %v62 = vld [vmem:[%s1 + $0x60] sm:$0xff]
  %v63 = vld [vmem:[%s1 + $0x68] sm:$0xff]
  %v64 = vld [vmem:[%s1 + $0x70] sm:$0xff]
  %v65 = vld [vmem:[%s1 + $0x78] sm:$0xff]
  %v66 = vld [vmem:[%s1 + $0x80] sm:$0xff]
  %v67 = vld [vmem:[%s1 + $0x88] sm:$0xff]
  %v68 = vld [vmem:[%s1 + $0x90] sm:$0xff]
  %v69 = vld [vmem:[%s1 + $0x98] sm:$0xff]
  %v70 = vld [vmem:[%s1 + $0xa0] sm:$0xff]
  %v71 = vld [vmem:[%s1 + $0xa8] sm:$0xff]
  %v72 = vld [vmem:[%s1 + $0xb0] sm:$0xff]
  %v73 = vld [vmem:[%s1 + $0xb8] sm:$0xff]
  %v74 = vld [vmem:[%s1 + $0xc0] sm:$0xff]
  %v75 = vld [vmem:[%s1 + $0xc8] sm:$0xff]
  %v76 = vld [vmem:[%s1 + $0xd0] sm:$0xff]
  %v77 = vld [vmem:[%s1 + $0xd8] sm:$0xff]
  %v78 = vld [vmem:[%s1 + $0xe0] sm:$0xff]
  %v79 = vld [vmem:[%s1 + $0xe8] sm:$0xff]
  %v80 = vld [vmem:[%s1 + $0xf0] sm:$0xff]
  %v81 = vld [vmem:[%s1 + $0xf8] sm:$0xff]
  %v82 = vld [vmem:[%s1 + $0x100] sm:$0xff]
  %v83 = vld [vmem:[%s1 + $0x108] sm:$0xff]
  %v84 = vld [vmem:[%s1 + $0x110] sm:$0xff]
  %v85 = vld [vmem:[%s1 + $0x118] sm:$0xff]
  %v86 = vld [vmem:[%s1 + $0x120] sm:$0xff]
  %v87 = vld [vmem:[%s1 + $0x128] sm:$0xff]
  %v88 = vld [vmem:[%s1 + $0x130] sm:$0xff]
  %v89 = vld [vmem:[%s1 + $0x138] sm:$0xff]
  %v90 = vld [vmem:[%s1 + $0x140] sm:$0xff]
  %v91 = vld [vmem:[%s1 + $0x148] sm:$0xff]
  %v92 = vld [vmem:[%s1 + $0x150] sm:$0xff]
  %v93 = vld [vmem:[%s1 + $0x158] sm:$0xff]
  %v94 = vld [vmem:[%s1 + $0x160] sm:$0xff]
  %v95 = vld [vmem:[%s1 + $0x168] sm:$0xff]
  %v96 = vld [vmem:[%s1 + $0x170] sm:$0xff]
  %v97 = vld [vmem:[%s1 + $0x178] sm:$0xff]
  %v98 = vld [vmem:[%s1 + $0x180] sm:$0xff]
  %v99 = vld [vmem:[%s1 + $0x188] sm:$0xff]
  %v100 = vld [vmem:[%s1 + $0x190] sm:$0xff]
  %v101 = vld [vmem:[%s1 + $0x198] sm:$0xff]
  %v102 = vld [vmem:[%s1 + $0x1a0] sm:$0xff]
  %v103 = vld [vmem:[%s1 + $0x1a8] sm:$0xff]
  %v104 = vld [vmem:[%s1 + $0x1b0] sm:$0xff]
  %v105 = vld [vmem:[%s1 + $0x1b8] sm:$0xff]
  %v106 = vld [vmem:[%s1 + $0x1c0] sm:$0xff]
  %v107 = vld [vmem:[%s1 + $0x1c8] sm:$0xff]
  %v108 = vld [vmem:[%s1 + $0x1d0] sm:$0xff]
  %v109 = vld [vmem:[%s1 + $0x1d8] sm:$0xff]
  %v110 = vld [vmem:[%s1 + $0x1e0] sm:$0xff]
  %v111 = vld [vmem:[%s1 + $0x1e8] sm:$0xff]
  %v112 = vld [vmem:[%s1 + $0x1f0] sm:$0xff]
  %v113 = vld [vmem:[%s1 + $0x1f8] sm:$0xff]
  %v114 = vld [vmem:[%s1 + $0x200] sm:$0xff]
  %v115 = vld [vmem:[%s1 + $0x208] sm:$0xff]
  %v116 = vld [vmem:[%s1 + $0x210] sm:$0xff]
  %v117 = vld [vmem:[%s1 + $0x218] sm:$0xff]
  %v118 = vld [vmem:[%s1 + $0x220] sm:$0xff]
  %v119 = vld [vmem:[%s1 + $0x228] sm:$0xff]
  %v120 = vld [vmem:[%s1 + $0x230] sm:$0xff]
  %v121 = vld [vmem:[%s1 + $0x238] sm:$0xff]
  %v122 = vld [vmem:[%s1 + $0x240] sm:$0xff]
  %v123 = vld [vmem:[%s1 + $0x248] sm:$0xff]
  %v124 = vld [vmem:[%s1 + $0x250] sm:$0xff]
  %v125 = vld [vmem:[%s1 + $0x258] sm:$0xff]
  %v126 = vld [vmem:[%s1 + $0x260] sm:$0xff]
  %v127 = vld [vmem:[%s1 + $0x268] sm:$0xff]
  %v128 = vld [vmem:[%s1 + $0x270] sm:$0xff]
  %v129 = vld [vmem:[%s1 + $0x278] sm:$0xff]
  %v130 = vld [vmem:[%s1 + $0x280] sm:$0xff]
  %v131 = vld [vmem:[%s1 + $0x288] sm:$0xff]
  %v132 = vld [vmem:[%s1 + $0x290] sm:$0xff]
  %v133 = vld [vmem:[%s1 + $0x298] sm:$0xff]
  %v134 = vld [vmem:[%s1 + $0x2a0] sm:$0xff]
  %v135 = vld [vmem:[%s1 + $0x2a8] sm:$0xff]
  %v136 = vld [vmem:[%s1 + $0x2b0] sm:$0xff]
  %v137 = vld [vmem:[%s1 + $0x2b8] sm:$0xff]
  %v138 = vld [vmem:[%s1 + $0x2c0] sm:$0xff]
  %v139 = vld [vmem:[%s1 + $0x2c8] sm:$0xff]
  %v140 = vld [vmem:[%s1 + $0x2d0] sm:$0xff]
  %v141 = vld [vmem:[%s1 + $0x2d8] sm:$0xff]
  %v142 = vld [vmem:[%s1 + $0x2e0] sm:$0xff]
  %v143 = vld [vmem:[%s1 + $0x2e8] sm:$0xff]
  %v144 = vld [vmem:[%s1 + $0x2f0] sm:$0xff]
  %v145 = vld [vmem:[%s1 + $0x2f8] sm:$0xff]
  %v146 = vld [vmem:[%s1 + $0x300] sm:$0xff]
  %v147 = vld [vmem:[%s1 + $0x308] sm:$0xff]
  %v148 = vld [vmem:[%s1 + $0x310] sm:$0xff]
  %v149 = vld [vmem:[%s1 + $0x318] sm:$0xff]
  %v150 = vld [vmem:[%s1 + $0x320] sm:$0xff]
  %v151 = vld [vmem:[%s1 + $0x328] sm:$0xff]
  %v152 = vld [vmem:[%s1 + $0x330] sm:$0xff]
  %v153 = vld [vmem:[%s1 + $0x338] sm:$0xff]
  %v154 = vld [vmem:[%s1 + $0x340] sm:$0xff]
  %v155 = vld [vmem:[%s1 + $0x348] sm:$0xff]
  %v156 = vld [vmem:[%s1 + $0x350] sm:$0xff]
  %v157 = vld [vmem:[%s1 + $0x358] sm:$0xff]
  %v158 = vld [vmem:[%s1 + $0x360] sm:$0xff]
  %v159 = vld [vmem:[%s1 + $0x368] sm:$0xff]
  %v160 = vld [vmem:[%s1 + $0x370] sm:$0xff]
  %v161 = vld [vmem:[%s1 + $0x378] sm:$0xff]
  %v162 = vld [vmem:[%s1 + $0x380] sm:$0xff]
  %v163 = vld [vmem:[%s1 + $0x388] sm:$0xff]
  %v164 = vld [vmem:[%s1 + $0x390] sm:$0xff]
  %v165 = vld [vmem:[%s1 + $0x398] sm:$0xff]
  %v166 = vld [vmem:[%s1 + $0x3a0] sm:$0xff]
  %v167 = vld [vmem:[%s1 + $0x3a8] sm:$0xff]
  %v168 = vld [vmem:[%s1 + $0x3b0] sm:$0xff]
  %v169 = vld [vmem:[%s1 + $0x3b8] sm:$0xff]
  %v170 = vld [vmem:[%s1 + $0x3c0] sm:$0xff]
  %v171 = vld [vmem:[%s1 + $0x3c8] sm:$0xff]
  %v172 = vld [vmem:[%s1 + $0x3d0] sm:$0xff]
  %v173 = vld [vmem:[%s1 + $0x3d8] sm:$0xff]
  %v174 = vld [vmem:[%s1 + $0x3e0] sm:$0xff]
  %v175 = vld [vmem:[%s1 + $0x3e8] sm:$0xff]
  %v176 = vld [vmem:[%s1 + $0x3f0] sm:$0xff]
  %v177 = vld [vmem:[%s1 + $0x3f8] sm:$0xff]
  %v178 = vld [vmem:[%s1 + $0x400] sm:$0xff]
  %v179 = vld [vmem:[%s1 + $0x408] sm:$0xff]
  %v180 = vld [vmem:[%s1 + $0x410] sm:$0xff]
  %v181 = vld [vmem:[%s1 + $0x418] sm:$0xff]
  %v182 = vld [vmem:[%s1 + $0x420] sm:$0xff]
  %v183 = vld [vmem:[%s1 + $0x428] sm:$0xff]
  %v184 = vld [vmem:[%s1 + $0x430] sm:$0xff]
  %v185 = vld [vmem:[%s1 + $0x438] sm:$0xff]
  %v186 = vld [vmem:[%s1 + $0x440] sm:$0xff]
  %v187 = vld [vmem:[%s1 + $0x448] sm:$0xff]
  %v188 = vld [vmem:[%s1 + $0x450] sm:$0xff]
  %v189 = vld [vmem:[%s1 + $0x458] sm:$0xff]
  %v190 = vld [vmem:[%s1 + $0x460] sm:$0xff]
  %v191 = vld [vmem:[%s1 + $0x468] sm:$0xff]
  %v192 = vld [vmem:[%s1 + $0x470] sm:$0xff]
  %v193 = vld [vmem:[%s1 + $0x478] sm:$0xff]
  %v194 = vld [vmem:[%s2] sm:$0x1]
  %v196 = vlaneseq
  %v197 = vshrl.u32 %v196, 7
  %v198 = vsub.s32 0, %v197
  %v199 = vrot.slane %v194, %v198
  %201 = vmatprep.subr.mxu0 0.0
  %202 = vmatpush1.msra.mxu0 %v50
  %203 = vmatprep.subr.mxu0 0.0
  %204 = vmatpush1.msra.mxu0 %v51
  %205 = vmatprep.subr.mxu0 0.0
  %206 = vmatpush1.msra.mxu0 %v52
  %207 = vmatprep.subr.mxu0 0.0
  %208 = vmatpush1.msra.mxu0 %v53
  %209 = vmatprep.subr.mxu0 0.0
  %210 = vmatpush1.msra.mxu0 %v54
  %211 = vmatprep.subr.mxu0 0.0
  %212 = vmatpush1.msra.mxu0 %v55
  %213 = vmatprep.subr.mxu0 0.0
  %214 = vmatpush1.msra.mxu0 %v56
  %215 = vmatprep.subr.mxu0 0.0
  %216 = vmatpush1.msra.mxu0 %v57
  %217 = vmatprep.subr.mxu0 0.0
  %218 = vmatpush1.msra.mxu0 %v58
  %219 = vmatprep.subr.mxu0 0.0
  %220 = vmatpush1.msra.mxu0 %v59
  %221 = vmatprep.subr.mxu0 0.0
  %222 = vmatpush1.msra.mxu0 %v60
  %223 = vmatprep.subr.mxu0 0.0
  %224 = vmatpush1.msra.mxu0 %v61
  %225 = vmatprep.subr.mxu0 0.0
  %226 = vmatpush1.msra.mxu0 %v62
  %227 = vmatprep.subr.mxu0 0.0
  %228 = vmatpush1.msra.mxu0 %v63
  %229 = vmatprep.subr.mxu0 0.0
  %230 = vmatpush1.msra.mxu0 %v64
  %231 = vmatprep.subr.mxu0 0.0
  %232 = vmatpush1.msra.mxu0 %v65
  %233 = vmatprep.subr.mxu0 0.0
  %234 = vmatpush1.msra.mxu0 %v66
  %235 = vmatprep.subr.mxu0 0.0
  %236 = vmatpush1.msra.mxu0 %v67
  %237 = vmatprep.subr.mxu0 0.0
  %238 = vmatpush1.msra.mxu0 %v68
  %239 = vmatprep.subr.mxu0 0.0
  %240 = vmatpush1.msra.mxu0 %v69
  %241 = vmatprep.subr.mxu0 0.0
  %242 = vmatpush1.msra.mxu0 %v70
  %243 = vmatprep.subr.mxu0 0.0
  %244 = vmatpush1.msra.mxu0 %v71
  %245 = vmatprep.subr.mxu0 0.0
  %246 = vmatpush1.msra.mxu0 %v72
  %247 = vmatprep.subr.mxu0 0.0
  %248 = vmatpush1.msra.mxu0 %v73
  %249 = vmatprep.subr.mxu0 0.0
  %250 = vmatpush1.msra.mxu0 %v74
  %251 = vmatprep.subr.mxu0 0.0
  %252 = vmatpush1.msra.mxu0 %v75
  %253 = vmatprep.subr.mxu0 0.0
  %254 = vmatpush1.msra.mxu0 %v76
  %255 = vmatprep.subr.mxu0 0.0
  %256 = vmatpush1.msra.mxu0 %v77
  %257 = vmatprep.subr.mxu0 0.0
  %258 = vmatpush1.msra.mxu0 %v78
  %259 = vmatprep.subr.mxu0 0.0
  %260 = vmatpush1.msra.mxu0 %v79
  %261 = vmatprep.subr.mxu0 0.0
  %262 = vmatpush1.msra.mxu0 %v80
  %263 = vmatprep.subr.mxu0 0.0
  %264 = vmatpush1.msra.mxu0 %v81
  %265 = vmatprep.mubr.f32.mxu0 %v15
  %266 = vmatmul.mubr.f32.gmra.mrb[0].mxu0 %v14
  %v267 = vpop.f32.mrb[0].mxu0
  %v268 = vadd.f32 %v199, %v267
  %v269 = vpop.f32.mrb[0].mxu0
  %270 = vmatprep.mubr.f32.mxu0 %v24
  %271 = vmatmul.mubr.f32.gmra.mrb[0].mxu0 %v23
  %v272 = vpop.f32.mrb[0].mxu0
  %v273 = vadd.f32 %v199, %v272
  %v274 = vpop.f32.mrb[0].mxu0
  %275 = vmatprep.mubr.f32.mxu0 %v33
  %276 = vmatmul.mubr.f32.gmra.mrb[0].mxu0 %v32
  %v277 = vpop.f32.mrb[0].mxu0
  %v278 = vadd.f32 %v199, %v277
  %v279 = vpop.f32.mrb[0].mxu0
  %280 = vmatprep.mubr.f32.mxu0 %v42
  %281 = vmatmul.mubr.f32.gmra.mrb[0].mxu0 %v41
  %v282 = vpop.f32.mrb[0].mxu0
  %v283 = vadd.f32 %v199, %v282
  %v284 = vpop.f32.mrb[0].mxu0
  %285 = vdwg.mxu0
  %286 = vmatprep.subr.mxu0 0.0
  %287 = vmatpush1.msra.mxu0 %v82
  %288 = vmatprep.subr.mxu0 0.0
  %289 = vmatpush1.msra.mxu0 %v83
  %290 = vmatprep.subr.mxu0 0.0
  %291 = vmatpush1.msra.mxu0 %v84
  %292 = vmatprep.subr.mxu0 0.0
  %293 = vmatpush1.msra.mxu0 %v85
  %294 = vmatprep.subr.mxu0 0.0
  %295 = vmatpush1.msra.mxu0 %v86
  %296 = vmatprep.subr.mxu0 0.0
  %297 = vmatpush1.msra.mxu0 %v87
  %298 = vmatprep.subr.mxu0 0.0
  %299 = vmatpush1.msra.mxu0 %v88
  %300 = vmatprep.subr.mxu0 0.0
  %301 = vmatpush1.msra.mxu0 %v89
  %302 = vmatprep.subr.mxu0 0.0
  %303 = vmatpush1.msra.mxu0 %v90
  %304 = vmatprep.subr.mxu0 0.0
  %305 = vmatpush1.msra.mxu0 %v91
  %306 = vmatprep.subr.mxu0 0.0
  %307 = vmatpush1.msra.mxu0 %v92
  %308 = vmatprep.subr.mxu0 0.0
  %309 = vmatpush1.msra.mxu0 %v93
  %310 = vmatprep.subr.mxu0 0.0
  %311 = vmatpush1.msra.mxu0 %v94
  %312 = vmatprep.subr.mxu0 0.0
  %313 = vmatpush1.msra.mxu0 %v95
  %314 = vmatprep.subr.mxu0 0.0
  %315 = vmatpush1.msra.mxu0 %v96
  %316 = vmatprep.subr.mxu0 0.0
  %317 = vmatpush1.msra.mxu0 %v97
  %318 = vmatprep.subr.mxu0 0.0
  %319 = vmatpush1.msra.mxu0 %v98
  %320 = vmatprep.subr.mxu0 0.0
  %321 = vmatpush1.msra.mxu0 %v99
  %322 = vmatprep.subr.mxu0 0.0
  %323 = vmatpush1.msra.mxu0 %v100
  %324 = vmatprep.subr.mxu0 0.0
  %325 = vmatpush1.msra.mxu0 %v101
  %326 = vmatprep.subr.mxu0 0.0
  %327 = vmatpush1.msra.mxu0 %v102
  %328 = vmatprep.subr.mxu0 0.0
  %329 = vmatpush1.msra.mxu0 %v103
  %330 = vmatprep.subr.mxu0 0.0
  %331 = vmatpush1.msra.mxu0 %v104
  %332 = vmatprep.subr.mxu0 0.0
  %333 = vmatpush1.msra.mxu0 %v105
  %334 = vmatprep.subr.mxu0 0.0
  %335 = vmatpush1.msra.mxu0 %v106
  %336 = vmatprep.subr.mxu0 0.0
  %337 = vmatpush1.msra.mxu0 %v107
  %338 = vmatprep.subr.mxu0 0.0
  %339 = vmatpush1.msra.mxu0 %v108
  %340 = vmatprep.subr.mxu0 0.0
  %341 = vmatpush1.msra.mxu0 %v109
  %342 = vmatprep.subr.mxu0 0.0
  %343 = vmatpush1.msra.mxu0 %v110
  %344 = vmatprep.subr.mxu0 0.0
  %345 = vmatpush1.msra.mxu0 %v111
  %346 = vmatprep.subr.mxu0 0.0
  %347 = vmatpush1.msra.mxu0 %v112
  %348 = vmatprep.subr.mxu0 0.0
  %349 = vmatpush1.msra.mxu0 %v113
  %350 = vmatprep.mubr.f32.mxu0 %v17
  %351 = vmatmul.mubr.f32.gmra.mrb[0].mxu0 %v16
  %v352 = vpop.f32.mrb[0].mxu0
  %v353 = vadd.f32 %v268, %v352
  %v354 = vpop.f32.mrb[0].mxu0
  %355 = vmatprep.mubr.f32.mxu0 %v26
  %356 = vmatmul.mubr.f32.gmra.mrb[0].mxu0 %v25
  %v357 = vpop.f32.mrb[0].mxu0
  %v358 = vadd.f32 %v273, %v357
  %v359 = vpop.f32.mrb[0].mxu0
  %360 = vmatprep.mubr.f32.mxu0 %v35
  %361 = vmatmul.mubr.f32.gmra.mrb[0].mxu0 %v34
  %v362 = vpop.f32.mrb[0].mxu0
  %v363 = vadd.f32 %v278, %v362
  %v364 = vpop.f32.mrb[0].mxu0
  %365 = vmatprep.mubr.f32.mxu0 %v44
  %366 = vmatmul.mubr.f32.gmra.mrb[0].mxu0 %v43
  %v367 = vpop.f32.mrb[0].mxu0
  %v368 = vadd.f32 %v283, %v367
  %v369 = vpop.f32.mrb[0].mxu0
  %370 = vdwg.mxu0
  %371 = vmatprep.subr.mxu0 0.0
  %372 = vmatpush1.msra.mxu0 %v114
  %373 = vmatprep.subr.mxu0 0.0
  %374 = vmatpush1.msra.mxu0 %v115
  %375 = vmatprep.subr.mxu0 0.0
  %376 = vmatpush1.msra.mxu0 %v116
  %377 = vmatprep.subr.mxu0 0.0
  %378 = vmatpush1.msra.mxu0 %v117
  %379 = vmatprep.subr.mxu0 0.0
  %380 = vmatpush1.msra.mxu0 %v118
  %381 = vmatprep.subr.mxu0 0.0
  %382 = vmatpush1.msra.mxu0 %v119
  %383 = vmatprep.subr.mxu0 0.0
  %384 = vmatpush1.msra.mxu0 %v120
  %385 = vmatprep.subr.mxu0 0.0
  %386 = vmatpush1.msra.mxu0 %v121
  %387 = vmatprep.subr.mxu0 0.0
  %388 = vmatpush1.msra.mxu0 %v122
  %389 = vmatprep.subr.mxu0 0.0
  %390 = vmatpush1.msra.mxu0 %v123
  %391 = vmatprep.subr.mxu0 0.0
  %392 = vmatpush1.msra.mxu0 %v124
  %393 = vmatprep.subr.mxu0 0.0
  %394 = vmatpush1.msra.mxu0 %v125
  %395 = vmatprep.subr.mxu0 0.0
  %396 = vmatpush1.msra.mxu0 %v126
  %397 = vmatprep.subr.mxu0 0.0
  %398 = vmatpush1.msra.mxu0 %v127
  %399 = vmatprep.subr.mxu0 0.0
  %400 = vmatpush1.msra.mxu0 %v128
  %401 = vmatprep.subr.mxu0 0.0
  %402 = vmatpush1.msra.mxu0 %v129
  %403 = vmatprep.subr.mxu0 0.0
  %404 = vmatpush1.msra.mxu0 %v130
  %405 = vmatprep.subr.mxu0 0.0
  %406 = vmatpush1.msra.mxu0 %v131
  %407 = vmatprep.subr.mxu0 0.0
  %408 = vmatpush1.msra.mxu0 %v132
  %409 = vmatprep.subr.mxu0 0.0
  %410 = vmatpush1.msra.mxu0 %v133
  %411 = vmatprep.subr.mxu0 0.0
  %412 = vmatpush1.msra.mxu0 %v134
  %413 = vmatprep.subr.mxu0 0.0
  %414 = vmatpush1.msra.mxu0 %v135
  %415 = vmatprep.subr.mxu0 0.0
  %416 = vmatpush1.msra.mxu0 %v136
  %417 = vmatprep.subr.mxu0 0.0
  %418 = vmatpush1.msra.mxu0 %v137
  %419 = vmatprep.subr.mxu0 0.0
  %420 = vmatpush1.msra.mxu0 %v138
  %421 = vmatprep.subr.mxu0 0.0
  %422 = vmatpush1.msra.mxu0 %v139
  %423 = vmatprep.subr.mxu0 0.0
  %424 = vmatpush1.msra.mxu0 %v140
  %425 = vmatprep.subr.mxu0 0.0
  %426 = vmatpush1.msra.mxu0 %v141
  %427 = vmatprep.subr.mxu0 0.0
  %428 = vmatpush1.msra.mxu0 %v142
  %429 = vmatprep.subr.mxu0 0.0
  %430 = vmatpush1.msra.mxu0 %v143
  %431 = vmatprep.subr.mxu0 0.0
  %432 = vmatpush1.msra.mxu0 %v144
  %433 = vmatprep.subr.mxu0 0.0
  %434 = vmatpush1.msra.mxu0 %v145
  %435 = vmatprep.mubr.f32.mxu0 %v19
  %436 = vmatmul.mubr.f32.gmra.mrb[0].mxu0 %v18
  %v437 = vpop.f32.mrb[0].mxu0
  %v438 = vadd.f32 %v353, %v437
  %v439 = vpop.f32.mrb[0].mxu0
  %440 = vmatprep.mubr.f32.mxu0 %v28
  %441 = vmatmul.mubr.f32.gmra.mrb[0].mxu0 %v27
  %v442 = vpop.f32.mrb[0].mxu0
  %v443 = vadd.f32 %v358, %v442
  %v444 = vpop.f32.mrb[0].mxu0
  %445 = vmatprep.mubr.f32.mxu0 %v37
  %446 = vmatmul.mubr.f32.gmra.mrb[0].mxu0 %v36
  %v447 = vpop.f32.mrb[0].mxu0
  %v448 = vadd.f32 %v363, %v447
  %v449 = vpop.f32.mrb[0].mxu0
  %450 = vmatprep.mubr.f32.mxu0 %v46
  %451 = vmatmul.mubr.f32.gmra.mrb[0].mxu0 %v45
  %v452 = vpop.f32.mrb[0].mxu0
  %v453 = vadd.f32 %v368, %v452
  %v454 = vpop.f32.mrb[0].mxu0
  %455 = vdwg.mxu0
  %456 = vmatprep.subr.mxu0 0.0
  %457 = vmatpush1.msra.mxu0 %v146
  %458 = vmatprep.subr.mxu0 0.0
  %459 = vmatpush1.msra.mxu0 %v147
  %460 = vmatprep.subr.mxu0 0.0
  %461 = vmatpush1.msra.mxu0 %v148
  %462 = vmatprep.subr.mxu0 0.0
  %463 = vmatpush1.msra.mxu0 %v149
  %464 = vmatprep.subr.mxu0 0.0
  %465 = vmatpush1.msra.mxu0 %v150
  %466 = vmatprep.subr.mxu0 0.0
  %467 = vmatpush1.msra.mxu0 %v151
  %468 = vmatprep.subr.mxu0 0.0
  %469 = vmatpush1.msra.mxu0 %v152
  %470 = vmatprep.subr.mxu0 0.0
  %471 = vmatpush1.msra.mxu0 %v153
  %472 = vmatprep.subr.mxu0 0.0
  %473 = vmatpush1.msra.mxu0 %v154
  %474 = vmatprep.subr.mxu0 0.0
  %475 = vmatpush1.msra.mxu0 %v155
  %476 = vmatprep.subr.mxu0 0.0
  %477 = vmatpush1.msra.mxu0 %v156
  %478 = vmatprep.subr.mxu0 0.0
  %479 = vmatpush1.msra.mxu0 %v157
  %480 = vmatprep.subr.mxu0 0.0
  %481 = vmatpush1.msra.mxu0 %v158
  %482 = vmatprep.subr.mxu0 0.0
  %483 = vmatpush1.msra.mxu0 %v159
  %484 = vmatprep.subr.mxu0 0.0
  %485 = vmatpush1.msra.mxu0 %v160
  %486 = vmatprep.subr.mxu0 0.0
  %487 = vmatpush1.msra.mxu0 %v161
  %488 = vmatprep.subr.mxu0 0.0
  %489 = vmatpush1.msra.mxu0 %v162
  %490 = vmatprep.subr.mxu0 0.0
  %491 = vmatpush1.msra.mxu0 %v163
  %492 = vmatprep.subr.mxu0 0.0
  %493 = vmatpush1.msra.mxu0 %v164
  %494 = vmatprep.subr.mxu0 0.0
  %495 = vmatpush1.msra.mxu0 %v165
  %496 = vmatprep.subr.mxu0 0.0
  %497 = vmatpush1.msra.mxu0 %v166
  %498 = vmatprep.subr.mxu0 0.0
  %499 = vmatpush1.msra.mxu0 %v167
  %500 = vmatprep.subr.mxu0 0.0
  %501 = vmatpush1.msra.mxu0 %v168
  %502 = vmatprep.subr.mxu0 0.0
  %503 = vmatpush1.msra.mxu0 %v169
  %504 = vmatprep.subr.mxu0 0.0
  %505 = vmatpush1.msra.mxu0 %v170
  %506 = vmatprep.subr.mxu0 0.0
  %507 = vmatpush1.msra.mxu0 %v171
  %508 = vmatprep.subr.mxu0 0.0
  %509 = vmatpush1.msra.mxu0 %v172
  %510 = vmatprep.subr.mxu0 0.0
  %511 = vmatpush1.msra.mxu0 %v173
  %512 = vmatprep.subr.mxu0 0.0
  %513 = vmatpush1.msra.mxu0 %v174
  %514 = vmatprep.subr.mxu0 0.0
  %515 = vmatpush1.msra.mxu0 %v175
  %516 = vmatprep.subr.mxu0 0.0
  %517 = vmatpush1.msra.mxu0 %v176
  %518 = vmatprep.subr.mxu0 0.0
  %519 = vmatpush1.msra.mxu0 %v177
  %520 = vmatprep.mubr.f32.mxu0 %v21
  %521 = vmatmul.mubr.f32.gmra.mrb[0].mxu0 %v20
  %v522 = vpop.f32.mrb[0].mxu0
  %v523 = vadd.f32 %v438, %v522
  %v524 = vpop.f32.mrb[0].mxu0
  %525 = vmatprep.mubr.f32.mxu0 %v30
  %526 = vmatmul.mubr.f32.gmra.mrb[0].mxu0 %v29
  %v527 = vpop.f32.mrb[0].mxu0
  %v528 = vadd.f32 %v443, %v527
  %v529 = vpop.f32.mrb[0].mxu0
  %530 = vmatprep.mubr.f32.mxu0 %v39
  %531 = vmatmul.mubr.f32.gmra.mrb[0].mxu0 %v38
  %v532 = vpop.f32.mrb[0].mxu0
  %v533 = vadd.f32 %v448, %v532
  %v534 = vpop.f32.mrb[0].mxu0
  %535 = vmatprep.mubr.f32.mxu0 %v48
  %536 = vmatmul.mubr.f32.gmra.mrb[0].mxu0 %v47
  %v537 = vpop.f32.mrb[0].mxu0
  %v538 = vadd.f32 %v453, %v537
  %v539 = vpop.f32.mrb[0].mxu0
  %540 = vdwg.mxu0
  %541 = vmatprep.subr.mxu0 0.0
  %542 = vmatpush1.msra.mxu0 %v178
  %543 = vmatprep.subr.mxu0 0.0
  %544 = vmatpush1.msra.mxu0 %v179
  %545 = vmatprep.subr.mxu0 0.0
  %546 = vmatpush1.msra.mxu0 %v180
  %547 = vmatprep.subr.mxu0 0.0
  %548 = vmatpush1.msra.mxu0 %v181
  %549 = vmatprep.subr.mxu0 0.0
  %550 = vmatpush1.msra.mxu0 %v182
  %551 = vmatprep.subr.mxu0 0.0
  %552 = vmatpush1.msra.mxu0 %v183
  %553 = vmatprep.subr.mxu0 0.0
  %554 = vmatpush1.msra.mxu0 %v184
  %555 = vmatprep.subr.mxu0 0.0
  %556 = vmatpush1.msra.mxu0 %v185
  %557 = vmatprep.subr.mxu0 0.0
  %558 = vmatpush1.msra.mxu0 %v186
  %559 = vmatprep.subr.mxu0 0.0
  %560 = vmatpush1.msra.mxu0 %v187
  %561 = vmatprep.subr.mxu0 0.0
  %562 = vmatpush1.msra.mxu0 %v188
  %563 = vmatprep.subr.mxu0 0.0
  %564 = vmatpush1.msra.mxu0 %v189
  %565 = vmatprep.subr.mxu0 0.0
  %566 = vmatpush1.msra.mxu0 %v190
  %567 = vmatprep.subr.mxu0 0.0
  %568 = vmatpush1.msra.mxu0 %v191
  %569 = vmatprep.subr.mxu0 0.0
  %570 = vmatpush1.msra.mxu0 %v192
  %571 = vmatprep.subr.mxu0 0.0
  %572 = vmatpush1.msra.mxu0 %v193
  %573 = vmatprep.subr.mxu0 0.0
  %574 = vmatpush1.msra.mxu0 0.0
  %575 = vmatprep.subr.mxu0 0.0
  %576 = vmatpush1.msra.mxu0 0.0
  %577 = vmatprep.subr.mxu0 0.0
  %578 = vmatpush1.msra.mxu0 0.0
  %579 = vmatprep.subr.mxu0 0.0
  %580 = vmatpush1.msra.mxu0 0.0
  %581 = vmatprep.subr.mxu0 0.0
  %582 = vmatpush1.msra.mxu0 0.0
  %583 = vmatprep.subr.mxu0 0.0
  %584 = vmatpush1.msra.mxu0 0.0
  %585 = vmatprep.subr.mxu0 0.0
  %586 = vmatpush1.msra.mxu0 0.0
  %587 = vmatprep.subr.mxu0 0.0
  %588 = vmatpush1.msra.mxu0 0.0
  %589 = vmatprep.subr.mxu0 0.0
  %590 = vmatpush1.msra.mxu0 0.0
  %591 = vmatprep.subr.mxu0 0.0
  %592 = vmatpush1.msra.mxu0 0.0
  %593 = vmatprep.subr.mxu0 0.0
  %594 = vmatpush1.msra.mxu0 0.0
  %595 = vmatprep.subr.mxu0 0.0
  %596 = vmatpush1.msra.mxu0 0.0
  %597 = vmatprep.subr.mxu0 0.0
  %598 = vmatpush1.msra.mxu0 0.0
  %599 = vmatprep.subr.mxu0 0.0
  %600 = vmatpush1.msra.mxu0 0.0
  %601 = vmatprep.subr.mxu0 0.0
  %602 = vmatpush1.msra.mxu0 0.0
  %603 = vmatprep.subr.mxu0 0.0
  %604 = vmatpush1.msra.mxu0 0.0
  %605 = vmatprep.mubr.f32.mxu0 0.0
  %606 = vmatmul.mubr.f32.gmra.mrb[0].mxu0 %v22
  %v607 = vpop.f32.mrb[0].mxu0
  %v608 = vadd.f32 %v523, %v607
  %v609 = vpop.f32.mrb[0].mxu0
  %610 = vmatprep.mubr.f32.mxu0 0.0
  %611 = vmatmul.mubr.f32.gmra.mrb[0].mxu0 %v31
  %v612 = vpop.f32.mrb[0].mxu0
  %v613 = vadd.f32 %v528, %v612
  %v614 = vpop.f32.mrb[0].mxu0
  %615 = vmatprep.mubr.f32.mxu0 0.0
  %616 = vmatmul.mubr.f32.gmra.mrb[0].mxu0 %v40
  %v617 = vpop.f32.mrb[0].mxu0
  %v618 = vadd.f32 %v533, %v617
  %v619 = vpop.f32.mrb[0].mxu0
  %620 = vmatprep.mubr.f32.mxu0 0.0
  %621 = vmatmul.mubr.f32.gmra.mrb[0].mxu0 %v49
  %v622 = vpop.f32.mrb[0].mxu0
  %v623 = vadd.f32 %v538, %v622
  %v624 = vpop.f32.mrb[0].mxu0
  %625 = vdwg.mxu0
  %v626 = vmax.f32 %v608, 0.0
  %v627 = vmax.f32 %v613, 0.0
  %v628 = vmax.f32 %v618, 0.0
  %v629 = vmax.f32 %v623, 0.0
  %630 = vst [vmem:[%s3] sm:$0xff] %v626
  %631 = vst [vmem:[%s3 + $0x8] sm:$0xff] %v627
  %632 = vst [vmem:[%s3 + $0x10] sm:$0xff] %v628
  %633 = vst [vmem:[%s3 + $0x18] sm:$0xff] %v629
  // Predicated region
  $region14: #{forward.10} parent=0 // pred_check
    _
  $region15: #{forward.10} parent=0 // pred_check_branch
    %635 = sbr.rel (0) target = $region17
  $region16: #{forward.10} parent=0 // pred_region
    _
  $region17: #{forward.10} parent=0 // pred_fallthru
    _
  // Predicated region
  $region18: #{forward.10} parent=0 // pred_check
    _
  $region19: #{forward.10} parent=0 // pred_check_branch
    %637 = sbr.rel (0) target = $region21
  $region20: #{forward.10} parent=0 // pred_region
    _
  $region21: #{forward.10} parent=0 // pred_fallthru
    _

// kernel: forward.11
$region0: #{forward.11}
  #allocation0 [shape = 'u32[]', space=smem, size = 0x4, offset = 0x4, fixed_abs, tag = 'smem constant byte address 0x4 - core index']
  #allocation1 [shape = 'u32[144,128]{1,0:T(1,128)}', space=vmem, size = 0x12000, scoped, tag = 'internal scratch']
  %s0 = inlined_call_operand.vmem [shape: f32[464,384], index: 0, kind: input, shape index: {}]
  %s1 = inlined_call_operand.vmem [shape: f32[384,128], index: 1, kind: input, shape index: {}]
  %s2 = inlined_call_operand.vmem [shape: f32[1,128], index: 2, kind: input, shape index: {}]
  %s3 = inlined_call_operand.vmem [shape: f32[464,128], index: 3, kind: output, shape index: {}]
  %s4 = sld [smem:[#allocation0]]
  $region45: #{forward.11} parent=0
    _
  %s6 = ssub.s32 1, %s4
  %s7 = scalar_select 0, %s6, %s4
  loop: start=0, step=1, limit=4
  $region2: #{forward.11} parent=0 // loop_pre_header
    _
  $region3: #{forward.11} parent=0 // loop_header
    %s9 = sphi 0, %s13
    %p10 = scmp.ge.s32.totalorder %s9, 4
    %s19 = sphi 0, %s21
    %s22 = sphi 0, %s19
    %s23 = sphi 0, %s22
    %s39 = sphi 0, %s23
    %s43 = sphi 0, %s43
    %s45 = sphi 0, %s43
    %s46 = sphi 0, %s45
    %s60 = sphi 0, %s46
    %s64 = sphi 0, %s64
    %s66 = sphi 0, %s64
    %s67 = sphi 0, %s66
    %s81 = sphi 0, %s67
    %s87 = sphi 0, %s89
    %s90 = sphi 0, %s87
    %s91 = sphi 0, %s90
    %s107 = sphi 0, %s91
  $region4: #{forward.11} parent=0 // loop_header_branch
    %12 = sbr.rel (%p10) target = $region8
  $region5: #{forward.11} parent=0 // loop_body
    %s14 = ssub.s32 %s9, 1
    %s15 = ssub.s32 %s9, 2
    %s16 = sadd.s32 %s9, 1
    %s17 = ssub.s32 %s9, %s16
    %p18 = scmp.eq.s32.totalorder %s17, 0
    %s20 = sadd.s32 %s19, 1
    %s21 = scalar_select %p18, %s19, %s20
    %p24 = pneg %p18
    %p25 = scmp.eq.s32.totalorder %s9, 1
    %p26 = por %p24, %p25
    %p27 = scmp.ne.s32.totalorder %s19, %s22
    %p28 = scmp.eq.s32.totalorder %s9, 0
    %p29 = por %p27, %p28
    %p30 = scmp.ne.s32.totalorder %s19, %s22
    %p31 = scmp.eq.s32.totalorder %s14, 1
    %p32 = por %p30, %p31
    %p33 = scmp.ne.s32.totalorder %s22, %s23
    %p34 = scmp.eq.s32.totalorder %s14, 0
    %p35 = por %p33, %p34
    %p36 = scmp.ne.s32.totalorder %s22, %s23
    %p37 = scmp.eq.s32.totalorder %s15, 1
    %p38 = por %p36, %p37
    %p40 = scmp.ne.s32.totalorder %s23, %s39
    %p41 = scmp.eq.s32.totalorder %s15, 0
    %p42 = por %p40, %p41
    %s44 = sadd.s32 %s43, 1
    %p47 = scmp.eq.s32.totalorder %s9, 1
    %p48 = scmp.ne.s32.totalorder %s43, %s45
    %p49 = scmp.eq.s32.totalorder %s9, 0
    %p50 = por %p48, %p49
    %p51 = scmp.ne.s32.totalorder %s43, %s45
    %p52 = scmp.eq.s32.totalorder %s14, 1
    %p53 = por %p51, %p52
    %p54 = scmp.ne.s32.totalorder %s45, %s46
    %p55 = scmp.eq.s32.totalorder %s14, 0
    %p56 = por %p54, %p55
    %p57 = scmp.ne.s32.totalorder %s45, %s46
    %p58 = scmp.eq.s32.totalorder %s15, 1
    %p59 = por %p57, %p58
    %p61 = scmp.ne.s32.totalorder %s46, %s60
    %p62 = scmp.eq.s32.totalorder %s15, 0
    %p63 = por %p61, %p62
    %s65 = sadd.s32 %s64, 1
    %p68 = scmp.eq.s32.totalorder %s9, 1
    %p69 = scmp.ne.s32.totalorder %s64, %s66
    %p70 = scmp.eq.s32.totalorder %s9, 0
    %p71 = por %p69, %p70
    %p72 = scmp.ne.s32.totalorder %s64, %s66
    %p73 = scmp.eq.s32.totalorder %s14, 1
    %p74 = por %p72, %p73
    %p75 = scmp.ne.s32.totalorder %s66, %s67
    %p76 = scmp.eq.s32.totalorder %s14, 0
    %p77 = por %p75, %p76
    %p78 = scmp.ne.s32.totalorder %s66, %s67
    %p79 = scmp.eq.s32.totalorder %s15, 1
    %p80 = por %p78, %p79
    %p82 = scmp.ne.s32.totalorder %s67, %s81
    %p83 = scmp.eq.s32.totalorder %s15, 0
    %p84 = por %p82, %p83
    %s85 = ssub.s32 %s9, %s16
    %p86 = scmp.eq.s32.totalorder %s85, 0
    %s88 = sadd.s32 %s87, 1
    %s89 = scalar_select %p86, %s87, %s88
    %p92 = pneg %p86
    %p93 = scmp.eq.s32.totalorder %s9, 1
    %p94 = por %p92, %p93
    %p95 = scmp.ne.s32.totalorder %s87, %s90
    %p96 = scmp.eq.s32.totalorder %s9, 0
    %p97 = por %p95, %p96
    %p98 = scmp.ne.s32.totalorder %s87, %s90
    %p99 = scmp.eq.s32.totalorder %s14, 1
    %p100 = por %p98, %p99
    %p101 = scmp.ne.s32.totalorder %s90, %s91
    %p102 = scmp.eq.s32.totalorder %s14, 0
    %p103 = por %p101, %p102
    %p104 = scmp.ne.s32.totalorder %s90, %s91
    %p105 = scmp.eq.s32.totalorder %s15, 1
    %p106 = por %p104, %p105
    %p108 = scmp.ne.s32.totalorder %s91, %s107
    %p109 = scmp.eq.s32.totalorder %s15, 0
    %p110 = por %p108, %p109
    %p111 = scmp.le.s32.totalorder 1, %s9
    %p112 = scmp.lt.s32.totalorder %s9, 3
    %p113 = pnand %p111, %p112
    %p114 = pneg %p113
    // Predicated region
    $region9: #{forward.11} parent=5 // pred_check
      _
    $region10: #{forward.11} parent=5 // pred_check_branch
      %116 = sbr.rel (%p113) target = $region12
    $region11: #{forward.11} parent=5 // pred_region
      %s117 = ssub.s32 %s9, 1
      // Predicated region
      $region13: #{forward.11} parent=11 // pred_check
        %p118 = pneg %p56
      $region14: #{forward.11} parent=11 // pred_check_branch
        %120 = sbr.rel (%p118) target = $region16
      $region15: #{forward.11} parent=11 // pred_region
        _
      $region16: #{forward.11} parent=11 // pred_fallthru
        _
      // Predicated region
      $region17: #{forward.11} parent=11 // pred_check
        %p121 = pneg %p77
      $region18: #{forward.11} parent=11 // pred_check_branch
        %123 = sbr.rel (%p121) target = $region20
      $region19: #{forward.11} parent=11 // pred_region
        _
      $region20: #{forward.11} parent=11 // pred_fallthru
        _
    $region12: #{forward.11} parent=5 // pred_fallthru
      _
    %p124 = scmp.lt.s32.totalorder %s9, 2
    // Predicated region
    $region21: #{forward.11} parent=5 // pred_check
      %p125 = pneg %p124
    $region22: #{forward.11} parent=5 // pred_check_branch
      %127 = sbr.rel (%p125) target = $region24
    $region23: #{forward.11} parent=5 // pred_region
      // Predicated region
      $region25: #{forward.11} parent=23 // pred_check
        %p128 = pneg %p29
      $region26: #{forward.11} parent=23 // pred_check_branch
        %130 = sbr.rel (%p128) target = $region28
      $region27: #{forward.11} parent=23 // pred_region
        %s131 = smul.u32 29, %s9
        %p132 = scmp.lt.s32.totalorder %s131, 57
        %s133 = scalar_select %p132, %s131, 57
        %s134 = smul.addr %s133, 3
        %s135 = smul.addr %s134, 8
        %s136 = scalar_lea.vmem %s0, %s135
        %s137 = smul.u32 29, %s9
      $region28: #{forward.11} parent=23 // pred_fallthru
        _
    $region24: #{forward.11} parent=5 // pred_fallthru
      _
    %p138 = scmp.le.s32.totalorder 1, %s9
    %p139 = scmp.lt.s32.totalorder %s9, 3
    %p140 = pnand %p138, %p139
    %p141 = pneg %p140
    // Predicated region
    $region29: #{forward.11} parent=5 // pred_check
      _
    $region30: #{forward.11} parent=5 // pred_check_branch
      %143 = sbr.rel (%p140) target = $region32
    $region31: #{forward.11} parent=5 // pred_region
      %s144 = ssub.s32 %s9, 1
      %s145 = smul.u32 29, %s14
      %p146 = scmp.lt.s32.totalorder %s145, 57
      %s147 = scalar_select %p146, %s145, 57
      %s148 = smul.addr %s147, 3
      %s149 = smul.addr %s148, 8
      %s150 = scalar_lea.vmem %s0, %s149
      %p151 = pneg %p35
      %p152 = pneg %p32
      %p153 = pneg %p56
      %p154 = pneg %p53
      %p155 = pneg %p77
      %p156 = pneg %p74
      %p157 = pneg %p103
      %p158 = pneg %p100
      %s159 = smul.u32 29, %s14
      %p160 = scmp.lt.s32.totalorder %s159, 57
      %s161 = scalar_select %p160, %s159, 57
      %s162 = smul.addr %s161, 8
      %s163 = scalar_lea.vmem %s3, %s162
      %s164 = smul.u32 29, %s14
      %p165 = scmp.lt.s32.totalorder %s164, 57
      %s166 = scalar_select %p165, %s164, 57
      %s167 = smul.addr %s166, 3
      %s168 = smul.addr %s167, 8
      %s169 = scalar_lea.vmem %s0, %s168
      %s170 = smul.u32 29, %s14
      %s171 = smul.u32 29, %s14
      %p172 = scmp.lt.s32.totalorder %s171, 57
      %s173 = scalar_select %p172, %s171, 57
      %s174 = smul.addr %s173, 8
      %s175 = scalar_lea.vmem %s3, %s174
      %s176 = smul.u32 29, %s14
      %v177 = vld [vmem:[%s169] sm:$0xff]
      %v178 = vld [vmem:[%s169 + $0x8] sm:$0xff]
      %v179 = vld [vmem:[%s169 + $0x10] sm:$0xff]
      %v180 = vld [vmem:[%s169 + $0x18] sm:$0xff]
      %v181 = vld [vmem:[%s169 + $0x20] sm:$0xff]
      %v182 = vld [vmem:[%s169 + $0x28] sm:$0xff]
      %v183 = vld [vmem:[%s169 + $0x30] sm:$0xff]
      %v184 = vld [vmem:[%s169 + $0x38] sm:$0xff]
      %v185 = vld [vmem:[%s169 + $0x40] sm:$0xff]
      %v186 = vld [vmem:[%s169 + $0x48] sm:$0xff]
      %v187 = vld [vmem:[%s169 + $0x50] sm:$0xff]
      %v188 = vld [vmem:[%s169 + $0x58] sm:$0xff]
      %v189 = vld [vmem:[%s169 + $0x60] sm:$0xff]
      %v190 = vld [vmem:[%s169 + $0x68] sm:$0xff]
      %v191 = vld [vmem:[%s169 + $0x70] sm:$0xff]
      %v192 = vld [vmem:[%s169 + $0x78] sm:$0xff]
      %v193 = vld [vmem:[%s169 + $0x80] sm:$0xff]
      %v194 = vld [vmem:[%s169 + $0x88] sm:$0xff]
      %v195 = vld [vmem:[%s169 + $0x90] sm:$0xff]
      %v196 = vld [vmem:[%s169 + $0x98] sm:$0xff]
      %v197 = vld [vmem:[%s169 + $0xa0] sm:$0xff]
      %v198 = vld [vmem:[%s169 + $0xa8] sm:$0xff]
      %v199 = vld [vmem:[%s169 + $0xb0] sm:$0xff]
      %v200 = vld [vmem:[%s169 + $0xb8] sm:$0xff]
      %v201 = vld [vmem:[%s169 + $0xc0] sm:$0xff]
      %v202 = vld [vmem:[%s169 + $0xc8] sm:$0xff]
      %v203 = vld [vmem:[%s169 + $0xd0] sm:$0xff]
      %v204 = vld [vmem:[%s169 + $0xd8] sm:$0xff]
      %v205 = vld [vmem:[%s169 + $0xe0] sm:$0xff]
      %v206 = vld [vmem:[%s169 + $0xe8] sm:$0xff]
      %v207 = vld [vmem:[%s169 + $0xf0] sm:$0xff]
      %v208 = vld [vmem:[%s169 + $0xf8] sm:$0xff]
      %v209 = vld [vmem:[%s169 + $0x100] sm:$0xff]
      %v210 = vld [vmem:[%s169 + $0x108] sm:$0xff]
      %v211 = vld [vmem:[%s169 + $0x110] sm:$0xff]
      %v212 = vld [vmem:[%s169 + $0x118] sm:$0xff]
      %v213 = vld [vmem:[%s169 + $0x120] sm:$0xff]
      %v214 = vld [vmem:[%s169 + $0x128] sm:$0xff]
      %v215 = vld [vmem:[%s169 + $0x130] sm:$0xff]
      %v216 = vld [vmem:[%s169 + $0x138] sm:$0xff]
      %v217 = vld [vmem:[%s169 + $0x140] sm:$0xff]
      %v218 = vld [vmem:[%s169 + $0x148] sm:$0xff]
      %v219 = vld [vmem:[%s169 + $0x150] sm:$0xff]
      %v220 = vld [vmem:[%s169 + $0x158] sm:$0xff]
      %v221 = vld [vmem:[%s169 + $0x160] sm:$0xff]
      %v222 = vld [vmem:[%s169 + $0x168] sm:$0xff]
      %v223 = vld [vmem:[%s169 + $0x170] sm:$0xff]
      %v224 = vld [vmem:[%s169 + $0x178] sm:$0xff]
      %v225 = vld [vmem:[%s169 + $0x180] sm:$0xff]
      %v226 = vld [vmem:[%s169 + $0x188] sm:$0xff]
      %v227 = vld [vmem:[%s169 + $0x190] sm:$0xff]
      %v228 = vld [vmem:[%s169 + $0x198] sm:$0xff]
      %v229 = vld [vmem:[%s169 + $0x1a0] sm:$0xff]
      %v230 = vld [vmem:[%s169 + $0x1a8] sm:$0xff]
      %v231 = vld [vmem:[%s169 + $0x1b0] sm:$0xff]
      %v232 = vld [vmem:[%s169 + $0x1b8] sm:$0xff]
      %v233 = vld [vmem:[%s169 + $0x1c0] sm:$0xff]
      %v234 = vld [vmem:[%s169 + $0x1c8] sm:$0xff]
      %v235 = vld [vmem:[%s169 + $0x1d0] sm:$0xff]
      %v236 = vld [vmem:[%s169 + $0x1d8] sm:$0xff]
      %v237 = vld [vmem:[%s169 + $0x1e0] sm:$0xff]
      %v238 = vld [vmem:[%s169 + $0x1e8] sm:$0xff]
      %v239 = vld [vmem:[%s169 + $0x1f0] sm:$0xff]
      %v240 = vld [vmem:[%s169 + $0x1f8] sm:$0xff]
      %v241 = vld [vmem:[%s169 + $0x200] sm:$0xff]
      %v242 = vld [vmem:[%s169 + $0x208] sm:$0xff]
      %v243 = vld [vmem:[%s169 + $0x210] sm:$0xff]
      %v244 = vld [vmem:[%s169 + $0x218] sm:$0xff]
      %v245 = vld [vmem:[%s169 + $0x220] sm:$0xff]
      %v246 = vld [vmem:[%s169 + $0x228] sm:$0xff]
      %v247 = vld [vmem:[%s169 + $0x230] sm:$0xff]
      %v248 = vld [vmem:[%s169 + $0x238] sm:$0xff]
      %v249 = vld [vmem:[%s169 + $0x240] sm:$0xff]
      %v250 = vld [vmem:[%s169 + $0x248] sm:$0xff]
      %v251 = vld [vmem:[%s169 + $0x250] sm:$0xff]
      %v252 = vld [vmem:[%s169 + $0x258] sm:$0xff]
      %v253 = vld [vmem:[%s169 + $0x260] sm:$0xff]
      %v254 = vld [vmem:[%s169 + $0x268] sm:$0xff]
      %v255 = vld [vmem:[%s169 + $0x270] sm:$0xff]
      %v256 = vld [vmem:[%s169 + $0x278] sm:$0xff]
      %v257 = vld [vmem:[%s169 + $0x280] sm:$0xff]
      %v258 = vld [vmem:[%s169 + $0x288] sm:$0xff]
      %v259 = vld [vmem:[%s169 + $0x290] sm:$0xff]
      %v260 = vld [vmem:[%s169 + $0x298] sm:$0xff]
      %v261 = vld [vmem:[%s169 + $0x2a0] sm:$0xff]
      %v262 = vld [vmem:[%s169 + $0x2a8] sm:$0xff]
      %v263 = vld [vmem:[%s169 + $0x2b0] sm:$0xff]
      %v264 = vld [vmem:[%s1] sm:$0xff]
      %v265 = vld [vmem:[%s1 + $0x8] sm:$0xff]
      %v266 = vld [vmem:[%s1 + $0x10] sm:$0xff]
      %v267 = vld [vmem:[%s1 + $0x18] sm:$0xff]
      %v268 = vld [vmem:[%s1 + $0x20] sm:$0xff]
      %v269 = vld [vmem:[%s1 + $0x28] sm:$0xff]
      %v270 = vld [vmem:[%s1 + $0x30] sm:$0xff]
      %v271 = vld [vmem:[%s1 + $0x38] sm:$0xff]
      %v272 = vld [vmem:[%s1 + $0x40] sm:$0xff]
      %v273 = vld [vmem:[%s1 + $0x48] sm:$0xff]
      %v274 = vld [vmem:[%s1 + $0x50] sm:$0xff]
      %v275 = vld [vmem:[%s1 + $0x58] sm:$0xff]
      %v276 = vld [vmem:[%s1 + $0x60] sm:$0xff]
      %v277 = vld [vmem:[%s1 + $0x68] sm:$0xff]
      %v278 = vld [vmem:[%s1 + $0x70] sm:$0xff]
      %v279 = vld [vmem:[%s1 + $0x78] sm:$0xff]
      %v280 = vld [vmem:[%s1 + $0x80] sm:$0xff]
      %v281 = vld [vmem:[%s1 + $0x88] sm:$0xff]
      %v282 = vld [vmem:[%s1 + $0x90] sm:$0xff]
      %v283 = vld [vmem:[%s1 + $0x98] sm:$0xff]
      %v284 = vld [vmem:[%s1 + $0xa0] sm:$0xff]
      %v285 = vld [vmem:[%s1 + $0xa8] sm:$0xff]
      %v286 = vld [vmem:[%s1 + $0xb0] sm:$0xff]
      %v287 = vld [vmem:[%s1 + $0xb8] sm:$0xff]
      %v288 = vld [vmem:[%s1 + $0xc0] sm:$0xff]
      %v289 = vld [vmem:[%s1 + $0xc8] sm:$0xff]
      %v290 = vld [vmem:[%s1 + $0xd0] sm:$0xff]
      %v291 = vld [vmem:[%s1 + $0xd8] sm:$0xff]
      %v292 = vld [vmem:[%s1 + $0xe0] sm:$0xff]
      %v293 = vld [vmem:[%s1 + $0xe8] sm:$0xff]
      %v294 = vld [vmem:[%s1 + $0xf0] sm:$0xff]
      %v295 = vld [vmem:[%s1 + $0xf8] sm:$0xff]
      %v296 = vld [vmem:[%s1 + $0x100] sm:$0xff]
      %v297 = vld [vmem:[%s1 + $0x108] sm:$0xff]
      %v298 = vld [vmem:[%s1 + $0x110] sm:$0xff]
      %v299 = vld [vmem:[%s1 + $0x118] sm:$0xff]
      %v300 = vld [vmem:[%s1 + $0x120] sm:$0xff]
      %v301 = vld [vmem:[%s1 + $0x128] sm:$0xff]
      %v302 = vld [vmem:[%s1 + $0x130] sm:$0xff]
      %v303 = vld [vmem:[%s1 + $0x138] sm:$0xff]
      %v304 = vld [vmem:[%s1 + $0x140] sm:$0xff]
      %v305 = vld [vmem:[%s1 + $0x148] sm:$0xff]
      %v306 = vld [vmem:[%s1 + $0x150] sm:$0xff]
      %v307 = vld [vmem:[%s1 + $0x158] sm:$0xff]
      %v308 = vld [vmem:[%s1 + $0x160] sm:$0xff]
      %v309 = vld [vmem:[%s1 + $0x168] sm:$0xff]
      %v310 = vld [vmem:[%s1 + $0x170] sm:$0xff]
      %v311 = vld [vmem:[%s1 + $0x178] sm:$0xff]
      %v312 = vld [vmem:[%s2] sm:$0x1]
      %v314 = vlaneseq
      %v315 = vshrl.u32 %v314, 7
      %v316 = vsub.s32 0, %v315
      %v317 = vrot.slane %v312, %v316
      %319 = vmatprep.subr.mxu0 0.0
      %320 = vmatpush1.msra.mxu0 %v264
      %321 = vmatprep.subr.mxu0 0.0
      %322 = vmatpush1.msra.mxu0 %v265
      %323 = vmatprep.subr.mxu0 0.0
      %324 = vmatpush1.msra.mxu0 %v266
      %325 = vmatprep.subr.mxu0 0.0
      %326 = vmatpush1.msra.mxu0 %v267
      %327 = vmatprep.subr.mxu0 0.0
      %328 = vmatpush1.msra.mxu0 %v268
      %329 = vmatprep.subr.mxu0 0.0
      %330 = vmatpush1.msra.mxu0 %v269
      %331 = vmatprep.subr.mxu0 0.0
      %332 = vmatpush1.msra.mxu0 %v270
      %333 = vmatprep.subr.mxu0 0.0
      %334 = vmatpush1.msra.mxu0 %v271
      %335 = vmatprep.subr.mxu0 0.0
      %336 = vmatpush1.msra.mxu0 %v272
      %337 = vmatprep.subr.mxu0 0.0
      %338 = vmatpush1.msra.mxu0 %v273
      %339 = vmatprep.subr.mxu0 0.0
      %340 = vmatpush1.msra.mxu0 %v274
      %341 = vmatprep.subr.mxu0 0.0
      %342 = vmatpush1.msra.mxu0 %v275
      %343 = vmatprep.subr.mxu0 0.0
      %344 = vmatpush1.msra.mxu0 %v276
      %345 = vmatprep.subr.mxu0 0.0
      %346 = vmatpush1.msra.mxu0 %v277
      %347 = vmatprep.subr.mxu0 0.0
      %348 = vmatpush1.msra.mxu0 %v278
      %349 = vmatprep.subr.mxu0 0.0
      %350 = vmatpush1.msra.mxu0 %v279
      %351 = vmatprep.subr.mxu0 0.0
      %352 = vmatpush1.msra.mxu0 %v280
      %353 = vmatprep.subr.mxu0 0.0
      %354 = vmatpush1.msra.mxu0 %v281
      %355 = vmatprep.subr.mxu0 0.0
      %356 = vmatpush1.msra.mxu0 %v282
      %357 = vmatprep.subr.mxu0 0.0
      %358 = vmatpush1.msra.mxu0 %v283
      %359 = vmatprep.subr.mxu0 0.0
      %360 = vmatpush1.msra.mxu0 %v284
      %361 = vmatprep.subr.mxu0 0.0
      %362 = vmatpush1.msra.mxu0 %v285
      %363 = vmatprep.subr.mxu0 0.0
      %364 = vmatpush1.msra.mxu0 %v286
      %365 = vmatprep.subr.mxu0 0.0
      %366 = vmatpush1.msra.mxu0 %v287
      %367 = vmatprep.subr.mxu0 0.0
      %368 = vmatpush1.msra.mxu0 %v288
      %369 = vmatprep.subr.mxu0 0.0
      %370 = vmatpush1.msra.mxu0 %v289
      %371 = vmatprep.subr.mxu0 0.0
      %372 = vmatpush1.msra.mxu0 %v290
      %373 = vmatprep.subr.mxu0 0.0
      %374 = vmatpush1.msra.mxu0 %v291
      %375 = vmatprep.subr.mxu0 0.0
      %376 = vmatpush1.msra.mxu0 %v292
      %377 = vmatprep.subr.mxu0 0.0
      %378 = vmatpush1.msra.mxu0 %v293
      %379 = vmatprep.subr.mxu0 0.0
      %380 = vmatpush1.msra.mxu0 %v294
      %381 = vmatprep.subr.mxu0 0.0
      %382 = vmatpush1.msra.mxu0 %v295
      %383 = vmatprep.mubr.f32.mxu0 %v178
      %384 = vmatmul.mubr.f32.gmra.mrb[0].mxu0 %v177
      %v385 = vpop.f32.mrb[0].mxu0
      %v386 = vadd.f32 %v317, %v385
      %v387 = vpop.f32.mrb[0].mxu0
      %388 = vmatprep.mubr.f32.mxu0 %v181
      %389 = vmatmul.mubr.f32.gmra.mrb[0].mxu0 %v180
      %v390 = vpop.f32.mrb[0].mxu0
      %v391 = vadd.f32 %v317, %v390
      %v392 = vpop.f32.mrb[0].mxu0
      %393 = vmatprep.mubr.f32.mxu0 %v184
      %394 = vmatmul.mubr.f32.gmra.mrb[0].mxu0 %v183
      %v395 = vpop.f32.mrb[0].mxu0
      %v396 = vadd.f32 %v317, %v395
      %v397 = vpop.f32.mrb[0].mxu0
      %398 = vmatprep.mubr.f32.mxu0 %v187
      %399 = vmatmul.mubr.f32.gmra.mrb[0].mxu0 %v186
      %v400 = vpop.f32.mrb[0].mxu0
      %v401 = vadd.f32 %v317, %v400
      %v402 = vpop.f32.mrb[0].mxu0
      %403 = vmatprep.mubr.f32.mxu0 %v190
      %404 = vmatmul.mubr.f32.gmra.mrb[0].mxu0 %v189
      %v405 = vpop.f32.mrb[0].mxu0
      %v406 = vadd.f32 %v317, %v405
      %v407 = vpop.f32.mrb[0].mxu0
      %408 = vmatprep.mubr.f32.mxu0 %v193
      %409 = vmatmul.mubr.f32.gmra.mrb[0].mxu0 %v192
      %v410 = vpop.f32.mrb[0].mxu0
      %v411 = vadd.f32 %v317, %v410
      %v412 = vpop.f32.mrb[0].mxu0
      %413 = vmatprep.mubr.f32.mxu0 %v196
      %414 = vmatmul.mubr.f32.gmra.mrb[0].mxu0 %v195
      %v415 = vpop.f32.mrb[0].mxu0
      %v416 = vadd.f32 %v317, %v415
      %v417 = vpop.f32.mrb[0].mxu0
      %418 = vmatprep.mubr.f32.mxu0 %v199
      %419 = vmatmul.mubr.f32.gmra.mrb[0].mxu0 %v198
      %v420 = vpop.f32.mrb[0].mxu0
      %v421 = vadd.f32 %v317, %v420
      %v422 = vpop.f32.mrb[0].mxu0
      %423 = vmatprep.mubr.f32.mxu0 %v202
      %424 = vmatmul.mubr.f32.gmra.mrb[0].mxu0 %v201
      %v425 = vpop.f32.mrb[0].mxu0
      %v426 = vadd.f32 %v317, %v425
      %v427 = vpop.f32.mrb[0].mxu0
      %428 = vmatprep.mubr.f32.mxu0 %v205
      %429 = vmatmul.mubr.f32.gmra.mrb[0].mxu0 %v204
      %v430 = vpop.f32.mrb[0].mxu0
      %v431 = vadd.f32 %v317, %v430
      %v432 = vpop.f32.mrb[0].mxu0
      %433 = vmatprep.mubr.f32.mxu0 %v208
      %434 = vmatmul.mubr.f32.gmra.mrb[0].mxu0 %v207
      %v435 = vpop.f32.mrb[0].mxu0
      %v436 = vadd.f32 %v317, %v435
      %v437 = vpop.f32.mrb[0].mxu0
      %438 = vmatprep.mubr.f32.mxu0 %v211
      %439 = vmatmul.mubr.f32.gmra.mrb[0].mxu0 %v210
      %v440 = vpop.f32.mrb[0].mxu0
      %v441 = vadd.f32 %v317, %v440
      %v442 = vpop.f32.mrb[0].mxu0
      %443 = vmatprep.mubr.f32.mxu0 %v214
      %444 = vmatmul.mubr.f32.gmra.mrb[0].mxu0 %v213
      %v445 = vpop.f32.mrb[0].mxu0
      %v446 = vadd.f32 %v317, %v445
      %v447 = vpop.f32.mrb[0].mxu0
      %448 = vmatprep.mubr.f32.mxu0 %v217
      %449 = vmatmul.mubr.f32.gmra.mrb[0].mxu0 %v216
      %v450 = vpop.f32.mrb[0].mxu0
      %v451 = vadd.f32 %v317, %v450
      %v452 = vpop.f32.mrb[0].mxu0
      %453 = vmatprep.mubr.f32.mxu0 %v220
      %454 = vmatmul.mubr.f32.gmra.mrb[0].mxu0 %v219
      %v455 = vpop.f32.mrb[0].mxu0
      %v456 = vadd.f32 %v317, %v455
      %v457 = vpop.f32.mrb[0].mxu0
      %458 = vmatprep.mubr.f32.mxu0 %v223
      %459 = vmatmul.mubr.f32.gmra.mrb[0].mxu0 %v222
      %v460 = vpop.f32.mrb[0].mxu0
      %v461 = vadd.f32 %v317, %v460
      %v462 = vpop.f32.mrb[0].mxu0
      %463 = vmatprep.mubr.f32.mxu0 %v226
      %464 = vmatmul.mubr.f32.gmra.mrb[0].mxu0 %v225
      %v465 = vpop.f32.mrb[0].mxu0
      %v466 = vadd.f32 %v317, %v465
      %v467 = vpop.f32.mrb[0].mxu0
      %468 = vmatprep.mubr.f32.mxu0 %v229
      %469 = vmatmul.mubr.f32.gmra.mrb[0].mxu0 %v228
      %v470 = vpop.f32.mrb[0].mxu0
      %v471 = vadd.f32 %v317, %v470
      %v472 = vpop.f32.mrb[0].mxu0
      %473 = vmatprep.mubr.f32.mxu0 %v232
      %474 = vmatmul.mubr.f32.gmra.mrb[0].mxu0 %v231
      %v475 = vpop.f32.mrb[0].mxu0
      %v476 = vadd.f32 %v317, %v475
      %v477 = vpop.f32.mrb[0].mxu0
      %478 = vmatprep.mubr.f32.mxu0 %v235
      %479 = vmatmul.mubr.f32.gmra.mrb[0].mxu0 %v234
      %v480 = vpop.f32.mrb[0].mxu0
      %v481 = vadd.f32 %v317, %v480
      %v482 = vpop.f32.mrb[0].mxu0
      %483 = vmatprep.mubr.f32.mxu0 %v238
      %484 = vmatmul.mubr.f32.gmra.mrb[0].mxu0 %v237
      %v485 = vpop.f32.mrb[0].mxu0
      %v486 = vadd.f32 %v317, %v485
      %v487 = vpop.f32.mrb[0].mxu0
      %488 = vmatprep.mubr.f32.mxu0 %v241
      %489 = vmatmul.mubr.f32.gmra.mrb[0].mxu0 %v240
      %v490 = vpop.f32.mrb[0].mxu0
      %v491 = vadd.f32 %v317, %v490
      %v492 = vpop.f32.mrb[0].mxu0
      %493 = vmatprep.mubr.f32.mxu0 %v244
      %494 = vmatmul.mubr.f32.gmra.mrb[0].mxu0 %v243
      %v495 = vpop.f32.mrb[0].mxu0
      %v496 = vadd.f32 %v317, %v495
      %v497 = vpop.f32.mrb[0].mxu0
      %498 = vmatprep.mubr.f32.mxu0 %v247
      %499 = vmatmul.mubr.f32.gmra.mrb[0].mxu0 %v246
      %v500 = vpop.f32.mrb[0].mxu0
      %v501 = vadd.f32 %v317, %v500
      %v502 = vpop.f32.mrb[0].mxu0
      %503 = vmatprep.mubr.f32.mxu0 %v250
      %504 = vmatmul.mubr.f32.gmra.mrb[0].mxu0 %v249
      %v505 = vpop.f32.mrb[0].mxu0
      %v506 = vadd.f32 %v317, %v505
      %v507 = vpop.f32.mrb[0].mxu0
      %508 = vmatprep.mubr.f32.mxu0 %v253
      %509 = vmatmul.mubr.f32.gmra.mrb[0].mxu0 %v252
      %v510 = vpop.f32.mrb[0].mxu0
      %v511 = vadd.f32 %v317, %v510
      %v512 = vpop.f32.mrb[0].mxu0
      %513 = vmatprep.mubr.f32.mxu0 %v256
      %514 = vmatmul.mubr.f32.gmra.mrb[0].mxu0 %v255
      %v515 = vpop.f32.mrb[0].mxu0
      %v516 = vadd.f32 %v317, %v515
      %v517 = vpop.f32.mrb[0].mxu0
      %518 = vmatprep.mubr.f32.mxu0 %v259
      %519 = vmatmul.mubr.f32.gmra.mrb[0].mxu0 %v258
      %v520 = vpop.f32.mrb[0].mxu0
      %v521 = vadd.f32 %v317, %v520
      %v522 = vpop.f32.mrb[0].mxu0
      %523 = vmatprep.mubr.f32.mxu0 %v262
      %524 = vmatmul.mubr.f32.gmra.mrb[0].mxu0 %v261
      %v525 = vpop.f32.mrb[0].mxu0
      %v526 = vadd.f32 %v317, %v525
      %v527 = vpop.f32.mrb[0].mxu0
      %528 = vdwg.mxu0
      %529 = vmatprep.subr.mxu0 0.0
      %530 = vmatpush1.msra.mxu0 %v296
      %531 = vmatprep.subr.mxu0 0.0
      %532 = vmatpush1.msra.mxu0 %v297
      %533 = vmatprep.subr.mxu0 0.0
      %534 = vmatpush1.msra.mxu0 %v298
      %535 = vmatprep.subr.mxu0 0.0
      %536 = vmatpush1.msra.mxu0 %v299
      %537 = vmatprep.subr.mxu0 0.0
      %538 = vmatpush1.msra.mxu0 %v300
      %539 = vmatprep.subr.mxu0 0.0
      %540 = vmatpush1.msra.mxu0 %v301
      %541 = vmatprep.subr.mxu0 0.0
      %542 = vmatpush1.msra.mxu0 %v302
      %543 = vmatprep.subr.mxu0 0.0
      %544 = vmatpush1.msra.mxu0 %v303
      %545 = vmatprep.subr.mxu0 0.0
      %546 = vmatpush1.msra.mxu0 %v304
      %547 = vmatprep.subr.mxu0 0.0
      %548 = vmatpush1.msra.mxu0 %v305
      %549 = vmatprep.subr.mxu0 0.0
      %550 = vmatpush1.msra.mxu0 %v306
      %551 = vmatprep.subr.mxu0 0.0
      %552 = vmatpush1.msra.mxu0 %v307
      %553 = vmatprep.subr.mxu0 0.0
      %554 = vmatpush1.msra.mxu0 %v308
      %555 = vmatprep.subr.mxu0 0.0
      %556 = vmatpush1.msra.mxu0 %v309
      %557 = vmatprep.subr.mxu0 0.0
      %558 = vmatpush1.msra.mxu0 %v310
      %559 = vmatprep.subr.mxu0 0.0
      %560 = vmatpush1.msra.mxu0 %v311
      %561 = vmatprep.subr.mxu0 0.0
      %562 = vmatpush1.msra.mxu0 0.0
      %563 = vmatprep.subr.mxu0 0.0
      %564 = vmatpush1.msra.mxu0 0.0
      %565 = vmatprep.subr.mxu0 0.0
      %566 = vmatpush1.msra.mxu0 0.0
      %567 = vmatprep.subr.mxu0 0.0
      %568 = vmatpush1.msra.mxu0 0.0
      %569 = vmatprep.subr.mxu0 0.0
      %570 = vmatpush1.msra.mxu0 0.0
      %571 = vmatprep.subr.mxu0 0.0
      %572 = vmatpush1.msra.mxu0 0.0
      %573 = vmatprep.subr.mxu0 0.0
      %574 = vmatpush1.msra.mxu0 0.0
      %575 = vmatprep.subr.mxu0 0.0
      %576 = vmatpush1.msra.mxu0 0.0
      %577 = vmatprep.subr.mxu0 0.0
      %578 = vmatpush1.msra.mxu0 0.0
      %579 = vmatprep.subr.mxu0 0.0
      %580 = vmatpush1.msra.mxu0 0.0
      %581 = vmatprep.subr.mxu0 0.0
      %582 = vmatpush1.msra.mxu0 0.0
      %583 = vmatprep.subr.mxu0 0.0
      %584 = vmatpush1.msra.mxu0 0.0
      %585 = vmatprep.subr.mxu0 0.0
      %586 = vmatpush1.msra.mxu0 0.0
      %587 = vmatprep.subr.mxu0 0.0
      %588 = vmatpush1.msra.mxu0 0.0
      %589 = vmatprep.subr.mxu0 0.0
      %590 = vmatpush1.msra.mxu0 0.0
      %591 = vmatprep.subr.mxu0 0.0
      %592 = vmatpush1.msra.mxu0 0.0
      %593 = vmatprep.mubr.f32.mxu0 0.0
      %594 = vmatmul.mubr.f32.gmra.mrb[0].mxu0 %v179
      %v595 = vpop.f32.mrb[0].mxu0
      %v596 = vadd.f32 %v386, %v595
      %v597 = vpop.f32.mrb[0].mxu0
      %598 = vmatprep.mubr.f32.mxu0 0.0
      %599 = vmatmul.mubr.f32.gmra.mrb[0].mxu0 %v182
      %v600 = vpop.f32.mrb[0].mxu0
      %v601 = vadd.f32 %v391, %v600
      %v602 = vpop.f32.mrb[0].mxu0
      %603 = vmatprep.mubr.f32.mxu0 0.0
      %604 = vmatmul.mubr.f32.gmra.mrb[0].mxu0 %v185
      %v605 = vpop.f32.mrb[0].mxu0
      %v606 = vadd.f32 %v396, %v605
      %v607 = vpop.f32.mrb[0].mxu0
      %608 = vmatprep.mubr.f32.mxu0 0.0
      %609 = vmatmul.mubr.f32.gmra.mrb[0].mxu0 %v188
      %v610 = vpop.f32.mrb[0].mxu0
      %v611 = vadd.f32 %v401, %v610
      %v612 = vpop.f32.mrb[0].mxu0
      %613 = vmatprep.mubr.f32.mxu0 0.0
      %614 = vmatmul.mubr.f32.gmra.mrb[0].mxu0 %v191
      %v615 = vpop.f32.mrb[0].mxu0
      %v616 = vadd.f32 %v406, %v615
      %v617 = vpop.f32.mrb[0].mxu0
      %618 = vmatprep.mubr.f32.mxu0 0.0
      %619 = vmatmul.mubr.f32.gmra.mrb[0].mxu0 %v194
      %v620 = vpop.f32.mrb[0].mxu0
      %v621 = vadd.f32 %v411, %v620
      %v622 = vpop.f32.mrb[0].mxu0
      %623 = vmatprep.mubr.f32.mxu0 0.0
      %624 = vmatmul.mubr.f32.gmra.mrb[0].mxu0 %v197
      %v625 = vpop.f32.mrb[0].mxu0
      %v626 = vadd.f32 %v416, %v625
      %v627 = vpop.f32.mrb[0].mxu0
      %628 = vmatprep.mubr.f32.mxu0 0.0
      %629 = vmatmul.mubr.f32.gmra.mrb[0].mxu0 %v200
      %v630 = vpop.f32.mrb[0].mxu0
      %v631 = vadd.f32 %v421, %v630
      %v632 = vpop.f32.mrb[0].mxu0
      %633 = vmatprep.mubr.f32.mxu0 0.0
      %634 = vmatmul.mubr.f32.gmra.mrb[0].mxu0 %v203
      %v635 = vpop.f32.mrb[0].mxu0
      %v636 = vadd.f32 %v426, %v635
      %v637 = vpop.f32.mrb[0].mxu0
      %638 = vmatprep.mubr.f32.mxu0 0.0
      %639 = vmatmul.mubr.f32.gmra.mrb[0].mxu0 %v206
      %v640 = vpop.f32.mrb[0].mxu0
      %v641 = vadd.f32 %v431, %v640
      %v642 = vpop.f32.mrb[0].mxu0
      %643 = vmatprep.mubr.f32.mxu0 0.0
      %644 = vmatmul.mubr.f32.gmra.mrb[0].mxu0 %v209
      %v645 = vpop.f32.mrb[0].mxu0
      %v646 = vadd.f32 %v436, %v645
      %v647 = vpop.f32.mrb[0].mxu0
      %648 = vmatprep.mubr.f32.mxu0 0.0
      %649 = vmatmul.mubr.f32.gmra.mrb[0].mxu0 %v212
      %v650 = vpop.f32.mrb[0].mxu0
      %v651 = vadd.f32 %v441, %v650
      %v652 = vpop.f32.mrb[0].mxu0
      %653 = vmatprep.mubr.f32.mxu0 0.0
      %654 = vmatmul.mubr.f32.gmra.mrb[0].mxu0 %v215
      %v655 = vpop.f32.mrb[0].mxu0
      %v656 = vadd.f32 %v446, %v655
      %v657 = vpop.f32.mrb[0].mxu0
      %658 = vmatprep.mubr.f32.mxu0 0.0
      %659 = vmatmul.mubr.f32.gmra.mrb[0].mxu0 %v218
      %v660 = vpop.f32.mrb[0].mxu0
      %v661 = vadd.f32 %v451, %v660
      %v662 = vpop.f32.mrb[0].mxu0
      %663 = vmatprep.mubr.f32.mxu0 0.0
      %664 = vmatmul.mubr.f32.gmra.mrb[0].mxu0 %v221
      %v665 = vpop.f32.mrb[0].mxu0
      %v666 = vadd.f32 %v456, %v665
      %v667 = vpop.f32.mrb[0].mxu0
      %668 = vmatprep.mubr.f32.mxu0 0.0
      %669 = vmatmul.mubr.f32.gmra.mrb[0].mxu0 %v224
      %v670 = vpop.f32.mrb[0].mxu0
      %v671 = vadd.f32 %v461, %v670
      %v672 = vpop.f32.mrb[0].mxu0
      %673 = vmatprep.mubr.f32.mxu0 0.0
      %674 = vmatmul.mubr.f32.gmra.mrb[0].mxu0 %v227
      %v675 = vpop.f32.mrb[0].mxu0
      %v676 = vadd.f32 %v466, %v675
      %v677 = vpop.f32.mrb[0].mxu0
      %678 = vmatprep.mubr.f32.mxu0 0.0
      %679 = vmatmul.mubr.f32.gmra.mrb[0].mxu0 %v230
      %v680 = vpop.f32.mrb[0].mxu0
      %v681 = vadd.f32 %v471, %v680
      %v682 = vpop.f32.mrb[0].mxu0
      %683 = vmatprep.mubr.f32.mxu0 0.0
      %684 = vmatmul.mubr.f32.gmra.mrb[0].mxu0 %v233
      %v685 = vpop.f32.mrb[0].mxu0
      %v686 = vadd.f32 %v476, %v685
      %v687 = vpop.f32.mrb[0].mxu0
      %688 = vmatprep.mubr.f32.mxu0 0.0
      %689 = vmatmul.mubr.f32.gmra.mrb[0].mxu0 %v236
      %v690 = vpop.f32.mrb[0].mxu0
      %v691 = vadd.f32 %v481, %v690
      %v692 = vpop.f32.mrb[0].mxu0
      %693 = vmatprep.mubr.f32.mxu0 0.0
      %694 = vmatmul.mubr.f32.gmra.mrb[0].mxu0 %v239
      %v695 = vpop.f32.mrb[0].mxu0
      %v696 = vadd.f32 %v486, %v695
      %v697 = vpop.f32.mrb[0].mxu0
      %698 = vmatprep.mubr.f32.mxu0 0.0
      %699 = vmatmul.mubr.f32.gmra.mrb[0].mxu0 %v242
      %v700 = vpop.f32.mrb[0].mxu0
      %v701 = vadd.f32 %v491, %v700
      %v702 = vpop.f32.mrb[0].mxu0
      %703 = vmatprep.mubr.f32.mxu0 0.0
      %704 = vmatmul.mubr.f32.gmra.mrb[0].mxu0 %v245
      %v705 = vpop.f32.mrb[0].mxu0
      %v706 = vadd.f32 %v496, %v705
      %v707 = vpop.f32.mrb[0].mxu0
      %708 = vmatprep.mubr.f32.mxu0 0.0
      %709 = vmatmul.mubr.f32.gmra.mrb[0].mxu0 %v248
      %v710 = vpop.f32.mrb[0].mxu0
      %v711 = vadd.f32 %v501, %v710
      %v712 = vpop.f32.mrb[0].mxu0
      %713 = vmatprep.mubr.f32.mxu0 0.0
      %714 = vmatmul.mubr.f32.gmra.mrb[0].mxu0 %v251
      %v715 = vpop.f32.mrb[0].mxu0
      %v716 = vadd.f32 %v506, %v715
      %v717 = vpop.f32.mrb[0].mxu0
      %718 = vmatprep.mubr.f32.mxu0 0.0
      %719 = vmatmul.mubr.f32.gmra.mrb[0].mxu0 %v254
      %v720 = vpop.f32.mrb[0].mxu0
      %v721 = vadd.f32 %v511, %v720
      %v722 = vpop.f32.mrb[0].mxu0
      %723 = vmatprep.mubr.f32.mxu0 0.0
      %724 = vmatmul.mubr.f32.gmra.mrb[0].mxu0 %v257
      %v725 = vpop.f32.mrb[0].mxu0
      %v726 = vadd.f32 %v516, %v725
      %v727 = vpop.f32.mrb[0].mxu0
      %728 = vmatprep.mubr.f32.mxu0 0.0
      %729 = vmatmul.mubr.f32.gmra.mrb[0].mxu0 %v260
      %v730 = vpop.f32.mrb[0].mxu0
      %v731 = vadd.f32 %v521, %v730
      %v732 = vpop.f32.mrb[0].mxu0
      %733 = vmatprep.mubr.f32.mxu0 0.0
      %734 = vmatmul.mubr.f32.gmra.mrb[0].mxu0 %v263
      %v735 = vpop.f32.mrb[0].mxu0
      %v736 = vadd.f32 %v526, %v735
      %v737 = vpop.f32.mrb[0].mxu0
      %738 = vdwg.mxu0
      %v739 = vmax.f32 %v596, 0.0
      %v740 = vmax.f32 %v601, 0.0
      %v741 = vmax.f32 %v606, 0.0
      %v742 = vmax.f32 %v611, 0.0
      %v743 = vmax.f32 %v616, 0.0
      %v744 = vmax.f32 %v621, 0.0
      %v745 = vmax.f32 %v626, 0.0
      %v746 = vmax.f32 %v631, 0.0
      %v747 = vmax.f32 %v636, 0.0
      %v748 = vmax.f32 %v641, 0.0
      %v749 = vmax.f32 %v646, 0.0
      %v750 = vmax.f32 %v651, 0.0
      %v751 = vmax.f32 %v656, 0.0
      %v752 = vmax.f32 %v661, 0.0
      %v753 = vmax.f32 %v666, 0.0
      %v754 = vmax.f32 %v671, 0.0
      %v755 = vmax.f32 %v676, 0.0
      %v756 = vmax.f32 %v681, 0.0
      %v757 = vmax.f32 %v686, 0.0
      %v758 = vmax.f32 %v691, 0.0
      %v759 = vmax.f32 %v696, 0.0
      %v760 = vmax.f32 %v701, 0.0
      %v761 = vmax.f32 %v706, 0.0
      %v762 = vmax.f32 %v711, 0.0
      %v763 = vmax.f32 %v716, 0.0
      %v764 = vmax.f32 %v721, 0.0
      %v765 = vmax.f32 %v726, 0.0
      %v766 = vmax.f32 %v731, 0.0
      %v767 = vmax.f32 %v736, 0.0
      %768 = vst [vmem:[%s175] sm:$0xff] %v739
      %769 = vst [vmem:[%s175 + $0x8] sm:$0xff] %v740
      %770 = vst [vmem:[%s175 + $0x10] sm:$0xff] %v741
      %771 = vst [vmem:[%s175 + $0x18] sm:$0xff] %v742
      %772 = vst [vmem:[%s175 + $0x20] sm:$0xff] %v743
      %773 = vst [vmem:[%s175 + $0x28] sm:$0xff] %v744
      %774 = vst [vmem:[%s175 + $0x30] sm:$0xff] %v745
      %775 = vst [vmem:[%s175 + $0x38] sm:$0xff] %v746
      %776 = vst [vmem:[%s175 + $0x40] sm:$0xff] %v747
      %777 = vst [vmem:[%s175 + $0x48] sm:$0xff] %v748
      %778 = vst [vmem:[%s175 + $0x50] sm:$0xff] %v749
      %779 = vst [vmem:[%s175 + $0x58] sm:$0xff] %v750
      %780 = vst [vmem:[%s175 + $0x60] sm:$0xff] %v751
      %781 = vst [vmem:[%s175 + $0x68] sm:$0xff] %v752
      %782 = vst [vmem:[%s175 + $0x70] sm:$0xff] %v753
      %783 = vst [vmem:[%s175 + $0x78] sm:$0xff] %v754
      %784 = vst [vmem:[%s175 + $0x80] sm:$0xff] %v755
      %785 = vst [vmem:[%s175 + $0x88] sm:$0xff] %v756
      %786 = vst [vmem:[%s175 + $0x90] sm:$0xff] %v757
      %787 = vst [vmem:[%s175 + $0x98] sm:$0xff] %v758
      %788 = vst [vmem:[%s175 + $0xa0] sm:$0xff] %v759
      %789 = vst [vmem:[%s175 + $0xa8] sm:$0xff] %v760
      %790 = vst [vmem:[%s175 + $0xb0] sm:$0xff] %v761
      %791 = vst [vmem:[%s175 + $0xb8] sm:$0xff] %v762
      %792 = vst [vmem:[%s175 + $0xc0] sm:$0xff] %v763
      %793 = vst [vmem:[%s175 + $0xc8] sm:$0xff] %v764
      %794 = vst [vmem:[%s175 + $0xd0] sm:$0xff] %v765
      %795 = vst [vmem:[%s175 + $0xd8] sm:$0xff] %v766
      %796 = vst [vmem:[%s175 + $0xe0] sm:$0xff] %v767
      %s797 = smul.u32 29, %s14
      %p798 = scmp.lt.s32.totalorder %s797, 57
      %s799 = scalar_select %p798, %s797, 57
      %s800 = smul.addr %s799, 8
      %s801 = scalar_lea.vmem %s3, %s800
      // Predicated region
      $region33: #{forward.11} parent=31 // pred_check
        %p802 = pneg %p100
      $region34: #{forward.11} parent=31 // pred_check_branch
        %804 = sbr.rel (%p802) target = $region36
      $region35: #{forward.11} parent=31 // pred_region
        %s805 = smul.u32 29, %s14
      $region36: #{forward.11} parent=31 // pred_fallthru
        _
    $region32: #{forward.11} parent=5 // pred_fallthru
      _
    %p806 = scmp.le.s32.totalorder 2, %s9
    // Predicated region
    $region37: #{forward.11} parent=5 // pred_check
      %p807 = pneg %p806
    $region38: #{forward.11} parent=5 // pred_check_branch
      %809 = sbr.rel (%p807) target = $region40
    $region39: #{forward.11} parent=5 // pred_region
      %s810 = ssub.s32 %s9, 2
      // Predicated region
      $region41: #{forward.11} parent=39 // pred_check
        %p811 = pneg %p106
      $region42: #{forward.11} parent=39 // pred_check_branch
        %813 = sbr.rel (%p811) target = $region44
      $region43: #{forward.11} parent=39 // pred_region
        %s814 = smul.u32 29, %s15
        %p815 = scmp.lt.s32.totalorder %s814, 57
        %s816 = scalar_select %p815, %s814, 57
        %s817 = smul.addr %s816, 8
        %s818 = scalar_lea.vmem %s3, %s817
      $region44: #{forward.11} parent=39 // pred_fallthru
        _
    $region40: #{forward.11} parent=5 // pred_fallthru
      _
  $region6: #{forward.11} parent=0 // loop_footer
    %s13 = sadd.s32 1, %s9
  $region7: #{forward.11} parent=0 // loop_footer_branch
    %8 = sbr.rel target = $region3
  $region8: #{forward.11} parent=0 // loop_exit
    _

// kernel: forward.13
$region0: #{forward.13}
  #allocation0 [shape = 'u32[]', space=smem, size = 0x4, offset = 0x4, fixed_abs, tag = 'smem constant byte address 0x4 - core index']
  #allocation1 [shape = 'u32[144,128]{1,0:T(1,128)}', space=vmem, size = 0x12000, scoped, tag = 'internal scratch']
  %s0 = inlined_call_operand.vmem [shape: f32[8,1024], index: 0, kind: input, shape index: {}]
  %s1 = inlined_call_operand.vmem [shape: f32[8,1024], index: 1, kind: input, shape index: {}]
  %s2 = inlined_call_operand.vmem [shape: f32[1024,128], index: 2, kind: input, shape index: {}]
  %s3 = inlined_call_operand.vmem [shape: f32[1,128], index: 3, kind: input, shape index: {}]
  %s4 = inlined_call_operand.vmem [shape: f32[1024,128], index: 4, kind: input, shape index: {}]
  %s5 = inlined_call_operand.vmem [shape: f32[1,128], index: 5, kind: input, shape index: {}]
  %s6 = inlined_call_operand.vmem [shape: f32[128,128], index: 6, kind: input, shape index: {}]
  %s7 = inlined_call_operand.vmem [shape: f32[1,128], index: 7, kind: input, shape index: {}]
  %s8 = inlined_call_operand.vmem [shape: f32[128,128], index: 8, kind: input, shape index: {}]
  %s9 = inlined_call_operand.vmem [shape: f32[1,128], index: 9, kind: input, shape index: {}]
  %s10 = inlined_call_operand.vmem [shape: f32[128,128], index: 10, kind: input, shape index: {}]
  %s11 = inlined_call_operand.vmem [shape: f32[128,128], index: 11, kind: input, shape index: {}]
  %s12 = inlined_call_operand.vmem [shape: f32[1,128], index: 12, kind: input, shape index: {}]
  %s13 = inlined_call_operand.vmem [shape: f32[128,3072], index: 13, kind: input, shape index: {}]
  %s14 = inlined_call_operand.vmem [shape: f32[1,3072], index: 14, kind: input, shape index: {}]
  %s15 = inlined_call_operand.vmem [shape: f32[8,3072], index: 15, kind: output, shape index: {}]
  %s16 = sld [smem:[#allocation0]]
  $region70: #{forward.13} parent=0
    _
  %s18 = ssub.s32 1, %s16
  %s19 = scalar_select 0, %s18, %s16
  // Predicated region
  $region2: #{forward.13} parent=0 // pred_check
    _
  $region3: #{forward.13} parent=0 // pred_check_branch
    %21 = sbr.rel (0) target = $region5
  $region4: #{forward.13} parent=0 // pred_region
    _
  $region5: #{forward.13} parent=0 // pred_fallthru
    _
  // Predicated region
  $region6: #{forward.13} parent=0 // pred_check
    _
  $region7: #{forward.13} parent=0 // pred_check_branch
    %23 = sbr.rel (0) target = $region9
  $region8: #{forward.13} parent=0 // pred_region
    _
  $region9: #{forward.13} parent=0 // pred_fallthru
    _
  // Predicated region
  $region10: #{forward.13} parent=0 // pred_check
    _
  $region11: #{forward.13} parent=0 // pred_check_branch
    %25 = sbr.rel (0) target = $region13
  $region12: #{forward.13} parent=0 // pred_region
    _
  $region13: #{forward.13} parent=0 // pred_fallthru
    _
  // Predicated region
  $region14: #{forward.13} parent=0 // pred_check
    _
  $region15: #{forward.13} parent=0 // pred_check_branch
    %27 = sbr.rel (0) target = $region17
  $region16: #{forward.13} parent=0 // pred_region
    _
  $region17: #{forward.13} parent=0 // pred_fallthru
    _
  // Predicated region
  $region18: #{forward.13} parent=0 // pred_check
    _
  $region19: #{forward.13} parent=0 // pred_check_branch
    %29 = sbr.rel (0) target = $region21
  $region20: #{forward.13} parent=0 // pred_region
    _
  $region21: #{forward.13} parent=0 // pred_fallthru
    _
  // Predicated region
  $region22: #{forward.13} parent=0 // pred_check
    _
  $region23: #{forward.13} parent=0 // pred_check_branch
    %31 = sbr.rel (0) target = $region25
  $region24: #{forward.13} parent=0 // pred_region
    _
  $region25: #{forward.13} parent=0 // pred_fallthru
    _
  // Predicated region
  $region26: #{forward.13} parent=0 // pred_check
    _
  $region27: #{forward.13} parent=0 // pred_check_branch
    %33 = sbr.rel (0) target = $region29
  $region28: #{forward.13} parent=0 // pred_region
    _
  $region29: #{forward.13} parent=0 // pred_fallthru
    _
  // Predicated region
  $region30: #{forward.13} parent=0 // pred_check
    _
  $region31: #{forward.13} parent=0 // pred_check_branch
    %35 = sbr.rel (0) target = $region33
  $region32: #{forward.13} parent=0 // pred_region
    _
  $region33: #{forward.13} parent=0 // pred_fallthru
    _
  // Predicated region
  $region34: #{forward.13} parent=0 // pred_check
    _
  $region35: #{forward.13} parent=0 // pred_check_branch
    %37 = sbr.rel (0) target = $region37
  $region36: #{forward.13} parent=0 // pred_region
    _
  $region37: #{forward.13} parent=0 // pred_fallthru
    _
  // Predicated region
  $region38: #{forward.13} parent=0 // pred_check
    _
  $region39: #{forward.13} parent=0 // pred_check_branch
    %39 = sbr.rel (0) target = $region41
  $region40: #{forward.13} parent=0 // pred_region
    _
  $region41: #{forward.13} parent=0 // pred_fallthru
    _
  // Predicated region
  $region42: #{forward.13} parent=0 // pred_check
    _
  $region43: #{forward.13} parent=0 // pred_check_branch
    %41 = sbr.rel (0) target = $region45
  $region44: #{forward.13} parent=0 // pred_region
    _
  $region45: #{forward.13} parent=0 // pred_fallthru
    _
  // Predicated region
  $region46: #{forward.13} parent=0 // pred_check
    _
  $region47: #{forward.13} parent=0 // pred_check_branch
    %43 = sbr.rel (0) target = $region49
  $region48: #{forward.13} parent=0 // pred_region
    _
  $region49: #{forward.13} parent=0 // pred_fallthru
    _
  // Predicated region
  $region50: #{forward.13} parent=0 // pred_check
    _
  $region51: #{forward.13} parent=0 // pred_check_branch
    %45 = sbr.rel (0) target = $region53
  $region52: #{forward.13} parent=0 // pred_region
    _
  $region53: #{forward.13} parent=0 // pred_fallthru
    _
  // Predicated region
  $region54: #{forward.13} parent=0 // pred_check
    _
  $region55: #{forward.13} parent=0 // pred_check_branch
    %47 = sbr.rel (0) target = $region57
  $region56: #{forward.13} parent=0 // pred_region
    _
  $region57: #{forward.13} parent=0 // pred_fallthru
    _
  // Predicated region
  $region58: #{forward.13} parent=0 // pred_check
    _
  $region59: #{forward.13} parent=0 // pred_check_branch
    %49 = sbr.rel (0) target = $region61
  $region60: #{forward.13} parent=0 // pred_region
    _
  $region61: #{forward.13} parent=0 // pred_fallthru
    _
  %v50 = vld [vmem:[%s0] sm:$0xff]
  %v51 = vld [vmem:[%s0 + $0x8] sm:$0xff]
  %v52 = vld [vmem:[%s0 + $0x10] sm:$0xff]
  %v53 = vld [vmem:[%s0 + $0x18] sm:$0xff]
  %v54 = vld [vmem:[%s0 + $0x20] sm:$0xff]
  %v55 = vld [vmem:[%s0 + $0x28] sm:$0xff]
  %v56 = vld [vmem:[%s0 + $0x30] sm:$0xff]
  %v57 = vld [vmem:[%s0 + $0x38] sm:$0xff]
  %v58 = vld [vmem:[%s2] sm:$0xff]
  %v59 = vld [vmem:[%s2 + $0x8] sm:$0xff]
  %v60 = vld [vmem:[%s2 + $0x10] sm:$0xff]
  %v61 = vld [vmem:[%s2 + $0x18] sm:$0xff]
  %v62 = vld [vmem:[%s2 + $0x20] sm:$0xff]
  %v63 = vld [vmem:[%s2 + $0x28] sm:$0xff]
  %v64 = vld [vmem:[%s2 + $0x30] sm:$0xff]
  %v65 = vld [vmem:[%s2 + $0x38] sm:$0xff]
  %v66 = vld [vmem:[%s2 + $0x40] sm:$0xff]
  %v67 = vld [vmem:[%s2 + $0x48] sm:$0xff]
  %v68 = vld [vmem:[%s2 + $0x50] sm:$0xff]
  %v69 = vld [vmem:[%s2 + $0x58] sm:$0xff]
  %v70 = vld [vmem:[%s2 + $0x60] sm:$0xff]
  %v71 = vld [vmem:[%s2 + $0x68] sm:$0xff]
  %v72 = vld [vmem:[%s2 + $0x70] sm:$0xff]
  %v73 = vld [vmem:[%s2 + $0x78] sm:$0xff]
  %v74 = vld [vmem:[%s2 + $0x80] sm:$0xff]
  %v75 = vld [vmem:[%s2 + $0x88] sm:$0xff]
  %v76 = vld [vmem:[%s2 + $0x90] sm:$0xff]
  %v77 = vld [vmem:[%s2 + $0x98] sm:$0xff]
  %v78 = vld [vmem:[%s2 + $0xa0] sm:$0xff]
  %v79 = vld [vmem:[%s2 + $0xa8] sm:$0xff]
  %v80 = vld [vmem:[%s2 + $0xb0] sm:$0xff]
  %v81 = vld [vmem:[%s2 + $0xb8] sm:$0xff]
  %v82 = vld [vmem:[%s2 + $0xc0] sm:$0xff]
  %v83 = vld [vmem:[%s2 + $0xc8] sm:$0xff]
  %v84 = vld [vmem:[%s2 + $0xd0] sm:$0xff]
  %v85 = vld [vmem:[%s2 + $0xd8] sm:$0xff]
  %v86 = vld [vmem:[%s2 + $0xe0] sm:$0xff]
  %v87 = vld [vmem:[%s2 + $0xe8] sm:$0xff]
  %v88 = vld [vmem:[%s2 + $0xf0] sm:$0xff]
  %v89 = vld [vmem:[%s2 + $0xf8] sm:$0xff]
  %v90 = vld [vmem:[%s2 + $0x100] sm:$0xff]
  %v91 = vld [vmem:[%s2 + $0x108] sm:$0xff]
  %v92 = vld [vmem:[%s2 + $0x110] sm:$0xff]
  %v93 = vld [vmem:[%s2 + $0x118] sm:$0xff]
  %v94 = vld [vmem:[%s2 + $0x120] sm:$0xff]
  %v95 = vld [vmem:[%s2 + $0x128] sm:$0xff]
  %v96 = vld [vmem:[%s2 + $0x130] sm:$0xff]
  %v97 = vld [vmem:[%s2 + $0x138] sm:$0xff]
  %v98 = vld [vmem:[%s2 + $0x140] sm:$0xff]
  %v99 = vld [vmem:[%s2 + $0x148] sm:$0xff]
  %v100 = vld [vmem:[%s2 + $0x150] sm:$0xff]
  %v101 = vld [vmem:[%s2 + $0x158] sm:$0xff]
  %v102 = vld [vmem:[%s2 + $0x160] sm:$0xff]
  %v103 = vld [vmem:[%s2 + $0x168] sm:$0xff]
  %v104 = vld [vmem:[%s2 + $0x170] sm:$0xff]
  %v105 = vld [vmem:[%s2 + $0x178] sm:$0xff]
  %v106 = vld [vmem:[%s2 + $0x180] sm:$0xff]
  %v107 = vld [vmem:[%s2 + $0x188] sm:$0xff]
  %v108 = vld [vmem:[%s2 + $0x190] sm:$0xff]
  %v109 = vld [vmem:[%s2 + $0x198] sm:$0xff]
  %v110 = vld [vmem:[%s2 + $0x1a0] sm:$0xff]
  %v111 = vld [vmem:[%s2 + $0x1a8] sm:$0xff]
  %v112 = vld [vmem:[%s2 + $0x1b0] sm:$0xff]
  %v113 = vld [vmem:[%s2 + $0x1b8] sm:$0xff]
  %v114 = vld [vmem:[%s2 + $0x1c0] sm:$0xff]
  %v115 = vld [vmem:[%s2 + $0x1c8] sm:$0xff]
  %v116 = vld [vmem:[%s2 + $0x1d0] sm:$0xff]
  %v117 = vld [vmem:[%s2 + $0x1d8] sm:$0xff]
  %v118 = vld [vmem:[%s2 + $0x1e0] sm:$0xff]
  %v119 = vld [vmem:[%s2 + $0x1e8] sm:$0xff]
  %v120 = vld [vmem:[%s2 + $0x1f0] sm:$0xff]
  %v121 = vld [vmem:[%s2 + $0x1f8] sm:$0xff]
  %v122 = vld [vmem:[%s2 + $0x200] sm:$0xff]
  %v123 = vld [vmem:[%s2 + $0x208] sm:$0xff]
  %v124 = vld [vmem:[%s2 + $0x210] sm:$0xff]
  %v125 = vld [vmem:[%s2 + $0x218] sm:$0xff]
  %v126 = vld [vmem:[%s2 + $0x220] sm:$0xff]
  %v127 = vld [vmem:[%s2 + $0x228] sm:$0xff]
  %v128 = vld [vmem:[%s2 + $0x230] sm:$0xff]
  %v129 = vld [vmem:[%s2 + $0x238] sm:$0xff]
  %v130 = vld [vmem:[%s2 + $0x240] sm:$0xff]
  %v131 = vld [vmem:[%s2 + $0x248] sm:$0xff]
  %v132 = vld [vmem:[%s2 + $0x250] sm:$0xff]
  %v133 = vld [vmem:[%s2 + $0x258] sm:$0xff]
  %v134 = vld [vmem:[%s2 + $0x260] sm:$0xff]
  %v135 = vld [vmem:[%s2 + $0x268] sm:$0xff]
  %v136 = vld [vmem:[%s2 + $0x270] sm:$0xff]
  %v137 = vld [vmem:[%s2 + $0x278] sm:$0xff]
  %v138 = vld [vmem:[%s2 + $0x280] sm:$0xff]
  %v139 = vld [vmem:[%s2 + $0x288] sm:$0xff]
  %v140 = vld [vmem:[%s2 + $0x290] sm:$0xff]
  %v141 = vld [vmem:[%s2 + $0x298] sm:$0xff]
  %v142 = vld [vmem:[%s2 + $0x2a0] sm:$0xff]
  %v143 = vld [vmem:[%s2 + $0x2a8] sm:$0xff]
  %v144 = vld [vmem:[%s2 + $0x2b0] sm:$0xff]
  %v145 = vld [vmem:[%s2 + $0x2b8] sm:$0xff]
  %v146 = vld [vmem:[%s2 + $0x2c0] sm:$0xff]
  %v147 = vld [vmem:[%s2 + $0x2c8] sm:$0xff]
  %v148 = vld [vmem:[%s2 + $0x2d0] sm:$0xff]
  %v149 = vld [vmem:[%s2 + $0x2d8] sm:$0xff]
  %v150 = vld [vmem:[%s2 + $0x2e0] sm:$0xff]
  %v151 = vld [vmem:[%s2 + $0x2e8] sm:$0xff]
  %v152 = vld [vmem:[%s2 + $0x2f0] sm:$0xff]
  %v153 = vld [vmem:[%s2 + $0x2f8] sm:$0xff]
  %v154 = vld [vmem:[%s2 + $0x300] sm:$0xff]
  %v155 = vld [vmem:[%s2 + $0x308] sm:$0xff]
  %v156 = vld [vmem:[%s2 + $0x310] sm:$0xff]
  %v157 = vld [vmem:[%s2 + $0x318] sm:$0xff]
  %v158 = vld [vmem:[%s2 + $0x320] sm:$0xff]
  %v159 = vld [vmem:[%s2 + $0x328] sm:$0xff]
  %v160 = vld [vmem:[%s2 + $0x330] sm:$0xff]
  %v161 = vld [vmem:[%s2 + $0x338] sm:$0xff]
  %v162 = vld [vmem:[%s2 + $0x340] sm:$0xff]
  %v163 = vld [vmem:[%s2 + $0x348] sm:$0xff]
  %v164 = vld [vmem:[%s2 + $0x350] sm:$0xff]
  %v165 = vld [vmem:[%s2 + $0x358] sm:$0xff]
  %v166 = vld [vmem:[%s2 + $0x360] sm:$0xff]
  %v167 = vld [vmem:[%s2 + $0x368] sm:$0xff]
  %v168 = vld [vmem:[%s2 + $0x370] sm:$0xff]
  %v169 = vld [vmem:[%s2 + $0x378] sm:$0xff]
  %v170 = vld [vmem:[%s2 + $0x380] sm:$0xff]
  %v171 = vld [vmem:[%s2 + $0x388] sm:$0xff]
  %v172 = vld [vmem:[%s2 + $0x390] sm:$0xff]
  %v173 = vld [vmem:[%s2 + $0x398] sm:$0xff]
  %v174 = vld [vmem:[%s2 + $0x3a0] sm:$0xff]
  %v175 = vld [vmem:[%s2 + $0x3a8] sm:$0xff]
  %v176 = vld [vmem:[%s2 + $0x3b0] sm:$0xff]
  %v177 = vld [vmem:[%s2 + $0x3b8] sm:$0xff]
  %v178 = vld [vmem:[%s2 + $0x3c0] sm:$0xff]
  %v179 = vld [vmem:[%s2 + $0x3c8] sm:$0xff]
  %v180 = vld [vmem:[%s2 + $0x3d0] sm:$0xff]
  %v181 = vld [vmem:[%s2 + $0x3d8] sm:$0xff]
  %v182 = vld [vmem:[%s2 + $0x3e0] sm:$0xff]
  %v183 = vld [vmem:[%s2 + $0x3e8] sm:$0xff]
  %v184 = vld [vmem:[%s2 + $0x3f0] sm:$0xff]
  %v185 = vld [vmem:[%s2 + $0x3f8] sm:$0xff]
  %v186 = vld [vmem:[%s3] sm:$0x1]
  %v188 = vlaneseq
  %v189 = vshrl.u32 %v188, 7
  %v190 = vsub.s32 0, %v189
  %v191 = vrot.slane %v186, %v190
  %193 = vmatprep.subr.mxu0 0.0
  %194 = vmatpush1.msra.mxu0 %v58
  %195 = vmatprep.subr.mxu0 0.0
  %196 = vmatpush1.msra.mxu0 %v59
  %197 = vmatprep.subr.mxu0 0.0
  %198 = vmatpush1.msra.mxu0 %v60
  %199 = vmatprep.subr.mxu0 0.0
  %200 = vmatpush1.msra.mxu0 %v61
  %201 = vmatprep.subr.mxu0 0.0
  %202 = vmatpush1.msra.mxu0 %v62
  %203 = vmatprep.subr.mxu0 0.0
  %204 = vmatpush1.msra.mxu0 %v63
  %205 = vmatprep.subr.mxu0 0.0
  %206 = vmatpush1.msra.mxu0 %v64
  %207 = vmatprep.subr.mxu0 0.0
  %208 = vmatpush1.msra.mxu0 %v65
  %209 = vmatprep.subr.mxu0 0.0
  %210 = vmatpush1.msra.mxu0 %v66
  %211 = vmatprep.subr.mxu0 0.0
  %212 = vmatpush1.msra.mxu0 %v67
  %213 = vmatprep.subr.mxu0 0.0
  %214 = vmatpush1.msra.mxu0 %v68
  %215 = vmatprep.subr.mxu0 0.0
  %216 = vmatpush1.msra.mxu0 %v69
  %217 = vmatprep.subr.mxu0 0.0
  %218 = vmatpush1.msra.mxu0 %v70
  %219 = vmatprep.subr.mxu0 0.0
  %220 = vmatpush1.msra.mxu0 %v71
  %221 = vmatprep.subr.mxu0 0.0
  %222 = vmatpush1.msra.mxu0 %v72
  %223 = vmatprep.subr.mxu0 0.0
  %224 = vmatpush1.msra.mxu0 %v73
  %225 = vmatprep.subr.mxu0 0.0
  %226 = vmatpush1.msra.mxu0 %v74
  %227 = vmatprep.subr.mxu0 0.0
  %228 = vmatpush1.msra.mxu0 %v75
  %229 = vmatprep.subr.mxu0 0.0
  %230 = vmatpush1.msra.mxu0 %v76
  %231 = vmatprep.subr.mxu0 0.0
  %232 = vmatpush1.msra.mxu0 %v77
  %233 = vmatprep.subr.mxu0 0.0
  %234 = vmatpush1.msra.mxu0 %v78
  %235 = vmatprep.subr.mxu0 0.0
  %236 = vmatpush1.msra.mxu0 %v79
  %237 = vmatprep.subr.mxu0 0.0
  %238 = vmatpush1.msra.mxu0 %v80
  %239 = vmatprep.subr.mxu0 0.0
  %240 = vmatpush1.msra.mxu0 %v81
  %241 = vmatprep.subr.mxu0 0.0
  %242 = vmatpush1.msra.mxu0 %v82
  %243 = vmatprep.subr.mxu0 0.0
  %244 = vmatpush1.msra.mxu0 %v83
  %245 = vmatprep.subr.mxu0 0.0
  %246 = vmatpush1.msra.mxu0 %v84
  %247 = vmatprep.subr.mxu0 0.0
  %248 = vmatpush1.msra.mxu0 %v85
  %249 = vmatprep.subr.mxu0 0.0
  %250 = vmatpush1.msra.mxu0 %v86
  %251 = vmatprep.subr.mxu0 0.0
  %252 = vmatpush1.msra.mxu0 %v87
  %253 = vmatprep.subr.mxu0 0.0
  %254 = vmatpush1.msra.mxu0 %v88
  %255 = vmatprep.subr.mxu0 0.0
  %256 = vmatpush1.msra.mxu0 %v89
  %257 = vmatprep.mubr.f32.mxu0 %v51
  %258 = vmatmul.mubr.f32.gmra.mrb[0].mxu0 %v50
  %v259 = vpop.f32.mrb[0].mxu0
  %v260 = vadd.f32 %v191, %v259
  %v261 = vpop.f32.mrb[0].mxu0
  %262 = vdwg.mxu0
  %263 = vmatprep.subr.mxu0 0.0
  %264 = vmatpush1.msra.mxu0 %v90
  %265 = vmatprep.subr.mxu0 0.0
  %266 = vmatpush1.msra.mxu0 %v91
  %267 = vmatprep.subr.mxu0 0.0
  %268 = vmatpush1.msra.mxu0 %v92
  %269 = vmatprep.subr.mxu0 0.0
  %270 = vmatpush1.msra.mxu0 %v93
  %271 = vmatprep.subr.mxu0 0.0
  %272 = vmatpush1.msra.mxu0 %v94
  %273 = vmatprep.subr.mxu0 0.0
  %274 = vmatpush1.msra.mxu0 %v95
  %275 = vmatprep.subr.mxu0 0.0
  %276 = vmatpush1.msra.mxu0 %v96
  %277 = vmatprep.subr.mxu0 0.0
  %278 = vmatpush1.msra.mxu0 %v97
  %279 = vmatprep.subr.mxu0 0.0
  %280 = vmatpush1.msra.mxu0 %v98
  %281 = vmatprep.subr.mxu0 0.0
  %282 = vmatpush1.msra.mxu0 %v99
  %283 = vmatprep.subr.mxu0 0.0
  %284 = vmatpush1.msra.mxu0 %v100
  %285 = vmatprep.subr.mxu0 0.0
  %286 = vmatpush1.msra.mxu0 %v101
  %287 = vmatprep.subr.mxu0 0.0
  %288 = vmatpush1.msra.mxu0 %v102
  %289 = vmatprep.subr.mxu0 0.0
  %290 = vmatpush1.msra.mxu0 %v103
  %291 = vmatprep.subr.mxu0 0.0
  %292 = vmatpush1.msra.mxu0 %v104
  %293 = vmatprep.subr.mxu0 0.0
  %294 = vmatpush1.msra.mxu0 %v105
  %295 = vmatprep.subr.mxu0 0.0
  %296 = vmatpush1.msra.mxu0 %v106
  %297 = vmatprep.subr.mxu0 0.0
  %298 = vmatpush1.msra.mxu0 %v107
  %299 = vmatprep.subr.mxu0 0.0
  %300 = vmatpush1.msra.mxu0 %v108
  %301 = vmatprep.subr.mxu0 0.0
  %302 = vmatpush1.msra.mxu0 %v109
  %303 = vmatprep.subr.mxu0 0.0
  %304 = vmatpush1.msra.mxu0 %v110
  %305 = vmatprep.subr.mxu0 0.0
  %306 = vmatpush1.msra.mxu0 %v111
  %307 = vmatprep.subr.mxu0 0.0
  %308 = vmatpush1.msra.mxu0 %v112
  %309 = vmatprep.subr.mxu0 0.0
  %310 = vmatpush1.msra.mxu0 %v113
  %311 = vmatprep.subr.mxu0 0.0
  %312 = vmatpush1.msra.mxu0 %v114
  %313 = vmatprep.subr.mxu0 0.0
  %314 = vmatpush1.msra.mxu0 %v115
  %315 = vmatprep.subr.mxu0 0.0
  %316 = vmatpush1.msra.mxu0 %v116
  %317 = vmatprep.subr.mxu0 0.0
  %318 = vmatpush1.msra.mxu0 %v117
  %319 = vmatprep.subr.mxu0 0.0
  %320 = vmatpush1.msra.mxu0 %v118
  %321 = vmatprep.subr.mxu0 0.0
  %322 = vmatpush1.msra.mxu0 %v119
  %323 = vmatprep.subr.mxu0 0.0
  %324 = vmatpush1.msra.mxu0 %v120
  %325 = vmatprep.subr.mxu0 0.0
  %326 = vmatpush1.msra.mxu0 %v121
  %327 = vmatprep.mubr.f32.mxu0 %v53
  %328 = vmatmul.mubr.f32.gmra.mrb[0].mxu0 %v52
  %v329 = vpop.f32.mrb[0].mxu0
  %v330 = vadd.f32 %v260, %v329
  %v331 = vpop.f32.mrb[0].mxu0
  %332 = vdwg.mxu0
  %333 = vmatprep.subr.mxu0 0.0
  %334 = vmatpush1.msra.mxu0 %v122
  %335 = vmatprep.subr.mxu0 0.0
  %336 = vmatpush1.msra.mxu0 %v123
  %337 = vmatprep.subr.mxu0 0.0
  %338 = vmatpush1.msra.mxu0 %v124
  %339 = vmatprep.subr.mxu0 0.0
  %340 = vmatpush1.msra.mxu0 %v125
  %341 = vmatprep.subr.mxu0 0.0
  %342 = vmatpush1.msra.mxu0 %v126
  %343 = vmatprep.subr.mxu0 0.0
  %344 = vmatpush1.msra.mxu0 %v127
  %345 = vmatprep.subr.mxu0 0.0
  %346 = vmatpush1.msra.mxu0 %v128
  %347 = vmatprep.subr.mxu0 0.0
  %348 = vmatpush1.msra.mxu0 %v129
  %349 = vmatprep.subr.mxu0 0.0
  %350 = vmatpush1.msra.mxu0 %v130
  %351 = vmatprep.subr.mxu0 0.0
  %352 = vmatpush1.msra.mxu0 %v131
  %353 = vmatprep.subr.mxu0 0.0
  %354 = vmatpush1.msra.mxu0 %v132
  %355 = vmatprep.subr.mxu0 0.0
  %356 = vmatpush1.msra.mxu0 %v133
  %357 = vmatprep.subr.mxu0 0.0
  %358 = vmatpush1.msra.mxu0 %v134
  %359 = vmatprep.subr.mxu0 0.0
  %360 = vmatpush1.msra.mxu0 %v135
  %361 = vmatprep.subr.mxu0 0.0
  %362 = vmatpush1.msra.mxu0 %v136
  %363 = vmatprep.subr.mxu0 0.0
  %364 = vmatpush1.msra.mxu0 %v137
  %365 = vmatprep.subr.mxu0 0.0
  %366 = vmatpush1.msra.mxu0 %v138
  %367 = vmatprep.subr.mxu0 0.0
  %368 = vmatpush1.msra.mxu0 %v139
  %369 = vmatprep.subr.mxu0 0.0
  %370 = vmatpush1.msra.mxu0 %v140
  %371 = vmatprep.subr.mxu0 0.0
  %372 = vmatpush1.msra.mxu0 %v141
  %373 = vmatprep.subr.mxu0 0.0
  %374 = vmatpush1.msra.mxu0 %v142
  %375 = vmatprep.subr.mxu0 0.0
  %376 = vmatpush1.msra.mxu0 %v143
  %377 = vmatprep.subr.mxu0 0.0
  %378 = vmatpush1.msra.mxu0 %v144
  %379 = vmatprep.subr.mxu0 0.0
  %380 = vmatpush1.msra.mxu0 %v145
  %381 = vmatprep.subr.mxu0 0.0
  %382 = vmatpush1.msra.mxu0 %v146
  %383 = vmatprep.subr.mxu0 0.0
  %384 = vmatpush1.msra.mxu0 %v147
  %385 = vmatprep.subr.mxu0 0.0
  %386 = vmatpush1.msra.mxu0 %v148
  %387 = vmatprep.subr.mxu0 0.0
  %388 = vmatpush1.msra.mxu0 %v149
  %389 = vmatprep.subr.mxu0 0.0
  %390 = vmatpush1.msra.mxu0 %v150
  %391 = vmatprep.subr.mxu0 0.0
  %392 = vmatpush1.msra.mxu0 %v151
  %393 = vmatprep.subr.mxu0 0.0
  %394 = vmatpush1.msra.mxu0 %v152
  %395 = vmatprep.subr.mxu0 0.0
  %396 = vmatpush1.msra.mxu0 %v153
  %397 = vmatprep.mubr.f32.mxu0 %v55
  %398 = vmatmul.mubr.f32.gmra.mrb[0].mxu0 %v54
  %v399 = vpop.f32.mrb[0].mxu0
  %v400 = vadd.f32 %v330, %v399
  %v401 = vpop.f32.mrb[0].mxu0
  %402 = vdwg.mxu0
  %403 = vmatprep.subr.mxu0 0.0
  %404 = vmatpush1.msra.mxu0 %v154
  %405 = vmatprep.subr.mxu0 0.0
  %406 = vmatpush1.msra.mxu0 %v155
  %407 = vmatprep.subr.mxu0 0.0
  %408 = vmatpush1.msra.mxu0 %v156
  %409 = vmatprep.subr.mxu0 0.0
  %410 = vmatpush1.msra.mxu0 %v157
  %411 = vmatprep.subr.mxu0 0.0
  %412 = vmatpush1.msra.mxu0 %v158
  %413 = vmatprep.subr.mxu0 0.0
  %414 = vmatpush1.msra.mxu0 %v159
  %415 = vmatprep.subr.mxu0 0.0
  %416 = vmatpush1.msra.mxu0 %v160
  %417 = vmatprep.subr.mxu0 0.0
  %418 = vmatpush1.msra.mxu0 %v161
  %419 = vmatprep.subr.mxu0 0.0
  %420 = vmatpush1.msra.mxu0 %v162
  %421 = vmatprep.subr.mxu0 0.0
  %422 = vmatpush1.msra.mxu0 %v163
  %423 = vmatprep.subr.mxu0 0.0
  %424 = vmatpush1.msra.mxu0 %v164
  %425 = vmatprep.subr.mxu0 0.0
  %426 = vmatpush1.msra.mxu0 %v165
  %427 = vmatprep.subr.mxu0 0.0
  %428 = vmatpush1.msra.mxu0 %v166
  %429 = vmatprep.subr.mxu0 0.0
  %430 = vmatpush1.msra.mxu0 %v167
  %431 = vmatprep.subr.mxu0 0.0
  %432 = vmatpush1.msra.mxu0 %v168
  %433 = vmatprep.subr.mxu0 0.0
  %434 = vmatpush1.msra.mxu0 %v169
  %435 = vmatprep.subr.mxu0 0.0
  %436 = vmatpush1.msra.mxu0 %v170
  %437 = vmatprep.subr.mxu0 0.0
  %438 = vmatpush1.msra.mxu0 %v171
  %439 = vmatprep.subr.mxu0 0.0
  %440 = vmatpush1.msra.mxu0 %v172
  %441 = vmatprep.subr.mxu0 0.0
  %442 = vmatpush1.msra.mxu0 %v173
  %443 = vmatprep.subr.mxu0 0.0
  %444 = vmatpush1.msra.mxu0 %v174
  %445 = vmatprep.subr.mxu0 0.0
  %446 = vmatpush1.msra.mxu0 %v175
  %447 = vmatprep.subr.mxu0 0.0
  %448 = vmatpush1.msra.mxu0 %v176
  %449 = vmatprep.subr.mxu0 0.0
  %450 = vmatpush1.msra.mxu0 %v177
  %451 = vmatprep.subr.mxu0 0.0
  %452 = vmatpush1.msra.mxu0 %v178
  %453 = vmatprep.subr.mxu0 0.0
  %454 = vmatpush1.msra.mxu0 %v179
  %455 = vmatprep.subr.mxu0 0.0
  %456 = vmatpush1.msra.mxu0 %v180
  %457 = vmatprep.subr.mxu0 0.0
  %458 = vmatpush1.msra.mxu0 %v181
  %459 = vmatprep.subr.mxu0 0.0
  %460 = vmatpush1.msra.mxu0 %v182
  %461 = vmatprep.subr.mxu0 0.0
  %462 = vmatpush1.msra.mxu0 %v183
  %463 = vmatprep.subr.mxu0 0.0
  %464 = vmatpush1.msra.mxu0 %v184
  %465 = vmatprep.subr.mxu0 0.0
  %466 = vmatpush1.msra.mxu0 %v185
  %467 = vmatprep.mubr.f32.mxu0 %v57
  %468 = vmatmul.mubr.f32.gmra.mrb[0].mxu0 %v56
  %v469 = vpop.f32.mrb[0].mxu0
  %v470 = vadd.f32 %v400, %v469
  %v471 = vpop.f32.mrb[0].mxu0
  %472 = vdwg.mxu0
  %v473 = vmax.f32 %v470, 0.0
  %v474 = vld [vmem:[%s1] sm:$0xff]
  %v475 = vld [vmem:[%s1 + $0x8] sm:$0xff]
  %v476 = vld [vmem:[%s1 + $0x10] sm:$0xff]
  %v477 = vld [vmem:[%s1 + $0x18] sm:$0xff]
  %v478 = vld [vmem:[%s1 + $0x20] sm:$0xff]
  %v479 = vld [vmem:[%s1 + $0x28] sm:$0xff]
  %v480 = vld [vmem:[%s1 + $0x30] sm:$0xff]
  %v481 = vld [vmem:[%s1 + $0x38] sm:$0xff]
  %v482 = vld [vmem:[%s4] sm:$0xff]
  %v483 = vld [vmem:[%s4 + $0x8] sm:$0xff]
  %v484 = vld [vmem:[%s4 + $0x10] sm:$0xff]
  %v485 = vld [vmem:[%s4 + $0x18] sm:$0xff]
  %v486 = vld [vmem:[%s4 + $0x20] sm:$0xff]
  %v487 = vld [vmem:[%s4 + $0x28] sm:$0xff]
  %v488 = vld [vmem:[%s4 + $0x30] sm:$0xff]
  %v489 = vld [vmem:[%s4 + $0x38] sm:$0xff]
  %v490 = vld [vmem:[%s4 + $0x40] sm:$0xff]
  %v491 = vld [vmem:[%s4 + $0x48] sm:$0xff]
  %v492 = vld [vmem:[%s4 + $0x50] sm:$0xff]
  %v493 = vld [vmem:[%s4 + $0x58] sm:$0xff]
  %v494 = vld [vmem:[%s4 + $0x60] sm:$0xff]
  %v495 = vld [vmem:[%s4 + $0x68] sm:$0xff]
  %v496 = vld [vmem:[%s4 + $0x70] sm:$0xff]
  %v497 = vld [vmem:[%s4 + $0x78] sm:$0xff]
  %v498 = vld [vmem:[%s4 + $0x80] sm:$0xff]
  %v499 = vld [vmem:[%s4 + $0x88] sm:$0xff]
  %v500 = vld [vmem:[%s4 + $0x90] sm:$0xff]
  %v501 = vld [vmem:[%s4 + $0x98] sm:$0xff]
  %v502 = vld [vmem:[%s4 + $0xa0] sm:$0xff]
  %v503 = vld [vmem:[%s4 + $0xa8] sm:$0xff]
  %v504 = vld [vmem:[%s4 + $0xb0] sm:$0xff]
  %v505 = vld [vmem:[%s4 + $0xb8] sm:$0xff]
  %v506 = vld [vmem:[%s4 + $0xc0] sm:$0xff]
  %v507 = vld [vmem:[%s4 + $0xc8] sm:$0xff]
  %v508 = vld [vmem:[%s4 + $0xd0] sm:$0xff]
  %v509 = vld [vmem:[%s4 + $0xd8] sm:$0xff]
  %v510 = vld [vmem:[%s4 + $0xe0] sm:$0xff]
  %v511 = vld [vmem:[%s4 + $0xe8] sm:$0xff]
  %v512 = vld [vmem:[%s4 + $0xf0] sm:$0xff]
  %v513 = vld [vmem:[%s4 + $0xf8] sm:$0xff]
  %v514 = vld [vmem:[%s4 + $0x100] sm:$0xff]
  %v515 = vld [vmem:[%s4 + $0x108] sm:$0xff]
  %v516 = vld [vmem:[%s4 + $0x110] sm:$0xff]
  %v517 = vld [vmem:[%s4 + $0x118] sm:$0xff]
  %v518 = vld [vmem:[%s4 + $0x120] sm:$0xff]
  %v519 = vld [vmem:[%s4 + $0x128] sm:$0xff]
  %v520 = vld [vmem:[%s4 + $0x130] sm:$0xff]
  %v521 = vld [vmem:[%s4 + $0x138] sm:$0xff]
  %v522 = vld [vmem:[%s4 + $0x140] sm:$0xff]
  %v523 = vld [vmem:[%s4 + $0x148] sm:$0xff]
  %v524 = vld [vmem:[%s4 + $0x150] sm:$0xff]
  %v525 = vld [vmem:[%s4 + $0x158] sm:$0xff]
  %v526 = vld [vmem:[%s4 + $0x160] sm:$0xff]
  %v527 = vld [vmem:[%s4 + $0x168] sm:$0xff]
  %v528 = vld [vmem:[%s4 + $0x170] sm:$0xff]
  %v529 = vld [vmem:[%s4 + $0x178] sm:$0xff]
  %v530 = vld [vmem:[%s4 + $0x180] sm:$0xff]
  %v531 = vld [vmem:[%s4 + $0x188] sm:$0xff]
  %v532 = vld [vmem:[%s4 + $0x190] sm:$0xff]
  %v533 = vld [vmem:[%s4 + $0x198] sm:$0xff]
  %v534 = vld [vmem:[%s4 + $0x1a0] sm:$0xff]
  %v535 = vld [vmem:[%s4 + $0x1a8] sm:$0xff]
  %v536 = vld [vmem:[%s4 + $0x1b0] sm:$0xff]
  %v537 = vld [vmem:[%s4 + $0x1b8] sm:$0xff]
  %v538 = vld [vmem:[%s4 + $0x1c0] sm:$0xff]
  %v539 = vld [vmem:[%s4 + $0x1c8] sm:$0xff]
  %v540 = vld [vmem:[%s4 + $0x1d0] sm:$0xff]
  %v541 = vld [vmem:[%s4 + $0x1d8] sm:$0xff]
  %v542 = vld [vmem:[%s4 + $0x1e0] sm:$0xff]
  %v543 = vld [vmem:[%s4 + $0x1e8] sm:$0xff]
  %v544 = vld [vmem:[%s4 + $0x1f0] sm:$0xff]
  %v545 = vld [vmem:[%s4 + $0x1f8] sm:$0xff]
  %v546 = vld [vmem:[%s4 + $0x200] sm:$0xff]
  %v547 = vld [vmem:[%s4 + $0x208] sm:$0xff]
  %v548 = vld [vmem:[%s4 + $0x210] sm:$0xff]
  %v549 = vld [vmem:[%s4 + $0x218] sm:$0xff]
  %v550 = vld [vmem:[%s4 + $0x220] sm:$0xff]
  %v551 = vld [vmem:[%s4 + $0x228] sm:$0xff]
  %v552 = vld [vmem:[%s4 + $0x230] sm:$0xff]
  %v553 = vld [vmem:[%s4 + $0x238] sm:$0xff]
  %v554 = vld [vmem:[%s4 + $0x240] sm:$0xff]
  %v555 = vld [vmem:[%s4 + $0x248] sm:$0xff]
  %v556 = vld [vmem:[%s4 + $0x250] sm:$0xff]
  %v557 = vld [vmem:[%s4 + $0x258] sm:$0xff]
  %v558 = vld [vmem:[%s4 + $0x260] sm:$0xff]
  %v559 = vld [vmem:[%s4 + $0x268] sm:$0xff]
  %v560 = vld [vmem:[%s4 + $0x270] sm:$0xff]
  %v561 = vld [vmem:[%s4 + $0x278] sm:$0xff]
  %v562 = vld [vmem:[%s4 + $0x280] sm:$0xff]
  %v563 = vld [vmem:[%s4 + $0x288] sm:$0xff]
  %v564 = vld [vmem:[%s4 + $0x290] sm:$0xff]
  %v565 = vld [vmem:[%s4 + $0x298] sm:$0xff]
  %v566 = vld [vmem:[%s4 + $0x2a0] sm:$0xff]
  %v567 = vld [vmem:[%s4 + $0x2a8] sm:$0xff]
  %v568 = vld [vmem:[%s4 + $0x2b0] sm:$0xff]
  %v569 = vld [vmem:[%s4 + $0x2b8] sm:$0xff]
  %v570 = vld [vmem:[%s4 + $0x2c0] sm:$0xff]
  %v571 = vld [vmem:[%s4 + $0x2c8] sm:$0xff]
  %v572 = vld [vmem:[%s4 + $0x2d0] sm:$0xff]
  %v573 = vld [vmem:[%s4 + $0x2d8] sm:$0xff]
  %v574 = vld [vmem:[%s4 + $0x2e0] sm:$0xff]
  %v575 = vld [vmem:[%s4 + $0x2e8] sm:$0xff]
  %v576 = vld [vmem:[%s4 + $0x2f0] sm:$0xff]
  %v577 = vld [vmem:[%s4 + $0x2f8] sm:$0xff]
  %v578 = vld [vmem:[%s4 + $0x300] sm:$0xff]
  %v579 = vld [vmem:[%s4 + $0x308] sm:$0xff]
  %v580 = vld [vmem:[%s4 + $0x310] sm:$0xff]
  %v581 = vld [vmem:[%s4 + $0x318] sm:$0xff]
  %v582 = vld [vmem:[%s4 + $0x320] sm:$0xff]
  %v583 = vld [vmem:[%s4 + $0x328] sm:$0xff]
  %v584 = vld [vmem:[%s4 + $0x330] sm:$0xff]
  %v585 = vld [vmem:[%s4 + $0x338] sm:$0xff]
  %v586 = vld [vmem:[%s4 + $0x340] sm:$0xff]
  %v587 = vld [vmem:[%s4 + $0x348] sm:$0xff]
  %v588 = vld [vmem:[%s4 + $0x350] sm:$0xff]
  %v589 = vld [vmem:[%s4 + $0x358] sm:$0xff]
  %v590 = vld [vmem:[%s4 + $0x360] sm:$0xff]
  %v591 = vld [vmem:[%s4 + $0x368] sm:$0xff]
  %v592 = vld [vmem:[%s4 + $0x370] sm:$0xff]
  %v593 = vld [vmem:[%s4 + $0x378] sm:$0xff]
  %v594 = vld [vmem:[%s4 + $0x380] sm:$0xff]
  %v595 = vld [vmem:[%s4 + $0x388] sm:$0xff]
  %v596 = vld [vmem:[%s4 + $0x390] sm:$0xff]
  %v597 = vld [vmem:[%s4 + $0x398] sm:$0xff]
  %v598 = vld [vmem:[%s4 + $0x3a0] sm:$0xff]
  %v599 = vld [vmem:[%s4 + $0x3a8] sm:$0xff]
  %v600 = vld [vmem:[%s4 + $0x3b0] sm:$0xff]
  %v601 = vld [vmem:[%s4 + $0x3b8] sm:$0xff]
  %v602 = vld [vmem:[%s4 + $0x3c0] sm:$0xff]
  %v603 = vld [vmem:[%s4 + $0x3c8] sm:$0xff]
  %v604 = vld [vmem:[%s4 + $0x3d0] sm:$0xff]
  %v605 = vld [vmem:[%s4 + $0x3d8] sm:$0xff]
  %v606 = vld [vmem:[%s4 + $0x3e0] sm:$0xff]
  %v607 = vld [vmem:[%s4 + $0x3e8] sm:$0xff]
  %v608 = vld [vmem:[%s4 + $0x3f0] sm:$0xff]
  %v609 = vld [vmem:[%s4 + $0x3f8] sm:$0xff]
  %v610 = vld [vmem:[%s5] sm:$0x1]
  %v612 = vlaneseq
  %v613 = vshrl.u32 %v612, 7
  %v614 = vsub.s32 0, %v613
  %v615 = vrot.slane %v610, %v614
  %617 = vmatprep.subr.mxu0 0.0
  %618 = vmatpush1.msra.mxu0 %v482
  %619 = vmatprep.subr.mxu0 0.0
  %620 = vmatpush1.msra.mxu0 %v483
  %621 = vmatprep.subr.mxu0 0.0
  %622 = vmatpush1.msra.mxu0 %v484
  %623 = vmatprep.subr.mxu0 0.0
  %624 = vmatpush1.msra.mxu0 %v485
  %625 = vmatprep.subr.mxu0 0.0
  %626 = vmatpush1.msra.mxu0 %v486
  %627 = vmatprep.subr.mxu0 0.0
  %628 = vmatpush1.msra.mxu0 %v487
  %629 = vmatprep.subr.mxu0 0.0
  %630 = vmatpush1.msra.mxu0 %v488
  %631 = vmatprep.subr.mxu0 0.0
  %632 = vmatpush1.msra.mxu0 %v489
  %633 = vmatprep.subr.mxu0 0.0
  %634 = vmatpush1.msra.mxu0 %v490
  %635 = vmatprep.subr.mxu0 0.0
  %636 = vmatpush1.msra.mxu0 %v491
  %637 = vmatprep.subr.mxu0 0.0
  %638 = vmatpush1.msra.mxu0 %v492
  %639 = vmatprep.subr.mxu0 0.0
  %640 = vmatpush1.msra.mxu0 %v493
  %641 = vmatprep.subr.mxu0 0.0
  %642 = vmatpush1.msra.mxu0 %v494
  %643 = vmatprep.subr.mxu0 0.0
  %644 = vmatpush1.msra.mxu0 %v495
  %645 = vmatprep.subr.mxu0 0.0
  %646 = vmatpush1.msra.mxu0 %v496
  %647 = vmatprep.subr.mxu0 0.0
  %648 = vmatpush1.msra.mxu0 %v497
  %649 = vmatprep.subr.mxu0 0.0
  %650 = vmatpush1.msra.mxu0 %v498
  %651 = vmatprep.subr.mxu0 0.0
  %652 = vmatpush1.msra.mxu0 %v499
  %653 = vmatprep.subr.mxu0 0.0
  %654 = vmatpush1.msra.mxu0 %v500
  %655 = vmatprep.subr.mxu0 0.0
  %656 = vmatpush1.msra.mxu0 %v501
  %657 = vmatprep.subr.mxu0 0.0
  %658 = vmatpush1.msra.mxu0 %v502
  %659 = vmatprep.subr.mxu0 0.0
  %660 = vmatpush1.msra.mxu0 %v503
  %661 = vmatprep.subr.mxu0 0.0
  %662 = vmatpush1.msra.mxu0 %v504
  %663 = vmatprep.subr.mxu0 0.0
  %664 = vmatpush1.msra.mxu0 %v505
  %665 = vmatprep.subr.mxu0 0.0
  %666 = vmatpush1.msra.mxu0 %v506
  %667 = vmatprep.subr.mxu0 0.0
  %668 = vmatpush1.msra.mxu0 %v507
  %669 = vmatprep.subr.mxu0 0.0
  %670 = vmatpush1.msra.mxu0 %v508
  %671 = vmatprep.subr.mxu0 0.0
  %672 = vmatpush1.msra.mxu0 %v509
  %673 = vmatprep.subr.mxu0 0.0
  %674 = vmatpush1.msra.mxu0 %v510
  %675 = vmatprep.subr.mxu0 0.0
  %676 = vmatpush1.msra.mxu0 %v511
  %677 = vmatprep.subr.mxu0 0.0
  %678 = vmatpush1.msra.mxu0 %v512
  %679 = vmatprep.subr.mxu0 0.0
  %680 = vmatpush1.msra.mxu0 %v513
  %681 = vmatprep.mubr.f32.mxu0 %v475
  %682 = vmatmul.mubr.f32.gmra.mrb[0].mxu0 %v474
  %v683 = vpop.f32.mrb[0].mxu0
  %v684 = vadd.f32 %v615, %v683
  %v685 = vpop.f32.mrb[0].mxu0
  %686 = vdwg.mxu0
  %687 = vmatprep.subr.mxu0 0.0
  %688 = vmatpush1.msra.mxu0 %v514
  %689 = vmatprep.subr.mxu0 0.0
  %690 = vmatpush1.msra.mxu0 %v515
  %691 = vmatprep.subr.mxu0 0.0
  %692 = vmatpush1.msra.mxu0 %v516
  %693 = vmatprep.subr.mxu0 0.0
  %694 = vmatpush1.msra.mxu0 %v517
  %695 = vmatprep.subr.mxu0 0.0
  %696 = vmatpush1.msra.mxu0 %v518
  %697 = vmatprep.subr.mxu0 0.0
  %698 = vmatpush1.msra.mxu0 %v519
  %699 = vmatprep.subr.mxu0 0.0
  %700 = vmatpush1.msra.mxu0 %v520
  %701 = vmatprep.subr.mxu0 0.0
  %702 = vmatpush1.msra.mxu0 %v521
  %703 = vmatprep.subr.mxu0 0.0
  %704 = vmatpush1.msra.mxu0 %v522
  %705 = vmatprep.subr.mxu0 0.0
  %706 = vmatpush1.msra.mxu0 %v523
  %707 = vmatprep.subr.mxu0 0.0
  %708 = vmatpush1.msra.mxu0 %v524
  %709 = vmatprep.subr.mxu0 0.0
  %710 = vmatpush1.msra.mxu0 %v525
  %711 = vmatprep.subr.mxu0 0.0
  %712 = vmatpush1.msra.mxu0 %v526
  %713 = vmatprep.subr.mxu0 0.0
  %714 = vmatpush1.msra.mxu0 %v527
  %715 = vmatprep.subr.mxu0 0.0
  %716 = vmatpush1.msra.mxu0 %v528
  %717 = vmatprep.subr.mxu0 0.0
  %718 = vmatpush1.msra.mxu0 %v529
  %719 = vmatprep.subr.mxu0 0.0
  %720 = vmatpush1.msra.mxu0 %v530
  %721 = vmatprep.subr.mxu0 0.0
  %722 = vmatpush1.msra.mxu0 %v531
  %723 = vmatprep.subr.mxu0 0.0
  %724 = vmatpush1.msra.mxu0 %v532
  %725 = vmatprep.subr.mxu0 0.0
  %726 = vmatpush1.msra.mxu0 %v533
  %727 = vmatprep.subr.mxu0 0.0
  %728 = vmatpush1.msra.mxu0 %v534
  %729 = vmatprep.subr.mxu0 0.0
  %730 = vmatpush1.msra.mxu0 %v535
  %731 = vmatprep.subr.mxu0 0.0
  %732 = vmatpush1.msra.mxu0 %v536
  %733 = vmatprep.subr.mxu0 0.0
  %734 = vmatpush1.msra.mxu0 %v537
  %735 = vmatprep.subr.mxu0 0.0
  %736 = vmatpush1.msra.mxu0 %v538
  %737 = vmatprep.subr.mxu0 0.0
  %738 = vmatpush1.msra.mxu0 %v539
  %739 = vmatprep.subr.mxu0 0.0
  %740 = vmatpush1.msra.mxu0 %v540
  %741 = vmatprep.subr.mxu0 0.0
  %742 = vmatpush1.msra.mxu0 %v541
  %743 = vmatprep.subr.mxu0 0.0
  %744 = vmatpush1.msra.mxu0 %v542
  %745 = vmatprep.subr.mxu0 0.0
  %746 = vmatpush1.msra.mxu0 %v543
  %747 = vmatprep.subr.mxu0 0.0
  %748 = vmatpush1.msra.mxu0 %v544
  %749 = vmatprep.subr.mxu0 0.0
  %750 = vmatpush1.msra.mxu0 %v545
  %751 = vmatprep.mubr.f32.mxu0 %v477
  %752 = vmatmul.mubr.f32.gmra.mrb[0].mxu0 %v476
  %v753 = vpop.f32.mrb[0].mxu0
  %v754 = vadd.f32 %v684, %v753
  %v755 = vpop.f32.mrb[0].mxu0
  %756 = vdwg.mxu0
  %757 = vmatprep.subr.mxu0 0.0
  %758 = vmatpush1.msra.mxu0 %v546
  %759 = vmatprep.subr.mxu0 0.0
  %760 = vmatpush1.msra.mxu0 %v547
  %761 = vmatprep.subr.mxu0 0.0
  %762 = vmatpush1.msra.mxu0 %v548
  %763 = vmatprep.subr.mxu0 0.0
  %764 = vmatpush1.msra.mxu0 %v549
  %765 = vmatprep.subr.mxu0 0.0
  %766 = vmatpush1.msra.mxu0 %v550
  %767 = vmatprep.subr.mxu0 0.0
  %768 = vmatpush1.msra.mxu0 %v551
  %769 = vmatprep.subr.mxu0 0.0
  %770 = vmatpush1.msra.mxu0 %v552
  %771 = vmatprep.subr.mxu0 0.0
  %772 = vmatpush1.msra.mxu0 %v553
  %773 = vmatprep.subr.mxu0 0.0
  %774 = vmatpush1.msra.mxu0 %v554
  %775 = vmatprep.subr.mxu0 0.0
  %776 = vmatpush1.msra.mxu0 %v555
  %777 = vmatprep.subr.mxu0 0.0
  %778 = vmatpush1.msra.mxu0 %v556
  %779 = vmatprep.subr.mxu0 0.0
  %780 = vmatpush1.msra.mxu0 %v557
  %781 = vmatprep.subr.mxu0 0.0
  %782 = vmatpush1.msra.mxu0 %v558
  %783 = vmatprep.subr.mxu0 0.0
  %784 = vmatpush1.msra.mxu0 %v559
  %785 = vmatprep.subr.mxu0 0.0
  %786 = vmatpush1.msra.mxu0 %v560
  %787 = vmatprep.subr.mxu0 0.0
  %788 = vmatpush1.msra.mxu0 %v561
  %789 = vmatprep.subr.mxu0 0.0
  %790 = vmatpush1.msra.mxu0 %v562
  %791 = vmatprep.subr.mxu0 0.0
  %792 = vmatpush1.msra.mxu0 %v563
  %793 = vmatprep.subr.mxu0 0.0
  %794 = vmatpush1.msra.mxu0 %v564
  %795 = vmatprep.subr.mxu0 0.0
  %796 = vmatpush1.msra.mxu0 %v565
  %797 = vmatprep.subr.mxu0 0.0
  %798 = vmatpush1.msra.mxu0 %v566
  %799 = vmatprep.subr.mxu0 0.0
  %800 = vmatpush1.msra.mxu0 %v567
  %801 = vmatprep.subr.mxu0 0.0
  %802 = vmatpush1.msra.mxu0 %v568
  %803 = vmatprep.subr.mxu0 0.0
  %804 = vmatpush1.msra.mxu0 %v569
  %805 = vmatprep.subr.mxu0 0.0
  %806 = vmatpush1.msra.mxu0 %v570
  %807 = vmatprep.subr.mxu0 0.0
  %808 = vmatpush1.msra.mxu0 %v571
  %809 = vmatprep.subr.mxu0 0.0
  %810 = vmatpush1.msra.mxu0 %v572
  %811 = vmatprep.subr.mxu0 0.0
  %812 = vmatpush1.msra.mxu0 %v573
  %813 = vmatprep.subr.mxu0 0.0
  %814 = vmatpush1.msra.mxu0 %v574
  %815 = vmatprep.subr.mxu0 0.0
  %816 = vmatpush1.msra.mxu0 %v575
  %817 = vmatprep.subr.mxu0 0.0
  %818 = vmatpush1.msra.mxu0 %v576
  %819 = vmatprep.subr.mxu0 0.0
  %820 = vmatpush1.msra.mxu0 %v577
  %821 = vmatprep.mubr.f32.mxu0 %v479
  %822 = vmatmul.mubr.f32.gmra.mrb[0].mxu0 %v478
  %v823 = vpop.f32.mrb[0].mxu0
  %v824 = vadd.f32 %v754, %v823
  %v825 = vpop.f32.mrb[0].mxu0
  %826 = vdwg.mxu0
  %827 = vmatprep.subr.mxu0 0.0
  %828 = vmatpush1.msra.mxu0 %v578
  %829 = vmatprep.subr.mxu0 0.0
  %830 = vmatpush1.msra.mxu0 %v579
  %831 = vmatprep.subr.mxu0 0.0
  %832 = vmatpush1.msra.mxu0 %v580
  %833 = vmatprep.subr.mxu0 0.0
  %834 = vmatpush1.msra.mxu0 %v581
  %835 = vmatprep.subr.mxu0 0.0
  %836 = vmatpush1.msra.mxu0 %v582
  %837 = vmatprep.subr.mxu0 0.0
  %838 = vmatpush1.msra.mxu0 %v583
  %839 = vmatprep.subr.mxu0 0.0
  %840 = vmatpush1.msra.mxu0 %v584
  %841 = vmatprep.subr.mxu0 0.0
  %842 = vmatpush1.msra.mxu0 %v585
  %843 = vmatprep.subr.mxu0 0.0
  %844 = vmatpush1.msra.mxu0 %v586
  %845 = vmatprep.subr.mxu0 0.0
  %846 = vmatpush1.msra.mxu0 %v587
  %847 = vmatprep.subr.mxu0 0.0
  %848 = vmatpush1.msra.mxu0 %v588
  %849 = vmatprep.subr.mxu0 0.0
  %850 = vmatpush1.msra.mxu0 %v589
  %851 = vmatprep.subr.mxu0 0.0
  %852 = vmatpush1.msra.mxu0 %v590
  %853 = vmatprep.subr.mxu0 0.0
  %854 = vmatpush1.msra.mxu0 %v591
  %855 = vmatprep.subr.mxu0 0.0
  %856 = vmatpush1.msra.mxu0 %v592
  %857 = vmatprep.subr.mxu0 0.0
  %858 = vmatpush1.msra.mxu0 %v593
  %859 = vmatprep.subr.mxu0 0.0
  %860 = vmatpush1.msra.mxu0 %v594
  %861 = vmatprep.subr.mxu0 0.0
  %862 = vmatpush1.msra.mxu0 %v595
  %863 = vmatprep.subr.mxu0 0.0
  %864 = vmatpush1.msra.mxu0 %v596
  %865 = vmatprep.subr.mxu0 0.0
  %866 = vmatpush1.msra.mxu0 %v597
  %867 = vmatprep.subr.mxu0 0.0
  %868 = vmatpush1.msra.mxu0 %v598
  %869 = vmatprep.subr.mxu0 0.0
  %870 = vmatpush1.msra.mxu0 %v599
  %871 = vmatprep.subr.mxu0 0.0
  %872 = vmatpush1.msra.mxu0 %v600
  %873 = vmatprep.subr.mxu0 0.0
  %874 = vmatpush1.msra.mxu0 %v601
  %875 = vmatprep.subr.mxu0 0.0
  %876 = vmatpush1.msra.mxu0 %v602
  %877 = vmatprep.subr.mxu0 0.0
  %878 = vmatpush1.msra.mxu0 %v603
  %879 = vmatprep.subr.mxu0 0.0
  %880 = vmatpush1.msra.mxu0 %v604
  %881 = vmatprep.subr.mxu0 0.0
  %882 = vmatpush1.msra.mxu0 %v605
  %883 = vmatprep.subr.mxu0 0.0
  %884 = vmatpush1.msra.mxu0 %v606
  %885 = vmatprep.subr.mxu0 0.0
  %886 = vmatpush1.msra.mxu0 %v607
  %887 = vmatprep.subr.mxu0 0.0
  %888 = vmatpush1.msra.mxu0 %v608
  %889 = vmatprep.subr.mxu0 0.0
  %890 = vmatpush1.msra.mxu0 %v609
  %891 = vmatprep.mubr.f32.mxu0 %v481
  %892 = vmatmul.mubr.f32.gmra.mrb[0].mxu0 %v480
  %v893 = vpop.f32.mrb[0].mxu0
  %v894 = vadd.f32 %v824, %v893
  %v895 = vpop.f32.mrb[0].mxu0
  %896 = vdwg.mxu0
  %v897 = vmax.f32 %v894, 0.0
  %v898 = vld [vmem:[%s6] sm:$0xff]
  %v899 = vld [vmem:[%s6 + $0x8] sm:$0xff]
  %v900 = vld [vmem:[%s6 + $0x10] sm:$0xff]
  %v901 = vld [vmem:[%s6 + $0x18] sm:$0xff]
  %v902 = vld [vmem:[%s6 + $0x20] sm:$0xff]
  %v903 = vld [vmem:[%s6 + $0x28] sm:$0xff]
  %v904 = vld [vmem:[%s6 + $0x30] sm:$0xff]
  %v905 = vld [vmem:[%s6 + $0x38] sm:$0xff]
  %v906 = vld [vmem:[%s6 + $0x40] sm:$0xff]
  %v907 = vld [vmem:[%s6 + $0x48] sm:$0xff]
  %v908 = vld [vmem:[%s6 + $0x50] sm:$0xff]
  %v909 = vld [vmem:[%s6 + $0x58] sm:$0xff]
  %v910 = vld [vmem:[%s6 + $0x60] sm:$0xff]
  %v911 = vld [vmem:[%s6 + $0x68] sm:$0xff]
  %v912 = vld [vmem:[%s6 + $0x70] sm:$0xff]
  %v913 = vld [vmem:[%s6 + $0x78] sm:$0xff]
  %v914 = vld [vmem:[%s7] sm:$0x1]
  %v916 = vlaneseq
  %v917 = vshrl.u32 %v916, 7
  %v918 = vsub.s32 0, %v917
  %v919 = vrot.slane %v914, %v918
  %921 = vmatprep.subr.mxu0 0.0
  %922 = vmatpush1.msra.mxu0 %v898
  %923 = vmatprep.subr.mxu0 0.0
  %924 = vmatpush1.msra.mxu0 %v899
  %925 = vmatprep.subr.mxu0 0.0
  %926 = vmatpush1.msra.mxu0 %v900
  %927 = vmatprep.subr.mxu0 0.0
  %928 = vmatpush1.msra.mxu0 %v901
  %929 = vmatprep.subr.mxu0 0.0
  %930 = vmatpush1.msra.mxu0 %v902
  %931 = vmatprep.subr.mxu0 0.0
  %932 = vmatpush1.msra.mxu0 %v903
  %933 = vmatprep.subr.mxu0 0.0
  %934 = vmatpush1.msra.mxu0 %v904
  %935 = vmatprep.subr.mxu0 0.0
  %936 = vmatpush1.msra.mxu0 %v905
  %937 = vmatprep.subr.mxu0 0.0
  %938 = vmatpush1.msra.mxu0 %v906
  %939 = vmatprep.subr.mxu0 0.0
  %940 = vmatpush1.msra.mxu0 %v907
  %941 = vmatprep.subr.mxu0 0.0
  %942 = vmatpush1.msra.mxu0 %v908
  %943 = vmatprep.subr.mxu0 0.0
  %944 = vmatpush1.msra.mxu0 %v909
  %945 = vmatprep.subr.mxu0 0.0
  %946 = vmatpush1.msra.mxu0 %v910
  %947 = vmatprep.subr.mxu0 0.0
  %948 = vmatpush1.msra.mxu0 %v911
  %949 = vmatprep.subr.mxu0 0.0
  %950 = vmatpush1.msra.mxu0 %v912
  %951 = vmatprep.subr.mxu0 0.0
  %952 = vmatpush1.msra.mxu0 %v913
  %953 = vmatprep.subr.mxu0 0.0
  %954 = vmatpush1.msra.mxu0 0.0
  %955 = vmatprep.subr.mxu0 0.0
  %956 = vmatpush1.msra.mxu0 0.0
  %957 = vmatprep.subr.mxu0 0.0
  %958 = vmatpush1.msra.mxu0 0.0
  %959 = vmatprep.subr.mxu0 0.0
  %960 = vmatpush1.msra.mxu0 0.0
  %961 = vmatprep.subr.mxu0 0.0
  %962 = vmatpush1.msra.mxu0 0.0
  %963 = vmatprep.subr.mxu0 0.0
  %964 = vmatpush1.msra.mxu0 0.0
  %965 = vmatprep.subr.mxu0 0.0
  %966 = vmatpush1.msra.mxu0 0.0
  %967 = vmatprep.subr.mxu0 0.0
  %968 = vmatpush1.msra.mxu0 0.0
  %969 = vmatprep.subr.mxu0 0.0
  %970 = vmatpush1.msra.mxu0 0.0
  %971 = vmatprep.subr.mxu0 0.0
  %972 = vmatpush1.msra.mxu0 0.0
  %973 = vmatprep.subr.mxu0 0.0
  %974 = vmatpush1.msra.mxu0 0.0
  %975 = vmatprep.subr.mxu0 0.0
  %976 = vmatpush1.msra.mxu0 0.0
  %977 = vmatprep.subr.mxu0 0.0
  %978 = vmatpush1.msra.mxu0 0.0
  %979 = vmatprep.subr.mxu0 0.0
  %980 = vmatpush1.msra.mxu0 0.0
  %981 = vmatprep.subr.mxu0 0.0
  %982 = vmatpush1.msra.mxu0 0.0
  %983 = vmatprep.subr.mxu0 0.0
  %984 = vmatpush1.msra.mxu0 0.0
  %985 = vmatprep.mubr.f32.mxu0 0.0
  %986 = vmatmul.mubr.f32.gmra.mrb[0].mxu0 %v473
  %v987 = vpop.f32.mrb[0].mxu0
  %v988 = vadd.f32 %v919, %v987
  %v989 = vpop.f32.mrb[0].mxu0
  %990 = vdwg.mxu0
  %v991 = vmax.f32 %v988, 0.0
  %v992 = vld [vmem:[%s8] sm:$0xff]
  %v993 = vld [vmem:[%s8 + $0x8] sm:$0xff]
  %v994 = vld [vmem:[%s8 + $0x10] sm:$0xff]
  %v995 = vld [vmem:[%s8 + $0x18] sm:$0xff]
  %v996 = vld [vmem:[%s8 + $0x20] sm:$0xff]
  %v997 = vld [vmem:[%s8 + $0x28] sm:$0xff]
  %v998 = vld [vmem:[%s8 + $0x30] sm:$0xff]
  %v999 = vld [vmem:[%s8 + $0x38] sm:$0xff]
  %v1000 = vld [vmem:[%s8 + $0x40] sm:$0xff]
  %v1001 = vld [vmem:[%s8 + $0x48] sm:$0xff]
  %v1002 = vld [vmem:[%s8 + $0x50] sm:$0xff]
  %v1003 = vld [vmem:[%s8 + $0x58] sm:$0xff]
  %v1004 = vld [vmem:[%s8 + $0x60] sm:$0xff]
  %v1005 = vld [vmem:[%s8 + $0x68] sm:$0xff]
  %v1006 = vld [vmem:[%s8 + $0x70] sm:$0xff]
  %v1007 = vld [vmem:[%s8 + $0x78] sm:$0xff]
  %v1008 = vld [vmem:[%s9] sm:$0x1]
  %v1010 = vlaneseq
  %v1011 = vshrl.u32 %v1010, 7
  %v1012 = vsub.s32 0, %v1011
  %v1013 = vrot.slane %v1008, %v1012
  %1015 = vmatprep.subr.mxu0 0.0
  %1016 = vmatpush1.msra.mxu0 %v992
  %1017 = vmatprep.subr.mxu0 0.0
  %1018 = vmatpush1.msra.mxu0 %v993
  %1019 = vmatprep.subr.mxu0 0.0
  %1020 = vmatpush1.msra.mxu0 %v994
  %1021 = vmatprep.subr.mxu0 0.0
  %1022 = vmatpush1.msra.mxu0 %v995
  %1023 = vmatprep.subr.mxu0 0.0
  %1024 = vmatpush1.msra.mxu0 %v996
  %1025 = vmatprep.subr.mxu0 0.0
  %1026 = vmatpush1.msra.mxu0 %v997
  %1027 = vmatprep.subr.mxu0 0.0
  %1028 = vmatpush1.msra.mxu0 %v998
  %1029 = vmatprep.subr.mxu0 0.0
  %1030 = vmatpush1.msra.mxu0 %v999
  %1031 = vmatprep.subr.mxu0 0.0
  %1032 = vmatpush1.msra.mxu0 %v1000
  %1033 = vmatprep.subr.mxu0 0.0
  %1034 = vmatpush1.msra.mxu0 %v1001
  %1035 = vmatprep.subr.mxu0 0.0
  %1036 = vmatpush1.msra.mxu0 %v1002
  %1037 = vmatprep.subr.mxu0 0.0
  %1038 = vmatpush1.msra.mxu0 %v1003
  %1039 = vmatprep.subr.mxu0 0.0
  %1040 = vmatpush1.msra.mxu0 %v1004
  %1041 = vmatprep.subr.mxu0 0.0
  %1042 = vmatpush1.msra.mxu0 %v1005
  %1043 = vmatprep.subr.mxu0 0.0
  %1044 = vmatpush1.msra.mxu0 %v1006
  %1045 = vmatprep.subr.mxu0 0.0
  %1046 = vmatpush1.msra.mxu0 %v1007
  %1047 = vmatprep.subr.mxu0 0.0
  %1048 = vmatpush1.msra.mxu0 0.0
  %1049 = vmatprep.subr.mxu0 0.0
  %1050 = vmatpush1.msra.mxu0 0.0
  %1051 = vmatprep.subr.mxu0 0.0
  %1052 = vmatpush1.msra.mxu0 0.0
  %1053 = vmatprep.subr.mxu0 0.0
  %1054 = vmatpush1.msra.mxu0 0.0
  %1055 = vmatprep.subr.mxu0 0.0
  %1056 = vmatpush1.msra.mxu0 0.0
  %1057 = vmatprep.subr.mxu0 0.0
  %1058 = vmatpush1.msra.mxu0 0.0
  %1059 = vmatprep.subr.mxu0 0.0
  %1060 = vmatpush1.msra.mxu0 0.0
  %1061 = vmatprep.subr.mxu0 0.0
  %1062 = vmatpush1.msra.mxu0 0.0
  %1063 = vmatprep.subr.mxu0 0.0
  %1064 = vmatpush1.msra.mxu0 0.0
  %1065 = vmatprep.subr.mxu0 0.0
  %1066 = vmatpush1.msra.mxu0 0.0
  %1067 = vmatprep.subr.mxu0 0.0
  %1068 = vmatpush1.msra.mxu0 0.0
  %1069 = vmatprep.subr.mxu0 0.0
  %1070 = vmatpush1.msra.mxu0 0.0
  %1071 = vmatprep.subr.mxu0 0.0
  %1072 = vmatpush1.msra.mxu0 0.0
  %1073 = vmatprep.subr.mxu0 0.0
  %1074 = vmatpush1.msra.mxu0 0.0
  %1075 = vmatprep.subr.mxu0 0.0
  %1076 = vmatpush1.msra.mxu0 0.0
  %1077 = vmatprep.subr.mxu0 0.0
  %1078 = vmatpush1.msra.mxu0 0.0
  %1079 = vmatprep.mubr.f32.mxu0 0.0
  %1080 = vmatmul.mubr.f32.gmra.mrb[0].mxu0 %v897
  %v1081 = vpop.f32.mrb[0].mxu0
  %v1082 = vadd.f32 %v1013, %v1081
  %v1083 = vpop.f32.mrb[0].mxu0
  %1084 = vdwg.mxu0
  %v1085 = vmax.f32 %v1082, 0.0
  %v1086 = vld [vmem:[%s10] sm:$0xff]
  %v1087 = vld [vmem:[%s10 + $0x8] sm:$0xff]
  %v1088 = vld [vmem:[%s10 + $0x10] sm:$0xff]
  %v1089 = vld [vmem:[%s10 + $0x18] sm:$0xff]
  %v1090 = vld [vmem:[%s10 + $0x20] sm:$0xff]
  %v1091 = vld [vmem:[%s10 + $0x28] sm:$0xff]
  %v1092 = vld [vmem:[%s10 + $0x30] sm:$0xff]
  %v1093 = vld [vmem:[%s10 + $0x38] sm:$0xff]
  %v1094 = vld [vmem:[%s10 + $0x40] sm:$0xff]
  %v1095 = vld [vmem:[%s10 + $0x48] sm:$0xff]
  %v1096 = vld [vmem:[%s10 + $0x50] sm:$0xff]
  %v1097 = vld [vmem:[%s10 + $0x58] sm:$0xff]
  %v1098 = vld [vmem:[%s10 + $0x60] sm:$0xff]
  %v1099 = vld [vmem:[%s10 + $0x68] sm:$0xff]
  %v1100 = vld [vmem:[%s10 + $0x70] sm:$0xff]
  %v1101 = vld [vmem:[%s10 + $0x78] sm:$0xff]
  %v1102 = vld [vmem:[%s11] sm:$0xff]
  %v1103 = vld [vmem:[%s11 + $0x8] sm:$0xff]
  %v1104 = vld [vmem:[%s11 + $0x10] sm:$0xff]
  %v1105 = vld [vmem:[%s11 + $0x18] sm:$0xff]
  %v1106 = vld [vmem:[%s11 + $0x20] sm:$0xff]
  %v1107 = vld [vmem:[%s11 + $0x28] sm:$0xff]
  %v1108 = vld [vmem:[%s11 + $0x30] sm:$0xff]
  %v1109 = vld [vmem:[%s11 + $0x38] sm:$0xff]
  %v1110 = vld [vmem:[%s11 + $0x40] sm:$0xff]
  %v1111 = vld [vmem:[%s11 + $0x48] sm:$0xff]
  %v1112 = vld [vmem:[%s11 + $0x50] sm:$0xff]
  %v1113 = vld [vmem:[%s11 + $0x58] sm:$0xff]
  %v1114 = vld [vmem:[%s11 + $0x60] sm:$0xff]
  %v1115 = vld [vmem:[%s11 + $0x68] sm:$0xff]
  %v1116 = vld [vmem:[%s11 + $0x70] sm:$0xff]
  %v1117 = vld [vmem:[%s11 + $0x78] sm:$0xff]
  %1118 = vmatprep.subr.mxu0 0.0
  %1119 = vmatpush1.msra.mxu0 %v1102
  %1120 = vmatprep.subr.mxu0 0.0
  %1121 = vmatpush1.msra.mxu0 %v1103
  %1122 = vmatprep.subr.mxu0 0.0
  %1123 = vmatpush1.msra.mxu0 %v1104
  %1124 = vmatprep.subr.mxu0 0.0
  %1125 = vmatpush1.msra.mxu0 %v1105
  %1126 = vmatprep.subr.mxu0 0.0
  %1127 = vmatpush1.msra.mxu0 %v1106
  %1128 = vmatprep.subr.mxu0 0.0
  %1129 = vmatpush1.msra.mxu0 %v1107
  %1130 = vmatprep.subr.mxu0 0.0
  %1131 = vmatpush1.msra.mxu0 %v1108
  %1132 = vmatprep.subr.mxu0 0.0
  %1133 = vmatpush1.msra.mxu0 %v1109
  %1134 = vmatprep.subr.mxu0 0.0
  %1135 = vmatpush1.msra.mxu0 %v1110
  %1136 = vmatprep.subr.mxu0 0.0
  %1137 = vmatpush1.msra.mxu0 %v1111
  %1138 = vmatprep.subr.mxu0 0.0
  %1139 = vmatpush1.msra.mxu0 %v1112
  %1140 = vmatprep.subr.mxu0 0.0
  %1141 = vmatpush1.msra.mxu0 %v1113
  %1142 = vmatprep.subr.mxu0 0.0
  %1143 = vmatpush1.msra.mxu0 %v1114
  %1144 = vmatprep.subr.mxu0 0.0
  %1145 = vmatpush1.msra.mxu0 %v1115
  %1146 = vmatprep.subr.mxu0 0.0
  %1147 = vmatpush1.msra.mxu0 %v1116
  %1148 = vmatprep.subr.mxu0 0.0
  %1149 = vmatpush1.msra.mxu0 %v1117
  %1150 = vmatprep.subr.mxu0 0.0
  %1151 = vmatpush1.msra.mxu0 0.0
  %1152 = vmatprep.subr.mxu0 0.0
  %1153 = vmatpush1.msra.mxu0 0.0
  %1154 = vmatprep.subr.mxu0 0.0
  %1155 = vmatpush1.msra.mxu0 0.0
  %1156 = vmatprep.subr.mxu0 0.0
  %1157 = vmatpush1.msra.mxu0 0.0
  %1158 = vmatprep.subr.mxu0 0.0
  %1159 = vmatpush1.msra.mxu0 0.0
  %1160 = vmatprep.subr.mxu0 0.0
  %1161 = vmatpush1.msra.mxu0 0.0
  %1162 = vmatprep.subr.mxu0 0.0
  %1163 = vmatpush1.msra.mxu0 0.0
  %1164 = vmatprep.subr.mxu0 0.0
  %1165 = vmatpush1.msra.mxu0 0.0
  %1166 = vmatprep.subr.mxu0 0.0
  %1167 = vmatpush1.msra.mxu0 0.0
  %1168 = vmatprep.subr.mxu0 0.0
  %1169 = vmatpush1.msra.mxu0 0.0
  %1170 = vmatprep.subr.mxu0 0.0
  %1171 = vmatpush1.msra.mxu0 0.0
  %1172 = vmatprep.subr.mxu0 0.0
  %1173 = vmatpush1.msra.mxu0 0.0
  %1174 = vmatprep.subr.mxu0 0.0
  %1175 = vmatpush1.msra.mxu0 0.0
  %1176 = vmatprep.subr.mxu0 0.0
  %1177 = vmatpush1.msra.mxu0 0.0
  %1178 = vmatprep.subr.mxu0 0.0
  %1179 = vmatpush1.msra.mxu0 0.0
  %1180 = vmatprep.subr.mxu0 0.0
  %1181 = vmatpush1.msra.mxu0 0.0
  %1182 = vmatprep.mubr.f32.mxu0 0.0
  %1183 = vmatmul.mubr.f32.gmra.mrb[0].mxu0 %v1085
  %v1184 = vpop.f32.mrb[0].mxu0
  %v1185 = vadd.f32 0.0, %v1184
  %v1186 = vpop.f32.mrb[0].mxu0
  %1187 = vdwg.mxu0
  %1188 = vmatprep.subr.mxu0 0.0
  %1189 = vmatpush1.msra.mxu0 %v1086
  %1190 = vmatprep.subr.mxu0 0.0
  %1191 = vmatpush1.msra.mxu0 %v1087
  %1192 = vmatprep.subr.mxu0 0.0
  %1193 = vmatpush1.msra.mxu0 %v1088
  %1194 = vmatprep.subr.mxu0 0.0
  %1195 = vmatpush1.msra.mxu0 %v1089
  %1196 = vmatprep.subr.mxu0 0.0
  %1197 = vmatpush1.msra.mxu0 %v1090
  %1198 = vmatprep.subr.mxu0 0.0
  %1199 = vmatpush1.msra.mxu0 %v1091
  %1200 = vmatprep.subr.mxu0 0.0
  %1201 = vmatpush1.msra.mxu0 %v1092
  %1202 = vmatprep.subr.mxu0 0.0
  %1203 = vmatpush1.msra.mxu0 %v1093
  %1204 = vmatprep.subr.mxu0 0.0
  %1205 = vmatpush1.msra.mxu0 %v1094
  %1206 = vmatprep.subr.mxu0 0.0
  %1207 = vmatpush1.msra.mxu0 %v1095
  %1208 = vmatprep.subr.mxu0 0.0
  %1209 = vmatpush1.msra.mxu0 %v1096
  %1210 = vmatprep.subr.mxu0 0.0
  %1211 = vmatpush1.msra.mxu0 %v1097
  %1212 = vmatprep.subr.mxu0 0.0
  %1213 = vmatpush1.msra.mxu0 %v1098
  %1214 = vmatprep.subr.mxu0 0.0
  %1215 = vmatpush1.msra.mxu0 %v1099
  %1216 = vmatprep.subr.mxu0 0.0
  %1217 = vmatpush1.msra.mxu0 %v1100
  %1218 = vmatprep.subr.mxu0 0.0
  %1219 = vmatpush1.msra.mxu0 %v1101
  %1220 = vmatprep.subr.mxu0 0.0
  %1221 = vmatpush1.msra.mxu0 0.0
  %1222 = vmatprep.subr.mxu0 0.0
  %1223 = vmatpush1.msra.mxu0 0.0
  %1224 = vmatprep.subr.mxu0 0.0
  %1225 = vmatpush1.msra.mxu0 0.0
  %1226 = vmatprep.subr.mxu0 0.0
  %1227 = vmatpush1.msra.mxu0 0.0
  %1228 = vmatprep.subr.mxu0 0.0
  %1229 = vmatpush1.msra.mxu0 0.0
  %1230 = vmatprep.subr.mxu0 0.0
  %1231 = vmatpush1.msra.mxu0 0.0
  %1232 = vmatprep.subr.mxu0 0.0
  %1233 = vmatpush1.msra.mxu0 0.0
  %1234 = vmatprep.subr.mxu0 0.0
  %1235 = vmatpush1.msra.mxu0 0.0
  %1236 = vmatprep.subr.mxu0 0.0
  %1237 = vmatpush1.msra.mxu0 0.0
  %1238 = vmatprep.subr.mxu0 0.0
  %1239 = vmatpush1.msra.mxu0 0.0
  %1240 = vmatprep.subr.mxu0 0.0
  %1241 = vmatpush1.msra.mxu0 0.0
  %1242 = vmatprep.subr.mxu0 0.0
  %1243 = vmatpush1.msra.mxu0 0.0
  %1244 = vmatprep.subr.mxu0 0.0
  %1245 = vmatpush1.msra.mxu0 0.0
  %1246 = vmatprep.subr.mxu0 0.0
  %1247 = vmatpush1.msra.mxu0 0.0
  %1248 = vmatprep.subr.mxu0 0.0
  %1249 = vmatpush1.msra.mxu0 0.0
  %1250 = vmatprep.subr.mxu0 0.0
  %1251 = vmatpush1.msra.mxu0 0.0
  %1252 = vmatprep.mubr.f32.mxu0 0.0
  %1253 = vmatmul.mubr.f32.gmra.mrb[0].mxu0 %v991
  %v1254 = vpop.f32.mrb[0].mxu0
  %v1255 = vadd.f32 %v1185, %v1254
  %v1256 = vpop.f32.mrb[0].mxu0
  %1257 = vdwg.mxu0
  %v1258 = vld [vmem:[%s12] sm:$0x1]
  %v1260 = vlaneseq
  %v1261 = vshrl.u32 %v1260, 7
  %v1262 = vsub.s32 0, %v1261
  %v1263 = vrot.slane %v1258, %v1262
  %v1265 = vadd.f32 %v1255, %v1263
  %v1266 = vld [vmem:[%s13] sm:$0xff]
  %v1267 = vld [vmem:[%s13 + $0x8] sm:$0xff]
  %v1268 = vld [vmem:[%s13 + $0x10] sm:$0xff]
  %v1269 = vld [vmem:[%s13 + $0x18] sm:$0xff]
  %v1270 = vld [vmem:[%s13 + $0x20] sm:$0xff]
  %v1271 = vld [vmem:[%s13 + $0x28] sm:$0xff]
  %v1272 = vld [vmem:[%s13 + $0x30] sm:$0xff]
  %v1273 = vld [vmem:[%s13 + $0x38] sm:$0xff]
  %v1274 = vld [vmem:[%s13 + $0x40] sm:$0xff]
  %v1275 = vld [vmem:[%s13 + $0x48] sm:$0xff]
  %v1276 = vld [vmem:[%s13 + $0x50] sm:$0xff]
  %v1277 = vld [vmem:[%s13 + $0x58] sm:$0xff]
  %v1278 = vld [vmem:[%s13 + $0x60] sm:$0xff]
  %v1279 = vld [vmem:[%s13 + $0x68] sm:$0xff]
  %v1280 = vld [vmem:[%s13 + $0x70] sm:$0xff]
  %v1281 = vld [vmem:[%s13 + $0x78] sm:$0xff]
  %v1282 = vld [vmem:[%s13 + $0x80] sm:$0xff]
  %v1283 = vld [vmem:[%s13 + $0x88] sm:$0xff]
  %v1284 = vld [vmem:[%s13 + $0x90] sm:$0xff]
  %v1285 = vld [vmem:[%s13 + $0x98] sm:$0xff]
  %v1286 = vld [vmem:[%s13 + $0xa0] sm:$0xff]
  %v1287 = vld [vmem:[%s13 + $0xa8] sm:$0xff]
  %v1288 = vld [vmem:[%s13 + $0xb0] sm:$0xff]
  %v1289 = vld [vmem:[%s13 + $0xb8] sm:$0xff]
  %v1290 = vld [vmem:[%s13 + $0xc0] sm:$0xff]
  %v1291 = vld [vmem:[%s13 + $0xc8] sm:$0xff]
  %v1292 = vld [vmem:[%s13 + $0xd0] sm:$0xff]
  %v1293 = vld [vmem:[%s13 + $0xd8] sm:$0xff]
  %v1294 = vld [vmem:[%s13 + $0xe0] sm:$0xff]
  %v1295 = vld [vmem:[%s13 + $0xe8] sm:$0xff]
  %v1296 = vld [vmem:[%s13 + $0xf0] sm:$0xff]
  %v1297 = vld [vmem:[%s13 + $0xf8] sm:$0xff]
  %v1298 = vld [vmem:[%s13 + $0x100] sm:$0xff]
  %v1299 = vld [vmem:[%s13 + $0x108] sm:$0xff]
  %v1300 = vld [vmem:[%s13 + $0x110] sm:$0xff]
  %v1301 = vld [vmem:[%s13 + $0x118] sm:$0xff]
  %v1302 = vld [vmem:[%s13 + $0x120] sm:$0xff]
  %v1303 = vld [vmem:[%s13 + $0x128] sm:$0xff]
  %v1304 = vld [vmem:[%s13 + $0x130] sm:$0xff]
  %v1305 = vld [vmem:[%s13 + $0x138] sm:$0xff]
  %v1306 = vld [vmem:[%s13 + $0x140] sm:$0xff]
  %v1307 = vld [vmem:[%s13 + $0x148] sm:$0xff]
  %v1308 = vld [vmem:[%s13 + $0x150] sm:$0xff]
  %v1309 = vld [vmem:[%s13 + $0x158] sm:$0xff]
  %v1310 = vld [vmem:[%s13 + $0x160] sm:$0xff]
  %v1311 = vld [vmem:[%s13 + $0x168] sm:$0xff]
  %v1312 = vld [vmem:[%s13 + $0x170] sm:$0xff]
  %v1313 = vld [vmem:[%s13 + $0x178] sm:$0xff]
  %v1314 = vld [vmem:[%s13 + $0x180] sm:$0xff]
  %v1315 = vld [vmem:[%s13 + $0x188] sm:$0xff]
  %v1316 = vld [vmem:[%s13 + $0x190] sm:$0xff]
  %v1317 = vld [vmem:[%s13 + $0x198] sm:$0xff]
  %v1318 = vld [vmem:[%s13 + $0x1a0] sm:$0xff]
  %v1319 = vld [vmem:[%s13 + $0x1a8] sm:$0xff]
  %v1320 = vld [vmem:[%s13 + $0x1b0] sm:$0xff]
  %v1321 = vld [vmem:[%s13 + $0x1b8] sm:$0xff]
  %v1322 = vld [vmem:[%s13 + $0x1c0] sm:$0xff]
  %v1323 = vld [vmem:[%s13 + $0x1c8] sm:$0xff]
  %v1324 = vld [vmem:[%s13 + $0x1d0] sm:$0xff]
  %v1325 = vld [vmem:[%s13 + $0x1d8] sm:$0xff]
  %v1326 = vld [vmem:[%s13 + $0x1e0] sm:$0xff]
  %v1327 = vld [vmem:[%s13 + $0x1e8] sm:$0xff]
  %v1328 = vld [vmem:[%s13 + $0x1f0] sm:$0xff]
  %v1329 = vld [vmem:[%s13 + $0x1f8] sm:$0xff]
  %v1330 = vld [vmem:[%s13 + $0x200] sm:$0xff]
  %v1331 = vld [vmem:[%s13 + $0x208] sm:$0xff]
  %v1332 = vld [vmem:[%s13 + $0x210] sm:$0xff]
  %v1333 = vld [vmem:[%s13 + $0x218] sm:$0xff]
  %v1334 = vld [vmem:[%s13 + $0x220] sm:$0xff]
  %v1335 = vld [vmem:[%s13 + $0x228] sm:$0xff]
  %v1336 = vld [vmem:[%s13 + $0x230] sm:$0xff]
  %v1337 = vld [vmem:[%s13 + $0x238] sm:$0xff]
  %v1338 = vld [vmem:[%s13 + $0x240] sm:$0xff]
  %v1339 = vld [vmem:[%s13 + $0x248] sm:$0xff]
  %v1340 = vld [vmem:[%s13 + $0x250] sm:$0xff]
  %v1341 = vld [vmem:[%s13 + $0x258] sm:$0xff]
  %v1342 = vld [vmem:[%s13 + $0x260] sm:$0xff]
  %v1343 = vld [vmem:[%s13 + $0x268] sm:$0xff]
  %v1344 = vld [vmem:[%s13 + $0x270] sm:$0xff]
  %v1345 = vld [vmem:[%s13 + $0x278] sm:$0xff]
  %v1346 = vld [vmem:[%s13 + $0x280] sm:$0xff]
  %v1347 = vld [vmem:[%s13 + $0x288] sm:$0xff]
  %v1348 = vld [vmem:[%s13 + $0x290] sm:$0xff]
  %v1349 = vld [vmem:[%s13 + $0x298] sm:$0xff]
  %v1350 = vld [vmem:[%s13 + $0x2a0] sm:$0xff]
  %v1351 = vld [vmem:[%s13 + $0x2a8] sm:$0xff]
  %v1352 = vld [vmem:[%s13 + $0x2b0] sm:$0xff]
  %v1353 = vld [vmem:[%s13 + $0x2b8] sm:$0xff]
  %v1354 = vld [vmem:[%s13 + $0x2c0] sm:$0xff]
  %v1355 = vld [vmem:[%s13 + $0x2c8] sm:$0xff]
  %v1356 = vld [vmem:[%s13 + $0x2d0] sm:$0xff]
  %v1357 = vld [vmem:[%s13 + $0x2d8] sm:$0xff]
  %v1358 = vld [vmem:[%s13 + $0x2e0] sm:$0xff]
  %v1359 = vld [vmem:[%s13 + $0x2e8] sm:$0xff]
  %v1360 = vld [vmem:[%s13 + $0x2f0] sm:$0xff]
  %v1361 = vld [vmem:[%s13 + $0x2f8] sm:$0xff]
  %v1362 = vld [vmem:[%s13 + $0x300] sm:$0xff]
  %v1363 = vld [vmem:[%s13 + $0x308] sm:$0xff]
  %v1364 = vld [vmem:[%s13 + $0x310] sm:$0xff]
  %v1365 = vld [vmem:[%s13 + $0x318] sm:$0xff]
  %v1366 = vld [vmem:[%s13 + $0x320] sm:$0xff]
  %v1367 = vld [vmem:[%s13 + $0x328] sm:$0xff]
  %v1368 = vld [vmem:[%s13 + $0x330] sm:$0xff]
  %v1369 = vld [vmem:[%s13 + $0x338] sm:$0xff]
  %v1370 = vld [vmem:[%s13 + $0x340] sm:$0xff]
  %v1371 = vld [vmem:[%s13 + $0x348] sm:$0xff]
  %v1372 = vld [vmem:[%s13 + $0x350] sm:$0xff]
  %v1373 = vld [vmem:[%s13 + $0x358] sm:$0xff]
  %v1374 = vld [vmem:[%s13 + $0x360] sm:$0xff]
  %v1375 = vld [vmem:[%s13 + $0x368] sm:$0xff]
  %v1376 = vld [vmem:[%s13 + $0x370] sm:$0xff]
  %v1377 = vld [vmem:[%s13 + $0x378] sm:$0xff]
  %v1378 = vld [vmem:[%s13 + $0x380] sm:$0xff]
  %v1379 = vld [vmem:[%s13 + $0x388] sm:$0xff]
  %v1380 = vld [vmem:[%s13 + $0x390] sm:$0xff]
  %v1381 = vld [vmem:[%s13 + $0x398] sm:$0xff]
  %v1382 = vld [vmem:[%s13 + $0x3a0] sm:$0xff]
  %v1383 = vld [vmem:[%s13 + $0x3a8] sm:$0xff]
  %v1384 = vld [vmem:[%s13 + $0x3b0] sm:$0xff]
  %v1385 = vld [vmem:[%s13 + $0x3b8] sm:$0xff]
  %v1386 = vld [vmem:[%s13 + $0x3c0] sm:$0xff]
  %v1387 = vld [vmem:[%s13 + $0x3c8] sm:$0xff]
  %v1388 = vld [vmem:[%s13 + $0x3d0] sm:$0xff]
  %v1389 = vld [vmem:[%s13 + $0x3d8] sm:$0xff]
  %v1390 = vld [vmem:[%s13 + $0x3e0] sm:$0xff]
  %v1391 = vld [vmem:[%s13 + $0x3e8] sm:$0xff]
  %v1392 = vld [vmem:[%s13 + $0x3f0] sm:$0xff]
  %v1393 = vld [vmem:[%s13 + $0x3f8] sm:$0xff]
  %v1394 = vld [vmem:[%s13 + $0x400] sm:$0xff]
  %v1395 = vld [vmem:[%s13 + $0x408] sm:$0xff]
  %v1396 = vld [vmem:[%s13 + $0x410] sm:$0xff]
  %v1397 = vld [vmem:[%s13 + $0x418] sm:$0xff]
  %v1398 = vld [vmem:[%s13 + $0x420] sm:$0xff]
  %v1399 = vld [vmem:[%s13 + $0x428] sm:$0xff]
  %v1400 = vld [vmem:[%s13 + $0x430] sm:$0xff]
  %v1401 = vld [vmem:[%s13 + $0x438] sm:$0xff]
  %v1402 = vld [vmem:[%s13 + $0x440] sm:$0xff]
  %v1403 = vld [vmem:[%s13 + $0x448] sm:$0xff]
  %v1404 = vld [vmem:[%s13 + $0x450] sm:$0xff]
  %v1405 = vld [vmem:[%s13 + $0x458] sm:$0xff]
  %v1406 = vld [vmem:[%s13 + $0x460] sm:$0xff]
  %v1407 = vld [vmem:[%s13 + $0x468] sm:$0xff]
  %v1408 = vld [vmem:[%s13 + $0x470] sm:$0xff]
  %v1409 = vld [vmem:[%s13 + $0x478] sm:$0xff]
  %v1410 = vld [vmem:[%s13 + $0x480] sm:$0xff]
  %v1411 = vld [vmem:[%s13 + $0x488] sm:$0xff]
  %v1412 = vld [vmem:[%s13 + $0x490] sm:$0xff]
  %v1413 = vld [vmem:[%s13 + $0x498] sm:$0xff]
  %v1414 = vld [vmem:[%s13 + $0x4a0] sm:$0xff]
  %v1415 = vld [vmem:[%s13 + $0x4a8] sm:$0xff]
  %v1416 = vld [vmem:[%s13 + $0x4b0] sm:$0xff]
  %v1417 = vld [vmem:[%s13 + $0x4b8] sm:$0xff]
  %v1418 = vld [vmem:[%s13 + $0x4c0] sm:$0xff]
  %v1419 = vld [vmem:[%s13 + $0x4c8] sm:$0xff]
  %v1420 = vld [vmem:[%s13 + $0x4d0] sm:$0xff]
  %v1421 = vld [vmem:[%s13 + $0x4d8] sm:$0xff]
  %v1422 = vld [vmem:[%s13 + $0x4e0] sm:$0xff]
  %v1423 = vld [vmem:[%s13 + $0x4e8] sm:$0xff]
  %v1424 = vld [vmem:[%s13 + $0x4f0] sm:$0xff]
  %v1425 = vld [vmem:[%s13 + $0x4f8] sm:$0xff]
  %v1426 = vld [vmem:[%s13 + $0x500] sm:$0xff]
  %v1427 = vld [vmem:[%s13 + $0x508] sm:$0xff]
  %v1428 = vld [vmem:[%s13 + $0x510] sm:$0xff]
  %v1429 = vld [vmem:[%s13 + $0x518] sm:$0xff]
  %v1430 = vld [vmem:[%s13 + $0x520] sm:$0xff]
  %v1431 = vld [vmem:[%s13 + $0x528] sm:$0xff]
  %v1432 = vld [vmem:[%s13 + $0x530] sm:$0xff]
  %v1433 = vld [vmem:[%s13 + $0x538] sm:$0xff]
  %v1434 = vld [vmem:[%s13 + $0x540] sm:$0xff]
  %v1435 = vld [vmem:[%s13 + $0x548] sm:$0xff]
  %v1436 = vld [vmem:[%s13 + $0x550] sm:$0xff]
  %v1437 = vld [vmem:[%s13 + $0x558] sm:$0xff]
  %v1438 = vld [vmem:[%s13 + $0x560] sm:$0xff]
  %v1439 = vld [vmem:[%s13 + $0x568] sm:$0xff]
  %v1440 = vld [vmem:[%s13 + $0x570] sm:$0xff]
  %v1441 = vld [vmem:[%s13 + $0x578] sm:$0xff]
  %v1442 = vld [vmem:[%s13 + $0x580] sm:$0xff]
  %v1443 = vld [vmem:[%s13 + $0x588] sm:$0xff]
  %v1444 = vld [vmem:[%s13 + $0x590] sm:$0xff]
  %v1445 = vld [vmem:[%s13 + $0x598] sm:$0xff]
  %v1446 = vld [vmem:[%s13 + $0x5a0] sm:$0xff]
  %v1447 = vld [vmem:[%s13 + $0x5a8] sm:$0xff]
  %v1448 = vld [vmem:[%s13 + $0x5b0] sm:$0xff]
  %v1449 = vld [vmem:[%s13 + $0x5b8] sm:$0xff]
  %v1450 = vld [vmem:[%s13 + $0x5c0] sm:$0xff]
  %v1451 = vld [vmem:[%s13 + $0x5c8] sm:$0xff]
  %v1452 = vld [vmem:[%s13 + $0x5d0] sm:$0xff]
  %v1453 = vld [vmem:[%s13 + $0x5d8] sm:$0xff]
  %v1454 = vld [vmem:[%s13 + $0x5e0] sm:$0xff]
  %v1455 = vld [vmem:[%s13 + $0x5e8] sm:$0xff]
  %v1456 = vld [vmem:[%s13 + $0x5f0] sm:$0xff]
  %v1457 = vld [vmem:[%s13 + $0x5f8] sm:$0xff]
  %v1458 = vld [vmem:[%s13 + $0x600] sm:$0xff]
  %v1459 = vld [vmem:[%s13 + $0x608] sm:$0xff]
  %v1460 = vld [vmem:[%s13 + $0x610] sm:$0xff]
  %v1461 = vld [vmem:[%s13 + $0x618] sm:$0xff]
  %v1462 = vld [vmem:[%s13 + $0x620] sm:$0xff]
  %v1463 = vld [vmem:[%s13 + $0x628] sm:$0xff]
  %v1464 = vld [vmem:[%s13 + $0x630] sm:$0xff]
  %v1465 = vld [vmem:[%s13 + $0x638] sm:$0xff]
  %v1466 = vld [vmem:[%s13 + $0x640] sm:$0xff]
  %v1467 = vld [vmem:[%s13 + $0x648] sm:$0xff]
  %v1468 = vld [vmem:[%s13 + $0x650] sm:$0xff]
  %v1469 = vld [vmem:[%s13 + $0x658] sm:$0xff]
  %v1470 = vld [vmem:[%s13 + $0x660] sm:$0xff]
  %v1471 = vld [vmem:[%s13 + $0x668] sm:$0xff]
  %v1472 = vld [vmem:[%s13 + $0x670] sm:$0xff]
  %v1473 = vld [vmem:[%s13 + $0x678] sm:$0xff]
  %v1474 = vld [vmem:[%s13 + $0x680] sm:$0xff]
  %v1475 = vld [vmem:[%s13 + $0x688] sm:$0xff]
  %v1476 = vld [vmem:[%s13 + $0x690] sm:$0xff]
  %v1477 = vld [vmem:[%s13 + $0x698] sm:$0xff]
  %v1478 = vld [vmem:[%s13 + $0x6a0] sm:$0xff]
  %v1479 = vld [vmem:[%s13 + $0x6a8] sm:$0xff]
  %v1480 = vld [vmem:[%s13 + $0x6b0] sm:$0xff]
  %v1481 = vld [vmem:[%s13 + $0x6b8] sm:$0xff]
  %v1482 = vld [vmem:[%s13 + $0x6c0] sm:$0xff]
  %v1483 = vld [vmem:[%s13 + $0x6c8] sm:$0xff]
  %v1484 = vld [vmem:[%s13 + $0x6d0] sm:$0xff]
  %v1485 = vld [vmem:[%s13 + $0x6d8] sm:$0xff]
  %v1486 = vld [vmem:[%s13 + $0x6e0] sm:$0xff]
  %v1487 = vld [vmem:[%s13 + $0x6e8] sm:$0xff]
  %v1488 = vld [vmem:[%s13 + $0x6f0] sm:$0xff]
  %v1489 = vld [vmem:[%s13 + $0x6f8] sm:$0xff]
  %v1490 = vld [vmem:[%s13 + $0x700] sm:$0xff]
  %v1491 = vld [vmem:[%s13 + $0x708] sm:$0xff]
  %v1492 = vld [vmem:[%s13 + $0x710] sm:$0xff]
  %v1493 = vld [vmem:[%s13 + $0x718] sm:$0xff]
  %v1494 = vld [vmem:[%s13 + $0x720] sm:$0xff]
  %v1495 = vld [vmem:[%s13 + $0x728] sm:$0xff]
  %v1496 = vld [vmem:[%s13 + $0x730] sm:$0xff]
  %v1497 = vld [vmem:[%s13 + $0x738] sm:$0xff]
  %v1498 = vld [vmem:[%s13 + $0x740] sm:$0xff]
  %v1499 = vld [vmem:[%s13 + $0x748] sm:$0xff]
  %v1500 = vld [vmem:[%s13 + $0x750] sm:$0xff]
  %v1501 = vld [vmem:[%s13 + $0x758] sm:$0xff]
  %v1502 = vld [vmem:[%s13 + $0x760] sm:$0xff]
  %v1503 = vld [vmem:[%s13 + $0x768] sm:$0xff]
  %v1504 = vld [vmem:[%s13 + $0x770] sm:$0xff]
  %v1505 = vld [vmem:[%s13 + $0x778] sm:$0xff]
  %v1506 = vld [vmem:[%s13 + $0x780] sm:$0xff]
  %v1507 = vld [vmem:[%s13 + $0x788] sm:$0xff]
  %v1508 = vld [vmem:[%s13 + $0x790] sm:$0xff]
  %v1509 = vld [vmem:[%s13 + $0x798] sm:$0xff]
  %v1510 = vld [vmem:[%s13 + $0x7a0] sm:$0xff]
  %v1511 = vld [vmem:[%s13 + $0x7a8] sm:$0xff]
  %v1512 = vld [vmem:[%s13 + $0x7b0] sm:$0xff]
  %v1513 = vld [vmem:[%s13 + $0x7b8] sm:$0xff]
  %v1514 = vld [vmem:[%s13 + $0x7c0] sm:$0xff]
  %v1515 = vld [vmem:[%s13 + $0x7c8] sm:$0xff]
  %v1516 = vld [vmem:[%s13 + $0x7d0] sm:$0xff]
  %v1517 = vld [vmem:[%s13 + $0x7d8] sm:$0xff]
  %v1518 = vld [vmem:[%s13 + $0x7e0] sm:$0xff]
  %v1519 = vld [vmem:[%s13 + $0x7e8] sm:$0xff]
  %v1520 = vld [vmem:[%s13 + $0x7f0] sm:$0xff]
  %v1521 = vld [vmem:[%s13 + $0x7f8] sm:$0xff]
  %v1522 = vld [vmem:[%s13 + $0x800] sm:$0xff]
  %v1523 = vld [vmem:[%s13 + $0x808] sm:$0xff]
  %v1524 = vld [vmem:[%s13 + $0x810] sm:$0xff]
  %v1525 = vld [vmem:[%s13 + $0x818] sm:$0xff]
  %v1526 = vld [vmem:[%s13 + $0x820] sm:$0xff]
  %v1527 = vld [vmem:[%s13 + $0x828] sm:$0xff]
  %v1528 = vld [vmem:[%s13 + $0x830] sm:$0xff]
  %v1529 = vld [vmem:[%s13 + $0x838] sm:$0xff]
  %v1530 = vld [vmem:[%s13 + $0x840] sm:$0xff]
  %v1531 = vld [vmem:[%s13 + $0x848] sm:$0xff]
  %v1532 = vld [vmem:[%s13 + $0x850] sm:$0xff]
  %v1533 = vld [vmem:[%s13 + $0x858] sm:$0xff]
  %v1534 = vld [vmem:[%s13 + $0x860] sm:$0xff]
  %v1535 = vld [vmem:[%s13 + $0x868] sm:$0xff]
  %v1536 = vld [vmem:[%s13 + $0x870] sm:$0xff]
  %v1537 = vld [vmem:[%s13 + $0x878] sm:$0xff]
  %v1538 = vld [vmem:[%s13 + $0x880] sm:$0xff]
  %v1539 = vld [vmem:[%s13 + $0x888] sm:$0xff]
  %v1540 = vld [vmem:[%s13 + $0x890] sm:$0xff]
  %v1541 = vld [vmem:[%s13 + $0x898] sm:$0xff]
  %v1542 = vld [vmem:[%s13 + $0x8a0] sm:$0xff]
  %v1543 = vld [vmem:[%s13 + $0x8a8] sm:$0xff]
  %v1544 = vld [vmem:[%s13 + $0x8b0] sm:$0xff]
  %v1545 = vld [vmem:[%s13 + $0x8b8] sm:$0xff]
  %v1546 = vld [vmem:[%s13 + $0x8c0] sm:$0xff]
  %v1547 = vld [vmem:[%s13 + $0x8c8] sm:$0xff]
  %v1548 = vld [vmem:[%s13 + $0x8d0] sm:$0xff]
  %v1549 = vld [vmem:[%s13 + $0x8d8] sm:$0xff]
  %v1550 = vld [vmem:[%s13 + $0x8e0] sm:$0xff]
  %v1551 = vld [vmem:[%s13 + $0x8e8] sm:$0xff]
  %v1552 = vld [vmem:[%s13 + $0x8f0] sm:$0xff]
  %v1553 = vld [vmem:[%s13 + $0x8f8] sm:$0xff]
  %v1554 = vld [vmem:[%s13 + $0x900] sm:$0xff]
  %v1555 = vld [vmem:[%s13 + $0x908] sm:$0xff]
  %v1556 = vld [vmem:[%s13 + $0x910] sm:$0xff]
  %v1557 = vld [vmem:[%s13 + $0x918] sm:$0xff]
  %v1558 = vld [vmem:[%s13 + $0x920] sm:$0xff]
  %v1559 = vld [vmem:[%s13 + $0x928] sm:$0xff]
  %v1560 = vld [vmem:[%s13 + $0x930] sm:$0xff]
  %v1561 = vld [vmem:[%s13 + $0x938] sm:$0xff]
  %v1562 = vld [vmem:[%s13 + $0x940] sm:$0xff]
  %v1563 = vld [vmem:[%s13 + $0x948] sm:$0xff]
  %v1564 = vld [vmem:[%s13 + $0x950] sm:$0xff]
  %v1565 = vld [vmem:[%s13 + $0x958] sm:$0xff]
  %v1566 = vld [vmem:[%s13 + $0x960] sm:$0xff]
  %v1567 = vld [vmem:[%s13 + $0x968] sm:$0xff]
  %v1568 = vld [vmem:[%s13 + $0x970] sm:$0xff]
  %v1569 = vld [vmem:[%s13 + $0x978] sm:$0xff]
  %v1570 = vld [vmem:[%s13 + $0x980] sm:$0xff]
  %v1571 = vld [vmem:[%s13 + $0x988] sm:$0xff]
  %v1572 = vld [vmem:[%s13 + $0x990] sm:$0xff]
  %v1573 = vld [vmem:[%s13 + $0x998] sm:$0xff]
  %v1574 = vld [vmem:[%s13 + $0x9a0] sm:$0xff]
  %v1575 = vld [vmem:[%s13 + $0x9a8] sm:$0xff]
  %v1576 = vld [vmem:[%s13 + $0x9b0] sm:$0xff]
  %v1577 = vld [vmem:[%s13 + $0x9b8] sm:$0xff]
  %v1578 = vld [vmem:[%s13 + $0x9c0] sm:$0xff]
  %v1579 = vld [vmem:[%s13 + $0x9c8] sm:$0xff]
  %v1580 = vld [vmem:[%s13 + $0x9d0] sm:$0xff]
  %v1581 = vld [vmem:[%s13 + $0x9d8] sm:$0xff]
  %v1582 = vld [vmem:[%s13 + $0x9e0] sm:$0xff]
  %v1583 = vld [vmem:[%s13 + $0x9e8] sm:$0xff]
  %v1584 = vld [vmem:[%s13 + $0x9f0] sm:$0xff]
  %v1585 = vld [vmem:[%s13 + $0x9f8] sm:$0xff]
  %v1586 = vld [vmem:[%s13 + $0xa00] sm:$0xff]
  %v1587 = vld [vmem:[%s13 + $0xa08] sm:$0xff]
  %v1588 = vld [vmem:[%s13 + $0xa10] sm:$0xff]
  %v1589 = vld [vmem:[%s13 + $0xa18] sm:$0xff]
  %v1590 = vld [vmem:[%s13 + $0xa20] sm:$0xff]
  %v1591 = vld [vmem:[%s13 + $0xa28] sm:$0xff]
  %v1592 = vld [vmem:[%s13 + $0xa30] sm:$0xff]
  %v1593 = vld [vmem:[%s13 + $0xa38] sm:$0xff]
  %v1594 = vld [vmem:[%s13 + $0xa40] sm:$0xff]
  %v1595 = vld [vmem:[%s13 + $0xa48] sm:$0xff]
  %v1596 = vld [vmem:[%s13 + $0xa50] sm:$0xff]
  %v1597 = vld [vmem:[%s13 + $0xa58] sm:$0xff]
  %v1598 = vld [vmem:[%s13 + $0xa60] sm:$0xff]
  %v1599 = vld [vmem:[%s13 + $0xa68] sm:$0xff]
  %v1600 = vld [vmem:[%s13 + $0xa70] sm:$0xff]
  %v1601 = vld [vmem:[%s13 + $0xa78] sm:$0xff]
  %v1602 = vld [vmem:[%s13 + $0xa80] sm:$0xff]
  %v1603 = vld [vmem:[%s13 + $0xa88] sm:$0xff]
  %v1604 = vld [vmem:[%s13 + $0xa90] sm:$0xff]
  %v1605 = vld [vmem:[%s13 + $0xa98] sm:$0xff]
  %v1606 = vld [vmem:[%s13 + $0xaa0] sm:$0xff]
  %v1607 = vld [vmem:[%s13 + $0xaa8] sm:$0xff]
  %v1608 = vld [vmem:[%s13 + $0xab0] sm:$0xff]
  %v1609 = vld [vmem:[%s13 + $0xab8] sm:$0xff]
  %v1610 = vld [vmem:[%s13 + $0xac0] sm:$0xff]
  %v1611 = vld [vmem:[%s13 + $0xac8] sm:$0xff]
  %v1612 = vld [vmem:[%s13 + $0xad0] sm:$0xff]
  %v1613 = vld [vmem:[%s13 + $0xad8] sm:$0xff]
  %v1614 = vld [vmem:[%s13 + $0xae0] sm:$0xff]
  %v1615 = vld [vmem:[%s13 + $0xae8] sm:$0xff]
  %v1616 = vld [vmem:[%s13 + $0xaf0] sm:$0xff]
  %v1617 = vld [vmem:[%s13 + $0xaf8] sm:$0xff]
  %v1618 = vld [vmem:[%s13 + $0xb00] sm:$0xff]
  %v1619 = vld [vmem:[%s13 + $0xb08] sm:$0xff]
  %v1620 = vld [vmem:[%s13 + $0xb10] sm:$0xff]
  %v1621 = vld [vmem:[%s13 + $0xb18] sm:$0xff]
  %v1622 = vld [vmem:[%s13 + $0xb20] sm:$0xff]
  %v1623 = vld [vmem:[%s13 + $0xb28] sm:$0xff]
  %v1624 = vld [vmem:[%s13 + $0xb30] sm:$0xff]
  %v1625 = vld [vmem:[%s13 + $0xb38] sm:$0xff]
  %v1626 = vld [vmem:[%s13 + $0xb40] sm:$0xff]
  %v1627 = vld [vmem:[%s13 + $0xb48] sm:$0xff]
  %v1628 = vld [vmem:[%s13 + $0xb50] sm:$0xff]
  %v1629 = vld [vmem:[%s13 + $0xb58] sm:$0xff]
  %v1630 = vld [vmem:[%s13 + $0xb60] sm:$0xff]
  %v1631 = vld [vmem:[%s13 + $0xb68] sm:$0xff]
  %v1632 = vld [vmem:[%s13 + $0xb70] sm:$0xff]
  %v1633 = vld [vmem:[%s13 + $0xb78] sm:$0xff]
  %v1634 = vld [vmem:[%s13 + $0xb80] sm:$0xff]
  %v1635 = vld [vmem:[%s13 + $0xb88] sm:$0xff]
  %v1636 = vld [vmem:[%s13 + $0xb90] sm:$0xff]
  %v1637 = vld [vmem:[%s13 + $0xb98] sm:$0xff]
  %v1638 = vld [vmem:[%s13 + $0xba0] sm:$0xff]
  %v1639 = vld [vmem:[%s13 + $0xba8] sm:$0xff]
  %v1640 = vld [vmem:[%s13 + $0xbb0] sm:$0xff]
  %v1641 = vld [vmem:[%s13 + $0xbb8] sm:$0xff]
  %v1642 = vld [vmem:[%s13 + $0xbc0] sm:$0xff]
  %v1643 = vld [vmem:[%s13 + $0xbc8] sm:$0xff]
  %v1644 = vld [vmem:[%s13 + $0xbd0] sm:$0xff]
  %v1645 = vld [vmem:[%s13 + $0xbd8] sm:$0xff]
  %v1646 = vld [vmem:[%s13 + $0xbe0] sm:$0xff]
  %v1647 = vld [vmem:[%s13 + $0xbe8] sm:$0xff]
  %v1648 = vld [vmem:[%s13 + $0xbf0] sm:$0xff]
  %v1649 = vld [vmem:[%s13 + $0xbf8] sm:$0xff]
  %v1650 = vld [vmem:[%s14] sm:$0xff]
  %v1651 = vld [vmem:[%s14 + $0x8] sm:$0xff]
  %v1652 = vld [vmem:[%s14 + $0x10] sm:$0xff]
  %v1656 = vlaneseq
  %v1657 = vshrl.u32 %v1656, 7
  %v1658 = vsub.s32 0, %v1657
  %v1659 = vrot.slane %v1650, %v1658
  %v1660 = vlaneseq
  %v1661 = vshrl.u32 %v1660, 7
  %v1662 = vsub.s32 1, %v1661
  %v1663 = vrot.slane %v1650, %v1662
  %v1664 = vlaneseq
  %v1665 = vshrl.u32 %v1664, 7
  %v1666 = vsub.s32 2, %v1665
  %v1667 = vrot.slane %v1650, %v1666
  %v1668 = vlaneseq
  %v1669 = vshrl.u32 %v1668, 7
  %v1670 = vsub.s32 3, %v1669
  %v1671 = vrot.slane %v1650, %v1670
  %v1672 = vlaneseq
  %v1673 = vshrl.u32 %v1672, 7
  %v1674 = vsub.s32 4, %v1673
  %v1675 = vrot.slane %v1650, %v1674
  %v1676 = vlaneseq
  %v1677 = vshrl.u32 %v1676, 7
  %v1678 = vsub.s32 5, %v1677
  %v1679 = vrot.slane %v1650, %v1678
  %v1680 = vlaneseq
  %v1681 = vshrl.u32 %v1680, 7
  %v1682 = vsub.s32 6, %v1681
  %v1683 = vrot.slane %v1650, %v1682
  %v1684 = vlaneseq
  %v1685 = vshrl.u32 %v1684, 7
  %v1686 = vsub.s32 7, %v1685
  %v1687 = vrot.slane %v1650, %v1686
  %v1688 = vlaneseq
  %v1689 = vshrl.u32 %v1688, 7
  %v1690 = vsub.s32 0, %v1689
  %v1691 = vrot.slane %v1651, %v1690
  %v1692 = vlaneseq
  %v1693 = vshrl.u32 %v1692, 7
  %v1694 = vsub.s32 1, %v1693
  %v1695 = vrot.slane %v1651, %v1694
  %v1696 = vlaneseq
  %v1697 = vshrl.u32 %v1696, 7
  %v1698 = vsub.s32 2, %v1697
  %v1699 = vrot.slane %v1651, %v1698
  %v1700 = vlaneseq
  %v1701 = vshrl.u32 %v1700, 7
  %v1702 = vsub.s32 3, %v1701
  %v1703 = vrot.slane %v1651, %v1702
  %v1704 = vlaneseq
  %v1705 = vshrl.u32 %v1704, 7
  %v1706 = vsub.s32 4, %v1705
  %v1707 = vrot.slane %v1651, %v1706
  %v1708 = vlaneseq
  %v1709 = vshrl.u32 %v1708, 7
  %v1710 = vsub.s32 5, %v1709
  %v1711 = vrot.slane %v1651, %v1710
  %v1712 = vlaneseq
  %v1713 = vshrl.u32 %v1712, 7
  %v1714 = vsub.s32 6, %v1713
  %v1715 = vrot.slane %v1651, %v1714
  %v1716 = vlaneseq
  %v1717 = vshrl.u32 %v1716, 7
  %v1718 = vsub.s32 7, %v1717
  %v1719 = vrot.slane %v1651, %v1718
  %v1720 = vlaneseq
  %v1721 = vshrl.u32 %v1720, 7
  %v1722 = vsub.s32 0, %v1721
  %v1723 = vrot.slane %v1652, %v1722
  %v1724 = vlaneseq
  %v1725 = vshrl.u32 %v1724, 7
  %v1726 = vsub.s32 1, %v1725
  %v1727 = vrot.slane %v1652, %v1726
  %v1728 = vlaneseq
  %v1729 = vshrl.u32 %v1728, 7
  %v1730 = vsub.s32 2, %v1729
  %v1731 = vrot.slane %v1652, %v1730
  %v1732 = vlaneseq
  %v1733 = vshrl.u32 %v1732, 7
  %v1734 = vsub.s32 3, %v1733
  %v1735 = vrot.slane %v1652, %v1734
  %v1736 = vlaneseq
  %v1737 = vshrl.u32 %v1736, 7
  %v1738 = vsub.s32 4, %v1737
  %v1739 = vrot.slane %v1652, %v1738
  %v1740 = vlaneseq
  %v1741 = vshrl.u32 %v1740, 7
  %v1742 = vsub.s32 5, %v1741
  %v1743 = vrot.slane %v1652, %v1742
  %v1744 = vlaneseq
  %v1745 = vshrl.u32 %v1744, 7
  %v1746 = vsub.s32 6, %v1745
  %v1747 = vrot.slane %v1652, %v1746
  %v1748 = vlaneseq
  %v1749 = vshrl.u32 %v1748, 7
  %v1750 = vsub.s32 7, %v1749
  %v1751 = vrot.slane %v1652, %v1750
  %1776 = vmatprep.subr.mxu0 %v1267
  %1777 = vmatpush1.msra.mxu0 %v1266
  %1778 = vmatprep.subr.mxu0 %v1291
  %1779 = vmatpush1.msra.mxu0 %v1290
  %1780 = vmatprep.subr.mxu0 %v1315
  %1781 = vmatpush1.msra.mxu0 %v1314
  %1782 = vmatprep.subr.mxu0 %v1339
  %1783 = vmatpush1.msra.mxu0 %v1338
  %1784 = vmatprep.subr.mxu0 %v1363
  %1785 = vmatpush1.msra.mxu0 %v1362
  %1786 = vmatprep.subr.mxu0 %v1387
  %1787 = vmatpush1.msra.mxu0 %v1386
  %1788 = vmatprep.subr.mxu0 %v1411
  %1789 = vmatpush1.msra.mxu0 %v1410
  %1790 = vmatprep.subr.mxu0 %v1435
  %1791 = vmatpush1.msra.mxu0 %v1434
  %1792 = vmatprep.subr.mxu0 %v1459
  %1793 = vmatpush1.msra.mxu0 %v1458
  %1794 = vmatprep.subr.mxu0 %v1483
  %1795 = vmatpush1.msra.mxu0 %v1482
  %1796 = vmatprep.subr.mxu0 %v1507
  %1797 = vmatpush1.msra.mxu0 %v1506
  %1798 = vmatprep.subr.mxu0 %v1531
  %1799 = vmatpush1.msra.mxu0 %v1530
  %1800 = vmatprep.subr.mxu0 %v1555
  %1801 = vmatpush1.msra.mxu0 %v1554
  %1802 = vmatprep.subr.mxu0 %v1579
  %1803 = vmatpush1.msra.mxu0 %v1578
  %1804 = vmatprep.subr.mxu0 %v1603
  %1805 = vmatpush1.msra.mxu0 %v1602
  %1806 = vmatprep.subr.mxu0 %v1627
  %1807 = vmatpush1.msra.mxu0 %v1626
  %1808 = vmatprep.subr.mxu0 0.0
  %1809 = vmatpush1.msra.mxu0 0.0
  %1810 = vmatprep.subr.mxu0 0.0
  %1811 = vmatpush1.msra.mxu0 0.0
  %1812 = vmatprep.subr.mxu0 0.0
  %1813 = vmatpush1.msra.mxu0 0.0
  %1814 = vmatprep.subr.mxu0 0.0
  %1815 = vmatpush1.msra.mxu0 0.0
  %1816 = vmatprep.subr.mxu0 0.0
  %1817 = vmatpush1.msra.mxu0 0.0
  %1818 = vmatprep.subr.mxu0 0.0
  %1819 = vmatpush1.msra.mxu0 0.0
  %1820 = vmatprep.subr.mxu0 0.0
  %1821 = vmatpush1.msra.mxu0 0.0
  %1822 = vmatprep.subr.mxu0 0.0
  %1823 = vmatpush1.msra.mxu0 0.0
  %1824 = vmatprep.subr.mxu0 0.0
  %1825 = vmatpush1.msra.mxu0 0.0
  %1826 = vmatprep.subr.mxu0 0.0
  %1827 = vmatpush1.msra.mxu0 0.0
  %1828 = vmatprep.subr.mxu0 0.0
  %1829 = vmatpush1.msra.mxu0 0.0
  %1830 = vmatprep.subr.mxu0 0.0
  %1831 = vmatpush1.msra.mxu0 0.0
  %1832 = vmatprep.subr.mxu0 0.0
  %1833 = vmatpush1.msra.mxu0 0.0
  %1834 = vmatprep.subr.mxu0 0.0
  %1835 = vmatpush1.msra.mxu0 0.0
  %1836 = vmatprep.subr.mxu0 0.0
  %1837 = vmatpush1.msra.mxu0 0.0
  %1838 = vmatprep.subr.mxu0 0.0
  %1839 = vmatpush1.msra.mxu0 0.0
  %1840 = vmatprep.mubr.f32.mxu0 0.0
  %1841 = vmatmul.mubr.f32.gmra.mrb[0].mxu0 %v1265
  %v1842 = vpop.f32.mrb[0].mxu0
  %v1843 = vadd.f32 %v1659, %v1842
  %v1844 = vpop.f32.mrb[0].mxu0
  %v1845 = vadd.f32 %v1663, %v1844
  %1846 = vdwg.mxu0
  %1847 = vmatprep.subr.mxu0 %v1269
  %1848 = vmatpush1.msra.mxu0 %v1268
  %1849 = vmatprep.subr.mxu0 %v1293
  %1850 = vmatpush1.msra.mxu0 %v1292
  %1851 = vmatprep.subr.mxu0 %v1317
  %1852 = vmatpush1.msra.mxu0 %v1316
  %1853 = vmatprep.subr.mxu0 %v1341
  %1854 = vmatpush1.msra.mxu0 %v1340
  %1855 = vmatprep.subr.mxu0 %v1365
  %1856 = vmatpush1.msra.mxu0 %v1364
  %1857 = vmatprep.subr.mxu0 %v1389
  %1858 = vmatpush1.msra.mxu0 %v1388
  %1859 = vmatprep.subr.mxu0 %v1413
  %1860 = vmatpush1.msra.mxu0 %v1412
  %1861 = vmatprep.subr.mxu0 %v1437
  %1862 = vmatpush1.msra.mxu0 %v1436
  %1863 = vmatprep.subr.mxu0 %v1461
  %1864 = vmatpush1.msra.mxu0 %v1460
  %1865 = vmatprep.subr.mxu0 %v1485
  %1866 = vmatpush1.msra.mxu0 %v1484
  %1867 = vmatprep.subr.mxu0 %v1509
  %1868 = vmatpush1.msra.mxu0 %v1508
  %1869 = vmatprep.subr.mxu0 %v1533
  %1870 = vmatpush1.msra.mxu0 %v1532
  %1871 = vmatprep.subr.mxu0 %v1557
  %1872 = vmatpush1.msra.mxu0 %v1556
  %1873 = vmatprep.subr.mxu0 %v1581
  %1874 = vmatpush1.msra.mxu0 %v1580
  %1875 = vmatprep.subr.mxu0 %v1605
  %1876 = vmatpush1.msra.mxu0 %v1604
  %1877 = vmatprep.subr.mxu0 %v1629
  %1878 = vmatpush1.msra.mxu0 %v1628
  %1879 = vmatprep.subr.mxu0 0.0
  %1880 = vmatpush1.msra.mxu0 0.0
  %1881 = vmatprep.subr.mxu0 0.0
  %1882 = vmatpush1.msra.mxu0 0.0
  %1883 = vmatprep.subr.mxu0 0.0
  %1884 = vmatpush1.msra.mxu0 0.0
  %1885 = vmatprep.subr.mxu0 0.0
  %1886 = vmatpush1.msra.mxu0 0.0
  %1887 = vmatprep.subr.mxu0 0.0
  %1888 = vmatpush1.msra.mxu0 0.0
  %1889 = vmatprep.subr.mxu0 0.0
  %1890 = vmatpush1.msra.mxu0 0.0
  %1891 = vmatprep.subr.mxu0 0.0
  %1892 = vmatpush1.msra.mxu0 0.0
  %1893 = vmatprep.subr.mxu0 0.0
  %1894 = vmatpush1.msra.mxu0 0.0
  %1895 = vmatprep.subr.mxu0 0.0
  %1896 = vmatpush1.msra.mxu0 0.0
  %1897 = vmatprep.subr.mxu0 0.0
  %1898 = vmatpush1.msra.mxu0 0.0
  %1899 = vmatprep.subr.mxu0 0.0
  %1900 = vmatpush1.msra.mxu0 0.0
  %1901 = vmatprep.subr.mxu0 0.0
  %1902 = vmatpush1.msra.mxu0 0.0
  %1903 = vmatprep.subr.mxu0 0.0
  %1904 = vmatpush1.msra.mxu0 0.0
  %1905 = vmatprep.subr.mxu0 0.0
  %1906 = vmatpush1.msra.mxu0 0.0
  %1907 = vmatprep.subr.mxu0 0.0
  %1908 = vmatpush1.msra.mxu0 0.0
  %1909 = vmatprep.subr.mxu0 0.0
  %1910 = vmatpush1.msra.mxu0 0.0
  %1911 = vmatprep.mubr.f32.mxu0 0.0
  %1912 = vmatmul.mubr.f32.gmra.mrb[0].mxu0 %v1265
  %v1913 = vpop.f32.mrb[0].mxu0
  %v1914 = vadd.f32 %v1667, %v1913
  %v1915 = vpop.f32.mrb[0].mxu0
  %v1916 = vadd.f32 %v1671, %v1915
  %1917 = vdwg.mxu0
  %1918 = vmatprep.subr.mxu0 %v1271
  %1919 = vmatpush1.msra.mxu0 %v1270
  %1920 = vmatprep.subr.mxu0 %v1295
  %1921 = vmatpush1.msra.mxu0 %v1294
  %1922 = vmatprep.subr.mxu0 %v1319
  %1923 = vmatpush1.msra.mxu0 %v1318
  %1924 = vmatprep.subr.mxu0 %v1343
  %1925 = vmatpush1.msra.mxu0 %v1342
  %1926 = vmatprep.subr.mxu0 %v1367
  %1927 = vmatpush1.msra.mxu0 %v1366
  %1928 = vmatprep.subr.mxu0 %v1391
  %1929 = vmatpush1.msra.mxu0 %v1390
  %1930 = vmatprep.subr.mxu0 %v1415
  %1931 = vmatpush1.msra.mxu0 %v1414
  %1932 = vmatprep.subr.mxu0 %v1439
  %1933 = vmatpush1.msra.mxu0 %v1438
  %1934 = vmatprep.subr.mxu0 %v1463
  %1935 = vmatpush1.msra.mxu0 %v1462
  %1936 = vmatprep.subr.mxu0 %v1487
  %1937 = vmatpush1.msra.mxu0 %v1486
  %1938 = vmatprep.subr.mxu0 %v1511
  %1939 = vmatpush1.msra.mxu0 %v1510
  %1940 = vmatprep.subr.mxu0 %v1535
  %1941 = vmatpush1.msra.mxu0 %v1534
  %1942 = vmatprep.subr.mxu0 %v1559
  %1943 = vmatpush1.msra.mxu0 %v1558
  %1944 = vmatprep.subr.mxu0 %v1583
  %1945 = vmatpush1.msra.mxu0 %v1582
  %1946 = vmatprep.subr.mxu0 %v1607
  %1947 = vmatpush1.msra.mxu0 %v1606
  %1948 = vmatprep.subr.mxu0 %v1631
  %1949 = vmatpush1.msra.mxu0 %v1630
  %1950 = vmatprep.subr.mxu0 0.0
  %1951 = vmatpush1.msra.mxu0 0.0
  %1952 = vmatprep.subr.mxu0 0.0
  %1953 = vmatpush1.msra.mxu0 0.0
  %1954 = vmatprep.subr.mxu0 0.0
  %1955 = vmatpush1.msra.mxu0 0.0
  %1956 = vmatprep.subr.mxu0 0.0
  %1957 = vmatpush1.msra.mxu0 0.0
  %1958 = vmatprep.subr.mxu0 0.0
  %1959 = vmatpush1.msra.mxu0 0.0
  %1960 = vmatprep.subr.mxu0 0.0
  %1961 = vmatpush1.msra.mxu0 0.0
  %1962 = vmatprep.subr.mxu0 0.0
  %1963 = vmatpush1.msra.mxu0 0.0
  %1964 = vmatprep.subr.mxu0 0.0
  %1965 = vmatpush1.msra.mxu0 0.0
  %1966 = vmatprep.subr.mxu0 0.0
  %1967 = vmatpush1.msra.mxu0 0.0
  %1968 = vmatprep.subr.mxu0 0.0
  %1969 = vmatpush1.msra.mxu0 0.0
  %1970 = vmatprep.subr.mxu0 0.0
  %1971 = vmatpush1.msra.mxu0 0.0
  %1972 = vmatprep.subr.mxu0 0.0
  %1973 = vmatpush1.msra.mxu0 0.0
  %1974 = vmatprep.subr.mxu0 0.0
  %1975 = vmatpush1.msra.mxu0 0.0
  %1976 = vmatprep.subr.mxu0 0.0
  %1977 = vmatpush1.msra.mxu0 0.0
  %1978 = vmatprep.subr.mxu0 0.0
  %1979 = vmatpush1.msra.mxu0 0.0
  %1980 = vmatprep.subr.mxu0 0.0
  %1981 = vmatpush1.msra.mxu0 0.0
  %1982 = vmatprep.mubr.f32.mxu0 0.0
  %1983 = vmatmul.mubr.f32.gmra.mrb[0].mxu0 %v1265
  %v1984 = vpop.f32.mrb[0].mxu0
  %v1985 = vadd.f32 %v1675, %v1984
  %v1986 = vpop.f32.mrb[0].mxu0
  %v1987 = vadd.f32 %v1679, %v1986
  %1988 = vdwg.mxu0
  %1989 = vmatprep.subr.mxu0 %v1273
  %1990 = vmatpush1.msra.mxu0 %v1272
  %1991 = vmatprep.subr.mxu0 %v1297
  %1992 = vmatpush1.msra.mxu0 %v1296
  %1993 = vmatprep.subr.mxu0 %v1321
  %1994 = vmatpush1.msra.mxu0 %v1320
  %1995 = vmatprep.subr.mxu0 %v1345
  %1996 = vmatpush1.msra.mxu0 %v1344
  %1997 = vmatprep.subr.mxu0 %v1369
  %1998 = vmatpush1.msra.mxu0 %v1368
  %1999 = vmatprep.subr.mxu0 %v1393
  %2000 = vmatpush1.msra.mxu0 %v1392
  %2001 = vmatprep.subr.mxu0 %v1417
  %2002 = vmatpush1.msra.mxu0 %v1416
  %2003 = vmatprep.subr.mxu0 %v1441
  %2004 = vmatpush1.msra.mxu0 %v1440
  %2005 = vmatprep.subr.mxu0 %v1465
  %2006 = vmatpush1.msra.mxu0 %v1464
  %2007 = vmatprep.subr.mxu0 %v1489
  %2008 = vmatpush1.msra.mxu0 %v1488
  %2009 = vmatprep.subr.mxu0 %v1513
  %2010 = vmatpush1.msra.mxu0 %v1512
  %2011 = vmatprep.subr.mxu0 %v1537
  %2012 = vmatpush1.msra.mxu0 %v1536
  %2013 = vmatprep.subr.mxu0 %v1561
  %2014 = vmatpush1.msra.mxu0 %v1560
  %2015 = vmatprep.subr.mxu0 %v1585
  %2016 = vmatpush1.msra.mxu0 %v1584
  %2017 = vmatprep.subr.mxu0 %v1609
  %2018 = vmatpush1.msra.mxu0 %v1608
  %2019 = vmatprep.subr.mxu0 %v1633
  %2020 = vmatpush1.msra.mxu0 %v1632
  %2021 = vmatprep.subr.mxu0 0.0
  %2022 = vmatpush1.msra.mxu0 0.0
  %2023 = vmatprep.subr.mxu0 0.0
  %2024 = vmatpush1.msra.mxu0 0.0
  %2025 = vmatprep.subr.mxu0 0.0
  %2026 = vmatpush1.msra.mxu0 0.0
  %2027 = vmatprep.subr.mxu0 0.0
  %2028 = vmatpush1.msra.mxu0 0.0
  %2029 = vmatprep.subr.mxu0 0.0
  %2030 = vmatpush1.msra.mxu0 0.0
  %2031 = vmatprep.subr.mxu0 0.0
  %2032 = vmatpush1.msra.mxu0 0.0
  %2033 = vmatprep.subr.mxu0 0.0
  %2034 = vmatpush1.msra.mxu0 0.0
  %2035 = vmatprep.subr.mxu0 0.0
  %2036 = vmatpush1.msra.mxu0 0.0
  %2037 = vmatprep.subr.mxu0 0.0
  %2038 = vmatpush1.msra.mxu0 0.0
  %2039 = vmatprep.subr.mxu0 0.0
  %2040 = vmatpush1.msra.mxu0 0.0
  %2041 = vmatprep.subr.mxu0 0.0
  %2042 = vmatpush1.msra.mxu0 0.0
  %2043 = vmatprep.subr.mxu0 0.0
  %2044 = vmatpush1.msra.mxu0 0.0
  %2045 = vmatprep.subr.mxu0 0.0
  %2046 = vmatpush1.msra.mxu0 0.0
  %2047 = vmatprep.subr.mxu0 0.0
  %2048 = vmatpush1.msra.mxu0 0.0
  %2049 = vmatprep.subr.mxu0 0.0
  %2050 = vmatpush1.msra.mxu0 0.0
  %2051 = vmatprep.subr.mxu0 0.0
  %2052 = vmatpush1.msra.mxu0 0.0
  %2053 = vmatprep.mubr.f32.mxu0 0.0
  %2054 = vmatmul.mubr.f32.gmra.mrb[0].mxu0 %v1265
  %v2055 = vpop.f32.mrb[0].mxu0
  %v2056 = vadd.f32 %v1683, %v2055
  %v2057 = vpop.f32.mrb[0].mxu0
  %v2058 = vadd.f32 %v1687, %v2057
  %2059 = vdwg.mxu0
  %2060 = vmatprep.subr.mxu0 %v1275
  %2061 = vmatpush1.msra.mxu0 %v1274
  %2062 = vmatprep.subr.mxu0 %v1299
  %2063 = vmatpush1.msra.mxu0 %v1298
  %2064 = vmatprep.subr.mxu0 %v1323
  %2065 = vmatpush1.msra.mxu0 %v1322
  %2066 = vmatprep.subr.mxu0 %v1347
  %2067 = vmatpush1.msra.mxu0 %v1346
  %2068 = vmatprep.subr.mxu0 %v1371
  %2069 = vmatpush1.msra.mxu0 %v1370
  %2070 = vmatprep.subr.mxu0 %v1395
  %2071 = vmatpush1.msra.mxu0 %v1394
  %2072 = vmatprep.subr.mxu0 %v1419
  %2073 = vmatpush1.msra.mxu0 %v1418
  %2074 = vmatprep.subr.mxu0 %v1443
  %2075 = vmatpush1.msra.mxu0 %v1442
  %2076 = vmatprep.subr.mxu0 %v1467
  %2077 = vmatpush1.msra.mxu0 %v1466
  %2078 = vmatprep.subr.mxu0 %v1491
  %2079 = vmatpush1.msra.mxu0 %v1490
  %2080 = vmatprep.subr.mxu0 %v1515
  %2081 = vmatpush1.msra.mxu0 %v1514
  %2082 = vmatprep.subr.mxu0 %v1539
  %2083 = vmatpush1.msra.mxu0 %v1538
  %2084 = vmatprep.subr.mxu0 %v1563
  %2085 = vmatpush1.msra.mxu0 %v1562
  %2086 = vmatprep.subr.mxu0 %v1587
  %2087 = vmatpush1.msra.mxu0 %v1586
  %2088 = vmatprep.subr.mxu0 %v1611
  %2089 = vmatpush1.msra.mxu0 %v1610
  %2090 = vmatprep.subr.mxu0 %v1635
  %2091 = vmatpush1.msra.mxu0 %v1634
  %2092 = vmatprep.subr.mxu0 0.0
  %2093 = vmatpush1.msra.mxu0 0.0
  %2094 = vmatprep.subr.mxu0 0.0
  %2095 = vmatpush1.msra.mxu0 0.0
  %2096 = vmatprep.subr.mxu0 0.0
  %2097 = vmatpush1.msra.mxu0 0.0
  %2098 = vmatprep.subr.mxu0 0.0
  %2099 = vmatpush1.msra.mxu0 0.0
  %2100 = vmatprep.subr.mxu0 0.0
  %2101 = vmatpush1.msra.mxu0 0.0
  %2102 = vmatprep.subr.mxu0 0.0
  %2103 = vmatpush1.msra.mxu0 0.0
  %2104 = vmatprep.subr.mxu0 0.0
  %2105 = vmatpush1.msra.mxu0 0.0
  %2106 = vmatprep.subr.mxu0 0.0
  %2107 = vmatpush1.msra.mxu0 0.0
  %2108 = vmatprep.subr.mxu0 0.0
  %2109 = vmatpush1.msra.mxu0 0.0
  %2110 = vmatprep.subr.mxu0 0.0
  %2111 = vmatpush1.msra.mxu0 0.0
  %2112 = vmatprep.subr.mxu0 0.0
  %2113 = vmatpush1.msra.mxu0 0.0
  %2114 = vmatprep.subr.mxu0 0.0
  %2115 = vmatpush1.msra.mxu0 0.0
  %2116 = vmatprep.subr.mxu0 0.0
  %2117 = vmatpush1.msra.mxu0 0.0
  %2118 = vmatprep.subr.mxu0 0.0
  %2119 = vmatpush1.msra.mxu0 0.0
  %2120 = vmatprep.subr.mxu0 0.0
  %2121 = vmatpush1.msra.mxu0 0.0
  %2122 = vmatprep.subr.mxu0 0.0
  %2123 = vmatpush1.msra.mxu0 0.0
  %2124 = vmatprep.mubr.f32.mxu0 0.0
  %2125 = vmatmul.mubr.f32.gmra.mrb[0].mxu0 %v1265
  %v2126 = vpop.f32.mrb[0].mxu0
  %v2127 = vadd.f32 %v1691, %v2126
  %v2128 = vpop.f32.mrb[0].mxu0
  %v2129 = vadd.f32 %v1695, %v2128
  %2130 = vdwg.mxu0
  %2131 = vmatprep.subr.mxu0 %v1277
  %2132 = vmatpush1.msra.mxu0 %v1276
  %2133 = vmatprep.subr.mxu0 %v1301
  %2134 = vmatpush1.msra.mxu0 %v1300
  %2135 = vmatprep.subr.mxu0 %v1325
  %2136 = vmatpush1.msra.mxu0 %v1324
  %2137 = vmatprep.subr.mxu0 %v1349
  %2138 = vmatpush1.msra.mxu0 %v1348
  %2139 = vmatprep.subr.mxu0 %v1373
  %2140 = vmatpush1.msra.mxu0 %v1372
  %2141 = vmatprep.subr.mxu0 %v1397
  %2142 = vmatpush1.msra.mxu0 %v1396
  %2143 = vmatprep.subr.mxu0 %v1421
  %2144 = vmatpush1.msra.mxu0 %v1420
  %2145 = vmatprep.subr.mxu0 %v1445
  %2146 = vmatpush1.msra.mxu0 %v1444
  %2147 = vmatprep.subr.mxu0 %v1469
  %2148 = vmatpush1.msra.mxu0 %v1468
  %2149 = vmatprep.subr.mxu0 %v1493
  %2150 = vmatpush1.msra.mxu0 %v1492
  %2151 = vmatprep.subr.mxu0 %v1517
  %2152 = vmatpush1.msra.mxu0 %v1516
  %2153 = vmatprep.subr.mxu0 %v1541
  %2154 = vmatpush1.msra.mxu0 %v1540
  %2155 = vmatprep.subr.mxu0 %v1565
  %2156 = vmatpush1.msra.mxu0 %v1564
  %2157 = vmatprep.subr.mxu0 %v1589
  %2158 = vmatpush1.msra.mxu0 %v1588
  %2159 = vmatprep.subr.mxu0 %v1613
  %2160 = vmatpush1.msra.mxu0 %v1612
  %2161 = vmatprep.subr.mxu0 %v1637
  %2162 = vmatpush1.msra.mxu0 %v1636
  %2163 = vmatprep.subr.mxu0 0.0
  %2164 = vmatpush1.msra.mxu0 0.0
  %2165 = vmatprep.subr.mxu0 0.0
  %2166 = vmatpush1.msra.mxu0 0.0
  %2167 = vmatprep.subr.mxu0 0.0
  %2168 = vmatpush1.msra.mxu0 0.0
  %2169 = vmatprep.subr.mxu0 0.0
  %2170 = vmatpush1.msra.mxu0 0.0
  %2171 = vmatprep.subr.mxu0 0.0
  %2172 = vmatpush1.msra.mxu0 0.0
  %2173 = vmatprep.subr.mxu0 0.0
  %2174 = vmatpush1.msra.mxu0 0.0
  %2175 = vmatprep.subr.mxu0 0.0
  %2176 = vmatpush1.msra.mxu0 0.0
  %2177 = vmatprep.subr.mxu0 0.0
  %2178 = vmatpush1.msra.mxu0 0.0
  %2179 = vmatprep.subr.mxu0 0.0
  %2180 = vmatpush1.msra.mxu0 0.0
  %2181 = vmatprep.subr.mxu0 0.0
  %2182 = vmatpush1.msra.mxu0 0.0
  %2183 = vmatprep.subr.mxu0 0.0
  %2184 = vmatpush1.msra.mxu0 0.0
  %2185 = vmatprep.subr.mxu0 0.0
  %2186 = vmatpush1.msra.mxu0 0.0
  %2187 = vmatprep.subr.mxu0 0.0
  %2188 = vmatpush1.msra.mxu0 0.0
  %2189 = vmatprep.subr.mxu0 0.0
  %2190 = vmatpush1.msra.mxu0 0.0
  %2191 = vmatprep.subr.mxu0 0.0
  %2192 = vmatpush1.msra.mxu0 0.0
  %2193 = vmatprep.subr.mxu0 0.0
  %2194 = vmatpush1.msra.mxu0 0.0
  %2195 = vmatprep.mubr.f32.mxu0 0.0
  %2196 = vmatmul.mubr.f32.gmra.mrb[0].mxu0 %v1265
  %v2197 = vpop.f32.mrb[0].mxu0
  %v2198 = vadd.f32 %v1699, %v2197
  %v2199 = vpop.f32.mrb[0].mxu0
  %v2200 = vadd.f32 %v1703, %v2199
  %2201 = vdwg.mxu0
  %2202 = vmatprep.subr.mxu0 %v1279
  %2203 = vmatpush1.msra.mxu0 %v1278
  %2204 = vmatprep.subr.mxu0 %v1303
  %2205 = vmatpush1.msra.mxu0 %v1302
  %2206 = vmatprep.subr.mxu0 %v1327
  %2207 = vmatpush1.msra.mxu0 %v1326
  %2208 = vmatprep.subr.mxu0 %v1351
  %2209 = vmatpush1.msra.mxu0 %v1350
  %2210 = vmatprep.subr.mxu0 %v1375
  %2211 = vmatpush1.msra.mxu0 %v1374
  %2212 = vmatprep.subr.mxu0 %v1399
  %2213 = vmatpush1.msra.mxu0 %v1398
  %2214 = vmatprep.subr.mxu0 %v1423
  %2215 = vmatpush1.msra.mxu0 %v1422
  %2216 = vmatprep.subr.mxu0 %v1447
  %2217 = vmatpush1.msra.mxu0 %v1446
  %2218 = vmatprep.subr.mxu0 %v1471
  %2219 = vmatpush1.msra.mxu0 %v1470
  %2220 = vmatprep.subr.mxu0 %v1495
  %2221 = vmatpush1.msra.mxu0 %v1494
  %2222 = vmatprep.subr.mxu0 %v1519
  %2223 = vmatpush1.msra.mxu0 %v1518
  %2224 = vmatprep.subr.mxu0 %v1543
  %2225 = vmatpush1.msra.mxu0 %v1542
  %2226 = vmatprep.subr.mxu0 %v1567
  %2227 = vmatpush1.msra.mxu0 %v1566
  %2228 = vmatprep.subr.mxu0 %v1591
  %2229 = vmatpush1.msra.mxu0 %v1590
  %2230 = vmatprep.subr.mxu0 %v1615
  %2231 = vmatpush1.msra.mxu0 %v1614
  %2232 = vmatprep.subr.mxu0 %v1639
  %2233 = vmatpush1.msra.mxu0 %v1638
  %2234 = vmatprep.subr.mxu0 0.0
  %2235 = vmatpush1.msra.mxu0 0.0
  %2236 = vmatprep.subr.mxu0 0.0
  %2237 = vmatpush1.msra.mxu0 0.0
  %2238 = vmatprep.subr.mxu0 0.0
  %2239 = vmatpush1.msra.mxu0 0.0
  %2240 = vmatprep.subr.mxu0 0.0
  %2241 = vmatpush1.msra.mxu0 0.0
  %2242 = vmatprep.subr.mxu0 0.0
  %2243 = vmatpush1.msra.mxu0 0.0
  %2244 = vmatprep.subr.mxu0 0.0
  %2245 = vmatpush1.msra.mxu0 0.0
  %2246 = vmatprep.subr.mxu0 0.0
  %2247 = vmatpush1.msra.mxu0 0.0
  %2248 = vmatprep.subr.mxu0 0.0
  %2249 = vmatpush1.msra.mxu0 0.0
  %2250 = vmatprep.subr.mxu0 0.0
  %2251 = vmatpush1.msra.mxu0 0.0
  %2252 = vmatprep.subr.mxu0 0.0
  %2253 = vmatpush1.msra.mxu0 0.0
  %2254 = vmatprep.subr.mxu0 0.0
  %2255 = vmatpush1.msra.mxu0 0.0
  %2256 = vmatprep.subr.mxu0 0.0
  %2257 = vmatpush1.msra.mxu0 0.0
  %2258 = vmatprep.subr.mxu0 0.0
  %2259 = vmatpush1.msra.mxu0 0.0
  %2260 = vmatprep.subr.mxu0 0.0
  %2261 = vmatpush1.msra.mxu0 0.0
  %2262 = vmatprep.subr.mxu0 0.0
  %2263 = vmatpush1.msra.mxu0 0.0
  %2264 = vmatprep.subr.mxu0 0.0
  %2265 = vmatpush1.msra.mxu0 0.0
  %2266 = vmatprep.mubr.f32.mxu0 0.0
  %2267 = vmatmul.mubr.f32.gmra.mrb[0].mxu0 %v1265
  %v2268 = vpop.f32.mrb[0].mxu0
  %v2269 = vadd.f32 %v1707, %v2268
  %v2270 = vpop.f32.mrb[0].mxu0
  %v2271 = vadd.f32 %v1711, %v2270
  %2272 = vdwg.mxu0
  %2273 = vmatprep.subr.mxu0 %v1281
  %2274 = vmatpush1.msra.mxu0 %v1280
  %2275 = vmatprep.subr.mxu0 %v1305
  %2276 = vmatpush1.msra.mxu0 %v1304
  %2277 = vmatprep.subr.mxu0 %v1329
  %2278 = vmatpush1.msra.mxu0 %v1328
  %2279 = vmatprep.subr.mxu0 %v1353
  %2280 = vmatpush1.msra.mxu0 %v1352
  %2281 = vmatprep.subr.mxu0 %v1377
  %2282 = vmatpush1.msra.mxu0 %v1376
  %2283 = vmatprep.subr.mxu0 %v1401
  %2284 = vmatpush1.msra.mxu0 %v1400
  %2285 = vmatprep.subr.mxu0 %v1425
  %2286 = vmatpush1.msra.mxu0 %v1424
  %2287 = vmatprep.subr.mxu0 %v1449
  %2288 = vmatpush1.msra.mxu0 %v1448
  %2289 = vmatprep.subr.mxu0 %v1473
  %2290 = vmatpush1.msra.mxu0 %v1472
  %2291 = vmatprep.subr.mxu0 %v1497
  %2292 = vmatpush1.msra.mxu0 %v1496
  %2293 = vmatprep.subr.mxu0 %v1521
  %2294 = vmatpush1.msra.mxu0 %v1520
  %2295 = vmatprep.subr.mxu0 %v1545
  %2296 = vmatpush1.msra.mxu0 %v1544
  %2297 = vmatprep.subr.mxu0 %v1569
  %2298 = vmatpush1.msra.mxu0 %v1568
  %2299 = vmatprep.subr.mxu0 %v1593
  %2300 = vmatpush1.msra.mxu0 %v1592
  %2301 = vmatprep.subr.mxu0 %v1617
  %2302 = vmatpush1.msra.mxu0 %v1616
  %2303 = vmatprep.subr.mxu0 %v1641
  %2304 = vmatpush1.msra.mxu0 %v1640
  %2305 = vmatprep.subr.mxu0 0.0
  %2306 = vmatpush1.msra.mxu0 0.0
  %2307 = vmatprep.subr.mxu0 0.0
  %2308 = vmatpush1.msra.mxu0 0.0
  %2309 = vmatprep.subr.mxu0 0.0
  %2310 = vmatpush1.msra.mxu0 0.0
  %2311 = vmatprep.subr.mxu0 0.0
  %2312 = vmatpush1.msra.mxu0 0.0
  %2313 = vmatprep.subr.mxu0 0.0
  %2314 = vmatpush1.msra.mxu0 0.0
  %2315 = vmatprep.subr.mxu0 0.0
  %2316 = vmatpush1.msra.mxu0 0.0
  %2317 = vmatprep.subr.mxu0 0.0
  %2318 = vmatpush1.msra.mxu0 0.0
  %2319 = vmatprep.subr.mxu0 0.0
  %2320 = vmatpush1.msra.mxu0 0.0
  %2321 = vmatprep.subr.mxu0 0.0
  %2322 = vmatpush1.msra.mxu0 0.0
  %2323 = vmatprep.subr.mxu0 0.0
  %2324 = vmatpush1.msra.mxu0 0.0
  %2325 = vmatprep.subr.mxu0 0.0
  %2326 = vmatpush1.msra.mxu0 0.0
  %2327 = vmatprep.subr.mxu0 0.0
  %2328 = vmatpush1.msra.mxu0 0.0
  %2329 = vmatprep.subr.mxu0 0.0
  %2330 = vmatpush1.msra.mxu0 0.0
  %2331 = vmatprep.subr.mxu0 0.0
  %2332 = vmatpush1.msra.mxu0 0.0
  %2333 = vmatprep.subr.mxu0 0.0
  %2334 = vmatpush1.msra.mxu0 0.0
  %2335 = vmatprep.subr.mxu0 0.0
  %2336 = vmatpush1.msra.mxu0 0.0
  %2337 = vmatprep.mubr.f32.mxu0 0.0
  %2338 = vmatmul.mubr.f32.gmra.mrb[0].mxu0 %v1265
  %v2339 = vpop.f32.mrb[0].mxu0
  %v2340 = vadd.f32 %v1715, %v2339
  %v2341 = vpop.f32.mrb[0].mxu0
  %v2342 = vadd.f32 %v1719, %v2341
  %2343 = vdwg.mxu0
  %2344 = vmatprep.subr.mxu0 %v1283
  %2345 = vmatpush1.msra.mxu0 %v1282
  %2346 = vmatprep.subr.mxu0 %v1307
  %2347 = vmatpush1.msra.mxu0 %v1306
  %2348 = vmatprep.subr.mxu0 %v1331
  %2349 = vmatpush1.msra.mxu0 %v1330
  %2350 = vmatprep.subr.mxu0 %v1355
  %2351 = vmatpush1.msra.mxu0 %v1354
  %2352 = vmatprep.subr.mxu0 %v1379
  %2353 = vmatpush1.msra.mxu0 %v1378
  %2354 = vmatprep.subr.mxu0 %v1403
  %2355 = vmatpush1.msra.mxu0 %v1402
  %2356 = vmatprep.subr.mxu0 %v1427
  %2357 = vmatpush1.msra.mxu0 %v1426
  %2358 = vmatprep.subr.mxu0 %v1451
  %2359 = vmatpush1.msra.mxu0 %v1450
  %2360 = vmatprep.subr.mxu0 %v1475
  %2361 = vmatpush1.msra.mxu0 %v1474
  %2362 = vmatprep.subr.mxu0 %v1499
  %2363 = vmatpush1.msra.mxu0 %v1498
  %2364 = vmatprep.subr.mxu0 %v1523
  %2365 = vmatpush1.msra.mxu0 %v1522
  %2366 = vmatprep.subr.mxu0 %v1547
  %2367 = vmatpush1.msra.mxu0 %v1546
  %2368 = vmatprep.subr.mxu0 %v1571
  %2369 = vmatpush1.msra.mxu0 %v1570
  %2370 = vmatprep.subr.mxu0 %v1595
  %2371 = vmatpush1.msra.mxu0 %v1594
  %2372 = vmatprep.subr.mxu0 %v1619
  %2373 = vmatpush1.msra.mxu0 %v1618
  %2374 = vmatprep.subr.mxu0 %v1643
  %2375 = vmatpush1.msra.mxu0 %v1642
  %2376 = vmatprep.subr.mxu0 0.0
  %2377 = vmatpush1.msra.mxu0 0.0
  %2378 = vmatprep.subr.mxu0 0.0
  %2379 = vmatpush1.msra.mxu0 0.0
  %2380 = vmatprep.subr.mxu0 0.0
  %2381 = vmatpush1.msra.mxu0 0.0
  %2382 = vmatprep.subr.mxu0 0.0
  %2383 = vmatpush1.msra.mxu0 0.0
  %2384 = vmatprep.subr.mxu0 0.0
  %2385 = vmatpush1.msra.mxu0 0.0
  %2386 = vmatprep.subr.mxu0 0.0
  %2387 = vmatpush1.msra.mxu0 0.0
  %2388 = vmatprep.subr.mxu0 0.0
  %2389 = vmatpush1.msra.mxu0 0.0
  %2390 = vmatprep.subr.mxu0 0.0
  %2391 = vmatpush1.msra.mxu0 0.0
  %2392 = vmatprep.subr.mxu0 0.0
  %2393 = vmatpush1.msra.mxu0 0.0
  %2394 = vmatprep.subr.mxu0 0.0
  %2395 = vmatpush1.msra.mxu0 0.0
  %2396 = vmatprep.subr.mxu0 0.0
  %2397 = vmatpush1.msra.mxu0 0.0
  %2398 = vmatprep.subr.mxu0 0.0
  %2399 = vmatpush1.msra.mxu0 0.0
  %2400 = vmatprep.subr.mxu0 0.0
  %2401 = vmatpush1.msra.mxu0 0.0
  %2402 = vmatprep.subr.mxu0 0.0
  %2403 = vmatpush1.msra.mxu0 0.0
  %2404 = vmatprep.subr.mxu0 0.0
  %2405 = vmatpush1.msra.mxu0 0.0
  %2406 = vmatprep.subr.mxu0 0.0
  %2407 = vmatpush1.msra.mxu0 0.0
  %2408 = vmatprep.mubr.f32.mxu0 0.0
  %2409 = vmatmul.mubr.f32.gmra.mrb[0].mxu0 %v1265
  %v2410 = vpop.f32.mrb[0].mxu0
  %v2411 = vadd.f32 %v1723, %v2410
  %v2412 = vpop.f32.mrb[0].mxu0
  %v2413 = vadd.f32 %v1727, %v2412
  %2414 = vdwg.mxu0
  %2415 = vmatprep.subr.mxu0 %v1285
  %2416 = vmatpush1.msra.mxu0 %v1284
  %2417 = vmatprep.subr.mxu0 %v1309
  %2418 = vmatpush1.msra.mxu0 %v1308
  %2419 = vmatprep.subr.mxu0 %v1333
  %2420 = vmatpush1.msra.mxu0 %v1332
  %2421 = vmatprep.subr.mxu0 %v1357
  %2422 = vmatpush1.msra.mxu0 %v1356
  %2423 = vmatprep.subr.mxu0 %v1381
  %2424 = vmatpush1.msra.mxu0 %v1380
  %2425 = vmatprep.subr.mxu0 %v1405
  %2426 = vmatpush1.msra.mxu0 %v1404
  %2427 = vmatprep.subr.mxu0 %v1429
  %2428 = vmatpush1.msra.mxu0 %v1428
  %2429 = vmatprep.subr.mxu0 %v1453
  %2430 = vmatpush1.msra.mxu0 %v1452
  %2431 = vmatprep.subr.mxu0 %v1477
  %2432 = vmatpush1.msra.mxu0 %v1476
  %2433 = vmatprep.subr.mxu0 %v1501
  %2434 = vmatpush1.msra.mxu0 %v1500
  %2435 = vmatprep.subr.mxu0 %v1525
  %2436 = vmatpush1.msra.mxu0 %v1524
  %2437 = vmatprep.subr.mxu0 %v1549
  %2438 = vmatpush1.msra.mxu0 %v1548
  %2439 = vmatprep.subr.mxu0 %v1573
  %2440 = vmatpush1.msra.mxu0 %v1572
  %2441 = vmatprep.subr.mxu0 %v1597
  %2442 = vmatpush1.msra.mxu0 %v1596
  %2443 = vmatprep.subr.mxu0 %v1621
  %2444 = vmatpush1.msra.mxu0 %v1620
  %2445 = vmatprep.subr.mxu0 %v1645
  %2446 = vmatpush1.msra.mxu0 %v1644
  %2447 = vmatprep.subr.mxu0 0.0
  %2448 = vmatpush1.msra.mxu0 0.0
  %2449 = vmatprep.subr.mxu0 0.0
  %2450 = vmatpush1.msra.mxu0 0.0
  %2451 = vmatprep.subr.mxu0 0.0
  %2452 = vmatpush1.msra.mxu0 0.0
  %2453 = vmatprep.subr.mxu0 0.0
  %2454 = vmatpush1.msra.mxu0 0.0
  %2455 = vmatprep.subr.mxu0 0.0
  %2456 = vmatpush1.msra.mxu0 0.0
  %2457 = vmatprep.subr.mxu0 0.0
  %2458 = vmatpush1.msra.mxu0 0.0
  %2459 = vmatprep.subr.mxu0 0.0
  %2460 = vmatpush1.msra.mxu0 0.0
  %2461 = vmatprep.subr.mxu0 0.0
  %2462 = vmatpush1.msra.mxu0 0.0
  %2463 = vmatprep.subr.mxu0 0.0
  %2464 = vmatpush1.msra.mxu0 0.0
  %2465 = vmatprep.subr.mxu0 0.0
  %2466 = vmatpush1.msra.mxu0 0.0
  %2467 = vmatprep.subr.mxu0 0.0
  %2468 = vmatpush1.msra.mxu0 0.0
  %2469 = vmatprep.subr.mxu0 0.0
  %2470 = vmatpush1.msra.mxu0 0.0
  %2471 = vmatprep.subr.mxu0 0.0
  %2472 = vmatpush1.msra.mxu0 0.0
  %2473 = vmatprep.subr.mxu0 0.0
  %2474 = vmatpush1.msra.mxu0 0.0
  %2475 = vmatprep.subr.mxu0 0.0
  %2476 = vmatpush1.msra.mxu0 0.0
  %2477 = vmatprep.subr.mxu0 0.0
  %2478 = vmatpush1.msra.mxu0 0.0
  %2479 = vmatprep.mubr.f32.mxu0 0.0
  %2480 = vmatmul.mubr.f32.gmra.mrb[0].mxu0 %v1265
  %v2481 = vpop.f32.mrb[0].mxu0
  %v2482 = vadd.f32 %v1731, %v2481
  %v2483 = vpop.f32.mrb[0].mxu0
  %v2484 = vadd.f32 %v1735, %v2483
  %2485 = vdwg.mxu0
  %2486 = vmatprep.subr.mxu0 %v1287
  %2487 = vmatpush1.msra.mxu0 %v1286
  %2488 = vmatprep.subr.mxu0 %v1311
  %2489 = vmatpush1.msra.mxu0 %v1310
  %2490 = vmatprep.subr.mxu0 %v1335
  %2491 = vmatpush1.msra.mxu0 %v1334
  %2492 = vmatprep.subr.mxu0 %v1359
  %2493 = vmatpush1.msra.mxu0 %v1358
  %2494 = vmatprep.subr.mxu0 %v1383
  %2495 = vmatpush1.msra.mxu0 %v1382
  %2496 = vmatprep.subr.mxu0 %v1407
  %2497 = vmatpush1.msra.mxu0 %v1406
  %2498 = vmatprep.subr.mxu0 %v1431
  %2499 = vmatpush1.msra.mxu0 %v1430
  %2500 = vmatprep.subr.mxu0 %v1455
  %2501 = vmatpush1.msra.mxu0 %v1454
  %2502 = vmatprep.subr.mxu0 %v1479
  %2503 = vmatpush1.msra.mxu0 %v1478
  %2504 = vmatprep.subr.mxu0 %v1503
  %2505 = vmatpush1.msra.mxu0 %v1502
  %2506 = vmatprep.subr.mxu0 %v1527
  %2507 = vmatpush1.msra.mxu0 %v1526
  %2508 = vmatprep.subr.mxu0 %v1551
  %2509 = vmatpush1.msra.mxu0 %v1550
  %2510 = vmatprep.subr.mxu0 %v1575
  %2511 = vmatpush1.msra.mxu0 %v1574
  %2512 = vmatprep.subr.mxu0 %v1599
  %2513 = vmatpush1.msra.mxu0 %v1598
  %2514 = vmatprep.subr.mxu0 %v1623
  %2515 = vmatpush1.msra.mxu0 %v1622
  %2516 = vmatprep.subr.mxu0 %v1647
  %2517 = vmatpush1.msra.mxu0 %v1646
  %2518 = vmatprep.subr.mxu0 0.0
  %2519 = vmatpush1.msra.mxu0 0.0
  %2520 = vmatprep.subr.mxu0 0.0
  %2521 = vmatpush1.msra.mxu0 0.0
  %2522 = vmatprep.subr.mxu0 0.0
  %2523 = vmatpush1.msra.mxu0 0.0
  %2524 = vmatprep.subr.mxu0 0.0
  %2525 = vmatpush1.msra.mxu0 0.0
  %2526 = vmatprep.subr.mxu0 0.0
  %2527 = vmatpush1.msra.mxu0 0.0
  %2528 = vmatprep.subr.mxu0 0.0
  %2529 = vmatpush1.msra.mxu0 0.0
  %2530 = vmatprep.subr.mxu0 0.0
  %2531 = vmatpush1.msra.mxu0 0.0
  %2532 = vmatprep.subr.mxu0 0.0
  %2533 = vmatpush1.msra.mxu0 0.0
  %2534 = vmatprep.subr.mxu0 0.0
  %2535 = vmatpush1.msra.mxu0 0.0
  %2536 = vmatprep.subr.mxu0 0.0
  %2537 = vmatpush1.msra.mxu0 0.0
  %2538 = vmatprep.subr.mxu0 0.0
  %2539 = vmatpush1.msra.mxu0 0.0
  %2540 = vmatprep.subr.mxu0 0.0
  %2541 = vmatpush1.msra.mxu0 0.0
  %2542 = vmatprep.subr.mxu0 0.0
  %2543 = vmatpush1.msra.mxu0 0.0
  %2544 = vmatprep.subr.mxu0 0.0
  %2545 = vmatpush1.msra.mxu0 0.0
  %2546 = vmatprep.subr.mxu0 0.0
  %2547 = vmatpush1.msra.mxu0 0.0
  %2548 = vmatprep.subr.mxu0 0.0
  %2549 = vmatpush1.msra.mxu0 0.0
  %2550 = vmatprep.mubr.f32.mxu0 0.0
  %2551 = vmatmul.mubr.f32.gmra.mrb[0].mxu0 %v1265
  %v2552 = vpop.f32.mrb[0].mxu0
  %v2553 = vadd.f32 %v1739, %v2552
  %v2554 = vpop.f32.mrb[0].mxu0
  %v2555 = vadd.f32 %v1743, %v2554
  %2556 = vdwg.mxu0
  %2557 = vmatprep.subr.mxu0 %v1289
  %2558 = vmatpush1.msra.mxu0 %v1288
  %2559 = vmatprep.subr.mxu0 %v1313
  %2560 = vmatpush1.msra.mxu0 %v1312
  %2561 = vmatprep.subr.mxu0 %v1337
  %2562 = vmatpush1.msra.mxu0 %v1336
  %2563 = vmatprep.subr.mxu0 %v1361
  %2564 = vmatpush1.msra.mxu0 %v1360
  %2565 = vmatprep.subr.mxu0 %v1385
  %2566 = vmatpush1.msra.mxu0 %v1384
  %2567 = vmatprep.subr.mxu0 %v1409
  %2568 = vmatpush1.msra.mxu0 %v1408
  %2569 = vmatprep.subr.mxu0 %v1433
  %2570 = vmatpush1.msra.mxu0 %v1432
  %2571 = vmatprep.subr.mxu0 %v1457
  %2572 = vmatpush1.msra.mxu0 %v1456
  %2573 = vmatprep.subr.mxu0 %v1481
  %2574 = vmatpush1.msra.mxu0 %v1480
  %2575 = vmatprep.subr.mxu0 %v1505
  %2576 = vmatpush1.msra.mxu0 %v1504
  %2577 = vmatprep.subr.mxu0 %v1529
  %2578 = vmatpush1.msra.mxu0 %v1528
  %2579 = vmatprep.subr.mxu0 %v1553
  %2580 = vmatpush1.msra.mxu0 %v1552
  %2581 = vmatprep.subr.mxu0 %v1577
  %2582 = vmatpush1.msra.mxu0 %v1576
  %2583 = vmatprep.subr.mxu0 %v1601
  %2584 = vmatpush1.msra.mxu0 %v1600
  %2585 = vmatprep.subr.mxu0 %v1625
  %2586 = vmatpush1.msra.mxu0 %v1624
  %2587 = vmatprep.subr.mxu0 %v1649
  %2588 = vmatpush1.msra.mxu0 %v1648
  %2589 = vmatprep.subr.mxu0 0.0
  %2590 = vmatpush1.msra.mxu0 0.0
  %2591 = vmatprep.subr.mxu0 0.0
  %2592 = vmatpush1.msra.mxu0 0.0
  %2593 = vmatprep.subr.mxu0 0.0
  %2594 = vmatpush1.msra.mxu0 0.0
  %2595 = vmatprep.subr.mxu0 0.0
  %2596 = vmatpush1.msra.mxu0 0.0
  %2597 = vmatprep.subr.mxu0 0.0
  %2598 = vmatpush1.msra.mxu0 0.0
  %2599 = vmatprep.subr.mxu0 0.0
  %2600 = vmatpush1.msra.mxu0 0.0
  %2601 = vmatprep.subr.mxu0 0.0
  %2602 = vmatpush1.msra.mxu0 0.0
  %2603 = vmatprep.subr.mxu0 0.0
  %2604 = vmatpush1.msra.mxu0 0.0
  %2605 = vmatprep.subr.mxu0 0.0
  %2606 = vmatpush1.msra.mxu0 0.0
  %2607 = vmatprep.subr.mxu0 0.0
  %2608 = vmatpush1.msra.mxu0 0.0
  %2609 = vmatprep.subr.mxu0 0.0
  %2610 = vmatpush1.msra.mxu0 0.0
  %2611 = vmatprep.subr.mxu0 0.0
  %2612 = vmatpush1.msra.mxu0 0.0
  %2613 = vmatprep.subr.mxu0 0.0
  %2614 = vmatpush1.msra.mxu0 0.0
  %2615 = vmatprep.subr.mxu0 0.0
  %2616 = vmatpush1.msra.mxu0 0.0
  %2617 = vmatprep.subr.mxu0 0.0
  %2618 = vmatpush1.msra.mxu0 0.0
  %2619 = vmatprep.subr.mxu0 0.0
  %2620 = vmatpush1.msra.mxu0 0.0
  %2621 = vmatprep.mubr.f32.mxu0 0.0
  %2622 = vmatmul.mubr.f32.gmra.mrb[0].mxu0 %v1265
  %v2623 = vpop.f32.mrb[0].mxu0
  %v2624 = vadd.f32 %v1747, %v2623
  %v2625 = vpop.f32.mrb[0].mxu0
  %v2626 = vadd.f32 %v1751, %v2625
  %2627 = vdwg.mxu0
  %v2628 = vmax.f32 %v1843, 0.0
  %v2629 = vmax.f32 %v1845, 0.0
  %v2630 = vmax.f32 %v1914, 0.0
  %v2631 = vmax.f32 %v1916, 0.0
  %v2632 = vmax.f32 %v1985, 0.0
  %v2633 = vmax.f32 %v1987, 0.0
  %v2634 = vmax.f32 %v2056, 0.0
  %v2635 = vmax.f32 %v2058, 0.0
  %v2636 = vmax.f32 %v2127, 0.0
  %v2637 = vmax.f32 %v2129, 0.0
  %v2638 = vmax.f32 %v2198, 0.0
  %v2639 = vmax.f32 %v2200, 0.0
  %v2640 = vmax.f32 %v2269, 0.0
  %v2641 = vmax.f32 %v2271, 0.0
  %v2642 = vmax.f32 %v2340, 0.0
  %v2643 = vmax.f32 %v2342, 0.0
  %v2644 = vmax.f32 %v2411, 0.0
  %v2645 = vmax.f32 %v2413, 0.0
  %v2646 = vmax.f32 %v2482, 0.0
  %v2647 = vmax.f32 %v2484, 0.0
  %v2648 = vmax.f32 %v2553, 0.0
  %v2649 = vmax.f32 %v2555, 0.0
  %v2650 = vmax.f32 %v2624, 0.0
  %v2651 = vmax.f32 %v2626, 0.0
  %2652 = vst [vmem:[%s15] sm:$0xff] %v2628
  %2653 = vst [vmem:[%s15 + $0x8] sm:$0xff] %v2629
  %2654 = vst [vmem:[%s15 + $0x10] sm:$0xff] %v2630
  %2655 = vst [vmem:[%s15 + $0x18] sm:$0xff] %v2631
  %2656 = vst [vmem:[%s15 + $0x20] sm:$0xff] %v2632
  %2657 = vst [vmem:[%s15 + $0x28] sm:$0xff] %v2633
  %2658 = vst [vmem:[%s15 + $0x30] sm:$0xff] %v2634
  %2659 = vst [vmem:[%s15 + $0x38] sm:$0xff] %v2635
  %2660 = vst [vmem:[%s15 + $0x40] sm:$0xff] %v2636
  %2661 = vst [vmem:[%s15 + $0x48] sm:$0xff] %v2637
  %2662 = vst [vmem:[%s15 + $0x50] sm:$0xff] %v2638
  %2663 = vst [vmem:[%s15 + $0x58] sm:$0xff] %v2639
  %2664 = vst [vmem:[%s15 + $0x60] sm:$0xff] %v2640
  %2665 = vst [vmem:[%s15 + $0x68] sm:$0xff] %v2641
  %2666 = vst [vmem:[%s15 + $0x70] sm:$0xff] %v2642
  %2667 = vst [vmem:[%s15 + $0x78] sm:$0xff] %v2643
  %2668 = vst [vmem:[%s15 + $0x80] sm:$0xff] %v2644
  %2669 = vst [vmem:[%s15 + $0x88] sm:$0xff] %v2645
  %2670 = vst [vmem:[%s15 + $0x90] sm:$0xff] %v2646
  %2671 = vst [vmem:[%s15 + $0x98] sm:$0xff] %v2647
  %2672 = vst [vmem:[%s15 + $0xa0] sm:$0xff] %v2648
  %2673 = vst [vmem:[%s15 + $0xa8] sm:$0xff] %v2649
  %2674 = vst [vmem:[%s15 + $0xb0] sm:$0xff] %v2650
  %2675 = vst [vmem:[%s15 + $0xb8] sm:$0xff] %v2651
  // Predicated region
  $region62: #{forward.13} parent=0 // pred_check
    _
  $region63: #{forward.13} parent=0 // pred_check_branch
    %2677 = sbr.rel (0) target = $region65
  $region64: #{forward.13} parent=0 // pred_region
    _
  $region65: #{forward.13} parent=0 // pred_fallthru
    _
  // Predicated region
  $region66: #{forward.13} parent=0 // pred_check
    _
  $region67: #{forward.13} parent=0 // pred_check_branch
    %2679 = sbr.rel (0) target = $region69
  $region68: #{forward.13} parent=0 // pred_region
    _
  $region69: #{forward.13} parent=0 // pred_fallthru
    _

// kernel: forward.14
$region0: #{forward.14}
  #allocation0 [shape = 'u32[]', space=smem, size = 0x4, offset = 0x4, fixed_abs, tag = 'smem constant byte address 0x4 - core index']
  #allocation1 [shape = 'u32[144,128]{1,0:T(1,128)}', space=vmem, size = 0x12000, scoped, tag = 'internal scratch']
  %s0 = inlined_call_operand.vmem [shape: f32[24,256], index: 0, kind: input, shape index: {}]
  %s1 = inlined_call_operand.vmem [shape: f32[256,1152], index: 1, kind: input, shape index: {}]
  %s2 = inlined_call_operand.vmem [shape: f32[1,1152], index: 2, kind: input, shape index: {}]
  %s3 = inlined_call_operand.vmem [shape: f32[24,1152], index: 3, kind: output, shape index: {}]
  %s4 = sld [smem:[#allocation0]]
  $region22: #{forward.14} parent=0
    _
  %s6 = ssub.s32 1, %s4
  %s7 = scalar_select 0, %s6, %s4
  // Predicated region
  $region2: #{forward.14} parent=0 // pred_check
    _
  $region3: #{forward.14} parent=0 // pred_check_branch
    %9 = sbr.rel (0) target = $region5
  $region4: #{forward.14} parent=0 // pred_region
    _
  $region5: #{forward.14} parent=0 // pred_fallthru
    _
  // Predicated region
  $region6: #{forward.14} parent=0 // pred_check
    _
  $region7: #{forward.14} parent=0 // pred_check_branch
    %11 = sbr.rel (0) target = $region9
  $region8: #{forward.14} parent=0 // pred_region
    _
  $region9: #{forward.14} parent=0 // pred_fallthru
    _
  // Predicated region
  $region10: #{forward.14} parent=0 // pred_check
    _
  $region11: #{forward.14} parent=0 // pred_check_branch
    %13 = sbr.rel (0) target = $region13
  $region12: #{forward.14} parent=0 // pred_region
    _
  $region13: #{forward.14} parent=0 // pred_fallthru
    _
  %v14 = vld [vmem:[%s0] sm:$0xff]
  %v15 = vld [vmem:[%s0 + $0x8] sm:$0xff]
  %v16 = vld [vmem:[%s0 + $0x10] sm:$0xff]
  %v17 = vld [vmem:[%s0 + $0x18] sm:$0xff]
  %v18 = vld [vmem:[%s0 + $0x20] sm:$0xff]
  %v19 = vld [vmem:[%s0 + $0x28] sm:$0xff]
  %v20 = vld [vmem:[%s1] sm:$0xff]
  %v21 = vld [vmem:[%s1 + $0x8] sm:$0xff]
  %v22 = vld [vmem:[%s1 + $0x10] sm:$0xff]
  %v23 = vld [vmem:[%s1 + $0x18] sm:$0xff]
  %v24 = vld [vmem:[%s1 + $0x20] sm:$0xff]
  %v25 = vld [vmem:[%s1 + $0x28] sm:$0xff]
  %v26 = vld [vmem:[%s1 + $0x30] sm:$0xff]
  %v27 = vld [vmem:[%s1 + $0x38] sm:$0xff]
  %v28 = vld [vmem:[%s1 + $0x40] sm:$0xff]
  %v29 = vld [vmem:[%s1 + $0x48] sm:$0xff]
  %v30 = vld [vmem:[%s1 + $0x50] sm:$0xff]
  %v31 = vld [vmem:[%s1 + $0x58] sm:$0xff]
  %v32 = vld [vmem:[%s1 + $0x60] sm:$0xff]
  %v33 = vld [vmem:[%s1 + $0x68] sm:$0xff]
  %v34 = vld [vmem:[%s1 + $0x70] sm:$0xff]
  %v35 = vld [vmem:[%s1 + $0x78] sm:$0xff]
  %v36 = vld [vmem:[%s1 + $0x80] sm:$0xff]
  %v37 = vld [vmem:[%s1 + $0x88] sm:$0xff]
  %v38 = vld [vmem:[%s1 + $0x90] sm:$0xff]
  %v39 = vld [vmem:[%s1 + $0x98] sm:$0xff]
  %v40 = vld [vmem:[%s1 + $0xa0] sm:$0xff]
  %v41 = vld [vmem:[%s1 + $0xa8] sm:$0xff]
  %v42 = vld [vmem:[%s1 + $0xb0] sm:$0xff]
  %v43 = vld [vmem:[%s1 + $0xb8] sm:$0xff]
  %v44 = vld [vmem:[%s1 + $0xc0] sm:$0xff]
  %v45 = vld [vmem:[%s1 + $0xc8] sm:$0xff]
  %v46 = vld [vmem:[%s1 + $0xd0] sm:$0xff]
  %v47 = vld [vmem:[%s1 + $0xd8] sm:$0xff]
  %v48 = vld [vmem:[%s1 + $0xe0] sm:$0xff]
  %v49 = vld [vmem:[%s1 + $0xe8] sm:$0xff]
  %v50 = vld [vmem:[%s1 + $0xf0] sm:$0xff]
  %v51 = vld [vmem:[%s1 + $0xf8] sm:$0xff]
  %v52 = vld [vmem:[%s1 + $0x100] sm:$0xff]
  %v53 = vld [vmem:[%s1 + $0x108] sm:$0xff]
  %v54 = vld [vmem:[%s1 + $0x110] sm:$0xff]
  %v55 = vld [vmem:[%s1 + $0x118] sm:$0xff]
  %v56 = vld [vmem:[%s1 + $0x120] sm:$0xff]
  %v57 = vld [vmem:[%s1 + $0x128] sm:$0xff]
  %v58 = vld [vmem:[%s1 + $0x130] sm:$0xff]
  %v59 = vld [vmem:[%s1 + $0x138] sm:$0xff]
  %v60 = vld [vmem:[%s1 + $0x140] sm:$0xff]
  %v61 = vld [vmem:[%s1 + $0x148] sm:$0xff]
  %v62 = vld [vmem:[%s1 + $0x150] sm:$0xff]
  %v63 = vld [vmem:[%s1 + $0x158] sm:$0xff]
  %v64 = vld [vmem:[%s1 + $0x160] sm:$0xff]
  %v65 = vld [vmem:[%s1 + $0x168] sm:$0xff]
  %v66 = vld [vmem:[%s1 + $0x170] sm:$0xff]
  %v67 = vld [vmem:[%s1 + $0x178] sm:$0xff]
  %v68 = vld [vmem:[%s1 + $0x180] sm:$0xff]
  %v69 = vld [vmem:[%s1 + $0x188] sm:$0xff]
  %v70 = vld [vmem:[%s1 + $0x190] sm:$0xff]
  %v71 = vld [vmem:[%s1 + $0x198] sm:$0xff]
  %v72 = vld [vmem:[%s1 + $0x1a0] sm:$0xff]
  %v73 = vld [vmem:[%s1 + $0x1a8] sm:$0xff]
  %v74 = vld [vmem:[%s1 + $0x1b0] sm:$0xff]
  %v75 = vld [vmem:[%s1 + $0x1b8] sm:$0xff]
  %v76 = vld [vmem:[%s1 + $0x1c0] sm:$0xff]
  %v77 = vld [vmem:[%s1 + $0x1c8] sm:$0xff]
  %v78 = vld [vmem:[%s1 + $0x1d0] sm:$0xff]
  %v79 = vld [vmem:[%s1 + $0x1d8] sm:$0xff]
  %v80 = vld [vmem:[%s1 + $0x1e0] sm:$0xff]
  %v81 = vld [vmem:[%s1 + $0x1e8] sm:$0xff]
  %v82 = vld [vmem:[%s1 + $0x1f0] sm:$0xff]
  %v83 = vld [vmem:[%s1 + $0x1f8] sm:$0xff]
  %v84 = vld [vmem:[%s1 + $0x200] sm:$0xff]
  %v85 = vld [vmem:[%s1 + $0x208] sm:$0xff]
  %v86 = vld [vmem:[%s1 + $0x210] sm:$0xff]
  %v87 = vld [vmem:[%s1 + $0x218] sm:$0xff]
  %v88 = vld [vmem:[%s1 + $0x220] sm:$0xff]
  %v89 = vld [vmem:[%s1 + $0x228] sm:$0xff]
  %v90 = vld [vmem:[%s1 + $0x230] sm:$0xff]
  %v91 = vld [vmem:[%s1 + $0x238] sm:$0xff]
  %v92 = vld [vmem:[%s1 + $0x240] sm:$0xff]
  %v93 = vld [vmem:[%s1 + $0x248] sm:$0xff]
  %v94 = vld [vmem:[%s1 + $0x250] sm:$0xff]
  %v95 = vld [vmem:[%s1 + $0x258] sm:$0xff]
  %v96 = vld [vmem:[%s1 + $0x260] sm:$0xff]
  %v97 = vld [vmem:[%s1 + $0x268] sm:$0xff]
  %v98 = vld [vmem:[%s1 + $0x270] sm:$0xff]
  %v99 = vld [vmem:[%s1 + $0x278] sm:$0xff]
  %v100 = vld [vmem:[%s1 + $0x280] sm:$0xff]
  %v101 = vld [vmem:[%s1 + $0x288] sm:$0xff]
  %v102 = vld [vmem:[%s1 + $0x290] sm:$0xff]
  %v103 = vld [vmem:[%s1 + $0x298] sm:$0xff]
  %v104 = vld [vmem:[%s1 + $0x2a0] sm:$0xff]
  %v105 = vld [vmem:[%s1 + $0x2a8] sm:$0xff]
  %v106 = vld [vmem:[%s1 + $0x2b0] sm:$0xff]
  %v107 = vld [vmem:[%s1 + $0x2b8] sm:$0xff]
  %v108 = vld [vmem:[%s1 + $0x2c0] sm:$0xff]
  %v109 = vld [vmem:[%s1 + $0x2c8] sm:$0xff]
  %v110 = vld [vmem:[%s1 + $0x2d0] sm:$0xff]
  %v111 = vld [vmem:[%s1 + $0x2d8] sm:$0xff]
  %v112 = vld [vmem:[%s1 + $0x2e0] sm:$0xff]
  %v113 = vld [vmem:[%s1 + $0x2e8] sm:$0xff]
  %v114 = vld [vmem:[%s1 + $0x2f0] sm:$0xff]
  %v115 = vld [vmem:[%s1 + $0x2f8] sm:$0xff]
  %v116 = vld [vmem:[%s1 + $0x300] sm:$0xff]
  %v117 = vld [vmem:[%s1 + $0x308] sm:$0xff]
  %v118 = vld [vmem:[%s1 + $0x310] sm:$0xff]
  %v119 = vld [vmem:[%s1 + $0x318] sm:$0xff]
  %v120 = vld [vmem:[%s1 + $0x320] sm:$0xff]
  %v121 = vld [vmem:[%s1 + $0x328] sm:$0xff]
  %v122 = vld [vmem:[%s1 + $0x330] sm:$0xff]
  %v123 = vld [vmem:[%s1 + $0x338] sm:$0xff]
  %v124 = vld [vmem:[%s1 + $0x340] sm:$0xff]
  %v125 = vld [vmem:[%s1 + $0x348] sm:$0xff]
  %v126 = vld [vmem:[%s1 + $0x350] sm:$0xff]
  %v127 = vld [vmem:[%s1 + $0x358] sm:$0xff]
  %v128 = vld [vmem:[%s1 + $0x360] sm:$0xff]
  %v129 = vld [vmem:[%s1 + $0x368] sm:$0xff]
  %v130 = vld [vmem:[%s1 + $0x370] sm:$0xff]
  %v131 = vld [vmem:[%s1 + $0x378] sm:$0xff]
  %v132 = vld [vmem:[%s1 + $0x380] sm:$0xff]
  %v133 = vld [vmem:[%s1 + $0x388] sm:$0xff]
  %v134 = vld [vmem:[%s1 + $0x390] sm:$0xff]
  %v135 = vld [vmem:[%s1 + $0x398] sm:$0xff]
  %v136 = vld [vmem:[%s1 + $0x3a0] sm:$0xff]
  %v137 = vld [vmem:[%s1 + $0x3a8] sm:$0xff]
  %v138 = vld [vmem:[%s1 + $0x3b0] sm:$0xff]
  %v139 = vld [vmem:[%s1 + $0x3b8] sm:$0xff]
  %v140 = vld [vmem:[%s1 + $0x3c0] sm:$0xff]
  %v141 = vld [vmem:[%s1 + $0x3c8] sm:$0xff]
  %v142 = vld [vmem:[%s1 + $0x3d0] sm:$0xff]
  %v143 = vld [vmem:[%s1 + $0x3d8] sm:$0xff]
  %v144 = vld [vmem:[%s1 + $0x3e0] sm:$0xff]
  %v145 = vld [vmem:[%s1 + $0x3e8] sm:$0xff]
  %v146 = vld [vmem:[%s1 + $0x3f0] sm:$0xff]
  %v147 = vld [vmem:[%s1 + $0x3f8] sm:$0xff]
  %v148 = vld [vmem:[%s1 + $0x400] sm:$0xff]
  %v149 = vld [vmem:[%s1 + $0x408] sm:$0xff]
  %v150 = vld [vmem:[%s1 + $0x410] sm:$0xff]
  %v151 = vld [vmem:[%s1 + $0x418] sm:$0xff]
  %v152 = vld [vmem:[%s1 + $0x420] sm:$0xff]
  %v153 = vld [vmem:[%s1 + $0x428] sm:$0xff]
  %v154 = vld [vmem:[%s1 + $0x430] sm:$0xff]
  %v155 = vld [vmem:[%s1 + $0x438] sm:$0xff]
  %v156 = vld [vmem:[%s1 + $0x440] sm:$0xff]
  %v157 = vld [vmem:[%s1 + $0x448] sm:$0xff]
  %v158 = vld [vmem:[%s1 + $0x450] sm:$0xff]
  %v159 = vld [vmem:[%s1 + $0x458] sm:$0xff]
  %v160 = vld [vmem:[%s1 + $0x460] sm:$0xff]
  %v161 = vld [vmem:[%s1 + $0x468] sm:$0xff]
  %v162 = vld [vmem:[%s1 + $0x470] sm:$0xff]
  %v163 = vld [vmem:[%s1 + $0x478] sm:$0xff]
  %v164 = vld [vmem:[%s1 + $0x480] sm:$0xff]
  %v165 = vld [vmem:[%s1 + $0x488] sm:$0xff]
  %v166 = vld [vmem:[%s1 + $0x490] sm:$0xff]
  %v167 = vld [vmem:[%s1 + $0x498] sm:$0xff]
  %v168 = vld [vmem:[%s1 + $0x4a0] sm:$0xff]
  %v169 = vld [vmem:[%s1 + $0x4a8] sm:$0xff]
  %v170 = vld [vmem:[%s1 + $0x4b0] sm:$0xff]
  %v171 = vld [vmem:[%s1 + $0x4b8] sm:$0xff]
  %v172 = vld [vmem:[%s1 + $0x4c0] sm:$0xff]
  %v173 = vld [vmem:[%s1 + $0x4c8] sm:$0xff]
  %v174 = vld [vmem:[%s1 + $0x4d0] sm:$0xff]
  %v175 = vld [vmem:[%s1 + $0x4d8] sm:$0xff]
  %v176 = vld [vmem:[%s1 + $0x4e0] sm:$0xff]
  %v177 = vld [vmem:[%s1 + $0x4e8] sm:$0xff]
  %v178 = vld [vmem:[%s1 + $0x4f0] sm:$0xff]
  %v179 = vld [vmem:[%s1 + $0x4f8] sm:$0xff]
  %v180 = vld [vmem:[%s1 + $0x500] sm:$0xff]
  %v181 = vld [vmem:[%s1 + $0x508] sm:$0xff]
  %v182 = vld [vmem:[%s1 + $0x510] sm:$0xff]
  %v183 = vld [vmem:[%s1 + $0x518] sm:$0xff]
  %v184 = vld [vmem:[%s1 + $0x520] sm:$0xff]
  %v185 = vld [vmem:[%s1 + $0x528] sm:$0xff]
  %v186 = vld [vmem:[%s1 + $0x530] sm:$0xff]
  %v187 = vld [vmem:[%s1 + $0x538] sm:$0xff]
  %v188 = vld [vmem:[%s1 + $0x540] sm:$0xff]
  %v189 = vld [vmem:[%s1 + $0x548] sm:$0xff]
  %v190 = vld [vmem:[%s1 + $0x550] sm:$0xff]
  %v191 = vld [vmem:[%s1 + $0x558] sm:$0xff]
  %v192 = vld [vmem:[%s1 + $0x560] sm:$0xff]
  %v193 = vld [vmem:[%s1 + $0x568] sm:$0xff]
  %v194 = vld [vmem:[%s1 + $0x570] sm:$0xff]
  %v195 = vld [vmem:[%s1 + $0x578] sm:$0xff]
  %v196 = vld [vmem:[%s1 + $0x580] sm:$0xff]
  %v197 = vld [vmem:[%s1 + $0x588] sm:$0xff]
  %v198 = vld [vmem:[%s1 + $0x590] sm:$0xff]
  %v199 = vld [vmem:[%s1 + $0x598] sm:$0xff]
  %v200 = vld [vmem:[%s1 + $0x5a0] sm:$0xff]
  %v201 = vld [vmem:[%s1 + $0x5a8] sm:$0xff]
  %v202 = vld [vmem:[%s1 + $0x5b0] sm:$0xff]
  %v203 = vld [vmem:[%s1 + $0x5b8] sm:$0xff]
  %v204 = vld [vmem:[%s1 + $0x5c0] sm:$0xff]
  %v205 = vld [vmem:[%s1 + $0x5c8] sm:$0xff]
  %v206 = vld [vmem:[%s1 + $0x5d0] sm:$0xff]
  %v207 = vld [vmem:[%s1 + $0x5d8] sm:$0xff]
  %v208 = vld [vmem:[%s1 + $0x5e0] sm:$0xff]
  %v209 = vld [vmem:[%s1 + $0x5e8] sm:$0xff]
  %v210 = vld [vmem:[%s1 + $0x5f0] sm:$0xff]
  %v211 = vld [vmem:[%s1 + $0x5f8] sm:$0xff]
  %v212 = vld [vmem:[%s1 + $0x600] sm:$0xff]
  %v213 = vld [vmem:[%s1 + $0x608] sm:$0xff]
  %v214 = vld [vmem:[%s1 + $0x610] sm:$0xff]
  %v215 = vld [vmem:[%s1 + $0x618] sm:$0xff]
  %v216 = vld [vmem:[%s1 + $0x620] sm:$0xff]
  %v217 = vld [vmem:[%s1 + $0x628] sm:$0xff]
  %v218 = vld [vmem:[%s1 + $0x630] sm:$0xff]
  %v219 = vld [vmem:[%s1 + $0x638] sm:$0xff]
  %v220 = vld [vmem:[%s1 + $0x640] sm:$0xff]
  %v221 = vld [vmem:[%s1 + $0x648] sm:$0xff]
  %v222 = vld [vmem:[%s1 + $0x650] sm:$0xff]
  %v223 = vld [vmem:[%s1 + $0x658] sm:$0xff]
  %v224 = vld [vmem:[%s1 + $0x660] sm:$0xff]
  %v225 = vld [vmem:[%s1 + $0x668] sm:$0xff]
  %v226 = vld [vmem:[%s1 + $0x670] sm:$0xff]
  %v227 = vld [vmem:[%s1 + $0x678] sm:$0xff]
  %v228 = vld [vmem:[%s1 + $0x680] sm:$0xff]
  %v229 = vld [vmem:[%s1 + $0x688] sm:$0xff]
  %v230 = vld [vmem:[%s1 + $0x690] sm:$0xff]
  %v231 = vld [vmem:[%s1 + $0x698] sm:$0xff]
  %v232 = vld [vmem:[%s1 + $0x6a0] sm:$0xff]
  %v233 = vld [vmem:[%s1 + $0x6a8] sm:$0xff]
  %v234 = vld [vmem:[%s1 + $0x6b0] sm:$0xff]
  %v235 = vld [vmem:[%s1 + $0x6b8] sm:$0xff]
  %v236 = vld [vmem:[%s1 + $0x6c0] sm:$0xff]
  %v237 = vld [vmem:[%s1 + $0x6c8] sm:$0xff]
  %v238 = vld [vmem:[%s1 + $0x6d0] sm:$0xff]
  %v239 = vld [vmem:[%s1 + $0x6d8] sm:$0xff]
  %v240 = vld [vmem:[%s1 + $0x6e0] sm:$0xff]
  %v241 = vld [vmem:[%s1 + $0x6e8] sm:$0xff]
  %v242 = vld [vmem:[%s1 + $0x6f0] sm:$0xff]
  %v243 = vld [vmem:[%s1 + $0x6f8] sm:$0xff]
  %v244 = vld [vmem:[%s1 + $0x700] sm:$0xff]
  %v245 = vld [vmem:[%s1 + $0x708] sm:$0xff]
  %v246 = vld [vmem:[%s1 + $0x710] sm:$0xff]
  %v247 = vld [vmem:[%s1 + $0x718] sm:$0xff]
  %v248 = vld [vmem:[%s1 + $0x720] sm:$0xff]
  %v249 = vld [vmem:[%s1 + $0x728] sm:$0xff]
  %v250 = vld [vmem:[%s1 + $0x730] sm:$0xff]
  %v251 = vld [vmem:[%s1 + $0x738] sm:$0xff]
  %v252 = vld [vmem:[%s1 + $0x740] sm:$0xff]
  %v253 = vld [vmem:[%s1 + $0x748] sm:$0xff]
  %v254 = vld [vmem:[%s1 + $0x750] sm:$0xff]
  %v255 = vld [vmem:[%s1 + $0x758] sm:$0xff]
  %v256 = vld [vmem:[%s1 + $0x760] sm:$0xff]
  %v257 = vld [vmem:[%s1 + $0x768] sm:$0xff]
  %v258 = vld [vmem:[%s1 + $0x770] sm:$0xff]
  %v259 = vld [vmem:[%s1 + $0x778] sm:$0xff]
  %v260 = vld [vmem:[%s1 + $0x780] sm:$0xff]
  %v261 = vld [vmem:[%s1 + $0x788] sm:$0xff]
  %v262 = vld [vmem:[%s1 + $0x790] sm:$0xff]
  %v263 = vld [vmem:[%s1 + $0x798] sm:$0xff]
  %v264 = vld [vmem:[%s1 + $0x7a0] sm:$0xff]
  %v265 = vld [vmem:[%s1 + $0x7a8] sm:$0xff]
  %v266 = vld [vmem:[%s1 + $0x7b0] sm:$0xff]
  %v267 = vld [vmem:[%s1 + $0x7b8] sm:$0xff]
  %v268 = vld [vmem:[%s1 + $0x7c0] sm:$0xff]
  %v269 = vld [vmem:[%s1 + $0x7c8] sm:$0xff]
  %v270 = vld [vmem:[%s1 + $0x7d0] sm:$0xff]
  %v271 = vld [vmem:[%s1 + $0x7d8] sm:$0xff]
  %v272 = vld [vmem:[%s1 + $0x7e0] sm:$0xff]
  %v273 = vld [vmem:[%s1 + $0x7e8] sm:$0xff]
  %v274 = vld [vmem:[%s1 + $0x7f0] sm:$0xff]
  %v275 = vld [vmem:[%s1 + $0x7f8] sm:$0xff]
  %v276 = vld [vmem:[%s1 + $0x800] sm:$0xff]
  %v277 = vld [vmem:[%s1 + $0x808] sm:$0xff]
  %v278 = vld [vmem:[%s1 + $0x810] sm:$0xff]
  %v279 = vld [vmem:[%s1 + $0x818] sm:$0xff]
  %v280 = vld [vmem:[%s1 + $0x820] sm:$0xff]
  %v281 = vld [vmem:[%s1 + $0x828] sm:$0xff]
  %v282 = vld [vmem:[%s1 + $0x830] sm:$0xff]
  %v283 = vld [vmem:[%s1 + $0x838] sm:$0xff]
  %v284 = vld [vmem:[%s1 + $0x840] sm:$0xff]
  %v285 = vld [vmem:[%s1 + $0x848] sm:$0xff]
  %v286 = vld [vmem:[%s1 + $0x850] sm:$0xff]
  %v287 = vld [vmem:[%s1 + $0x858] sm:$0xff]
  %v288 = vld [vmem:[%s1 + $0x860] sm:$0xff]
  %v289 = vld [vmem:[%s1 + $0x868] sm:$0xff]
  %v290 = vld [vmem:[%s1 + $0x870] sm:$0xff]
  %v291 = vld [vmem:[%s1 + $0x878] sm:$0xff]
  %v292 = vld [vmem:[%s1 + $0x880] sm:$0xff]
  %v293 = vld [vmem:[%s1 + $0x888] sm:$0xff]
  %v294 = vld [vmem:[%s1 + $0x890] sm:$0xff]
  %v295 = vld [vmem:[%s1 + $0x898] sm:$0xff]
  %v296 = vld [vmem:[%s1 + $0x8a0] sm:$0xff]
  %v297 = vld [vmem:[%s1 + $0x8a8] sm:$0xff]
  %v298 = vld [vmem:[%s1 + $0x8b0] sm:$0xff]
  %v299 = vld [vmem:[%s1 + $0x8b8] sm:$0xff]
  %v300 = vld [vmem:[%s1 + $0x8c0] sm:$0xff]
  %v301 = vld [vmem:[%s1 + $0x8c8] sm:$0xff]
  %v302 = vld [vmem:[%s1 + $0x8d0] sm:$0xff]
  %v303 = vld [vmem:[%s1 + $0x8d8] sm:$0xff]
  %v304 = vld [vmem:[%s1 + $0x8e0] sm:$0xff]
  %v305 = vld [vmem:[%s1 + $0x8e8] sm:$0xff]
  %v306 = vld [vmem:[%s1 + $0x8f0] sm:$0xff]
  %v307 = vld [vmem:[%s1 + $0x8f8] sm:$0xff]
  %v308 = vld [vmem:[%s2] sm:$0xff]
  %v309 = vld [vmem:[%s2 + $0x8] sm:$0x1]
  %v312 = vlaneseq
  %v313 = vshrl.u32 %v312, 7
  %v314 = vsub.s32 0, %v313
  %v315 = vrot.slane %v308, %v314
  %v316 = vlaneseq
  %v317 = vshrl.u32 %v316, 7
  %v318 = vsub.s32 1, %v317
  %v319 = vrot.slane %v308, %v318
  %v320 = vlaneseq
  %v321 = vshrl.u32 %v320, 7
  %v322 = vsub.s32 2, %v321
  %v323 = vrot.slane %v308, %v322
  %v324 = vlaneseq
  %v325 = vshrl.u32 %v324, 7
  %v326 = vsub.s32 3, %v325
  %v327 = vrot.slane %v308, %v326
  %v328 = vlaneseq
  %v329 = vshrl.u32 %v328, 7
  %v330 = vsub.s32 4, %v329
  %v331 = vrot.slane %v308, %v330
  %v332 = vlaneseq
  %v333 = vshrl.u32 %v332, 7
  %v334 = vsub.s32 5, %v333
  %v335 = vrot.slane %v308, %v334
  %v336 = vlaneseq
  %v337 = vshrl.u32 %v336, 7
  %v338 = vsub.s32 6, %v337
  %v339 = vrot.slane %v308, %v338
  %v340 = vlaneseq
  %v341 = vshrl.u32 %v340, 7
  %v342 = vsub.s32 7, %v341
  %v343 = vrot.slane %v308, %v342
  %v344 = vlaneseq
  %v345 = vshrl.u32 %v344, 7
  %v346 = vsub.s32 0, %v345
  %v347 = vrot.slane %v309, %v346
  %357 = vmatprep.subr.mxu0 %v21
  %358 = vmatpush1.msra.mxu0 %v20
  %359 = vmatprep.subr.mxu0 %v30
  %360 = vmatpush1.msra.mxu0 %v29
  %361 = vmatprep.subr.mxu0 %v39
  %362 = vmatpush1.msra.mxu0 %v38
  %363 = vmatprep.subr.mxu0 %v48
  %364 = vmatpush1.msra.mxu0 %v47
  %365 = vmatprep.subr.mxu0 %v57
  %366 = vmatpush1.msra.mxu0 %v56
  %367 = vmatprep.subr.mxu0 %v66
  %368 = vmatpush1.msra.mxu0 %v65
  %369 = vmatprep.subr.mxu0 %v75
  %370 = vmatpush1.msra.mxu0 %v74
  %371 = vmatprep.subr.mxu0 %v84
  %372 = vmatpush1.msra.mxu0 %v83
  %373 = vmatprep.subr.mxu0 %v93
  %374 = vmatpush1.msra.mxu0 %v92
  %375 = vmatprep.subr.mxu0 %v102
  %376 = vmatpush1.msra.mxu0 %v101
  %377 = vmatprep.subr.mxu0 %v111
  %378 = vmatpush1.msra.mxu0 %v110
  %379 = vmatprep.subr.mxu0 %v120
  %380 = vmatpush1.msra.mxu0 %v119
  %381 = vmatprep.subr.mxu0 %v129
  %382 = vmatpush1.msra.mxu0 %v128
  %383 = vmatprep.subr.mxu0 %v138
  %384 = vmatpush1.msra.mxu0 %v137
  %385 = vmatprep.subr.mxu0 %v147
  %386 = vmatpush1.msra.mxu0 %v146
  %387 = vmatprep.subr.mxu0 %v156
  %388 = vmatpush1.msra.mxu0 %v155
  %389 = vmatprep.subr.mxu0 %v165
  %390 = vmatpush1.msra.mxu0 %v164
  %391 = vmatprep.subr.mxu0 %v174
  %392 = vmatpush1.msra.mxu0 %v173
  %393 = vmatprep.subr.mxu0 %v183
  %394 = vmatpush1.msra.mxu0 %v182
  %395 = vmatprep.subr.mxu0 %v192
  %396 = vmatpush1.msra.mxu0 %v191
  %397 = vmatprep.subr.mxu0 %v201
  %398 = vmatpush1.msra.mxu0 %v200
  %399 = vmatprep.subr.mxu0 %v210
  %400 = vmatpush1.msra.mxu0 %v209
  %401 = vmatprep.subr.mxu0 %v219
  %402 = vmatpush1.msra.mxu0 %v218
  %403 = vmatprep.subr.mxu0 %v228
  %404 = vmatpush1.msra.mxu0 %v227
  %405 = vmatprep.subr.mxu0 %v237
  %406 = vmatpush1.msra.mxu0 %v236
  %407 = vmatprep.subr.mxu0 %v246
  %408 = vmatpush1.msra.mxu0 %v245
  %409 = vmatprep.subr.mxu0 %v255
  %410 = vmatpush1.msra.mxu0 %v254
  %411 = vmatprep.subr.mxu0 %v264
  %412 = vmatpush1.msra.mxu0 %v263
  %413 = vmatprep.subr.mxu0 %v273
  %414 = vmatpush1.msra.mxu0 %v272
  %415 = vmatprep.subr.mxu0 %v282
  %416 = vmatpush1.msra.mxu0 %v281
  %417 = vmatprep.subr.mxu0 %v291
  %418 = vmatpush1.msra.mxu0 %v290
  %419 = vmatprep.subr.mxu0 %v300
  %420 = vmatpush1.msra.mxu0 %v299
  %421 = vmatprep.mubr.f32.mxu0 %v15
  %422 = vmatmul.mubr.f32.gmra.mrb[0].mxu0 %v14
  %v423 = vpop.f32.mrb[0].mxu0
  %v424 = vadd.f32 %v315, %v423
  %v425 = vpop.f32.mrb[0].mxu0
  %v426 = vadd.f32 %v319, %v425
  %427 = vmatprep.mubr.f32.mxu0 %v17
  %428 = vmatmul.mubr.f32.gmra.mrb[0].mxu0 %v16
  %v429 = vpop.f32.mrb[0].mxu0
  %v430 = vadd.f32 %v315, %v429
  %v431 = vpop.f32.mrb[0].mxu0
  %v432 = vadd.f32 %v319, %v431
  %433 = vmatprep.mubr.f32.mxu0 %v19
  %434 = vmatmul.mubr.f32.gmra.mrb[0].mxu0 %v18
  %v435 = vpop.f32.mrb[0].mxu0
  %v436 = vadd.f32 %v315, %v435
  %v437 = vpop.f32.mrb[0].mxu0
  %v438 = vadd.f32 %v319, %v437
  %439 = vdwg.mxu0
  %440 = vmatprep.subr.mxu0 %v23
  %441 = vmatpush1.msra.mxu0 %v22
  %442 = vmatprep.subr.mxu0 %v32
  %443 = vmatpush1.msra.mxu0 %v31
  %444 = vmatprep.subr.mxu0 %v41
  %445 = vmatpush1.msra.mxu0 %v40
  %446 = vmatprep.subr.mxu0 %v50
  %447 = vmatpush1.msra.mxu0 %v49
  %448 = vmatprep.subr.mxu0 %v59
  %449 = vmatpush1.msra.mxu0 %v58
  %450 = vmatprep.subr.mxu0 %v68
  %451 = vmatpush1.msra.mxu0 %v67
  %452 = vmatprep.subr.mxu0 %v77
  %453 = vmatpush1.msra.mxu0 %v76
  %454 = vmatprep.subr.mxu0 %v86
  %455 = vmatpush1.msra.mxu0 %v85
  %456 = vmatprep.subr.mxu0 %v95
  %457 = vmatpush1.msra.mxu0 %v94
  %458 = vmatprep.subr.mxu0 %v104
  %459 = vmatpush1.msra.mxu0 %v103
  %460 = vmatprep.subr.mxu0 %v113
  %461 = vmatpush1.msra.mxu0 %v112
  %462 = vmatprep.subr.mxu0 %v122
  %463 = vmatpush1.msra.mxu0 %v121
  %464 = vmatprep.subr.mxu0 %v131
  %465 = vmatpush1.msra.mxu0 %v130
  %466 = vmatprep.subr.mxu0 %v140
  %467 = vmatpush1.msra.mxu0 %v139
  %468 = vmatprep.subr.mxu0 %v149
  %469 = vmatpush1.msra.mxu0 %v148
  %470 = vmatprep.subr.mxu0 %v158
  %471 = vmatpush1.msra.mxu0 %v157
  %472 = vmatprep.subr.mxu0 %v167
  %473 = vmatpush1.msra.mxu0 %v166
  %474 = vmatprep.subr.mxu0 %v176
  %475 = vmatpush1.msra.mxu0 %v175
  %476 = vmatprep.subr.mxu0 %v185
  %477 = vmatpush1.msra.mxu0 %v184
  %478 = vmatprep.subr.mxu0 %v194
  %479 = vmatpush1.msra.mxu0 %v193
  %480 = vmatprep.subr.mxu0 %v203
  %481 = vmatpush1.msra.mxu0 %v202
  %482 = vmatprep.subr.mxu0 %v212
  %483 = vmatpush1.msra.mxu0 %v211
  %484 = vmatprep.subr.mxu0 %v221
  %485 = vmatpush1.msra.mxu0 %v220
  %486 = vmatprep.subr.mxu0 %v230
  %487 = vmatpush1.msra.mxu0 %v229
  %488 = vmatprep.subr.mxu0 %v239
  %489 = vmatpush1.msra.mxu0 %v238
  %490 = vmatprep.subr.mxu0 %v248
  %491 = vmatpush1.msra.mxu0 %v247
  %492 = vmatprep.subr.mxu0 %v257
  %493 = vmatpush1.msra.mxu0 %v256
  %494 = vmatprep.subr.mxu0 %v266
  %495 = vmatpush1.msra.mxu0 %v265
  %496 = vmatprep.subr.mxu0 %v275
  %497 = vmatpush1.msra.mxu0 %v274
  %498 = vmatprep.subr.mxu0 %v284
  %499 = vmatpush1.msra.mxu0 %v283
  %500 = vmatprep.subr.mxu0 %v293
  %501 = vmatpush1.msra.mxu0 %v292
  %502 = vmatprep.subr.mxu0 %v302
  %503 = vmatpush1.msra.mxu0 %v301
  %504 = vmatprep.mubr.f32.mxu0 %v15
  %505 = vmatmul.mubr.f32.gmra.mrb[0].mxu0 %v14
  %v506 = vpop.f32.mrb[0].mxu0
  %v507 = vadd.f32 %v323, %v506
  %v508 = vpop.f32.mrb[0].mxu0
  %v509 = vadd.f32 %v327, %v508
  %510 = vmatprep.mubr.f32.mxu0 %v17
  %511 = vmatmul.mubr.f32.gmra.mrb[0].mxu0 %v16
  %v512 = vpop.f32.mrb[0].mxu0
  %v513 = vadd.f32 %v323, %v512
  %v514 = vpop.f32.mrb[0].mxu0
  %v515 = vadd.f32 %v327, %v514
  %516 = vmatprep.mubr.f32.mxu0 %v19
  %517 = vmatmul.mubr.f32.gmra.mrb[0].mxu0 %v18
  %v518 = vpop.f32.mrb[0].mxu0
  %v519 = vadd.f32 %v323, %v518
  %v520 = vpop.f32.mrb[0].mxu0
  %v521 = vadd.f32 %v327, %v520
  %522 = vdwg.mxu0
  %523 = vmatprep.subr.mxu0 %v25
  %524 = vmatpush1.msra.mxu0 %v24
  %525 = vmatprep.subr.mxu0 %v34
  %526 = vmatpush1.msra.mxu0 %v33
  %527 = vmatprep.subr.mxu0 %v43
  %528 = vmatpush1.msra.mxu0 %v42
  %529 = vmatprep.subr.mxu0 %v52
  %530 = vmatpush1.msra.mxu0 %v51
  %531 = vmatprep.subr.mxu0 %v61
  %532 = vmatpush1.msra.mxu0 %v60
  %533 = vmatprep.subr.mxu0 %v70
  %534 = vmatpush1.msra.mxu0 %v69
  %535 = vmatprep.subr.mxu0 %v79
  %536 = vmatpush1.msra.mxu0 %v78
  %537 = vmatprep.subr.mxu0 %v88
  %538 = vmatpush1.msra.mxu0 %v87
  %539 = vmatprep.subr.mxu0 %v97
  %540 = vmatpush1.msra.mxu0 %v96
  %541 = vmatprep.subr.mxu0 %v106
  %542 = vmatpush1.msra.mxu0 %v105
  %543 = vmatprep.subr.mxu0 %v115
  %544 = vmatpush1.msra.mxu0 %v114
  %545 = vmatprep.subr.mxu0 %v124
  %546 = vmatpush1.msra.mxu0 %v123
  %547 = vmatprep.subr.mxu0 %v133
  %548 = vmatpush1.msra.mxu0 %v132
  %549 = vmatprep.subr.mxu0 %v142
  %550 = vmatpush1.msra.mxu0 %v141
  %551 = vmatprep.subr.mxu0 %v151
  %552 = vmatpush1.msra.mxu0 %v150
  %553 = vmatprep.subr.mxu0 %v160
  %554 = vmatpush1.msra.mxu0 %v159
  %555 = vmatprep.subr.mxu0 %v169
  %556 = vmatpush1.msra.mxu0 %v168
  %557 = vmatprep.subr.mxu0 %v178
  %558 = vmatpush1.msra.mxu0 %v177
  %559 = vmatprep.subr.mxu0 %v187
  %560 = vmatpush1.msra.mxu0 %v186
  %561 = vmatprep.subr.mxu0 %v196
  %562 = vmatpush1.msra.mxu0 %v195
  %563 = vmatprep.subr.mxu0 %v205
  %564 = vmatpush1.msra.mxu0 %v204
  %565 = vmatprep.subr.mxu0 %v214
  %566 = vmatpush1.msra.mxu0 %v213
  %567 = vmatprep.subr.mxu0 %v223
  %568 = vmatpush1.msra.mxu0 %v222
  %569 = vmatprep.subr.mxu0 %v232
  %570 = vmatpush1.msra.mxu0 %v231
  %571 = vmatprep.subr.mxu0 %v241
  %572 = vmatpush1.msra.mxu0 %v240
  %573 = vmatprep.subr.mxu0 %v250
  %574 = vmatpush1.msra.mxu0 %v249
  %575 = vmatprep.subr.mxu0 %v259
  %576 = vmatpush1.msra.mxu0 %v258
  %577 = vmatprep.subr.mxu0 %v268
  %578 = vmatpush1.msra.mxu0 %v267
  %579 = vmatprep.subr.mxu0 %v277
  %580 = vmatpush1.msra.mxu0 %v276
  %581 = vmatprep.subr.mxu0 %v286
  %582 = vmatpush1.msra.mxu0 %v285
  %583 = vmatprep.subr.mxu0 %v295
  %584 = vmatpush1.msra.mxu0 %v294
  %585 = vmatprep.subr.mxu0 %v304
  %586 = vmatpush1.msra.mxu0 %v303
  %587 = vmatprep.mubr.f32.mxu0 %v15
  %588 = vmatmul.mubr.f32.gmra.mrb[0].mxu0 %v14
  %v589 = vpop.f32.mrb[0].mxu0
  %v590 = vadd.f32 %v331, %v589
  %v591 = vpop.f32.mrb[0].mxu0
  %v592 = vadd.f32 %v335, %v591
  %593 = vmatprep.mubr.f32.mxu0 %v17
  %594 = vmatmul.mubr.f32.gmra.mrb[0].mxu0 %v16
  %v595 = vpop.f32.mrb[0].mxu0
  %v596 = vadd.f32 %v331, %v595
  %v597 = vpop.f32.mrb[0].mxu0
  %v598 = vadd.f32 %v335, %v597
  %599 = vmatprep.mubr.f32.mxu0 %v19
  %600 = vmatmul.mubr.f32.gmra.mrb[0].mxu0 %v18
  %v601 = vpop.f32.mrb[0].mxu0
  %v602 = vadd.f32 %v331, %v601
  %v603 = vpop.f32.mrb[0].mxu0
  %v604 = vadd.f32 %v335, %v603
  %605 = vdwg.mxu0
  %606 = vmatprep.subr.mxu0 %v27
  %607 = vmatpush1.msra.mxu0 %v26
  %608 = vmatprep.subr.mxu0 %v36
  %609 = vmatpush1.msra.mxu0 %v35
  %610 = vmatprep.subr.mxu0 %v45
  %611 = vmatpush1.msra.mxu0 %v44
  %612 = vmatprep.subr.mxu0 %v54
  %613 = vmatpush1.msra.mxu0 %v53
  %614 = vmatprep.subr.mxu0 %v63
  %615 = vmatpush1.msra.mxu0 %v62
  %616 = vmatprep.subr.mxu0 %v72
  %617 = vmatpush1.msra.mxu0 %v71
  %618 = vmatprep.subr.mxu0 %v81
  %619 = vmatpush1.msra.mxu0 %v80
  %620 = vmatprep.subr.mxu0 %v90
  %621 = vmatpush1.msra.mxu0 %v89
  %622 = vmatprep.subr.mxu0 %v99
  %623 = vmatpush1.msra.mxu0 %v98
  %624 = vmatprep.subr.mxu0 %v108
  %625 = vmatpush1.msra.mxu0 %v107
  %626 = vmatprep.subr.mxu0 %v117
  %627 = vmatpush1.msra.mxu0 %v116
  %628 = vmatprep.subr.mxu0 %v126
  %629 = vmatpush1.msra.mxu0 %v125
  %630 = vmatprep.subr.mxu0 %v135
  %631 = vmatpush1.msra.mxu0 %v134
  %632 = vmatprep.subr.mxu0 %v144
  %633 = vmatpush1.msra.mxu0 %v143
  %634 = vmatprep.subr.mxu0 %v153
  %635 = vmatpush1.msra.mxu0 %v152
  %636 = vmatprep.subr.mxu0 %v162
  %637 = vmatpush1.msra.mxu0 %v161
  %638 = vmatprep.subr.mxu0 %v171
  %639 = vmatpush1.msra.mxu0 %v170
  %640 = vmatprep.subr.mxu0 %v180
  %641 = vmatpush1.msra.mxu0 %v179
  %642 = vmatprep.subr.mxu0 %v189
  %643 = vmatpush1.msra.mxu0 %v188
  %644 = vmatprep.subr.mxu0 %v198
  %645 = vmatpush1.msra.mxu0 %v197
  %646 = vmatprep.subr.mxu0 %v207
  %647 = vmatpush1.msra.mxu0 %v206
  %648 = vmatprep.subr.mxu0 %v216
  %649 = vmatpush1.msra.mxu0 %v215
  %650 = vmatprep.subr.mxu0 %v225
  %651 = vmatpush1.msra.mxu0 %v224
  %652 = vmatprep.subr.mxu0 %v234
  %653 = vmatpush1.msra.mxu0 %v233
  %654 = vmatprep.subr.mxu0 %v243
  %655 = vmatpush1.msra.mxu0 %v242
  %656 = vmatprep.subr.mxu0 %v252
  %657 = vmatpush1.msra.mxu0 %v251
  %658 = vmatprep.subr.mxu0 %v261
  %659 = vmatpush1.msra.mxu0 %v260
  %660 = vmatprep.subr.mxu0 %v270
  %661 = vmatpush1.msra.mxu0 %v269
  %662 = vmatprep.subr.mxu0 %v279
  %663 = vmatpush1.msra.mxu0 %v278
  %664 = vmatprep.subr.mxu0 %v288
  %665 = vmatpush1.msra.mxu0 %v287
  %666 = vmatprep.subr.mxu0 %v297
  %667 = vmatpush1.msra.mxu0 %v296
  %668 = vmatprep.subr.mxu0 %v306
  %669 = vmatpush1.msra.mxu0 %v305
  %670 = vmatprep.mubr.f32.mxu0 %v15
  %671 = vmatmul.mubr.f32.gmra.mrb[0].mxu0 %v14
  %v672 = vpop.f32.mrb[0].mxu0
  %v673 = vadd.f32 %v339, %v672
  %v674 = vpop.f32.mrb[0].mxu0
  %v675 = vadd.f32 %v343, %v674
  %676 = vmatprep.mubr.f32.mxu0 %v17
  %677 = vmatmul.mubr.f32.gmra.mrb[0].mxu0 %v16
  %v678 = vpop.f32.mrb[0].mxu0
  %v679 = vadd.f32 %v339, %v678
  %v680 = vpop.f32.mrb[0].mxu0
  %v681 = vadd.f32 %v343, %v680
  %682 = vmatprep.mubr.f32.mxu0 %v19
  %683 = vmatmul.mubr.f32.gmra.mrb[0].mxu0 %v18
  %v684 = vpop.f32.mrb[0].mxu0
  %v685 = vadd.f32 %v339, %v684
  %v686 = vpop.f32.mrb[0].mxu0
  %v687 = vadd.f32 %v343, %v686
  %688 = vdwg.mxu0
  %689 = vmatprep.subr.mxu0 0.0
  %690 = vmatpush1.msra.mxu0 %v28
  %691 = vmatprep.subr.mxu0 0.0
  %692 = vmatpush1.msra.mxu0 %v37
  %693 = vmatprep.subr.mxu0 0.0
  %694 = vmatpush1.msra.mxu0 %v46
  %695 = vmatprep.subr.mxu0 0.0
  %696 = vmatpush1.msra.mxu0 %v55
  %697 = vmatprep.subr.mxu0 0.0
  %698 = vmatpush1.msra.mxu0 %v64
  %699 = vmatprep.subr.mxu0 0.0
  %700 = vmatpush1.msra.mxu0 %v73
  %701 = vmatprep.subr.mxu0 0.0
  %702 = vmatpush1.msra.mxu0 %v82
  %703 = vmatprep.subr.mxu0 0.0
  %704 = vmatpush1.msra.mxu0 %v91
  %705 = vmatprep.subr.mxu0 0.0
  %706 = vmatpush1.msra.mxu0 %v100
  %707 = vmatprep.subr.mxu0 0.0
  %708 = vmatpush1.msra.mxu0 %v109
  %709 = vmatprep.subr.mxu0 0.0
  %710 = vmatpush1.msra.mxu0 %v118
  %711 = vmatprep.subr.mxu0 0.0
  %712 = vmatpush1.msra.mxu0 %v127
  %713 = vmatprep.subr.mxu0 0.0
  %714 = vmatpush1.msra.mxu0 %v136
  %715 = vmatprep.subr.mxu0 0.0
  %716 = vmatpush1.msra.mxu0 %v145
  %717 = vmatprep.subr.mxu0 0.0
  %718 = vmatpush1.msra.mxu0 %v154
  %719 = vmatprep.subr.mxu0 0.0
  %720 = vmatpush1.msra.mxu0 %v163
  %721 = vmatprep.subr.mxu0 0.0
  %722 = vmatpush1.msra.mxu0 %v172
  %723 = vmatprep.subr.mxu0 0.0
  %724 = vmatpush1.msra.mxu0 %v181
  %725 = vmatprep.subr.mxu0 0.0
  %726 = vmatpush1.msra.mxu0 %v190
  %727 = vmatprep.subr.mxu0 0.0
  %728 = vmatpush1.msra.mxu0 %v199
  %729 = vmatprep.subr.mxu0 0.0
  %730 = vmatpush1.msra.mxu0 %v208
  %731 = vmatprep.subr.mxu0 0.0
  %732 = vmatpush1.msra.mxu0 %v217
  %733 = vmatprep.subr.mxu0 0.0
  %734 = vmatpush1.msra.mxu0 %v226
  %735 = vmatprep.subr.mxu0 0.0
  %736 = vmatpush1.msra.mxu0 %v235
  %737 = vmatprep.subr.mxu0 0.0
  %738 = vmatpush1.msra.mxu0 %v244
  %739 = vmatprep.subr.mxu0 0.0
  %740 = vmatpush1.msra.mxu0 %v253
  %741 = vmatprep.subr.mxu0 0.0
  %742 = vmatpush1.msra.mxu0 %v262
  %743 = vmatprep.subr.mxu0 0.0
  %744 = vmatpush1.msra.mxu0 %v271
  %745 = vmatprep.subr.mxu0 0.0
  %746 = vmatpush1.msra.mxu0 %v280
  %747 = vmatprep.subr.mxu0 0.0
  %748 = vmatpush1.msra.mxu0 %v289
  %749 = vmatprep.subr.mxu0 0.0
  %750 = vmatpush1.msra.mxu0 %v298
  %751 = vmatprep.subr.mxu0 0.0
  %752 = vmatpush1.msra.mxu0 %v307
  %753 = vmatprep.mubr.f32.mxu0 %v15
  %754 = vmatmul.mubr.f32.gmra.mrb[0].mxu0 %v14
  %v755 = vpop.f32.mrb[0].mxu0
  %v756 = vadd.f32 %v347, %v755
  %v757 = vpop.f32.mrb[0].mxu0
  %758 = vmatprep.mubr.f32.mxu0 %v17
  %759 = vmatmul.mubr.f32.gmra.mrb[0].mxu0 %v16
  %v760 = vpop.f32.mrb[0].mxu0
  %v761 = vadd.f32 %v347, %v760
  %v762 = vpop.f32.mrb[0].mxu0
  %763 = vmatprep.mubr.f32.mxu0 %v19
  %764 = vmatmul.mubr.f32.gmra.mrb[0].mxu0 %v18
  %v765 = vpop.f32.mrb[0].mxu0
  %v766 = vadd.f32 %v347, %v765
  %v767 = vpop.f32.mrb[0].mxu0
  %768 = vdwg.mxu0
  %v769 = vmax.f32 %v424, 0.0
  %v770 = vmax.f32 %v426, 0.0
  %v771 = vmax.f32 %v507, 0.0
  %v772 = vmax.f32 %v509, 0.0
  %v773 = vmax.f32 %v590, 0.0
  %v774 = vmax.f32 %v592, 0.0
  %v775 = vmax.f32 %v673, 0.0
  %v776 = vmax.f32 %v675, 0.0
  %v777 = vmax.f32 %v756, 0.0
  %v778 = vmax.f32 %v430, 0.0
  %v779 = vmax.f32 %v432, 0.0
  %v780 = vmax.f32 %v513, 0.0
  %v781 = vmax.f32 %v515, 0.0
  %v782 = vmax.f32 %v596, 0.0
  %v783 = vmax.f32 %v598, 0.0
  %v784 = vmax.f32 %v679, 0.0
  %v785 = vmax.f32 %v681, 0.0
  %v786 = vmax.f32 %v761, 0.0
  %v787 = vmax.f32 %v436, 0.0
  %v788 = vmax.f32 %v438, 0.0
  %v789 = vmax.f32 %v519, 0.0
  %v790 = vmax.f32 %v521, 0.0
  %v791 = vmax.f32 %v602, 0.0
  %v792 = vmax.f32 %v604, 0.0
  %v793 = vmax.f32 %v685, 0.0
  %v794 = vmax.f32 %v687, 0.0
  %v795 = vmax.f32 %v766, 0.0
  %796 = vst [vmem:[%s3] sm:$0xff] %v769
  %797 = vst [vmem:[%s3 + $0x8] sm:$0xff] %v770
  %798 = vst [vmem:[%s3 + $0x10] sm:$0xff] %v771
  %799 = vst [vmem:[%s3 + $0x18] sm:$0xff] %v772
  %800 = vst [vmem:[%s3 + $0x20] sm:$0xff] %v773
  %801 = vst [vmem:[%s3 + $0x28] sm:$0xff] %v774
  %802 = vst [vmem:[%s3 + $0x30] sm:$0xff] %v775
  %803 = vst [vmem:[%s3 + $0x38] sm:$0xff] %v776
  %804 = vst [vmem:[%s3 + $0x40] sm:$0xff] %v777
  %805 = vst [vmem:[%s3 + $0x48] sm:$0xff] %v778
  %806 = vst [vmem:[%s3 + $0x50] sm:$0xff] %v779
  %807 = vst [vmem:[%s3 + $0x58] sm:$0xff] %v780
  %808 = vst [vmem:[%s3 + $0x60] sm:$0xff] %v781
  %809 = vst [vmem:[%s3 + $0x68] sm:$0xff] %v782
  %810 = vst [vmem:[%s3 + $0x70] sm:$0xff] %v783
  %811 = vst [vmem:[%s3 + $0x78] sm:$0xff] %v784
  %812 = vst [vmem:[%s3 + $0x80] sm:$0xff] %v785
  %813 = vst [vmem:[%s3 + $0x88] sm:$0xff] %v786
  %814 = vst [vmem:[%s3 + $0x90] sm:$0xff] %v787
  %815 = vst [vmem:[%s3 + $0x98] sm:$0xff] %v788
  %816 = vst [vmem:[%s3 + $0xa0] sm:$0xff] %v789
  %817 = vst [vmem:[%s3 + $0xa8] sm:$0xff] %v790
  %818 = vst [vmem:[%s3 + $0xb0] sm:$0xff] %v791
  %819 = vst [vmem:[%s3 + $0xb8] sm:$0xff] %v792
  %820 = vst [vmem:[%s3 + $0xc0] sm:$0xff] %v793
  %821 = vst [vmem:[%s3 + $0xc8] sm:$0xff] %v794
  %822 = vst [vmem:[%s3 + $0xd0] sm:$0xff] %v795
  // Predicated region
  $region14: #{forward.14} parent=0 // pred_check
    _
  $region15: #{forward.14} parent=0 // pred_check_branch
    %824 = sbr.rel (0) target = $region17
  $region16: #{forward.14} parent=0 // pred_region
    _
  $region17: #{forward.14} parent=0 // pred_fallthru
    _
  // Predicated region
  $region18: #{forward.14} parent=0 // pred_check
    _
  $region19: #{forward.14} parent=0 // pred_check_branch
    %826 = sbr.rel (0) target = $region21
  $region20: #{forward.14} parent=0 // pred_region
    _
  $region21: #{forward.14} parent=0 // pred_fallthru
    _

// kernel: forward.15
$region0: #{forward.15}
  #allocation0 [shape = 'u32[]', space=smem, size = 0x4, offset = 0x4, fixed_abs, tag = 'smem constant byte address 0x4 - core index']
  #allocation1 [shape = 'u32[144,128]{1,0:T(1,128)}', space=vmem, size = 0x12000, scoped, tag = 'internal scratch']
  %s0 = inlined_call_operand.vmem [shape: f32[216,128], index: 0, kind: input, shape index: {}]
  %s1 = inlined_call_operand.vmem [shape: f32[128,640], index: 1, kind: input, shape index: {}]
  %s2 = inlined_call_operand.vmem [shape: f32[1,640], index: 2, kind: input, shape index: {}]
  %s3 = inlined_call_operand.vmem [shape: f32[216,640], index: 3, kind: output, shape index: {}]
  %s4 = sld [smem:[#allocation0]]
  $region22: #{forward.15} parent=0
    _
  %s6 = ssub.s32 1, %s4
  %s7 = scalar_select 0, %s6, %s4
  // Predicated region
  $region2: #{forward.15} parent=0 // pred_check
    _
  $region3: #{forward.15} parent=0 // pred_check_branch
    %9 = sbr.rel (0) target = $region5
  $region4: #{forward.15} parent=0 // pred_region
    _
  $region5: #{forward.15} parent=0 // pred_fallthru
    _
  // Predicated region
  $region6: #{forward.15} parent=0 // pred_check
    _
  $region7: #{forward.15} parent=0 // pred_check_branch
    %11 = sbr.rel (0) target = $region9
  $region8: #{forward.15} parent=0 // pred_region
    _
  $region9: #{forward.15} parent=0 // pred_fallthru
    _
  // Predicated region
  $region10: #{forward.15} parent=0 // pred_check
    _
  $region11: #{forward.15} parent=0 // pred_check_branch
    %13 = sbr.rel (0) target = $region13
  $region12: #{forward.15} parent=0 // pred_region
    _
  $region13: #{forward.15} parent=0 // pred_fallthru
    _
  %v14 = vld [vmem:[%s0] sm:$0xff]
  %v15 = vld [vmem:[%s0 + $0x8] sm:$0xff]
  %v16 = vld [vmem:[%s0 + $0x10] sm:$0xff]
  %v17 = vld [vmem:[%s0 + $0x18] sm:$0xff]
  %v18 = vld [vmem:[%s0 + $0x20] sm:$0xff]
  %v19 = vld [vmem:[%s0 + $0x28] sm:$0xff]
  %v20 = vld [vmem:[%s0 + $0x30] sm:$0xff]
  %v21 = vld [vmem:[%s0 + $0x38] sm:$0xff]
  %v22 = vld [vmem:[%s0 + $0x40] sm:$0xff]
  %v23 = vld [vmem:[%s0 + $0x48] sm:$0xff]
  %v24 = vld [vmem:[%s0 + $0x50] sm:$0xff]
  %v25 = vld [vmem:[%s0 + $0x58] sm:$0xff]
  %v26 = vld [vmem:[%s0 + $0x60] sm:$0xff]
  %v27 = vld [vmem:[%s0 + $0x68] sm:$0xff]
  %v28 = vld [vmem:[%s0 + $0x70] sm:$0xff]
  %v29 = vld [vmem:[%s0 + $0x78] sm:$0xff]
  %v30 = vld [vmem:[%s0 + $0x80] sm:$0xff]
  %v31 = vld [vmem:[%s0 + $0x88] sm:$0xff]
  %v32 = vld [vmem:[%s0 + $0x90] sm:$0xff]
  %v33 = vld [vmem:[%s0 + $0x98] sm:$0xff]
  %v34 = vld [vmem:[%s0 + $0xa0] sm:$0xff]
  %v35 = vld [vmem:[%s0 + $0xa8] sm:$0xff]
  %v36 = vld [vmem:[%s0 + $0xb0] sm:$0xff]
  %v37 = vld [vmem:[%s0 + $0xb8] sm:$0xff]
  %v38 = vld [vmem:[%s0 + $0xc0] sm:$0xff]
  %v39 = vld [vmem:[%s0 + $0xc8] sm:$0xff]
  %v40 = vld [vmem:[%s0 + $0xd0] sm:$0xff]
  %v41 = vld [vmem:[%s1] sm:$0xff]
  %v42 = vld [vmem:[%s1 + $0x8] sm:$0xff]
  %v43 = vld [vmem:[%s1 + $0x10] sm:$0xff]
  %v44 = vld [vmem:[%s1 + $0x18] sm:$0xff]
  %v45 = vld [vmem:[%s1 + $0x20] sm:$0xff]
  %v46 = vld [vmem:[%s1 + $0x28] sm:$0xff]
  %v47 = vld [vmem:[%s1 + $0x30] sm:$0xff]
  %v48 = vld [vmem:[%s1 + $0x38] sm:$0xff]
  %v49 = vld [vmem:[%s1 + $0x40] sm:$0xff]
  %v50 = vld [vmem:[%s1 + $0x48] sm:$0xff]
  %v51 = vld [vmem:[%s1 + $0x50] sm:$0xff]
  %v52 = vld [vmem:[%s1 + $0x58] sm:$0xff]
  %v53 = vld [vmem:[%s1 + $0x60] sm:$0xff]
  %v54 = vld [vmem:[%s1 + $0x68] sm:$0xff]
  %v55 = vld [vmem:[%s1 + $0x70] sm:$0xff]
  %v56 = vld [vmem:[%s1 + $0x78] sm:$0xff]
  %v57 = vld [vmem:[%s1 + $0x80] sm:$0xff]
  %v58 = vld [vmem:[%s1 + $0x88] sm:$0xff]
  %v59 = vld [vmem:[%s1 + $0x90] sm:$0xff]
  %v60 = vld [vmem:[%s1 + $0x98] sm:$0xff]
  %v61 = vld [vmem:[%s1 + $0xa0] sm:$0xff]
  %v62 = vld [vmem:[%s1 + $0xa8] sm:$0xff]
  %v63 = vld [vmem:[%s1 + $0xb0] sm:$0xff]
  %v64 = vld [vmem:[%s1 + $0xb8] sm:$0xff]
  %v65 = vld [vmem:[%s1 + $0xc0] sm:$0xff]
  %v66 = vld [vmem:[%s1 + $0xc8] sm:$0xff]
  %v67 = vld [vmem:[%s1 + $0xd0] sm:$0xff]
  %v68 = vld [vmem:[%s1 + $0xd8] sm:$0xff]
  %v69 = vld [vmem:[%s1 + $0xe0] sm:$0xff]
  %v70 = vld [vmem:[%s1 + $0xe8] sm:$0xff]
  %v71 = vld [vmem:[%s1 + $0xf0] sm:$0xff]
  %v72 = vld [vmem:[%s1 + $0xf8] sm:$0xff]
  %v73 = vld [vmem:[%s1 + $0x100] sm:$0xff]
  %v74 = vld [vmem:[%s1 + $0x108] sm:$0xff]
  %v75 = vld [vmem:[%s1 + $0x110] sm:$0xff]
  %v76 = vld [vmem:[%s1 + $0x118] sm:$0xff]
  %v77 = vld [vmem:[%s1 + $0x120] sm:$0xff]
  %v78 = vld [vmem:[%s1 + $0x128] sm:$0xff]
  %v79 = vld [vmem:[%s1 + $0x130] sm:$0xff]
  %v80 = vld [vmem:[%s1 + $0x138] sm:$0xff]
  %v81 = vld [vmem:[%s1 + $0x140] sm:$0xff]
  %v82 = vld [vmem:[%s1 + $0x148] sm:$0xff]
  %v83 = vld [vmem:[%s1 + $0x150] sm:$0xff]
  %v84 = vld [vmem:[%s1 + $0x158] sm:$0xff]
  %v85 = vld [vmem:[%s1 + $0x160] sm:$0xff]
  %v86 = vld [vmem:[%s1 + $0x168] sm:$0xff]
  %v87 = vld [vmem:[%s1 + $0x170] sm:$0xff]
  %v88 = vld [vmem:[%s1 + $0x178] sm:$0xff]
  %v89 = vld [vmem:[%s1 + $0x180] sm:$0xff]
  %v90 = vld [vmem:[%s1 + $0x188] sm:$0xff]
  %v91 = vld [vmem:[%s1 + $0x190] sm:$0xff]
  %v92 = vld [vmem:[%s1 + $0x198] sm:$0xff]
  %v93 = vld [vmem:[%s1 + $0x1a0] sm:$0xff]
  %v94 = vld [vmem:[%s1 + $0x1a8] sm:$0xff]
  %v95 = vld [vmem:[%s1 + $0x1b0] sm:$0xff]
  %v96 = vld [vmem:[%s1 + $0x1b8] sm:$0xff]
  %v97 = vld [vmem:[%s1 + $0x1c0] sm:$0xff]
  %v98 = vld [vmem:[%s1 + $0x1c8] sm:$0xff]
  %v99 = vld [vmem:[%s1 + $0x1d0] sm:$0xff]
  %v100 = vld [vmem:[%s1 + $0x1d8] sm:$0xff]
  %v101 = vld [vmem:[%s1 + $0x1e0] sm:$0xff]
  %v102 = vld [vmem:[%s1 + $0x1e8] sm:$0xff]
  %v103 = vld [vmem:[%s1 + $0x1f0] sm:$0xff]
  %v104 = vld [vmem:[%s1 + $0x1f8] sm:$0xff]
  %v105 = vld [vmem:[%s1 + $0x200] sm:$0xff]
  %v106 = vld [vmem:[%s1 + $0x208] sm:$0xff]
  %v107 = vld [vmem:[%s1 + $0x210] sm:$0xff]
  %v108 = vld [vmem:[%s1 + $0x218] sm:$0xff]
  %v109 = vld [vmem:[%s1 + $0x220] sm:$0xff]
  %v110 = vld [vmem:[%s1 + $0x228] sm:$0xff]
  %v111 = vld [vmem:[%s1 + $0x230] sm:$0xff]
  %v112 = vld [vmem:[%s1 + $0x238] sm:$0xff]
  %v113 = vld [vmem:[%s1 + $0x240] sm:$0xff]
  %v114 = vld [vmem:[%s1 + $0x248] sm:$0xff]
  %v115 = vld [vmem:[%s1 + $0x250] sm:$0xff]
  %v116 = vld [vmem:[%s1 + $0x258] sm:$0xff]
  %v117 = vld [vmem:[%s1 + $0x260] sm:$0xff]
  %v118 = vld [vmem:[%s1 + $0x268] sm:$0xff]
  %v119 = vld [vmem:[%s1 + $0x270] sm:$0xff]
  %v120 = vld [vmem:[%s1 + $0x278] sm:$0xff]
  %v121 = vld [vmem:[%s2] sm:$0x1f]
  %v123 = vlaneseq
  %v124 = vshrl.u32 %v123, 7
  %v125 = vsub.s32 0, %v124
  %v126 = vrot.slane %v121, %v125
  %v127 = vlaneseq
  %v128 = vshrl.u32 %v127, 7
  %v129 = vsub.s32 1, %v128
  %v130 = vrot.slane %v121, %v129
  %v131 = vlaneseq
  %v132 = vshrl.u32 %v131, 7
  %v133 = vsub.s32 2, %v132
  %v134 = vrot.slane %v121, %v133
  %v135 = vlaneseq
  %v136 = vshrl.u32 %v135, 7
  %v137 = vsub.s32 3, %v136
  %v138 = vrot.slane %v121, %v137
  %v139 = vlaneseq
  %v140 = vshrl.u32 %v139, 7
  %v141 = vsub.s32 4, %v140
  %v142 = vrot.slane %v121, %v141
  %148 = vmatprep.subr.mxu0 %v42
  %149 = vmatpush1.msra.mxu0 %v41
  %150 = vmatprep.subr.mxu0 %v47
  %151 = vmatpush1.msra.mxu0 %v46
  %152 = vmatprep.subr.mxu0 %v52
  %153 = vmatpush1.msra.mxu0 %v51
  %154 = vmatprep.subr.mxu0 %v57
  %155 = vmatpush1.msra.mxu0 %v56
  %156 = vmatprep.subr.mxu0 %v62
  %157 = vmatpush1.msra.mxu0 %v61
  %158 = vmatprep.subr.mxu0 %v67
  %159 = vmatpush1.msra.mxu0 %v66
  %160 = vmatprep.subr.mxu0 %v72
  %161 = vmatpush1.msra.mxu0 %v71
  %162 = vmatprep.subr.mxu0 %v77
  %163 = vmatpush1.msra.mxu0 %v76
  %164 = vmatprep.subr.mxu0 %v82
  %165 = vmatpush1.msra.mxu0 %v81
  %166 = vmatprep.subr.mxu0 %v87
  %167 = vmatpush1.msra.mxu0 %v86
  %168 = vmatprep.subr.mxu0 %v92
  %169 = vmatpush1.msra.mxu0 %v91
  %170 = vmatprep.subr.mxu0 %v97
  %171 = vmatpush1.msra.mxu0 %v96
  %172 = vmatprep.subr.mxu0 %v102
  %173 = vmatpush1.msra.mxu0 %v101
  %174 = vmatprep.subr.mxu0 %v107
  %175 = vmatpush1.msra.mxu0 %v106
  %176 = vmatprep.subr.mxu0 %v112
  %177 = vmatpush1.msra.mxu0 %v111
  %178 = vmatprep.subr.mxu0 %v117
  %179 = vmatpush1.msra.mxu0 %v116
  %180 = vmatprep.subr.mxu0 0.0
  %181 = vmatpush1.msra.mxu0 0.0
  %182 = vmatprep.subr.mxu0 0.0
  %183 = vmatpush1.msra.mxu0 0.0
  %184 = vmatprep.subr.mxu0 0.0
  %185 = vmatpush1.msra.mxu0 0.0
  %186 = vmatprep.subr.mxu0 0.0
  %187 = vmatpush1.msra.mxu0 0.0
  %188 = vmatprep.subr.mxu0 0.0
  %189 = vmatpush1.msra.mxu0 0.0
  %190 = vmatprep.subr.mxu0 0.0
  %191 = vmatpush1.msra.mxu0 0.0
  %192 = vmatprep.subr.mxu0 0.0
  %193 = vmatpush1.msra.mxu0 0.0
  %194 = vmatprep.subr.mxu0 0.0
  %195 = vmatpush1.msra.mxu0 0.0
  %196 = vmatprep.subr.mxu0 0.0
  %197 = vmatpush1.msra.mxu0 0.0
  %198 = vmatprep.subr.mxu0 0.0
  %199 = vmatpush1.msra.mxu0 0.0
  %200 = vmatprep.subr.mxu0 0.0
  %201 = vmatpush1.msra.mxu0 0.0
  %202 = vmatprep.subr.mxu0 0.0
  %203 = vmatpush1.msra.mxu0 0.0
  %204 = vmatprep.subr.mxu0 0.0
  %205 = vmatpush1.msra.mxu0 0.0
  %206 = vmatprep.subr.mxu0 0.0
  %207 = vmatpush1.msra.mxu0 0.0
  %208 = vmatprep.subr.mxu0 0.0
  %209 = vmatpush1.msra.mxu0 0.0
  %210 = vmatprep.subr.mxu0 0.0
  %211 = vmatpush1.msra.mxu0 0.0
  %212 = vmatprep.mubr.f32.mxu0 0.0
  %213 = vmatmul.mubr.f32.gmra.mrb[0].mxu0 %v14
  %v214 = vpop.f32.mrb[0].mxu0
  %v215 = vadd.f32 %v126, %v214
  %v216 = vpop.f32.mrb[0].mxu0
  %v217 = vadd.f32 %v130, %v216
  %218 = vmatprep.mubr.f32.mxu0 0.0
  %219 = vmatmul.mubr.f32.gmra.mrb[0].mxu0 %v15
  %v220 = vpop.f32.mrb[0].mxu0
  %v221 = vadd.f32 %v126, %v220
  %v222 = vpop.f32.mrb[0].mxu0
  %v223 = vadd.f32 %v130, %v222
  %224 = vmatprep.mubr.f32.mxu0 0.0
  %225 = vmatmul.mubr.f32.gmra.mrb[0].mxu0 %v16
  %v226 = vpop.f32.mrb[0].mxu0
  %v227 = vadd.f32 %v126, %v226
  %v228 = vpop.f32.mrb[0].mxu0
  %v229 = vadd.f32 %v130, %v228
  %230 = vmatprep.mubr.f32.mxu0 0.0
  %231 = vmatmul.mubr.f32.gmra.mrb[0].mxu0 %v17
  %v232 = vpop.f32.mrb[0].mxu0
  %v233 = vadd.f32 %v126, %v232
  %v234 = vpop.f32.mrb[0].mxu0
  %v235 = vadd.f32 %v130, %v234
  %236 = vmatprep.mubr.f32.mxu0 0.0
  %237 = vmatmul.mubr.f32.gmra.mrb[0].mxu0 %v18
  %v238 = vpop.f32.mrb[0].mxu0
  %v239 = vadd.f32 %v126, %v238
  %v240 = vpop.f32.mrb[0].mxu0
  %v241 = vadd.f32 %v130, %v240
  %242 = vmatprep.mubr.f32.mxu0 0.0
  %243 = vmatmul.mubr.f32.gmra.mrb[0].mxu0 %v19
  %v244 = vpop.f32.mrb[0].mxu0
  %v245 = vadd.f32 %v126, %v244
  %v246 = vpop.f32.mrb[0].mxu0
  %v247 = vadd.f32 %v130, %v246
  %248 = vmatprep.mubr.f32.mxu0 0.0
  %249 = vmatmul.mubr.f32.gmra.mrb[0].mxu0 %v20
  %v250 = vpop.f32.mrb[0].mxu0
  %v251 = vadd.f32 %v126, %v250
  %v252 = vpop.f32.mrb[0].mxu0
  %v253 = vadd.f32 %v130, %v252
  %254 = vmatprep.mubr.f32.mxu0 0.0
  %255 = vmatmul.mubr.f32.gmra.mrb[0].mxu0 %v21
  %v256 = vpop.f32.mrb[0].mxu0
  %v257 = vadd.f32 %v126, %v256
  %v258 = vpop.f32.mrb[0].mxu0
  %v259 = vadd.f32 %v130, %v258
  %260 = vmatprep.mubr.f32.mxu0 0.0
  %261 = vmatmul.mubr.f32.gmra.mrb[0].mxu0 %v22
  %v262 = vpop.f32.mrb[0].mxu0
  %v263 = vadd.f32 %v126, %v262
  %v264 = vpop.f32.mrb[0].mxu0
  %v265 = vadd.f32 %v130, %v264
  %266 = vmatprep.mubr.f32.mxu0 0.0
  %267 = vmatmul.mubr.f32.gmra.mrb[0].mxu0 %v23
  %v268 = vpop.f32.mrb[0].mxu0
  %v269 = vadd.f32 %v126, %v268
  %v270 = vpop.f32.mrb[0].mxu0
  %v271 = vadd.f32 %v130, %v270
  %272 = vmatprep.mubr.f32.mxu0 0.0
  %273 = vmatmul.mubr.f32.gmra.mrb[0].mxu0 %v24
  %v274 = vpop.f32.mrb[0].mxu0
  %v275 = vadd.f32 %v126, %v274
  %v276 = vpop.f32.mrb[0].mxu0
  %v277 = vadd.f32 %v130, %v276
  %278 = vmatprep.mubr.f32.mxu0 0.0
  %279 = vmatmul.mubr.f32.gmra.mrb[0].mxu0 %v25
  %v280 = vpop.f32.mrb[0].mxu0
  %v281 = vadd.f32 %v126, %v280
  %v282 = vpop.f32.mrb[0].mxu0
  %v283 = vadd.f32 %v130, %v282
  %284 = vmatprep.mubr.f32.mxu0 0.0
  %285 = vmatmul.mubr.f32.gmra.mrb[0].mxu0 %v26
  %v286 = vpop.f32.mrb[0].mxu0
  %v287 = vadd.f32 %v126, %v286
  %v288 = vpop.f32.mrb[0].mxu0
  %v289 = vadd.f32 %v130, %v288
  %290 = vmatprep.mubr.f32.mxu0 0.0
  %291 = vmatmul.mubr.f32.gmra.mrb[0].mxu0 %v27
  %v292 = vpop.f32.mrb[0].mxu0
  %v293 = vadd.f32 %v126, %v292
  %v294 = vpop.f32.mrb[0].mxu0
  %v295 = vadd.f32 %v130, %v294
  %296 = vmatprep.mubr.f32.mxu0 0.0
  %297 = vmatmul.mubr.f32.gmra.mrb[0].mxu0 %v28
  %v298 = vpop.f32.mrb[0].mxu0
  %v299 = vadd.f32 %v126, %v298
  %v300 = vpop.f32.mrb[0].mxu0
  %v301 = vadd.f32 %v130, %v300
  %302 = vmatprep.mubr.f32.mxu0 0.0
  %303 = vmatmul.mubr.f32.gmra.mrb[0].mxu0 %v29
  %v304 = vpop.f32.mrb[0].mxu0
  %v305 = vadd.f32 %v126, %v304
  %v306 = vpop.f32.mrb[0].mxu0
  %v307 = vadd.f32 %v130, %v306
  %308 = vmatprep.mubr.f32.mxu0 0.0
  %309 = vmatmul.mubr.f32.gmra.mrb[0].mxu0 %v30
  %v310 = vpop.f32.mrb[0].mxu0
  %v311 = vadd.f32 %v126, %v310
  %v312 = vpop.f32.mrb[0].mxu0
  %v313 = vadd.f32 %v130, %v312
  %314 = vmatprep.mubr.f32.mxu0 0.0
  %315 = vmatmul.mubr.f32.gmra.mrb[0].mxu0 %v31
  %v316 = vpop.f32.mrb[0].mxu0
  %v317 = vadd.f32 %v126, %v316
  %v318 = vpop.f32.mrb[0].mxu0
  %v319 = vadd.f32 %v130, %v318
  %320 = vmatprep.mubr.f32.mxu0 0.0
  %321 = vmatmul.mubr.f32.gmra.mrb[0].mxu0 %v32
  %v322 = vpop.f32.mrb[0].mxu0
  %v323 = vadd.f32 %v126, %v322
  %v324 = vpop.f32.mrb[0].mxu0
  %v325 = vadd.f32 %v130, %v324
  %326 = vmatprep.mubr.f32.mxu0 0.0
  %327 = vmatmul.mubr.f32.gmra.mrb[0].mxu0 %v33
  %v328 = vpop.f32.mrb[0].mxu0
  %v329 = vadd.f32 %v126, %v328
  %v330 = vpop.f32.mrb[0].mxu0
  %v331 = vadd.f32 %v130, %v330
  %332 = vmatprep.mubr.f32.mxu0 0.0
  %333 = vmatmul.mubr.f32.gmra.mrb[0].mxu0 %v34
  %v334 = vpop.f32.mrb[0].mxu0
  %v335 = vadd.f32 %v126, %v334
  %v336 = vpop.f32.mrb[0].mxu0
  %v337 = vadd.f32 %v130, %v336
  %338 = vmatprep.mubr.f32.mxu0 0.0
  %339 = vmatmul.mubr.f32.gmra.mrb[0].mxu0 %v35
  %v340 = vpop.f32.mrb[0].mxu0
  %v341 = vadd.f32 %v126, %v340
  %v342 = vpop.f32.mrb[0].mxu0
  %v343 = vadd.f32 %v130, %v342
  %344 = vmatprep.mubr.f32.mxu0 0.0
  %345 = vmatmul.mubr.f32.gmra.mrb[0].mxu0 %v36
  %v346 = vpop.f32.mrb[0].mxu0
  %v347 = vadd.f32 %v126, %v346
  %v348 = vpop.f32.mrb[0].mxu0
  %v349 = vadd.f32 %v130, %v348
  %350 = vmatprep.mubr.f32.mxu0 0.0
  %351 = vmatmul.mubr.f32.gmra.mrb[0].mxu0 %v37
  %v352 = vpop.f32.mrb[0].mxu0
  %v353 = vadd.f32 %v126, %v352
  %v354 = vpop.f32.mrb[0].mxu0
  %v355 = vadd.f32 %v130, %v354
  %356 = vmatprep.mubr.f32.mxu0 0.0
  %357 = vmatmul.mubr.f32.gmra.mrb[0].mxu0 %v38
  %v358 = vpop.f32.mrb[0].mxu0
  %v359 = vadd.f32 %v126, %v358
  %v360 = vpop.f32.mrb[0].mxu0
  %v361 = vadd.f32 %v130, %v360
  %362 = vmatprep.mubr.f32.mxu0 0.0
  %363 = vmatmul.mubr.f32.gmra.mrb[0].mxu0 %v39
  %v364 = vpop.f32.mrb[0].mxu0
  %v365 = vadd.f32 %v126, %v364
  %v366 = vpop.f32.mrb[0].mxu0
  %v367 = vadd.f32 %v130, %v366
  %368 = vmatprep.mubr.f32.mxu0 0.0
  %369 = vmatmul.mubr.f32.gmra.mrb[0].mxu0 %v40
  %v370 = vpop.f32.mrb[0].mxu0
  %v371 = vadd.f32 %v126, %v370
  %v372 = vpop.f32.mrb[0].mxu0
  %v373 = vadd.f32 %v130, %v372
  %374 = vdwg.mxu0
  %375 = vmatprep.subr.mxu0 %v44
  %376 = vmatpush1.msra.mxu0 %v43
  %377 = vmatprep.subr.mxu0 %v49
  %378 = vmatpush1.msra.mxu0 %v48
  %379 = vmatprep.subr.mxu0 %v54
  %380 = vmatpush1.msra.mxu0 %v53
  %381 = vmatprep.subr.mxu0 %v59
  %382 = vmatpush1.msra.mxu0 %v58
  %383 = vmatprep.subr.mxu0 %v64
  %384 = vmatpush1.msra.mxu0 %v63
  %385 = vmatprep.subr.mxu0 %v69
  %386 = vmatpush1.msra.mxu0 %v68
  %387 = vmatprep.subr.mxu0 %v74
  %388 = vmatpush1.msra.mxu0 %v73
  %389 = vmatprep.subr.mxu0 %v79
  %390 = vmatpush1.msra.mxu0 %v78
  %391 = vmatprep.subr.mxu0 %v84
  %392 = vmatpush1.msra.mxu0 %v83
  %393 = vmatprep.subr.mxu0 %v89
  %394 = vmatpush1.msra.mxu0 %v88
  %395 = vmatprep.subr.mxu0 %v94
  %396 = vmatpush1.msra.mxu0 %v93
  %397 = vmatprep.subr.mxu0 %v99
  %398 = vmatpush1.msra.mxu0 %v98
  %399 = vmatprep.subr.mxu0 %v104
  %400 = vmatpush1.msra.mxu0 %v103
  %401 = vmatprep.subr.mxu0 %v109
  %402 = vmatpush1.msra.mxu0 %v108
  %403 = vmatprep.subr.mxu0 %v114
  %404 = vmatpush1.msra.mxu0 %v113
  %405 = vmatprep.subr.mxu0 %v119
  %406 = vmatpush1.msra.mxu0 %v118
  %407 = vmatprep.subr.mxu0 0.0
  %408 = vmatpush1.msra.mxu0 0.0
  %409 = vmatprep.subr.mxu0 0.0
  %410 = vmatpush1.msra.mxu0 0.0
  %411 = vmatprep.subr.mxu0 0.0
  %412 = vmatpush1.msra.mxu0 0.0
  %413 = vmatprep.subr.mxu0 0.0
  %414 = vmatpush1.msra.mxu0 0.0
  %415 = vmatprep.subr.mxu0 0.0
  %416 = vmatpush1.msra.mxu0 0.0
  %417 = vmatprep.subr.mxu0 0.0
  %418 = vmatpush1.msra.mxu0 0.0
  %419 = vmatprep.subr.mxu0 0.0
  %420 = vmatpush1.msra.mxu0 0.0
  %421 = vmatprep.subr.mxu0 0.0
  %422 = vmatpush1.msra.mxu0 0.0
  %423 = vmatprep.subr.mxu0 0.0
  %424 = vmatpush1.msra.mxu0 0.0
  %425 = vmatprep.subr.mxu0 0.0
  %426 = vmatpush1.msra.mxu0 0.0
  %427 = vmatprep.subr.mxu0 0.0
  %428 = vmatpush1.msra.mxu0 0.0
  %429 = vmatprep.subr.mxu0 0.0
  %430 = vmatpush1.msra.mxu0 0.0
  %431 = vmatprep.subr.mxu0 0.0
  %432 = vmatpush1.msra.mxu0 0.0
  %433 = vmatprep.subr.mxu0 0.0
  %434 = vmatpush1.msra.mxu0 0.0
  %435 = vmatprep.subr.mxu0 0.0
  %436 = vmatpush1.msra.mxu0 0.0
  %437 = vmatprep.subr.mxu0 0.0
  %438 = vmatpush1.msra.mxu0 0.0
  %439 = vmatprep.mubr.f32.mxu0 0.0
  %440 = vmatmul.mubr.f32.gmra.mrb[0].mxu0 %v14
  %v441 = vpop.f32.mrb[0].mxu0
  %v442 = vadd.f32 %v134, %v441
  %v443 = vpop.f32.mrb[0].mxu0
  %v444 = vadd.f32 %v138, %v443
  %445 = vmatprep.mubr.f32.mxu0 0.0
  %446 = vmatmul.mubr.f32.gmra.mrb[0].mxu0 %v15
  %v447 = vpop.f32.mrb[0].mxu0
  %v448 = vadd.f32 %v134, %v447
  %v449 = vpop.f32.mrb[0].mxu0
  %v450 = vadd.f32 %v138, %v449
  %451 = vmatprep.mubr.f32.mxu0 0.0
  %452 = vmatmul.mubr.f32.gmra.mrb[0].mxu0 %v16
  %v453 = vpop.f32.mrb[0].mxu0
  %v454 = vadd.f32 %v134, %v453
  %v455 = vpop.f32.mrb[0].mxu0
  %v456 = vadd.f32 %v138, %v455
  %457 = vmatprep.mubr.f32.mxu0 0.0
  %458 = vmatmul.mubr.f32.gmra.mrb[0].mxu0 %v17
  %v459 = vpop.f32.mrb[0].mxu0
  %v460 = vadd.f32 %v134, %v459
  %v461 = vpop.f32.mrb[0].mxu0
  %v462 = vadd.f32 %v138, %v461
  %463 = vmatprep.mubr.f32.mxu0 0.0
  %464 = vmatmul.mubr.f32.gmra.mrb[0].mxu0 %v18
  %v465 = vpop.f32.mrb[0].mxu0
  %v466 = vadd.f32 %v134, %v465
  %v467 = vpop.f32.mrb[0].mxu0
  %v468 = vadd.f32 %v138, %v467
  %469 = vmatprep.mubr.f32.mxu0 0.0
  %470 = vmatmul.mubr.f32.gmra.mrb[0].mxu0 %v19
  %v471 = vpop.f32.mrb[0].mxu0
  %v472 = vadd.f32 %v134, %v471
  %v473 = vpop.f32.mrb[0].mxu0
  %v474 = vadd.f32 %v138, %v473
  %475 = vmatprep.mubr.f32.mxu0 0.0
  %476 = vmatmul.mubr.f32.gmra.mrb[0].mxu0 %v20
  %v477 = vpop.f32.mrb[0].mxu0
  %v478 = vadd.f32 %v134, %v477
  %v479 = vpop.f32.mrb[0].mxu0
  %v480 = vadd.f32 %v138, %v479
  %481 = vmatprep.mubr.f32.mxu0 0.0
  %482 = vmatmul.mubr.f32.gmra.mrb[0].mxu0 %v21
  %v483 = vpop.f32.mrb[0].mxu0
  %v484 = vadd.f32 %v134, %v483
  %v485 = vpop.f32.mrb[0].mxu0
  %v486 = vadd.f32 %v138, %v485
  %487 = vmatprep.mubr.f32.mxu0 0.0
  %488 = vmatmul.mubr.f32.gmra.mrb[0].mxu0 %v22
  %v489 = vpop.f32.mrb[0].mxu0
  %v490 = vadd.f32 %v134, %v489
  %v491 = vpop.f32.mrb[0].mxu0
  %v492 = vadd.f32 %v138, %v491
  %493 = vmatprep.mubr.f32.mxu0 0.0
  %494 = vmatmul.mubr.f32.gmra.mrb[0].mxu0 %v23
  %v495 = vpop.f32.mrb[0].mxu0
  %v496 = vadd.f32 %v134, %v495
  %v497 = vpop.f32.mrb[0].mxu0
  %v498 = vadd.f32 %v138, %v497
  %499 = vmatprep.mubr.f32.mxu0 0.0
  %500 = vmatmul.mubr.f32.gmra.mrb[0].mxu0 %v24
  %v501 = vpop.f32.mrb[0].mxu0
  %v502 = vadd.f32 %v134, %v501
  %v503 = vpop.f32.mrb[0].mxu0
  %v504 = vadd.f32 %v138, %v503
  %505 = vmatprep.mubr.f32.mxu0 0.0
  %506 = vmatmul.mubr.f32.gmra.mrb[0].mxu0 %v25
  %v507 = vpop.f32.mrb[0].mxu0
  %v508 = vadd.f32 %v134, %v507
  %v509 = vpop.f32.mrb[0].mxu0
  %v510 = vadd.f32 %v138, %v509
  %511 = vmatprep.mubr.f32.mxu0 0.0
  %512 = vmatmul.mubr.f32.gmra.mrb[0].mxu0 %v26
  %v513 = vpop.f32.mrb[0].mxu0
  %v514 = vadd.f32 %v134, %v513
  %v515 = vpop.f32.mrb[0].mxu0
  %v516 = vadd.f32 %v138, %v515
  %517 = vmatprep.mubr.f32.mxu0 0.0
  %518 = vmatmul.mubr.f32.gmra.mrb[0].mxu0 %v27
  %v519 = vpop.f32.mrb[0].mxu0
  %v520 = vadd.f32 %v134, %v519
  %v521 = vpop.f32.mrb[0].mxu0
  %v522 = vadd.f32 %v138, %v521
  %523 = vmatprep.mubr.f32.mxu0 0.0
  %524 = vmatmul.mubr.f32.gmra.mrb[0].mxu0 %v28
  %v525 = vpop.f32.mrb[0].mxu0
  %v526 = vadd.f32 %v134, %v525
  %v527 = vpop.f32.mrb[0].mxu0
  %v528 = vadd.f32 %v138, %v527
  %529 = vmatprep.mubr.f32.mxu0 0.0
  %530 = vmatmul.mubr.f32.gmra.mrb[0].mxu0 %v29
  %v531 = vpop.f32.mrb[0].mxu0
  %v532 = vadd.f32 %v134, %v531
  %v533 = vpop.f32.mrb[0].mxu0
  %v534 = vadd.f32 %v138, %v533
  %535 = vmatprep.mubr.f32.mxu0 0.0
  %536 = vmatmul.mubr.f32.gmra.mrb[0].mxu0 %v30
  %v537 = vpop.f32.mrb[0].mxu0
  %v538 = vadd.f32 %v134, %v537
  %v539 = vpop.f32.mrb[0].mxu0
  %v540 = vadd.f32 %v138, %v539
  %541 = vmatprep.mubr.f32.mxu0 0.0
  %542 = vmatmul.mubr.f32.gmra.mrb[0].mxu0 %v31
  %v543 = vpop.f32.mrb[0].mxu0
  %v544 = vadd.f32 %v134, %v543
  %v545 = vpop.f32.mrb[0].mxu0
  %v546 = vadd.f32 %v138, %v545
  %547 = vmatprep.mubr.f32.mxu0 0.0
  %548 = vmatmul.mubr.f32.gmra.mrb[0].mxu0 %v32
  %v549 = vpop.f32.mrb[0].mxu0
  %v550 = vadd.f32 %v134, %v549
  %v551 = vpop.f32.mrb[0].mxu0
  %v552 = vadd.f32 %v138, %v551
  %553 = vmatprep.mubr.f32.mxu0 0.0
  %554 = vmatmul.mubr.f32.gmra.mrb[0].mxu0 %v33
  %v555 = vpop.f32.mrb[0].mxu0
  %v556 = vadd.f32 %v134, %v555
  %v557 = vpop.f32.mrb[0].mxu0
  %v558 = vadd.f32 %v138, %v557
  %559 = vmatprep.mubr.f32.mxu0 0.0
  %560 = vmatmul.mubr.f32.gmra.mrb[0].mxu0 %v34
  %v561 = vpop.f32.mrb[0].mxu0
  %v562 = vadd.f32 %v134, %v561
  %v563 = vpop.f32.mrb[0].mxu0
  %v564 = vadd.f32 %v138, %v563
  %565 = vmatprep.mubr.f32.mxu0 0.0
  %566 = vmatmul.mubr.f32.gmra.mrb[0].mxu0 %v35
  %v567 = vpop.f32.mrb[0].mxu0
  %v568 = vadd.f32 %v134, %v567
  %v569 = vpop.f32.mrb[0].mxu0
  %v570 = vadd.f32 %v138, %v569
  %571 = vmatprep.mubr.f32.mxu0 0.0
  %572 = vmatmul.mubr.f32.gmra.mrb[0].mxu0 %v36
  %v573 = vpop.f32.mrb[0].mxu0
  %v574 = vadd.f32 %v134, %v573
  %v575 = vpop.f32.mrb[0].mxu0
  %v576 = vadd.f32 %v138, %v575
  %577 = vmatprep.mubr.f32.mxu0 0.0
  %578 = vmatmul.mubr.f32.gmra.mrb[0].mxu0 %v37
  %v579 = vpop.f32.mrb[0].mxu0
  %v580 = vadd.f32 %v134, %v579
  %v581 = vpop.f32.mrb[0].mxu0
  %v582 = vadd.f32 %v138, %v581
  %583 = vmatprep.mubr.f32.mxu0 0.0
  %584 = vmatmul.mubr.f32.gmra.mrb[0].mxu0 %v38
  %v585 = vpop.f32.mrb[0].mxu0
  %v586 = vadd.f32 %v134, %v585
  %v587 = vpop.f32.mrb[0].mxu0
  %v588 = vadd.f32 %v138, %v587
  %589 = vmatprep.mubr.f32.mxu0 0.0
  %590 = vmatmul.mubr.f32.gmra.mrb[0].mxu0 %v39
  %v591 = vpop.f32.mrb[0].mxu0
  %v592 = vadd.f32 %v134, %v591
  %v593 = vpop.f32.mrb[0].mxu0
  %v594 = vadd.f32 %v138, %v593
  %595 = vmatprep.mubr.f32.mxu0 0.0
  %596 = vmatmul.mubr.f32.gmra.mrb[0].mxu0 %v40
  %v597 = vpop.f32.mrb[0].mxu0
  %v598 = vadd.f32 %v134, %v597
  %v599 = vpop.f32.mrb[0].mxu0
  %v600 = vadd.f32 %v138, %v599
  %601 = vdwg.mxu0
  %602 = vmatprep.subr.mxu0 0.0
  %603 = vmatpush1.msra.mxu0 %v45
  %604 = vmatprep.subr.mxu0 0.0
  %605 = vmatpush1.msra.mxu0 %v50
  %606 = vmatprep.subr.mxu0 0.0
  %607 = vmatpush1.msra.mxu0 %v55
  %608 = vmatprep.subr.mxu0 0.0
  %609 = vmatpush1.msra.mxu0 %v60
  %610 = vmatprep.subr.mxu0 0.0
  %611 = vmatpush1.msra.mxu0 %v65
  %612 = vmatprep.subr.mxu0 0.0
  %613 = vmatpush1.msra.mxu0 %v70
  %614 = vmatprep.subr.mxu0 0.0
  %615 = vmatpush1.msra.mxu0 %v75
  %616 = vmatprep.subr.mxu0 0.0
  %617 = vmatpush1.msra.mxu0 %v80
  %618 = vmatprep.subr.mxu0 0.0
  %619 = vmatpush1.msra.mxu0 %v85
  %620 = vmatprep.subr.mxu0 0.0
  %621 = vmatpush1.msra.mxu0 %v90
  %622 = vmatprep.subr.mxu0 0.0
  %623 = vmatpush1.msra.mxu0 %v95
  %624 = vmatprep.subr.mxu0 0.0
  %625 = vmatpush1.msra.mxu0 %v100
  %626 = vmatprep.subr.mxu0 0.0
  %627 = vmatpush1.msra.mxu0 %v105
  %628 = vmatprep.subr.mxu0 0.0
  %629 = vmatpush1.msra.mxu0 %v110
  %630 = vmatprep.subr.mxu0 0.0
  %631 = vmatpush1.msra.mxu0 %v115
  %632 = vmatprep.subr.mxu0 0.0
  %633 = vmatpush1.msra.mxu0 %v120
  %634 = vmatprep.subr.mxu0 0.0
  %635 = vmatpush1.msra.mxu0 0.0
  %636 = vmatprep.subr.mxu0 0.0
  %637 = vmatpush1.msra.mxu0 0.0
  %638 = vmatprep.subr.mxu0 0.0
  %639 = vmatpush1.msra.mxu0 0.0
  %640 = vmatprep.subr.mxu0 0.0
  %641 = vmatpush1.msra.mxu0 0.0
  %642 = vmatprep.subr.mxu0 0.0
  %643 = vmatpush1.msra.mxu0 0.0
  %644 = vmatprep.subr.mxu0 0.0
  %645 = vmatpush1.msra.mxu0 0.0
  %646 = vmatprep.subr.mxu0 0.0
  %647 = vmatpush1.msra.mxu0 0.0
  %648 = vmatprep.subr.mxu0 0.0
  %649 = vmatpush1.msra.mxu0 0.0
  %650 = vmatprep.subr.mxu0 0.0
  %651 = vmatpush1.msra.mxu0 0.0
  %652 = vmatprep.subr.mxu0 0.0
  %653 = vmatpush1.msra.mxu0 0.0
  %654 = vmatprep.subr.mxu0 0.0
  %655 = vmatpush1.msra.mxu0 0.0
  %656 = vmatprep.subr.mxu0 0.0
  %657 = vmatpush1.msra.mxu0 0.0
  %658 = vmatprep.subr.mxu0 0.0
  %659 = vmatpush1.msra.mxu0 0.0
  %660 = vmatprep.subr.mxu0 0.0
  %661 = vmatpush1.msra.mxu0 0.0
  %662 = vmatprep.subr.mxu0 0.0
  %663 = vmatpush1.msra.mxu0 0.0
  %664 = vmatprep.subr.mxu0 0.0
  %665 = vmatpush1.msra.mxu0 0.0
  %666 = vmatprep.mubr.f32.mxu0 0.0
  %667 = vmatmul.mubr.f32.gmra.mrb[0].mxu0 %v14
  %v668 = vpop.f32.mrb[0].mxu0
  %v669 = vadd.f32 %v142, %v668
  %v670 = vpop.f32.mrb[0].mxu0
  %671 = vmatprep.mubr.f32.mxu0 0.0
  %672 = vmatmul.mubr.f32.gmra.mrb[0].mxu0 %v15
  %v673 = vpop.f32.mrb[0].mxu0
  %v674 = vadd.f32 %v142, %v673
  %v675 = vpop.f32.mrb[0].mxu0
  %676 = vmatprep.mubr.f32.mxu0 0.0
  %677 = vmatmul.mubr.f32.gmra.mrb[0].mxu0 %v16
  %v678 = vpop.f32.mrb[0].mxu0
  %v679 = vadd.f32 %v142, %v678
  %v680 = vpop.f32.mrb[0].mxu0
  %681 = vmatprep.mubr.f32.mxu0 0.0
  %682 = vmatmul.mubr.f32.gmra.mrb[0].mxu0 %v17
  %v683 = vpop.f32.mrb[0].mxu0
  %v684 = vadd.f32 %v142, %v683
  %v685 = vpop.f32.mrb[0].mxu0
  %686 = vmatprep.mubr.f32.mxu0 0.0
  %687 = vmatmul.mubr.f32.gmra.mrb[0].mxu0 %v18
  %v688 = vpop.f32.mrb[0].mxu0
  %v689 = vadd.f32 %v142, %v688
  %v690 = vpop.f32.mrb[0].mxu0
  %691 = vmatprep.mubr.f32.mxu0 0.0
  %692 = vmatmul.mubr.f32.gmra.mrb[0].mxu0 %v19
  %v693 = vpop.f32.mrb[0].mxu0
  %v694 = vadd.f32 %v142, %v693
  %v695 = vpop.f32.mrb[0].mxu0
  %696 = vmatprep.mubr.f32.mxu0 0.0
  %697 = vmatmul.mubr.f32.gmra.mrb[0].mxu0 %v20
  %v698 = vpop.f32.mrb[0].mxu0
  %v699 = vadd.f32 %v142, %v698
  %v700 = vpop.f32.mrb[0].mxu0
  %701 = vmatprep.mubr.f32.mxu0 0.0
  %702 = vmatmul.mubr.f32.gmra.mrb[0].mxu0 %v21
  %v703 = vpop.f32.mrb[0].mxu0
  %v704 = vadd.f32 %v142, %v703
  %v705 = vpop.f32.mrb[0].mxu0
  %706 = vmatprep.mubr.f32.mxu0 0.0
  %707 = vmatmul.mubr.f32.gmra.mrb[0].mxu0 %v22
  %v708 = vpop.f32.mrb[0].mxu0
  %v709 = vadd.f32 %v142, %v708
  %v710 = vpop.f32.mrb[0].mxu0
  %711 = vmatprep.mubr.f32.mxu0 0.0
  %712 = vmatmul.mubr.f32.gmra.mrb[0].mxu0 %v23
  %v713 = vpop.f32.mrb[0].mxu0
  %v714 = vadd.f32 %v142, %v713
  %v715 = vpop.f32.mrb[0].mxu0
  %716 = vmatprep.mubr.f32.mxu0 0.0
  %717 = vmatmul.mubr.f32.gmra.mrb[0].mxu0 %v24
  %v718 = vpop.f32.mrb[0].mxu0
  %v719 = vadd.f32 %v142, %v718
  %v720 = vpop.f32.mrb[0].mxu0
  %721 = vmatprep.mubr.f32.mxu0 0.0
  %722 = vmatmul.mubr.f32.gmra.mrb[0].mxu0 %v25
  %v723 = vpop.f32.mrb[0].mxu0
  %v724 = vadd.f32 %v142, %v723
  %v725 = vpop.f32.mrb[0].mxu0
  %726 = vmatprep.mubr.f32.mxu0 0.0
  %727 = vmatmul.mubr.f32.gmra.mrb[0].mxu0 %v26
  %v728 = vpop.f32.mrb[0].mxu0
  %v729 = vadd.f32 %v142, %v728
  %v730 = vpop.f32.mrb[0].mxu0
  %731 = vmatprep.mubr.f32.mxu0 0.0
  %732 = vmatmul.mubr.f32.gmra.mrb[0].mxu0 %v27
  %v733 = vpop.f32.mrb[0].mxu0
  %v734 = vadd.f32 %v142, %v733
  %v735 = vpop.f32.mrb[0].mxu0
  %736 = vmatprep.mubr.f32.mxu0 0.0
  %737 = vmatmul.mubr.f32.gmra.mrb[0].mxu0 %v28
  %v738 = vpop.f32.mrb[0].mxu0
  %v739 = vadd.f32 %v142, %v738
  %v740 = vpop.f32.mrb[0].mxu0
  %741 = vmatprep.mubr.f32.mxu0 0.0
  %742 = vmatmul.mubr.f32.gmra.mrb[0].mxu0 %v29
  %v743 = vpop.f32.mrb[0].mxu0
  %v744 = vadd.f32 %v142, %v743
  %v745 = vpop.f32.mrb[0].mxu0
  %746 = vmatprep.mubr.f32.mxu0 0.0
  %747 = vmatmul.mubr.f32.gmra.mrb[0].mxu0 %v30
  %v748 = vpop.f32.mrb[0].mxu0
  %v749 = vadd.f32 %v142, %v748
  %v750 = vpop.f32.mrb[0].mxu0
  %751 = vmatprep.mubr.f32.mxu0 0.0
  %752 = vmatmul.mubr.f32.gmra.mrb[0].mxu0 %v31
  %v753 = vpop.f32.mrb[0].mxu0
  %v754 = vadd.f32 %v142, %v753
  %v755 = vpop.f32.mrb[0].mxu0
  %756 = vmatprep.mubr.f32.mxu0 0.0
  %757 = vmatmul.mubr.f32.gmra.mrb[0].mxu0 %v32
  %v758 = vpop.f32.mrb[0].mxu0
  %v759 = vadd.f32 %v142, %v758
  %v760 = vpop.f32.mrb[0].mxu0
  %761 = vmatprep.mubr.f32.mxu0 0.0
  %762 = vmatmul.mubr.f32.gmra.mrb[0].mxu0 %v33
  %v763 = vpop.f32.mrb[0].mxu0
  %v764 = vadd.f32 %v142, %v763
  %v765 = vpop.f32.mrb[0].mxu0
  %766 = vmatprep.mubr.f32.mxu0 0.0
  %767 = vmatmul.mubr.f32.gmra.mrb[0].mxu0 %v34
  %v768 = vpop.f32.mrb[0].mxu0
  %v769 = vadd.f32 %v142, %v768
  %v770 = vpop.f32.mrb[0].mxu0
  %771 = vmatprep.mubr.f32.mxu0 0.0
  %772 = vmatmul.mubr.f32.gmra.mrb[0].mxu0 %v35
  %v773 = vpop.f32.mrb[0].mxu0
  %v774 = vadd.f32 %v142, %v773
  %v775 = vpop.f32.mrb[0].mxu0
  %776 = vmatprep.mubr.f32.mxu0 0.0
  %777 = vmatmul.mubr.f32.gmra.mrb[0].mxu0 %v36
  %v778 = vpop.f32.mrb[0].mxu0
  %v779 = vadd.f32 %v142, %v778
  %v780 = vpop.f32.mrb[0].mxu0
  %781 = vmatprep.mubr.f32.mxu0 0.0
  %782 = vmatmul.mubr.f32.gmra.mrb[0].mxu0 %v37
  %v783 = vpop.f32.mrb[0].mxu0
  %v784 = vadd.f32 %v142, %v783
  %v785 = vpop.f32.mrb[0].mxu0
  %786 = vmatprep.mubr.f32.mxu0 0.0
  %787 = vmatmul.mubr.f32.gmra.mrb[0].mxu0 %v38
  %v788 = vpop.f32.mrb[0].mxu0
  %v789 = vadd.f32 %v142, %v788
  %v790 = vpop.f32.mrb[0].mxu0
  %791 = vmatprep.mubr.f32.mxu0 0.0
  %792 = vmatmul.mubr.f32.gmra.mrb[0].mxu0 %v39
  %v793 = vpop.f32.mrb[0].mxu0
  %v794 = vadd.f32 %v142, %v793
  %v795 = vpop.f32.mrb[0].mxu0
  %796 = vmatprep.mubr.f32.mxu0 0.0
  %797 = vmatmul.mubr.f32.gmra.mrb[0].mxu0 %v40
  %v798 = vpop.f32.mrb[0].mxu0
  %v799 = vadd.f32 %v142, %v798
  %v800 = vpop.f32.mrb[0].mxu0
  %801 = vdwg.mxu0
  %v802 = vmax.f32 %v215, 0.0
  %v803 = vmax.f32 %v217, 0.0
  %v804 = vmax.f32 %v442, 0.0
  %v805 = vmax.f32 %v444, 0.0
  %v806 = vmax.f32 %v669, 0.0
  %v807 = vmax.f32 %v221, 0.0
  %v808 = vmax.f32 %v223, 0.0
  %v809 = vmax.f32 %v448, 0.0
  %v810 = vmax.f32 %v450, 0.0
  %v811 = vmax.f32 %v674, 0.0
  %v812 = vmax.f32 %v227, 0.0
  %v813 = vmax.f32 %v229, 0.0
  %v814 = vmax.f32 %v454, 0.0
  %v815 = vmax.f32 %v456, 0.0
  %v816 = vmax.f32 %v679, 0.0
  %v817 = vmax.f32 %v233, 0.0
  %v818 = vmax.f32 %v235, 0.0
  %v819 = vmax.f32 %v460, 0.0
  %v820 = vmax.f32 %v462, 0.0
  %v821 = vmax.f32 %v684, 0.0
  %v822 = vmax.f32 %v239, 0.0
  %v823 = vmax.f32 %v241, 0.0
  %v824 = vmax.f32 %v466, 0.0
  %v825 = vmax.f32 %v468, 0.0
  %v826 = vmax.f32 %v689, 0.0
  %v827 = vmax.f32 %v245, 0.0
  %v828 = vmax.f32 %v247, 0.0
  %v829 = vmax.f32 %v472, 0.0
  %v830 = vmax.f32 %v474, 0.0
  %v831 = vmax.f32 %v694, 0.0
  %v832 = vmax.f32 %v251, 0.0
  %v833 = vmax.f32 %v253, 0.0
  %v834 = vmax.f32 %v478, 0.0
  %v835 = vmax.f32 %v480, 0.0
  %v836 = vmax.f32 %v699, 0.0
  %v837 = vmax.f32 %v257, 0.0
  %v838 = vmax.f32 %v259, 0.0
  %v839 = vmax.f32 %v484, 0.0
  %v840 = vmax.f32 %v486, 0.0
  %v841 = vmax.f32 %v704, 0.0
  %v842 = vmax.f32 %v263, 0.0
  %v843 = vmax.f32 %v265, 0.0
  %v844 = vmax.f32 %v490, 0.0
  %v845 = vmax.f32 %v492, 0.0
  %v846 = vmax.f32 %v709, 0.0
  %v847 = vmax.f32 %v269, 0.0
  %v848 = vmax.f32 %v271, 0.0
  %v849 = vmax.f32 %v496, 0.0
  %v850 = vmax.f32 %v498, 0.0
  %v851 = vmax.f32 %v714, 0.0
  %v852 = vmax.f32 %v275, 0.0
  %v853 = vmax.f32 %v277, 0.0
  %v854 = vmax.f32 %v502, 0.0
  %v855 = vmax.f32 %v504, 0.0
  %v856 = vmax.f32 %v719, 0.0
  %v857 = vmax.f32 %v281, 0.0
  %v858 = vmax.f32 %v283, 0.0
  %v859 = vmax.f32 %v508, 0.0
  %v860 = vmax.f32 %v510, 0.0
  %v861 = vmax.f32 %v724, 0.0
  %v862 = vmax.f32 %v287, 0.0
  %v863 = vmax.f32 %v289, 0.0
  %v864 = vmax.f32 %v514, 0.0
  %v865 = vmax.f32 %v516, 0.0
  %v866 = vmax.f32 %v729, 0.0
  %v867 = vmax.f32 %v293, 0.0
  %v868 = vmax.f32 %v295, 0.0
  %v869 = vmax.f32 %v520, 0.0
  %v870 = vmax.f32 %v522, 0.0
  %v871 = vmax.f32 %v734, 0.0
  %v872 = vmax.f32 %v299, 0.0
  %v873 = vmax.f32 %v301, 0.0
  %v874 = vmax.f32 %v526, 0.0
  %v875 = vmax.f32 %v528, 0.0
  %v876 = vmax.f32 %v739, 0.0
  %v877 = vmax.f32 %v305, 0.0
  %v878 = vmax.f32 %v307, 0.0
  %v879 = vmax.f32 %v532, 0.0
  %v880 = vmax.f32 %v534, 0.0
  %v881 = vmax.f32 %v744, 0.0
  %v882 = vmax.f32 %v311, 0.0
  %v883 = vmax.f32 %v313, 0.0
  %v884 = vmax.f32 %v538, 0.0
  %v885 = vmax.f32 %v540, 0.0
  %v886 = vmax.f32 %v749, 0.0
  %v887 = vmax.f32 %v317, 0.0
  %v888 = vmax.f32 %v319, 0.0
  %v889 = vmax.f32 %v544, 0.0
  %v890 = vmax.f32 %v546, 0.0
  %v891 = vmax.f32 %v754, 0.0
  %v892 = vmax.f32 %v323, 0.0
  %v893 = vmax.f32 %v325, 0.0
  %v894 = vmax.f32 %v550, 0.0
  %v895 = vmax.f32 %v552, 0.0
  %v896 = vmax.f32 %v759, 0.0
  %v897 = vmax.f32 %v329, 0.0
  %v898 = vmax.f32 %v331, 0.0
  %v899 = vmax.f32 %v556, 0.0
  %v900 = vmax.f32 %v558, 0.0
  %v901 = vmax.f32 %v764, 0.0
  %v902 = vmax.f32 %v335, 0.0
  %v903 = vmax.f32 %v337, 0.0
  %v904 = vmax.f32 %v562, 0.0
  %v905 = vmax.f32 %v564, 0.0
  %v906 = vmax.f32 %v769, 0.0
  %v907 = vmax.f32 %v341, 0.0
  %v908 = vmax.f32 %v343, 0.0
  %v909 = vmax.f32 %v568, 0.0
  %v910 = vmax.f32 %v570, 0.0
  %v911 = vmax.f32 %v774, 0.0
  %v912 = vmax.f32 %v347, 0.0
  %v913 = vmax.f32 %v349, 0.0
  %v914 = vmax.f32 %v574, 0.0
  %v915 = vmax.f32 %v576, 0.0
  %v916 = vmax.f32 %v779, 0.0
  %v917 = vmax.f32 %v353, 0.0
  %v918 = vmax.f32 %v355, 0.0
  %v919 = vmax.f32 %v580, 0.0
  %v920 = vmax.f32 %v582, 0.0
  %v921 = vmax.f32 %v784, 0.0
  %v922 = vmax.f32 %v359, 0.0
  %v923 = vmax.f32 %v361, 0.0
  %v924 = vmax.f32 %v586, 0.0
  %v925 = vmax.f32 %v588, 0.0
  %v926 = vmax.f32 %v789, 0.0
  %v927 = vmax.f32 %v365, 0.0
  %v928 = vmax.f32 %v367, 0.0
  %v929 = vmax.f32 %v592, 0.0
  %v930 = vmax.f32 %v594, 0.0
  %v931 = vmax.f32 %v794, 0.0
  %v932 = vmax.f32 %v371, 0.0
  %v933 = vmax.f32 %v373, 0.0
  %v934 = vmax.f32 %v598, 0.0
  %v935 = vmax.f32 %v600, 0.0
  %v936 = vmax.f32 %v799, 0.0
  %937 = vst [vmem:[%s3] sm:$0xff] %v802
  %938 = vst [vmem:[%s3 + $0x8] sm:$0xff] %v803
  %939 = vst [vmem:[%s3 + $0x10] sm:$0xff] %v804
  %940 = vst [vmem:[%s3 + $0x18] sm:$0xff] %v805
  %941 = vst [vmem:[%s3 + $0x20] sm:$0xff] %v806
  %942 = vst [vmem:[%s3 + $0x28] sm:$0xff] %v807
  %943 = vst [vmem:[%s3 + $0x30] sm:$0xff] %v808
  %944 = vst [vmem:[%s3 + $0x38] sm:$0xff] %v809
  %945 = vst [vmem:[%s3 + $0x40] sm:$0xff] %v810
  %946 = vst [vmem:[%s3 + $0x48] sm:$0xff] %v811
  %947 = vst [vmem:[%s3 + $0x50] sm:$0xff] %v812
  %948 = vst [vmem:[%s3 + $0x58] sm:$0xff] %v813
  %949 = vst [vmem:[%s3 + $0x60] sm:$0xff] %v814
  %950 = vst [vmem:[%s3 + $0x68] sm:$0xff] %v815
  %951 = vst [vmem:[%s3 + $0x70] sm:$0xff] %v816
  %952 = vst [vmem:[%s3 + $0x78] sm:$0xff] %v817
  %953 = vst [vmem:[%s3 + $0x80] sm:$0xff] %v818
  %954 = vst [vmem:[%s3 + $0x88] sm:$0xff] %v819
  %955 = vst [vmem:[%s3 + $0x90] sm:$0xff] %v820
  %956 = vst [vmem:[%s3 + $0x98] sm:$0xff] %v821
  %957 = vst [vmem:[%s3 + $0xa0] sm:$0xff] %v822
  %958 = vst [vmem:[%s3 + $0xa8] sm:$0xff] %v823
  %959 = vst [vmem:[%s3 + $0xb0] sm:$0xff] %v824
  %960 = vst [vmem:[%s3 + $0xb8] sm:$0xff] %v825
  %961 = vst [vmem:[%s3 + $0xc0] sm:$0xff] %v826
  %962 = vst [vmem:[%s3 + $0xc8] sm:$0xff] %v827
  %963 = vst [vmem:[%s3 + $0xd0] sm:$0xff] %v828
  %964 = vst [vmem:[%s3 + $0xd8] sm:$0xff] %v829
  %965 = vst [vmem:[%s3 + $0xe0] sm:$0xff] %v830
  %966 = vst [vmem:[%s3 + $0xe8] sm:$0xff] %v831
  %967 = vst [vmem:[%s3 + $0xf0] sm:$0xff] %v832
  %968 = vst [vmem:[%s3 + $0xf8] sm:$0xff] %v833
  %969 = vst [vmem:[%s3 + $0x100] sm:$0xff] %v834
  %970 = vst [vmem:[%s3 + $0x108] sm:$0xff] %v835
  %971 = vst [vmem:[%s3 + $0x110] sm:$0xff] %v836
  %972 = vst [vmem:[%s3 + $0x118] sm:$0xff] %v837
  %973 = vst [vmem:[%s3 + $0x120] sm:$0xff] %v838
  %974 = vst [vmem:[%s3 + $0x128] sm:$0xff] %v839
  %975 = vst [vmem:[%s3 + $0x130] sm:$0xff] %v840
  %976 = vst [vmem:[%s3 + $0x138] sm:$0xff] %v841
  %977 = vst [vmem:[%s3 + $0x140] sm:$0xff] %v842
  %978 = vst [vmem:[%s3 + $0x148] sm:$0xff] %v843
  %979 = vst [vmem:[%s3 + $0x150] sm:$0xff] %v844
  %980 = vst [vmem:[%s3 + $0x158] sm:$0xff] %v845
  %981 = vst [vmem:[%s3 + $0x160] sm:$0xff] %v846
  %982 = vst [vmem:[%s3 + $0x168] sm:$0xff] %v847
  %983 = vst [vmem:[%s3 + $0x170] sm:$0xff] %v848
  %984 = vst [vmem:[%s3 + $0x178] sm:$0xff] %v849
  %985 = vst [vmem:[%s3 + $0x180] sm:$0xff] %v850
  %986 = vst [vmem:[%s3 + $0x188] sm:$0xff] %v851
  %987 = vst [vmem:[%s3 + $0x190] sm:$0xff] %v852
  %988 = vst [vmem:[%s3 + $0x198] sm:$0xff] %v853
  %989 = vst [vmem:[%s3 + $0x1a0] sm:$0xff] %v854
  %990 = vst [vmem:[%s3 + $0x1a8] sm:$0xff] %v855
  %991 = vst [vmem:[%s3 + $0x1b0] sm:$0xff] %v856
  %992 = vst [vmem:[%s3 + $0x1b8] sm:$0xff] %v857
  %993 = vst [vmem:[%s3 + $0x1c0] sm:$0xff] %v858
  %994 = vst [vmem:[%s3 + $0x1c8] sm:$0xff] %v859
  %995 = vst [vmem:[%s3 + $0x1d0] sm:$0xff] %v860
  %996 = vst [vmem:[%s3 + $0x1d8] sm:$0xff] %v861
  %997 = vst [vmem:[%s3 + $0x1e0] sm:$0xff] %v862
  %998 = vst [vmem:[%s3 + $0x1e8] sm:$0xff] %v863
  %999 = vst [vmem:[%s3 + $0x1f0] sm:$0xff] %v864
  %1000 = vst [vmem:[%s3 + $0x1f8] sm:$0xff] %v865
  %1001 = vst [vmem:[%s3 + $0x200] sm:$0xff] %v866
  %1002 = vst [vmem:[%s3 + $0x208] sm:$0xff] %v867
  %1003 = vst [vmem:[%s3 + $0x210] sm:$0xff] %v868
  %1004 = vst [vmem:[%s3 + $0x218] sm:$0xff] %v869
  %1005 = vst [vmem:[%s3 + $0x220] sm:$0xff] %v870
  %1006 = vst [vmem:[%s3 + $0x228] sm:$0xff] %v871
  %1007 = vst [vmem:[%s3 + $0x230] sm:$0xff] %v872
  %1008 = vst [vmem:[%s3 + $0x238] sm:$0xff] %v873
  %1009 = vst [vmem:[%s3 + $0x240] sm:$0xff] %v874
  %1010 = vst [vmem:[%s3 + $0x248] sm:$0xff] %v875
  %1011 = vst [vmem:[%s3 + $0x250] sm:$0xff] %v876
  %1012 = vst [vmem:[%s3 + $0x258] sm:$0xff] %v877
  %1013 = vst [vmem:[%s3 + $0x260] sm:$0xff] %v878
  %1014 = vst [vmem:[%s3 + $0x268] sm:$0xff] %v879
  %1015 = vst [vmem:[%s3 + $0x270] sm:$0xff] %v880
  %1016 = vst [vmem:[%s3 + $0x278] sm:$0xff] %v881
  %1017 = vst [vmem:[%s3 + $0x280] sm:$0xff] %v882
  %1018 = vst [vmem:[%s3 + $0x288] sm:$0xff] %v883
  %1019 = vst [vmem:[%s3 + $0x290] sm:$0xff] %v884
  %1020 = vst [vmem:[%s3 + $0x298] sm:$0xff] %v885
  %1021 = vst [vmem:[%s3 + $0x2a0] sm:$0xff] %v886
  %1022 = vst [vmem:[%s3 + $0x2a8] sm:$0xff] %v887
  %1023 = vst [vmem:[%s3 + $0x2b0] sm:$0xff] %v888
  %1024 = vst [vmem:[%s3 + $0x2b8] sm:$0xff] %v889
  %1025 = vst [vmem:[%s3 + $0x2c0] sm:$0xff] %v890
  %1026 = vst [vmem:[%s3 + $0x2c8] sm:$0xff] %v891
  %1027 = vst [vmem:[%s3 + $0x2d0] sm:$0xff] %v892
  %1028 = vst [vmem:[%s3 + $0x2d8] sm:$0xff] %v893
  %1029 = vst [vmem:[%s3 + $0x2e0] sm:$0xff] %v894
  %1030 = vst [vmem:[%s3 + $0x2e8] sm:$0xff] %v895
  %1031 = vst [vmem:[%s3 + $0x2f0] sm:$0xff] %v896
  %1032 = vst [vmem:[%s3 + $0x2f8] sm:$0xff] %v897
  %1033 = vst [vmem:[%s3 + $0x300] sm:$0xff] %v898
  %1034 = vst [vmem:[%s3 + $0x308] sm:$0xff] %v899
  %1035 = vst [vmem:[%s3 + $0x310] sm:$0xff] %v900
  %1036 = vst [vmem:[%s3 + $0x318] sm:$0xff] %v901
  %1037 = vst [vmem:[%s3 + $0x320] sm:$0xff] %v902
  %1038 = vst [vmem:[%s3 + $0x328] sm:$0xff] %v903
  %1039 = vst [vmem:[%s3 + $0x330] sm:$0xff] %v904
  %1040 = vst [vmem:[%s3 + $0x338] sm:$0xff] %v905
  %1041 = vst [vmem:[%s3 + $0x340] sm:$0xff] %v906
  %1042 = vst [vmem:[%s3 + $0x348] sm:$0xff] %v907
  %1043 = vst [vmem:[%s3 + $0x350] sm:$0xff] %v908
  %1044 = vst [vmem:[%s3 + $0x358] sm:$0xff] %v909
  %1045 = vst [vmem:[%s3 + $0x360] sm:$0xff] %v910
  %1046 = vst [vmem:[%s3 + $0x368] sm:$0xff] %v911
  %1047 = vst [vmem:[%s3 + $0x370] sm:$0xff] %v912
  %1048 = vst [vmem:[%s3 + $0x378] sm:$0xff] %v913
  %1049 = vst [vmem:[%s3 + $0x380] sm:$0xff] %v914
  %1050 = vst [vmem:[%s3 + $0x388] sm:$0xff] %v915
  %1051 = vst [vmem:[%s3 + $0x390] sm:$0xff] %v916
  %1052 = vst [vmem:[%s3 + $0x398] sm:$0xff] %v917
  %1053 = vst [vmem:[%s3 + $0x3a0] sm:$0xff] %v918
  %1054 = vst [vmem:[%s3 + $0x3a8] sm:$0xff] %v919
  %1055 = vst [vmem:[%s3 + $0x3b0] sm:$0xff] %v920
  %1056 = vst [vmem:[%s3 + $0x3b8] sm:$0xff] %v921
  %1057 = vst [vmem:[%s3 + $0x3c0] sm:$0xff] %v922
  %1058 = vst [vmem:[%s3 + $0x3c8] sm:$0xff] %v923
  %1059 = vst [vmem:[%s3 + $0x3d0] sm:$0xff] %v924
  %1060 = vst [vmem:[%s3 + $0x3d8] sm:$0xff] %v925
  %1061 = vst [vmem:[%s3 + $0x3e0] sm:$0xff] %v926
  %1062 = vst [vmem:[%s3 + $0x3e8] sm:$0xff] %v927
  %1063 = vst [vmem:[%s3 + $0x3f0] sm:$0xff] %v928
  %1064 = vst [vmem:[%s3 + $0x3f8] sm:$0xff] %v929
  %1065 = vst [vmem:[%s3 + $0x400] sm:$0xff] %v930
  %1066 = vst [vmem:[%s3 + $0x408] sm:$0xff] %v931
  %1067 = vst [vmem:[%s3 + $0x410] sm:$0xff] %v932
  %1068 = vst [vmem:[%s3 + $0x418] sm:$0xff] %v933
  %1069 = vst [vmem:[%s3 + $0x420] sm:$0xff] %v934
  %1070 = vst [vmem:[%s3 + $0x428] sm:$0xff] %v935
  %1071 = vst [vmem:[%s3 + $0x430] sm:$0xff] %v936
  // Predicated region
  $region14: #{forward.15} parent=0 // pred_check
    _
  $region15: #{forward.15} parent=0 // pred_check_branch
    %1073 = sbr.rel (0) target = $region17
  $region16: #{forward.15} parent=0 // pred_region
    _
  $region17: #{forward.15} parent=0 // pred_fallthru
    _
  // Predicated region
  $region18: #{forward.15} parent=0 // pred_check
    _
  $region19: #{forward.15} parent=0 // pred_check_branch
    %1075 = sbr.rel (0) target = $region21
  $region20: #{forward.15} parent=0 // pred_region
    _
  $region21: #{forward.15} parent=0 // pred_fallthru
    _

// kernel: forward.16
$region0: #{forward.16}
  #allocation0 [shape = 'u32[]', space=smem, size = 0x4, offset = 0x4, fixed_abs, tag = 'smem constant byte address 0x4 - core index']
  #allocation1 [shape = 'u32[144,128]{1,0:T(1,128)}', space=vmem, size = 0x12000, scoped, tag = 'internal scratch']
  %s0 = inlined_call_operand.vmem [shape: f32[2272,256], index: 0, kind: input, shape index: {}]
  %s1 = inlined_call_operand.vmem [shape: f32[256,128], index: 1, kind: input, shape index: {}]
  %s2 = inlined_call_operand.vmem [shape: f32[1,128], index: 2, kind: input, shape index: {}]
  %s3 = inlined_call_operand.vmem [shape: f32[2272,128], index: 3, kind: output, shape index: {}]
  %s4 = sld [smem:[#allocation0]]
  $region45: #{forward.16} parent=0
    _
  %s6 = ssub.s32 1, %s4
  %s7 = scalar_select 0, %s6, %s4
  loop: start=0, step=1, limit=4
  $region2: #{forward.16} parent=0 // loop_pre_header
    _
  $region3: #{forward.16} parent=0 // loop_header
    %s9 = sphi 0, %s13
    %p10 = scmp.ge.s32.totalorder %s9, 4
    %s19 = sphi 0, %s21
    %s22 = sphi 0, %s19
    %s23 = sphi 0, %s22
    %s39 = sphi 0, %s23
    %s43 = sphi 0, %s43
    %s45 = sphi 0, %s43
    %s46 = sphi 0, %s45
    %s60 = sphi 0, %s46
    %s64 = sphi 0, %s64
    %s66 = sphi 0, %s64
    %s67 = sphi 0, %s66
    %s81 = sphi 0, %s67
    %s87 = sphi 0, %s89
    %s90 = sphi 0, %s87
    %s91 = sphi 0, %s90
    %s107 = sphi 0, %s91
  $region4: #{forward.16} parent=0 // loop_header_branch
    %12 = sbr.rel (%p10) target = $region8
  $region5: #{forward.16} parent=0 // loop_body
    %s14 = ssub.s32 %s9, 1
    %s15 = ssub.s32 %s9, 2
    %s16 = sadd.s32 %s9, 1
    %s17 = ssub.s32 %s9, %s16
    %p18 = scmp.eq.s32.totalorder %s17, 0
    %s20 = sadd.s32 %s19, 1
    %s21 = scalar_select %p18, %s19, %s20
    %p24 = pneg %p18
    %p25 = scmp.eq.s32.totalorder %s9, 1
    %p26 = por %p24, %p25
    %p27 = scmp.ne.s32.totalorder %s19, %s22
    %p28 = scmp.eq.s32.totalorder %s9, 0
    %p29 = por %p27, %p28
    %p30 = scmp.ne.s32.totalorder %s19, %s22
    %p31 = scmp.eq.s32.totalorder %s14, 1
    %p32 = por %p30, %p31
    %p33 = scmp.ne.s32.totalorder %s22, %s23
    %p34 = scmp.eq.s32.totalorder %s14, 0
    %p35 = por %p33, %p34
    %p36 = scmp.ne.s32.totalorder %s22, %s23
    %p37 = scmp.eq.s32.totalorder %s15, 1
    %p38 = por %p36, %p37
    %p40 = scmp.ne.s32.totalorder %s23, %s39
    %p41 = scmp.eq.s32.totalorder %s15, 0
    %p42 = por %p40, %p41
    %s44 = sadd.s32 %s43, 1
    %p47 = scmp.eq.s32.totalorder %s9, 1
    %p48 = scmp.ne.s32.totalorder %s43, %s45
    %p49 = scmp.eq.s32.totalorder %s9, 0
    %p50 = por %p48, %p49
    %p51 = scmp.ne.s32.totalorder %s43, %s45
    %p52 = scmp.eq.s32.totalorder %s14, 1
    %p53 = por %p51, %p52
    %p54 = scmp.ne.s32.totalorder %s45, %s46
    %p55 = scmp.eq.s32.totalorder %s14, 0
    %p56 = por %p54, %p55
    %p57 = scmp.ne.s32.totalorder %s45, %s46
    %p58 = scmp.eq.s32.totalorder %s15, 1
    %p59 = por %p57, %p58
    %p61 = scmp.ne.s32.totalorder %s46, %s60
    %p62 = scmp.eq.s32.totalorder %s15, 0
    %p63 = por %p61, %p62
    %s65 = sadd.s32 %s64, 1
    %p68 = scmp.eq.s32.totalorder %s9, 1
    %p69 = scmp.ne.s32.totalorder %s64, %s66
    %p70 = scmp.eq.s32.totalorder %s9, 0
    %p71 = por %p69, %p70
    %p72 = scmp.ne.s32.totalorder %s64, %s66
    %p73 = scmp.eq.s32.totalorder %s14, 1
    %p74 = por %p72, %p73
    %p75 = scmp.ne.s32.totalorder %s66, %s67
    %p76 = scmp.eq.s32.totalorder %s14, 0
    %p77 = por %p75, %p76
    %p78 = scmp.ne.s32.totalorder %s66, %s67
    %p79 = scmp.eq.s32.totalorder %s15, 1
    %p80 = por %p78, %p79
    %p82 = scmp.ne.s32.totalorder %s67, %s81
    %p83 = scmp.eq.s32.totalorder %s15, 0
    %p84 = por %p82, %p83
    %s85 = ssub.s32 %s9, %s16
    %p86 = scmp.eq.s32.totalorder %s85, 0
    %s88 = sadd.s32 %s87, 1
    %s89 = scalar_select %p86, %s87, %s88
    %p92 = pneg %p86
    %p93 = scmp.eq.s32.totalorder %s9, 1
    %p94 = por %p92, %p93
    %p95 = scmp.ne.s32.totalorder %s87, %s90
    %p96 = scmp.eq.s32.totalorder %s9, 0
    %p97 = por %p95, %p96
    %p98 = scmp.ne.s32.totalorder %s87, %s90
    %p99 = scmp.eq.s32.totalorder %s14, 1
    %p100 = por %p98, %p99
    %p101 = scmp.ne.s32.totalorder %s90, %s91
    %p102 = scmp.eq.s32.totalorder %s14, 0
    %p103 = por %p101, %p102
    %p104 = scmp.ne.s32.totalorder %s90, %s91
    %p105 = scmp.eq.s32.totalorder %s15, 1
    %p106 = por %p104, %p105
    %p108 = scmp.ne.s32.totalorder %s91, %s107
    %p109 = scmp.eq.s32.totalorder %s15, 0
    %p110 = por %p108, %p109
    %p111 = scmp.le.s32.totalorder 1, %s9
    %p112 = scmp.lt.s32.totalorder %s9, 3
    %p113 = pnand %p111, %p112
    %p114 = pneg %p113
    // Predicated region
    $region9: #{forward.16} parent=5 // pred_check
      _
    $region10: #{forward.16} parent=5 // pred_check_branch
      %116 = sbr.rel (%p113) target = $region12
    $region11: #{forward.16} parent=5 // pred_region
      %s117 = ssub.s32 %s9, 1
      // Predicated region
      $region13: #{forward.16} parent=11 // pred_check
        %p118 = pneg %p56
      $region14: #{forward.16} parent=11 // pred_check_branch
        %120 = sbr.rel (%p118) target = $region16
      $region15: #{forward.16} parent=11 // pred_region
        _
      $region16: #{forward.16} parent=11 // pred_fallthru
        _
      // Predicated region
      $region17: #{forward.16} parent=11 // pred_check
        %p121 = pneg %p77
      $region18: #{forward.16} parent=11 // pred_check_branch
        %123 = sbr.rel (%p121) target = $region20
      $region19: #{forward.16} parent=11 // pred_region
        _
      $region20: #{forward.16} parent=11 // pred_fallthru
        _
    $region12: #{forward.16} parent=5 // pred_fallthru
      _
    %p124 = scmp.lt.s32.totalorder %s9, 2
    // Predicated region
    $region21: #{forward.16} parent=5 // pred_check
      %p125 = pneg %p124
    $region22: #{forward.16} parent=5 // pred_check_branch
      %127 = sbr.rel (%p125) target = $region24
    $region23: #{forward.16} parent=5 // pred_region
      // Predicated region
      $region25: #{forward.16} parent=23 // pred_check
        %p128 = pneg %p29
      $region26: #{forward.16} parent=23 // pred_check_branch
        %130 = sbr.rel (%p128) target = $region28
      $region27: #{forward.16} parent=23 // pred_region
        %s131 = smul.u32 142, %s9
        %p132 = scmp.lt.s32.totalorder %s131, 283
        %s133 = scalar_select %p132, %s131, 283
        %s134 = smul.addr %s133, 2
        %s135 = smul.addr %s134, 8
        %s136 = scalar_lea.vmem %s0, %s135
        %s137 = smul.u32 142, %s9
      $region28: #{forward.16} parent=23 // pred_fallthru
        _
    $region24: #{forward.16} parent=5 // pred_fallthru
      _
    %p138 = scmp.le.s32.totalorder 1, %s9
    %p139 = scmp.lt.s32.totalorder %s9, 3
    %p140 = pnand %p138, %p139
    %p141 = pneg %p140
    // Predicated region
    $region29: #{forward.16} parent=5 // pred_check
      _
    $region30: #{forward.16} parent=5 // pred_check_branch
      %143 = sbr.rel (%p140) target = $region32
    $region31: #{forward.16} parent=5 // pred_region
      %s144 = ssub.s32 %s9, 1
      %s145 = smul.u32 142, %s14
      %p146 = scmp.lt.s32.totalorder %s145, 283
      %s147 = scalar_select %p146, %s145, 283
      %s148 = smul.addr %s147, 2
      %s149 = smul.addr %s148, 8
      %s150 = scalar_lea.vmem %s0, %s149
      %p151 = pneg %p35
      %p152 = pneg %p32
      %p153 = pneg %p56
      %p154 = pneg %p53
      %p155 = pneg %p77
      %p156 = pneg %p74
      %p157 = pneg %p103
      %p158 = pneg %p100
      %s159 = smul.u32 142, %s14
      %p160 = scmp.lt.s32.totalorder %s159, 283
      %s161 = scalar_select %p160, %s159, 283
      %s162 = smul.addr %s161, 8
      %s163 = scalar_lea.vmem %s3, %s162
      %s164 = smul.u32 142, %s14
      %p165 = scmp.lt.s32.totalorder %s164, 283
      %s166 = scalar_select %p165, %s164, 283
      %s167 = smul.addr %s166, 2
      %s168 = smul.addr %s167, 8
      %s169 = scalar_lea.vmem %s0, %s168
      %s170 = smul.u32 142, %s14
      %s171 = smul.u32 142, %s14
      %p172 = scmp.lt.s32.totalorder %s171, 283
      %s173 = scalar_select %p172, %s171, 283
      %s174 = smul.addr %s173, 8
      %s175 = scalar_lea.vmem %s3, %s174
      %s176 = smul.u32 142, %s14
      %v177 = vld [vmem:[%s169] sm:$0xff]
      %v178 = vld [vmem:[%s169 + $0x8] sm:$0xff]
      %v179 = vld [vmem:[%s169 + $0x10] sm:$0xff]
      %v180 = vld [vmem:[%s169 + $0x18] sm:$0xff]
      %v181 = vld [vmem:[%s169 + $0x20] sm:$0xff]
      %v182 = vld [vmem:[%s169 + $0x28] sm:$0xff]
      %v183 = vld [vmem:[%s169 + $0x30] sm:$0xff]
      %v184 = vld [vmem:[%s169 + $0x38] sm:$0xff]
      %v185 = vld [vmem:[%s169 + $0x40] sm:$0xff]
      %v186 = vld [vmem:[%s169 + $0x48] sm:$0xff]
      %v187 = vld [vmem:[%s169 + $0x50] sm:$0xff]
      %v188 = vld [vmem:[%s169 + $0x58] sm:$0xff]
      %v189 = vld [vmem:[%s169 + $0x60] sm:$0xff]
      %v190 = vld [vmem:[%s169 + $0x68] sm:$0xff]
      %v191 = vld [vmem:[%s169 + $0x70] sm:$0xff]
      %v192 = vld [vmem:[%s169 + $0x78] sm:$0xff]
      %v193 = vld [vmem:[%s169 + $0x80] sm:$0xff]
      %v194 = vld [vmem:[%s169 + $0x88] sm:$0xff]
      %v195 = vld [vmem:[%s169 + $0x90] sm:$0xff]
      %v196 = vld [vmem:[%s169 + $0x98] sm:$0xff]
      %v197 = vld [vmem:[%s169 + $0xa0] sm:$0xff]
      %v198 = vld [vmem:[%s169 + $0xa8] sm:$0xff]
      %v199 = vld [vmem:[%s169 + $0xb0] sm:$0xff]
      %v200 = vld [vmem:[%s169 + $0xb8] sm:$0xff]
      %v201 = vld [vmem:[%s169 + $0xc0] sm:$0xff]
      %v202 = vld [vmem:[%s169 + $0xc8] sm:$0xff]
      %v203 = vld [vmem:[%s169 + $0xd0] sm:$0xff]
      %v204 = vld [vmem:[%s169 + $0xd8] sm:$0xff]
      %v205 = vld [vmem:[%s169 + $0xe0] sm:$0xff]
      %v206 = vld [vmem:[%s169 + $0xe8] sm:$0xff]
      %v207 = vld [vmem:[%s169 + $0xf0] sm:$0xff]
      %v208 = vld [vmem:[%s169 + $0xf8] sm:$0xff]
      %v209 = vld [vmem:[%s169 + $0x100] sm:$0xff]
      %v210 = vld [vmem:[%s169 + $0x108] sm:$0xff]
      %v211 = vld [vmem:[%s169 + $0x110] sm:$0xff]
      %v212 = vld [vmem:[%s169 + $0x118] sm:$0xff]
      %v213 = vld [vmem:[%s169 + $0x120] sm:$0xff]
      %v214 = vld [vmem:[%s169 + $0x128] sm:$0xff]
      %v215 = vld [vmem:[%s169 + $0x130] sm:$0xff]
      %v216 = vld [vmem:[%s169 + $0x138] sm:$0xff]
      %v217 = vld [vmem:[%s169 + $0x140] sm:$0xff]
      %v218 = vld [vmem:[%s169 + $0x148] sm:$0xff]
      %v219 = vld [vmem:[%s169 + $0x150] sm:$0xff]
      %v220 = vld [vmem:[%s169 + $0x158] sm:$0xff]
      %v221 = vld [vmem:[%s169 + $0x160] sm:$0xff]
      %v222 = vld [vmem:[%s169 + $0x168] sm:$0xff]
      %v223 = vld [vmem:[%s169 + $0x170] sm:$0xff]
      %v224 = vld [vmem:[%s169 + $0x178] sm:$0xff]
      %v225 = vld [vmem:[%s169 + $0x180] sm:$0xff]
      %v226 = vld [vmem:[%s169 + $0x188] sm:$0xff]
      %v227 = vld [vmem:[%s169 + $0x190] sm:$0xff]
      %v228 = vld [vmem:[%s169 + $0x198] sm:$0xff]
      %v229 = vld [vmem:[%s169 + $0x1a0] sm:$0xff]
      %v230 = vld [vmem:[%s169 + $0x1a8] sm:$0xff]
      %v231 = vld [vmem:[%s169 + $0x1b0] sm:$0xff]
      %v232 = vld [vmem:[%s169 + $0x1b8] sm:$0xff]
      %v233 = vld [vmem:[%s169 + $0x1c0] sm:$0xff]
      %v234 = vld [vmem:[%s169 + $0x1c8] sm:$0xff]
      %v235 = vld [vmem:[%s169 + $0x1d0] sm:$0xff]
      %v236 = vld [vmem:[%s169 + $0x1d8] sm:$0xff]
      %v237 = vld [vmem:[%s169 + $0x1e0] sm:$0xff]
      %v238 = vld [vmem:[%s169 + $0x1e8] sm:$0xff]
      %v239 = vld [vmem:[%s169 + $0x1f0] sm:$0xff]
      %v240 = vld [vmem:[%s169 + $0x1f8] sm:$0xff]
      %v241 = vld [vmem:[%s169 + $0x200] sm:$0xff]
      %v242 = vld [vmem:[%s169 + $0x208] sm:$0xff]
      %v243 = vld [vmem:[%s169 + $0x210] sm:$0xff]
      %v244 = vld [vmem:[%s169 + $0x218] sm:$0xff]
      %v245 = vld [vmem:[%s169 + $0x220] sm:$0xff]
      %v246 = vld [vmem:[%s169 + $0x228] sm:$0xff]
      %v247 = vld [vmem:[%s169 + $0x230] sm:$0xff]
      %v248 = vld [vmem:[%s169 + $0x238] sm:$0xff]
      %v249 = vld [vmem:[%s169 + $0x240] sm:$0xff]
      %v250 = vld [vmem:[%s169 + $0x248] sm:$0xff]
      %v251 = vld [vmem:[%s169 + $0x250] sm:$0xff]
      %v252 = vld [vmem:[%s169 + $0x258] sm:$0xff]
      %v253 = vld [vmem:[%s169 + $0x260] sm:$0xff]
      %v254 = vld [vmem:[%s169 + $0x268] sm:$0xff]
      %v255 = vld [vmem:[%s169 + $0x270] sm:$0xff]
      %v256 = vld [vmem:[%s169 + $0x278] sm:$0xff]
      %v257 = vld [vmem:[%s169 + $0x280] sm:$0xff]
      %v258 = vld [vmem:[%s169 + $0x288] sm:$0xff]
      %v259 = vld [vmem:[%s169 + $0x290] sm:$0xff]
      %v260 = vld [vmem:[%s169 + $0x298] sm:$0xff]
      %v261 = vld [vmem:[%s169 + $0x2a0] sm:$0xff]
      %v262 = vld [vmem:[%s169 + $0x2a8] sm:$0xff]
      %v263 = vld [vmem:[%s169 + $0x2b0] sm:$0xff]
      %v264 = vld [vmem:[%s169 + $0x2b8] sm:$0xff]
      %v265 = vld [vmem:[%s169 + $0x2c0] sm:$0xff]
      %v266 = vld [vmem:[%s169 + $0x2c8] sm:$0xff]
      %v267 = vld [vmem:[%s169 + $0x2d0] sm:$0xff]
      %v268 = vld [vmem:[%s169 + $0x2d8] sm:$0xff]
      %v269 = vld [vmem:[%s169 + $0x2e0] sm:$0xff]
      %v270 = vld [vmem:[%s169 + $0x2e8] sm:$0xff]
      %v271 = vld [vmem:[%s169 + $0x2f0] sm:$0xff]
      %v272 = vld [vmem:[%s169 + $0x2f8] sm:$0xff]
      %v273 = vld [vmem:[%s169 + $0x300] sm:$0xff]
      %v274 = vld [vmem:[%s169 + $0x308] sm:$0xff]
      %v275 = vld [vmem:[%s169 + $0x310] sm:$0xff]
      %v276 = vld [vmem:[%s169 + $0x318] sm:$0xff]
      %v277 = vld [vmem:[%s169 + $0x320] sm:$0xff]
      %v278 = vld [vmem:[%s169 + $0x328] sm:$0xff]
      %v279 = vld [vmem:[%s169 + $0x330] sm:$0xff]
      %v280 = vld [vmem:[%s169 + $0x338] sm:$0xff]
      %v281 = vld [vmem:[%s169 + $0x340] sm:$0xff]
      %v282 = vld [vmem:[%s169 + $0x348] sm:$0xff]
      %v283 = vld [vmem:[%s169 + $0x350] sm:$0xff]
      %v284 = vld [vmem:[%s169 + $0x358] sm:$0xff]
      %v285 = vld [vmem:[%s169 + $0x360] sm:$0xff]
      %v286 = vld [vmem:[%s169 + $0x368] sm:$0xff]
      %v287 = vld [vmem:[%s169 + $0x370] sm:$0xff]
      %v288 = vld [vmem:[%s169 + $0x378] sm:$0xff]
      %v289 = vld [vmem:[%s169 + $0x380] sm:$0xff]
      %v290 = vld [vmem:[%s169 + $0x388] sm:$0xff]
      %v291 = vld [vmem:[%s169 + $0x390] sm:$0xff]
      %v292 = vld [vmem:[%s169 + $0x398] sm:$0xff]
      %v293 = vld [vmem:[%s169 + $0x3a0] sm:$0xff]
      %v294 = vld [vmem:[%s169 + $0x3a8] sm:$0xff]
      %v295 = vld [vmem:[%s169 + $0x3b0] sm:$0xff]
      %v296 = vld [vmem:[%s169 + $0x3b8] sm:$0xff]
      %v297 = vld [vmem:[%s169 + $0x3c0] sm:$0xff]
      %v298 = vld [vmem:[%s169 + $0x3c8] sm:$0xff]
      %v299 = vld [vmem:[%s169 + $0x3d0] sm:$0xff]
      %v300 = vld [vmem:[%s169 + $0x3d8] sm:$0xff]
      %v301 = vld [vmem:[%s169 + $0x3e0] sm:$0xff]
      %v302 = vld [vmem:[%s169 + $0x3e8] sm:$0xff]
      %v303 = vld [vmem:[%s169 + $0x3f0] sm:$0xff]
      %v304 = vld [vmem:[%s169 + $0x3f8] sm:$0xff]
      %v305 = vld [vmem:[%s169 + $0x400] sm:$0xff]
      %v306 = vld [vmem:[%s169 + $0x408] sm:$0xff]
      %v307 = vld [vmem:[%s169 + $0x410] sm:$0xff]
      %v308 = vld [vmem:[%s169 + $0x418] sm:$0xff]
      %v309 = vld [vmem:[%s169 + $0x420] sm:$0xff]
      %v310 = vld [vmem:[%s169 + $0x428] sm:$0xff]
      %v311 = vld [vmem:[%s169 + $0x430] sm:$0xff]
      %v312 = vld [vmem:[%s169 + $0x438] sm:$0xff]
      %v313 = vld [vmem:[%s169 + $0x440] sm:$0xff]
      %v314 = vld [vmem:[%s169 + $0x448] sm:$0xff]
      %v315 = vld [vmem:[%s169 + $0x450] sm:$0xff]
      %v316 = vld [vmem:[%s169 + $0x458] sm:$0xff]
      %v317 = vld [vmem:[%s169 + $0x460] sm:$0xff]
      %v318 = vld [vmem:[%s169 + $0x468] sm:$0xff]
      %v319 = vld [vmem:[%s169 + $0x470] sm:$0xff]
      %v320 = vld [vmem:[%s169 + $0x478] sm:$0xff]
      %v321 = vld [vmem:[%s169 + $0x480] sm:$0xff]
      %v322 = vld [vmem:[%s169 + $0x488] sm:$0xff]
      %v323 = vld [vmem:[%s169 + $0x490] sm:$0xff]
      %v324 = vld [vmem:[%s169 + $0x498] sm:$0xff]
      %v325 = vld [vmem:[%s169 + $0x4a0] sm:$0xff]
      %v326 = vld [vmem:[%s169 + $0x4a8] sm:$0xff]
      %v327 = vld [vmem:[%s169 + $0x4b0] sm:$0xff]
      %v328 = vld [vmem:[%s169 + $0x4b8] sm:$0xff]
      %v329 = vld [vmem:[%s169 + $0x4c0] sm:$0xff]
      %v330 = vld [vmem:[%s169 + $0x4c8] sm:$0xff]
      %v331 = vld [vmem:[%s169 + $0x4d0] sm:$0xff]
      %v332 = vld [vmem:[%s169 + $0x4d8] sm:$0xff]
      %v333 = vld [vmem:[%s169 + $0x4e0] sm:$0xff]
      %v334 = vld [vmem:[%s169 + $0x4e8] sm:$0xff]
      %v335 = vld [vmem:[%s169 + $0x4f0] sm:$0xff]
      %v336 = vld [vmem:[%s169 + $0x4f8] sm:$0xff]
      %v337 = vld [vmem:[%s169 + $0x500] sm:$0xff]
      %v338 = vld [vmem:[%s169 + $0x508] sm:$0xff]
      %v339 = vld [vmem:[%s169 + $0x510] sm:$0xff]
      %v340 = vld [vmem:[%s169 + $0x518] sm:$0xff]
      %v341 = vld [vmem:[%s169 + $0x520] sm:$0xff]
      %v342 = vld [vmem:[%s169 + $0x528] sm:$0xff]
      %v343 = vld [vmem:[%s169 + $0x530] sm:$0xff]
      %v344 = vld [vmem:[%s169 + $0x538] sm:$0xff]
      %v345 = vld [vmem:[%s169 + $0x540] sm:$0xff]
      %v346 = vld [vmem:[%s169 + $0x548] sm:$0xff]
      %v347 = vld [vmem:[%s169 + $0x550] sm:$0xff]
      %v348 = vld [vmem:[%s169 + $0x558] sm:$0xff]
      %v349 = vld [vmem:[%s169 + $0x560] sm:$0xff]
      %v350 = vld [vmem:[%s169 + $0x568] sm:$0xff]
      %v351 = vld [vmem:[%s169 + $0x570] sm:$0xff]
      %v352 = vld [vmem:[%s169 + $0x578] sm:$0xff]
      %v353 = vld [vmem:[%s169 + $0x580] sm:$0xff]
      %v354 = vld [vmem:[%s169 + $0x588] sm:$0xff]
      %v355 = vld [vmem:[%s169 + $0x590] sm:$0xff]
      %v356 = vld [vmem:[%s169 + $0x598] sm:$0xff]
      %v357 = vld [vmem:[%s169 + $0x5a0] sm:$0xff]
      %v358 = vld [vmem:[%s169 + $0x5a8] sm:$0xff]
      %v359 = vld [vmem:[%s169 + $0x5b0] sm:$0xff]
      %v360 = vld [vmem:[%s169 + $0x5b8] sm:$0xff]
      %v361 = vld [vmem:[%s169 + $0x5c0] sm:$0xff]
      %v362 = vld [vmem:[%s169 + $0x5c8] sm:$0xff]
      %v363 = vld [vmem:[%s169 + $0x5d0] sm:$0xff]
      %v364 = vld [vmem:[%s169 + $0x5d8] sm:$0xff]
      %v365 = vld [vmem:[%s169 + $0x5e0] sm:$0xff]
      %v366 = vld [vmem:[%s169 + $0x5e8] sm:$0xff]
      %v367 = vld [vmem:[%s169 + $0x5f0] sm:$0xff]
      %v368 = vld [vmem:[%s169 + $0x5f8] sm:$0xff]
      %v369 = vld [vmem:[%s169 + $0x600] sm:$0xff]
      %v370 = vld [vmem:[%s169 + $0x608] sm:$0xff]
      %v371 = vld [vmem:[%s169 + $0x610] sm:$0xff]
      %v372 = vld [vmem:[%s169 + $0x618] sm:$0xff]
      %v373 = vld [vmem:[%s169 + $0x620] sm:$0xff]
      %v374 = vld [vmem:[%s169 + $0x628] sm:$0xff]
      %v375 = vld [vmem:[%s169 + $0x630] sm:$0xff]
      %v376 = vld [vmem:[%s169 + $0x638] sm:$0xff]
      %v377 = vld [vmem:[%s169 + $0x640] sm:$0xff]
      %v378 = vld [vmem:[%s169 + $0x648] sm:$0xff]
      %v379 = vld [vmem:[%s169 + $0x650] sm:$0xff]
      %v380 = vld [vmem:[%s169 + $0x658] sm:$0xff]
      %v381 = vld [vmem:[%s169 + $0x660] sm:$0xff]
      %v382 = vld [vmem:[%s169 + $0x668] sm:$0xff]
      %v383 = vld [vmem:[%s169 + $0x670] sm:$0xff]
      %v384 = vld [vmem:[%s169 + $0x678] sm:$0xff]
      %v385 = vld [vmem:[%s169 + $0x680] sm:$0xff]
      %v386 = vld [vmem:[%s169 + $0x688] sm:$0xff]
      %v387 = vld [vmem:[%s169 + $0x690] sm:$0xff]
      %v388 = vld [vmem:[%s169 + $0x698] sm:$0xff]
      %v389 = vld [vmem:[%s169 + $0x6a0] sm:$0xff]
      %v390 = vld [vmem:[%s169 + $0x6a8] sm:$0xff]
      %v391 = vld [vmem:[%s169 + $0x6b0] sm:$0xff]
      %v392 = vld [vmem:[%s169 + $0x6b8] sm:$0xff]
      %v393 = vld [vmem:[%s169 + $0x6c0] sm:$0xff]
      %v394 = vld [vmem:[%s169 + $0x6c8] sm:$0xff]
      %v395 = vld [vmem:[%s169 + $0x6d0] sm:$0xff]
      %v396 = vld [vmem:[%s169 + $0x6d8] sm:$0xff]
      %v397 = vld [vmem:[%s169 + $0x6e0] sm:$0xff]
      %v398 = vld [vmem:[%s169 + $0x6e8] sm:$0xff]
      %v399 = vld [vmem:[%s169 + $0x6f0] sm:$0xff]
      %v400 = vld [vmem:[%s169 + $0x6f8] sm:$0xff]
      %v401 = vld [vmem:[%s169 + $0x700] sm:$0xff]
      %v402 = vld [vmem:[%s169 + $0x708] sm:$0xff]
      %v403 = vld [vmem:[%s169 + $0x710] sm:$0xff]
      %v404 = vld [vmem:[%s169 + $0x718] sm:$0xff]
      %v405 = vld [vmem:[%s169 + $0x720] sm:$0xff]
      %v406 = vld [vmem:[%s169 + $0x728] sm:$0xff]
      %v407 = vld [vmem:[%s169 + $0x730] sm:$0xff]
      %v408 = vld [vmem:[%s169 + $0x738] sm:$0xff]
      %v409 = vld [vmem:[%s169 + $0x740] sm:$0xff]
      %v410 = vld [vmem:[%s169 + $0x748] sm:$0xff]
      %v411 = vld [vmem:[%s169 + $0x750] sm:$0xff]
      %v412 = vld [vmem:[%s169 + $0x758] sm:$0xff]
      %v413 = vld [vmem:[%s169 + $0x760] sm:$0xff]
      %v414 = vld [vmem:[%s169 + $0x768] sm:$0xff]
      %v415 = vld [vmem:[%s169 + $0x770] sm:$0xff]
      %v416 = vld [vmem:[%s169 + $0x778] sm:$0xff]
      %v417 = vld [vmem:[%s169 + $0x780] sm:$0xff]
      %v418 = vld [vmem:[%s169 + $0x788] sm:$0xff]
      %v419 = vld [vmem:[%s169 + $0x790] sm:$0xff]
      %v420 = vld [vmem:[%s169 + $0x798] sm:$0xff]
      %v421 = vld [vmem:[%s169 + $0x7a0] sm:$0xff]
      %v422 = vld [vmem:[%s169 + $0x7a8] sm:$0xff]
      %v423 = vld [vmem:[%s169 + $0x7b0] sm:$0xff]
      %v424 = vld [vmem:[%s169 + $0x7b8] sm:$0xff]
      %v425 = vld [vmem:[%s169 + $0x7c0] sm:$0xff]
      %v426 = vld [vmem:[%s169 + $0x7c8] sm:$0xff]
      %v427 = vld [vmem:[%s169 + $0x7d0] sm:$0xff]
      %v428 = vld [vmem:[%s169 + $0x7d8] sm:$0xff]
      %v429 = vld [vmem:[%s169 + $0x7e0] sm:$0xff]
      %v430 = vld [vmem:[%s169 + $0x7e8] sm:$0xff]
      %v431 = vld [vmem:[%s169 + $0x7f0] sm:$0xff]
      %v432 = vld [vmem:[%s169 + $0x7f8] sm:$0xff]
      %v433 = vld [vmem:[%s169 + $0x800] sm:$0xff]
      %v434 = vld [vmem:[%s169 + $0x808] sm:$0xff]
      %v435 = vld [vmem:[%s169 + $0x810] sm:$0xff]
      %v436 = vld [vmem:[%s169 + $0x818] sm:$0xff]
      %v437 = vld [vmem:[%s169 + $0x820] sm:$0xff]
      %v438 = vld [vmem:[%s169 + $0x828] sm:$0xff]
      %v439 = vld [vmem:[%s169 + $0x830] sm:$0xff]
      %v440 = vld [vmem:[%s169 + $0x838] sm:$0xff]
      %v441 = vld [vmem:[%s169 + $0x840] sm:$0xff]
      %v442 = vld [vmem:[%s169 + $0x848] sm:$0xff]
      %v443 = vld [vmem:[%s169 + $0x850] sm:$0xff]
      %v444 = vld [vmem:[%s169 + $0x858] sm:$0xff]
      %v445 = vld [vmem:[%s169 + $0x860] sm:$0xff]
      %v446 = vld [vmem:[%s169 + $0x868] sm:$0xff]
      %v447 = vld [vmem:[%s169 + $0x870] sm:$0xff]
      %v448 = vld [vmem:[%s169 + $0x878] sm:$0xff]
      %v449 = vld [vmem:[%s169 + $0x880] sm:$0xff]
      %v450 = vld [vmem:[%s169 + $0x888] sm:$0xff]
      %v451 = vld [vmem:[%s169 + $0x890] sm:$0xff]
      %v452 = vld [vmem:[%s169 + $0x898] sm:$0xff]
      %v453 = vld [vmem:[%s169 + $0x8a0] sm:$0xff]
      %v454 = vld [vmem:[%s169 + $0x8a8] sm:$0xff]
      %v455 = vld [vmem:[%s169 + $0x8b0] sm:$0xff]
      %v456 = vld [vmem:[%s169 + $0x8b8] sm:$0xff]
      %v457 = vld [vmem:[%s169 + $0x8c0] sm:$0xff]
      %v458 = vld [vmem:[%s169 + $0x8c8] sm:$0xff]
      %v459 = vld [vmem:[%s169 + $0x8d0] sm:$0xff]
      %v460 = vld [vmem:[%s169 + $0x8d8] sm:$0xff]
      %v461 = vld [vmem:[%s1] sm:$0xff]
      %v462 = vld [vmem:[%s1 + $0x8] sm:$0xff]
      %v463 = vld [vmem:[%s1 + $0x10] sm:$0xff]
      %v464 = vld [vmem:[%s1 + $0x18] sm:$0xff]
      %v465 = vld [vmem:[%s1 + $0x20] sm:$0xff]
      %v466 = vld [vmem:[%s1 + $0x28] sm:$0xff]
      %v467 = vld [vmem:[%s1 + $0x30] sm:$0xff]
      %v468 = vld [vmem:[%s1 + $0x38] sm:$0xff]
      %v469 = vld [vmem:[%s1 + $0x40] sm:$0xff]
      %v470 = vld [vmem:[%s1 + $0x48] sm:$0xff]
      %v471 = vld [vmem:[%s1 + $0x50] sm:$0xff]
      %v472 = vld [vmem:[%s1 + $0x58] sm:$0xff]
      %v473 = vld [vmem:[%s1 + $0x60] sm:$0xff]
      %v474 = vld [vmem:[%s1 + $0x68] sm:$0xff]
      %v475 = vld [vmem:[%s1 + $0x70] sm:$0xff]
      %v476 = vld [vmem:[%s1 + $0x78] sm:$0xff]
      %v477 = vld [vmem:[%s1 + $0x80] sm:$0xff]
      %v478 = vld [vmem:[%s1 + $0x88] sm:$0xff]
      %v479 = vld [vmem:[%s1 + $0x90] sm:$0xff]
      %v480 = vld [vmem:[%s1 + $0x98] sm:$0xff]
      %v481 = vld [vmem:[%s1 + $0xa0] sm:$0xff]
      %v482 = vld [vmem:[%s1 + $0xa8] sm:$0xff]
      %v483 = vld [vmem:[%s1 + $0xb0] sm:$0xff]
      %v484 = vld [vmem:[%s1 + $0xb8] sm:$0xff]
      %v485 = vld [vmem:[%s1 + $0xc0] sm:$0xff]
      %v486 = vld [vmem:[%s1 + $0xc8] sm:$0xff]
      %v487 = vld [vmem:[%s1 + $0xd0] sm:$0xff]
      %v488 = vld [vmem:[%s1 + $0xd8] sm:$0xff]
      %v489 = vld [vmem:[%s1 + $0xe0] sm:$0xff]
      %v490 = vld [vmem:[%s1 + $0xe8] sm:$0xff]
      %v491 = vld [vmem:[%s1 + $0xf0] sm:$0xff]
      %v492 = vld [vmem:[%s1 + $0xf8] sm:$0xff]
      %v493 = vld [vmem:[%s2] sm:$0x1]
      %v495 = vlaneseq
      %v496 = vshrl.u32 %v495, 7
      %v497 = vsub.s32 0, %v496
      %v498 = vrot.slane %v493, %v497
      %500 = vmatprep.subr.mxu0 0.0
      %501 = vmatpush1.msra.mxu0 %v461
      %502 = vmatprep.subr.mxu0 0.0
      %503 = vmatpush1.msra.mxu0 %v462
      %504 = vmatprep.subr.mxu0 0.0
      %505 = vmatpush1.msra.mxu0 %v463
      %506 = vmatprep.subr.mxu0 0.0
      %507 = vmatpush1.msra.mxu0 %v464
      %508 = vmatprep.subr.mxu0 0.0
      %509 = vmatpush1.msra.mxu0 %v465
      %510 = vmatprep.subr.mxu0 0.0
      %511 = vmatpush1.msra.mxu0 %v466
      %512 = vmatprep.subr.mxu0 0.0
      %513 = vmatpush1.msra.mxu0 %v467
      %514 = vmatprep.subr.mxu0 0.0
      %515 = vmatpush1.msra.mxu0 %v468
      %516 = vmatprep.subr.mxu0 0.0
      %517 = vmatpush1.msra.mxu0 %v469
      %518 = vmatprep.subr.mxu0 0.0
      %519 = vmatpush1.msra.mxu0 %v470
      %520 = vmatprep.subr.mxu0 0.0
      %521 = vmatpush1.msra.mxu0 %v471
      %522 = vmatprep.subr.mxu0 0.0
      %523 = vmatpush1.msra.mxu0 %v472
      %524 = vmatprep.subr.mxu0 0.0
      %525 = vmatpush1.msra.mxu0 %v473
      %526 = vmatprep.subr.mxu0 0.0
      %527 = vmatpush1.msra.mxu0 %v474
      %528 = vmatprep.subr.mxu0 0.0
      %529 = vmatpush1.msra.mxu0 %v475
      %530 = vmatprep.subr.mxu0 0.0
      %531 = vmatpush1.msra.mxu0 %v476
      %532 = vmatprep.subr.mxu0 0.0
      %533 = vmatpush1.msra.mxu0 %v477
      %534 = vmatprep.subr.mxu0 0.0
      %535 = vmatpush1.msra.mxu0 %v478
      %536 = vmatprep.subr.mxu0 0.0
      %537 = vmatpush1.msra.mxu0 %v479
      %538 = vmatprep.subr.mxu0 0.0
      %539 = vmatpush1.msra.mxu0 %v480
      %540 = vmatprep.subr.mxu0 0.0
      %541 = vmatpush1.msra.mxu0 %v481
      %542 = vmatprep.subr.mxu0 0.0
      %543 = vmatpush1.msra.mxu0 %v482
      %544 = vmatprep.subr.mxu0 0.0
      %545 = vmatpush1.msra.mxu0 %v483
      %546 = vmatprep.subr.mxu0 0.0
      %547 = vmatpush1.msra.mxu0 %v484
      %548 = vmatprep.subr.mxu0 0.0
      %549 = vmatpush1.msra.mxu0 %v485
      %550 = vmatprep.subr.mxu0 0.0
      %551 = vmatpush1.msra.mxu0 %v486
      %552 = vmatprep.subr.mxu0 0.0
      %553 = vmatpush1.msra.mxu0 %v487
      %554 = vmatprep.subr.mxu0 0.0
      %555 = vmatpush1.msra.mxu0 %v488
      %556 = vmatprep.subr.mxu0 0.0
      %557 = vmatpush1.msra.mxu0 %v489
      %558 = vmatprep.subr.mxu0 0.0
      %559 = vmatpush1.msra.mxu0 %v490
      %560 = vmatprep.subr.mxu0 0.0
      %561 = vmatpush1.msra.mxu0 %v491
      %562 = vmatprep.subr.mxu0 0.0
      %563 = vmatpush1.msra.mxu0 %v492
      %564 = vmatprep.mubr.f32.mxu0 %v178
      %565 = vmatmul.mubr.f32.gmra.mrb[0].mxu0 %v177
      %v566 = vpop.f32.mrb[0].mxu0
      %v567 = vadd.f32 %v498, %v566
      %v568 = vpop.f32.mrb[0].mxu0
      %569 = vmatprep.mubr.f32.mxu0 %v180
      %570 = vmatmul.mubr.f32.gmra.mrb[0].mxu0 %v179
      %v571 = vpop.f32.mrb[0].mxu0
      %v572 = vadd.f32 %v498, %v571
      %v573 = vpop.f32.mrb[0].mxu0
      %574 = vmatprep.mubr.f32.mxu0 %v182
      %575 = vmatmul.mubr.f32.gmra.mrb[0].mxu0 %v181
      %v576 = vpop.f32.mrb[0].mxu0
      %v577 = vadd.f32 %v498, %v576
      %v578 = vpop.f32.mrb[0].mxu0
      %579 = vmatprep.mubr.f32.mxu0 %v184
      %580 = vmatmul.mubr.f32.gmra.mrb[0].mxu0 %v183
      %v581 = vpop.f32.mrb[0].mxu0
      %v582 = vadd.f32 %v498, %v581
      %v583 = vpop.f32.mrb[0].mxu0
      %584 = vmatprep.mubr.f32.mxu0 %v186
      %585 = vmatmul.mubr.f32.gmra.mrb[0].mxu0 %v185
      %v586 = vpop.f32.mrb[0].mxu0
      %v587 = vadd.f32 %v498, %v586
      %v588 = vpop.f32.mrb[0].mxu0
      %589 = vmatprep.mubr.f32.mxu0 %v188
      %590 = vmatmul.mubr.f32.gmra.mrb[0].mxu0 %v187
      %v591 = vpop.f32.mrb[0].mxu0
      %v592 = vadd.f32 %v498, %v591
      %v593 = vpop.f32.mrb[0].mxu0
      %594 = vmatprep.mubr.f32.mxu0 %v190
      %595 = vmatmul.mubr.f32.gmra.mrb[0].mxu0 %v189
      %v596 = vpop.f32.mrb[0].mxu0
      %v597 = vadd.f32 %v498, %v596
      %v598 = vpop.f32.mrb[0].mxu0
      %599 = vmatprep.mubr.f32.mxu0 %v192
      %600 = vmatmul.mubr.f32.gmra.mrb[0].mxu0 %v191
      %v601 = vpop.f32.mrb[0].mxu0
      %v602 = vadd.f32 %v498, %v601
      %v603 = vpop.f32.mrb[0].mxu0
      %604 = vmatprep.mubr.f32.mxu0 %v194
      %605 = vmatmul.mubr.f32.gmra.mrb[0].mxu0 %v193
      %v606 = vpop.f32.mrb[0].mxu0
      %v607 = vadd.f32 %v498, %v606
      %v608 = vpop.f32.mrb[0].mxu0
      %609 = vmatprep.mubr.f32.mxu0 %v196
      %610 = vmatmul.mubr.f32.gmra.mrb[0].mxu0 %v195
      %v611 = vpop.f32.mrb[0].mxu0
      %v612 = vadd.f32 %v498, %v611
      %v613 = vpop.f32.mrb[0].mxu0
      %614 = vmatprep.mubr.f32.mxu0 %v198
      %615 = vmatmul.mubr.f32.gmra.mrb[0].mxu0 %v197
      %v616 = vpop.f32.mrb[0].mxu0
      %v617 = vadd.f32 %v498, %v616
      %v618 = vpop.f32.mrb[0].mxu0
      %619 = vmatprep.mubr.f32.mxu0 %v200
      %620 = vmatmul.mubr.f32.gmra.mrb[0].mxu0 %v199
      %v621 = vpop.f32.mrb[0].mxu0
      %v622 = vadd.f32 %v498, %v621
      %v623 = vpop.f32.mrb[0].mxu0
      %624 = vmatprep.mubr.f32.mxu0 %v202
      %625 = vmatmul.mubr.f32.gmra.mrb[0].mxu0 %v201
      %v626 = vpop.f32.mrb[0].mxu0
      %v627 = vadd.f32 %v498, %v626
      %v628 = vpop.f32.mrb[0].mxu0
      %629 = vmatprep.mubr.f32.mxu0 %v204
      %630 = vmatmul.mubr.f32.gmra.mrb[0].mxu0 %v203
      %v631 = vpop.f32.mrb[0].mxu0
      %v632 = vadd.f32 %v498, %v631
      %v633 = vpop.f32.mrb[0].mxu0
      %634 = vmatprep.mubr.f32.mxu0 %v206
      %635 = vmatmul.mubr.f32.gmra.mrb[0].mxu0 %v205
      %v636 = vpop.f32.mrb[0].mxu0
      %v637 = vadd.f32 %v498, %v636
      %v638 = vpop.f32.mrb[0].mxu0
      %639 = vmatprep.mubr.f32.mxu0 %v208
      %640 = vmatmul.mubr.f32.gmra.mrb[0].mxu0 %v207
      %v641 = vpop.f32.mrb[0].mxu0
      %v642 = vadd.f32 %v498, %v641
      %v643 = vpop.f32.mrb[0].mxu0
      %644 = vmatprep.mubr.f32.mxu0 %v210
      %645 = vmatmul.mubr.f32.gmra.mrb[0].mxu0 %v209
      %v646 = vpop.f32.mrb[0].mxu0
      %v647 = vadd.f32 %v498, %v646
      %v648 = vpop.f32.mrb[0].mxu0
      %649 = vmatprep.mubr.f32.mxu0 %v212
      %650 = vmatmul.mubr.f32.gmra.mrb[0].mxu0 %v211
      %v651 = vpop.f32.mrb[0].mxu0
      %v652 = vadd.f32 %v498, %v651
      %v653 = vpop.f32.mrb[0].mxu0
      %654 = vmatprep.mubr.f32.mxu0 %v214
      %655 = vmatmul.mubr.f32.gmra.mrb[0].mxu0 %v213
      %v656 = vpop.f32.mrb[0].mxu0
      %v657 = vadd.f32 %v498, %v656
      %v658 = vpop.f32.mrb[0].mxu0
      %659 = vmatprep.mubr.f32.mxu0 %v216
      %660 = vmatmul.mubr.f32.gmra.mrb[0].mxu0 %v215
      %v661 = vpop.f32.mrb[0].mxu0
      %v662 = vadd.f32 %v498, %v661
      %v663 = vpop.f32.mrb[0].mxu0
      %664 = vmatprep.mubr.f32.mxu0 %v218
      %665 = vmatmul.mubr.f32.gmra.mrb[0].mxu0 %v217
      %v666 = vpop.f32.mrb[0].mxu0
      %v667 = vadd.f32 %v498, %v666
      %v668 = vpop.f32.mrb[0].mxu0
      %669 = vmatprep.mubr.f32.mxu0 %v220
      %670 = vmatmul.mubr.f32.gmra.mrb[0].mxu0 %v219
      %v671 = vpop.f32.mrb[0].mxu0
      %v672 = vadd.f32 %v498, %v671
      %v673 = vpop.f32.mrb[0].mxu0
      %674 = vmatprep.mubr.f32.mxu0 %v222
      %675 = vmatmul.mubr.f32.gmra.mrb[0].mxu0 %v221
      %v676 = vpop.f32.mrb[0].mxu0
      %v677 = vadd.f32 %v498, %v676
      %v678 = vpop.f32.mrb[0].mxu0
      %679 = vmatprep.mubr.f32.mxu0 %v224
      %680 = vmatmul.mubr.f32.gmra.mrb[0].mxu0 %v223
      %v681 = vpop.f32.mrb[0].mxu0
      %v682 = vadd.f32 %v498, %v681
      %v683 = vpop.f32.mrb[0].mxu0
      %684 = vmatprep.mubr.f32.mxu0 %v226
      %685 = vmatmul.mubr.f32.gmra.mrb[0].mxu0 %v225
      %v686 = vpop.f32.mrb[0].mxu0
      %v687 = vadd.f32 %v498, %v686
      %v688 = vpop.f32.mrb[0].mxu0
      %689 = vmatprep.mubr.f32.mxu0 %v228
      %690 = vmatmul.mubr.f32.gmra.mrb[0].mxu0 %v227
      %v691 = vpop.f32.mrb[0].mxu0
      %v692 = vadd.f32 %v498, %v691
      %v693 = vpop.f32.mrb[0].mxu0
      %694 = vmatprep.mubr.f32.mxu0 %v230
      %695 = vmatmul.mubr.f32.gmra.mrb[0].mxu0 %v229
      %v696 = vpop.f32.mrb[0].mxu0
      %v697 = vadd.f32 %v498, %v696
      %v698 = vpop.f32.mrb[0].mxu0
      %699 = vmatprep.mubr.f32.mxu0 %v232
      %700 = vmatmul.mubr.f32.gmra.mrb[0].mxu0 %v231
      %v701 = vpop.f32.mrb[0].mxu0
      %v702 = vadd.f32 %v498, %v701
      %v703 = vpop.f32.mrb[0].mxu0
      %704 = vmatprep.mubr.f32.mxu0 %v234
      %705 = vmatmul.mubr.f32.gmra.mrb[0].mxu0 %v233
      %v706 = vpop.f32.mrb[0].mxu0
      %v707 = vadd.f32 %v498, %v706
      %v708 = vpop.f32.mrb[0].mxu0
      %709 = vmatprep.mubr.f32.mxu0 %v236
      %710 = vmatmul.mubr.f32.gmra.mrb[0].mxu0 %v235
      %v711 = vpop.f32.mrb[0].mxu0
      %v712 = vadd.f32 %v498, %v711
      %v713 = vpop.f32.mrb[0].mxu0
      %714 = vmatprep.mubr.f32.mxu0 %v238
      %715 = vmatmul.mubr.f32.gmra.mrb[0].mxu0 %v237
      %v716 = vpop.f32.mrb[0].mxu0
      %v717 = vadd.f32 %v498, %v716
      %v718 = vpop.f32.mrb[0].mxu0
      %719 = vmatprep.mubr.f32.mxu0 %v240
      %720 = vmatmul.mubr.f32.gmra.mrb[0].mxu0 %v239
      %v721 = vpop.f32.mrb[0].mxu0
      %v722 = vadd.f32 %v498, %v721
      %v723 = vpop.f32.mrb[0].mxu0
      %724 = vmatprep.mubr.f32.mxu0 %v242
      %725 = vmatmul.mubr.f32.gmra.mrb[0].mxu0 %v241
      %v726 = vpop.f32.mrb[0].mxu0
      %v727 = vadd.f32 %v498, %v726
      %v728 = vpop.f32.mrb[0].mxu0
      %729 = vmatprep.mubr.f32.mxu0 %v244
      %730 = vmatmul.mubr.f32.gmra.mrb[0].mxu0 %v243
      %v731 = vpop.f32.mrb[0].mxu0
      %v732 = vadd.f32 %v498, %v731
      %v733 = vpop.f32.mrb[0].mxu0
      %734 = vmatprep.mubr.f32.mxu0 %v246
      %735 = vmatmul.mubr.f32.gmra.mrb[0].mxu0 %v245
      %v736 = vpop.f32.mrb[0].mxu0
      %v737 = vadd.f32 %v498, %v736
      %v738 = vpop.f32.mrb[0].mxu0
      %739 = vmatprep.mubr.f32.mxu0 %v248
      %740 = vmatmul.mubr.f32.gmra.mrb[0].mxu0 %v247
      %v741 = vpop.f32.mrb[0].mxu0
      %v742 = vadd.f32 %v498, %v741
      %v743 = vpop.f32.mrb[0].mxu0
      %744 = vmatprep.mubr.f32.mxu0 %v250
      %745 = vmatmul.mubr.f32.gmra.mrb[0].mxu0 %v249
      %v746 = vpop.f32.mrb[0].mxu0
      %v747 = vadd.f32 %v498, %v746
      %v748 = vpop.f32.mrb[0].mxu0
      %749 = vmatprep.mubr.f32.mxu0 %v252
      %750 = vmatmul.mubr.f32.gmra.mrb[0].mxu0 %v251
      %v751 = vpop.f32.mrb[0].mxu0
      %v752 = vadd.f32 %v498, %v751
      %v753 = vpop.f32.mrb[0].mxu0
      %754 = vmatprep.mubr.f32.mxu0 %v254
      %755 = vmatmul.mubr.f32.gmra.mrb[0].mxu0 %v253
      %v756 = vpop.f32.mrb[0].mxu0
      %v757 = vadd.f32 %v498, %v756
      %v758 = vpop.f32.mrb[0].mxu0
      %759 = vmatprep.mubr.f32.mxu0 %v256
      %760 = vmatmul.mubr.f32.gmra.mrb[0].mxu0 %v255
      %v761 = vpop.f32.mrb[0].mxu0
      %v762 = vadd.f32 %v498, %v761
      %v763 = vpop.f32.mrb[0].mxu0
      %764 = vmatprep.mubr.f32.mxu0 %v258
      %765 = vmatmul.mubr.f32.gmra.mrb[0].mxu0 %v257
      %v766 = vpop.f32.mrb[0].mxu0
      %v767 = vadd.f32 %v498, %v766
      %v768 = vpop.f32.mrb[0].mxu0
      %769 = vmatprep.mubr.f32.mxu0 %v260
      %770 = vmatmul.mubr.f32.gmra.mrb[0].mxu0 %v259
      %v771 = vpop.f32.mrb[0].mxu0
      %v772 = vadd.f32 %v498, %v771
      %v773 = vpop.f32.mrb[0].mxu0
      %774 = vmatprep.mubr.f32.mxu0 %v262
      %775 = vmatmul.mubr.f32.gmra.mrb[0].mxu0 %v261
      %v776 = vpop.f32.mrb[0].mxu0
      %v777 = vadd.f32 %v498, %v776
      %v778 = vpop.f32.mrb[0].mxu0
      %779 = vmatprep.mubr.f32.mxu0 %v264
      %780 = vmatmul.mubr.f32.gmra.mrb[0].mxu0 %v263
      %v781 = vpop.f32.mrb[0].mxu0
      %v782 = vadd.f32 %v498, %v781
      %v783 = vpop.f32.mrb[0].mxu0
      %784 = vmatprep.mubr.f32.mxu0 %v266
      %785 = vmatmul.mubr.f32.gmra.mrb[0].mxu0 %v265
      %v786 = vpop.f32.mrb[0].mxu0
      %v787 = vadd.f32 %v498, %v786
      %v788 = vpop.f32.mrb[0].mxu0
      %789 = vmatprep.mubr.f32.mxu0 %v268
      %790 = vmatmul.mubr.f32.gmra.mrb[0].mxu0 %v267
      %v791 = vpop.f32.mrb[0].mxu0
      %v792 = vadd.f32 %v498, %v791
      %v793 = vpop.f32.mrb[0].mxu0
      %794 = vmatprep.mubr.f32.mxu0 %v270
      %795 = vmatmul.mubr.f32.gmra.mrb[0].mxu0 %v269
      %v796 = vpop.f32.mrb[0].mxu0
      %v797 = vadd.f32 %v498, %v796
      %v798 = vpop.f32.mrb[0].mxu0
      %799 = vmatprep.mubr.f32.mxu0 %v272
      %800 = vmatmul.mubr.f32.gmra.mrb[0].mxu0 %v271
      %v801 = vpop.f32.mrb[0].mxu0
      %v802 = vadd.f32 %v498, %v801
      %v803 = vpop.f32.mrb[0].mxu0
      %804 = vmatprep.mubr.f32.mxu0 %v274
      %805 = vmatmul.mubr.f32.gmra.mrb[0].mxu0 %v273
      %v806 = vpop.f32.mrb[0].mxu0
      %v807 = vadd.f32 %v498, %v806
      %v808 = vpop.f32.mrb[0].mxu0
      %809 = vmatprep.mubr.f32.mxu0 %v276
      %810 = vmatmul.mubr.f32.gmra.mrb[0].mxu0 %v275
      %v811 = vpop.f32.mrb[0].mxu0
      %v812 = vadd.f32 %v498, %v811
      %v813 = vpop.f32.mrb[0].mxu0
      %814 = vmatprep.mubr.f32.mxu0 %v278
      %815 = vmatmul.mubr.f32.gmra.mrb[0].mxu0 %v277
      %v816 = vpop.f32.mrb[0].mxu0
      %v817 = vadd.f32 %v498, %v816
      %v818 = vpop.f32.mrb[0].mxu0
      %819 = vmatprep.mubr.f32.mxu0 %v280
      %820 = vmatmul.mubr.f32.gmra.mrb[0].mxu0 %v279
      %v821 = vpop.f32.mrb[0].mxu0
      %v822 = vadd.f32 %v498, %v821
      %v823 = vpop.f32.mrb[0].mxu0
      %824 = vmatprep.mubr.f32.mxu0 %v282
      %825 = vmatmul.mubr.f32.gmra.mrb[0].mxu0 %v281
      %v826 = vpop.f32.mrb[0].mxu0
      %v827 = vadd.f32 %v498, %v826
      %v828 = vpop.f32.mrb[0].mxu0
      %829 = vmatprep.mubr.f32.mxu0 %v284
      %830 = vmatmul.mubr.f32.gmra.mrb[0].mxu0 %v283
      %v831 = vpop.f32.mrb[0].mxu0
      %v832 = vadd.f32 %v498, %v831
      %v833 = vpop.f32.mrb[0].mxu0
      %834 = vmatprep.mubr.f32.mxu0 %v286
      %835 = vmatmul.mubr.f32.gmra.mrb[0].mxu0 %v285
      %v836 = vpop.f32.mrb[0].mxu0
      %v837 = vadd.f32 %v498, %v836
      %v838 = vpop.f32.mrb[0].mxu0
      %839 = vmatprep.mubr.f32.mxu0 %v288
      %840 = vmatmul.mubr.f32.gmra.mrb[0].mxu0 %v287
      %v841 = vpop.f32.mrb[0].mxu0
      %v842 = vadd.f32 %v498, %v841
      %v843 = vpop.f32.mrb[0].mxu0
      %844 = vmatprep.mubr.f32.mxu0 %v290
      %845 = vmatmul.mubr.f32.gmra.mrb[0].mxu0 %v289
      %v846 = vpop.f32.mrb[0].mxu0
      %v847 = vadd.f32 %v498, %v846
      %v848 = vpop.f32.mrb[0].mxu0
      %849 = vmatprep.mubr.f32.mxu0 %v292
      %850 = vmatmul.mubr.f32.gmra.mrb[0].mxu0 %v291
      %v851 = vpop.f32.mrb[0].mxu0
      %v852 = vadd.f32 %v498, %v851
      %v853 = vpop.f32.mrb[0].mxu0
      %854 = vmatprep.mubr.f32.mxu0 %v294
      %855 = vmatmul.mubr.f32.gmra.mrb[0].mxu0 %v293
      %v856 = vpop.f32.mrb[0].mxu0
      %v857 = vadd.f32 %v498, %v856
      %v858 = vpop.f32.mrb[0].mxu0
      %859 = vmatprep.mubr.f32.mxu0 %v296
      %860 = vmatmul.mubr.f32.gmra.mrb[0].mxu0 %v295
      %v861 = vpop.f32.mrb[0].mxu0
      %v862 = vadd.f32 %v498, %v861
      %v863 = vpop.f32.mrb[0].mxu0
      %864 = vmatprep.mubr.f32.mxu0 %v298
      %865 = vmatmul.mubr.f32.gmra.mrb[0].mxu0 %v297
      %v866 = vpop.f32.mrb[0].mxu0
      %v867 = vadd.f32 %v498, %v866
      %v868 = vpop.f32.mrb[0].mxu0
      %869 = vmatprep.mubr.f32.mxu0 %v300
      %870 = vmatmul.mubr.f32.gmra.mrb[0].mxu0 %v299
      %v871 = vpop.f32.mrb[0].mxu0
      %v872 = vadd.f32 %v498, %v871
      %v873 = vpop.f32.mrb[0].mxu0
      %874 = vmatprep.mubr.f32.mxu0 %v302
      %875 = vmatmul.mubr.f32.gmra.mrb[0].mxu0 %v301
      %v876 = vpop.f32.mrb[0].mxu0
      %v877 = vadd.f32 %v498, %v876
      %v878 = vpop.f32.mrb[0].mxu0
      %879 = vmatprep.mubr.f32.mxu0 %v304
      %880 = vmatmul.mubr.f32.gmra.mrb[0].mxu0 %v303
      %v881 = vpop.f32.mrb[0].mxu0
      %v882 = vadd.f32 %v498, %v881
      %v883 = vpop.f32.mrb[0].mxu0
      %884 = vmatprep.mubr.f32.mxu0 %v306
      %885 = vmatmul.mubr.f32.gmra.mrb[0].mxu0 %v305
      %v886 = vpop.f32.mrb[0].mxu0
      %v887 = vadd.f32 %v498, %v886
      %v888 = vpop.f32.mrb[0].mxu0
      %889 = vmatprep.mubr.f32.mxu0 %v308
      %890 = vmatmul.mubr.f32.gmra.mrb[0].mxu0 %v307
      %v891 = vpop.f32.mrb[0].mxu0
      %v892 = vadd.f32 %v498, %v891
      %v893 = vpop.f32.mrb[0].mxu0
      %894 = vmatprep.mubr.f32.mxu0 %v310
      %895 = vmatmul.mubr.f32.gmra.mrb[0].mxu0 %v309
      %v896 = vpop.f32.mrb[0].mxu0
      %v897 = vadd.f32 %v498, %v896
      %v898 = vpop.f32.mrb[0].mxu0
      %899 = vmatprep.mubr.f32.mxu0 %v312
      %900 = vmatmul.mubr.f32.gmra.mrb[0].mxu0 %v311
      %v901 = vpop.f32.mrb[0].mxu0
      %v902 = vadd.f32 %v498, %v901
      %v903 = vpop.f32.mrb[0].mxu0
      %904 = vmatprep.mubr.f32.mxu0 %v314
      %905 = vmatmul.mubr.f32.gmra.mrb[0].mxu0 %v313
      %v906 = vpop.f32.mrb[0].mxu0
      %v907 = vadd.f32 %v498, %v906
      %v908 = vpop.f32.mrb[0].mxu0
      %909 = vmatprep.mubr.f32.mxu0 %v316
      %910 = vmatmul.mubr.f32.gmra.mrb[0].mxu0 %v315
      %v911 = vpop.f32.mrb[0].mxu0
      %v912 = vadd.f32 %v498, %v911
      %v913 = vpop.f32.mrb[0].mxu0
      %914 = vmatprep.mubr.f32.mxu0 %v318
      %915 = vmatmul.mubr.f32.gmra.mrb[0].mxu0 %v317
      %v916 = vpop.f32.mrb[0].mxu0
      %v917 = vadd.f32 %v498, %v916
      %v918 = vpop.f32.mrb[0].mxu0
      %919 = vmatprep.mubr.f32.mxu0 %v320
      %920 = vmatmul.mubr.f32.gmra.mrb[0].mxu0 %v319
      %v921 = vpop.f32.mrb[0].mxu0
      %v922 = vadd.f32 %v498, %v921
      %v923 = vpop.f32.mrb[0].mxu0
      %924 = vmatprep.mubr.f32.mxu0 %v322
      %925 = vmatmul.mubr.f32.gmra.mrb[0].mxu0 %v321
      %v926 = vpop.f32.mrb[0].mxu0
      %v927 = vadd.f32 %v498, %v926
      %v928 = vpop.f32.mrb[0].mxu0
      %929 = vmatprep.mubr.f32.mxu0 %v324
      %930 = vmatmul.mubr.f32.gmra.mrb[0].mxu0 %v323
      %v931 = vpop.f32.mrb[0].mxu0
      %v932 = vadd.f32 %v498, %v931
      %v933 = vpop.f32.mrb[0].mxu0
      %934 = vmatprep.mubr.f32.mxu0 %v326
      %935 = vmatmul.mubr.f32.gmra.mrb[0].mxu0 %v325
      %v936 = vpop.f32.mrb[0].mxu0
      %v937 = vadd.f32 %v498, %v936
      %v938 = vpop.f32.mrb[0].mxu0
      %939 = vmatprep.mubr.f32.mxu0 %v328
      %940 = vmatmul.mubr.f32.gmra.mrb[0].mxu0 %v327
      %v941 = vpop.f32.mrb[0].mxu0
      %v942 = vadd.f32 %v498, %v941
      %v943 = vpop.f32.mrb[0].mxu0
      %944 = vmatprep.mubr.f32.mxu0 %v330
      %945 = vmatmul.mubr.f32.gmra.mrb[0].mxu0 %v329
      %v946 = vpop.f32.mrb[0].mxu0
      %v947 = vadd.f32 %v498, %v946
      %v948 = vpop.f32.mrb[0].mxu0
      %949 = vmatprep.mubr.f32.mxu0 %v332
      %950 = vmatmul.mubr.f32.gmra.mrb[0].mxu0 %v331
      %v951 = vpop.f32.mrb[0].mxu0
      %v952 = vadd.f32 %v498, %v951
      %v953 = vpop.f32.mrb[0].mxu0
      %954 = vmatprep.mubr.f32.mxu0 %v334
      %955 = vmatmul.mubr.f32.gmra.mrb[0].mxu0 %v333
      %v956 = vpop.f32.mrb[0].mxu0
      %v957 = vadd.f32 %v498, %v956
      %v958 = vpop.f32.mrb[0].mxu0
      %959 = vmatprep.mubr.f32.mxu0 %v336
      %960 = vmatmul.mubr.f32.gmra.mrb[0].mxu0 %v335
      %v961 = vpop.f32.mrb[0].mxu0
      %v962 = vadd.f32 %v498, %v961
      %v963 = vpop.f32.mrb[0].mxu0
      %964 = vmatprep.mubr.f32.mxu0 %v338
      %965 = vmatmul.mubr.f32.gmra.mrb[0].mxu0 %v337
      %v966 = vpop.f32.mrb[0].mxu0
      %v967 = vadd.f32 %v498, %v966
      %v968 = vpop.f32.mrb[0].mxu0
      %969 = vmatprep.mubr.f32.mxu0 %v340
      %970 = vmatmul.mubr.f32.gmra.mrb[0].mxu0 %v339
      %v971 = vpop.f32.mrb[0].mxu0
      %v972 = vadd.f32 %v498, %v971
      %v973 = vpop.f32.mrb[0].mxu0
      %974 = vmatprep.mubr.f32.mxu0 %v342
      %975 = vmatmul.mubr.f32.gmra.mrb[0].mxu0 %v341
      %v976 = vpop.f32.mrb[0].mxu0
      %v977 = vadd.f32 %v498, %v976
      %v978 = vpop.f32.mrb[0].mxu0
      %979 = vmatprep.mubr.f32.mxu0 %v344
      %980 = vmatmul.mubr.f32.gmra.mrb[0].mxu0 %v343
      %v981 = vpop.f32.mrb[0].mxu0
      %v982 = vadd.f32 %v498, %v981
      %v983 = vpop.f32.mrb[0].mxu0
      %984 = vmatprep.mubr.f32.mxu0 %v346
      %985 = vmatmul.mubr.f32.gmra.mrb[0].mxu0 %v345
      %v986 = vpop.f32.mrb[0].mxu0
      %v987 = vadd.f32 %v498, %v986
      %v988 = vpop.f32.mrb[0].mxu0
      %989 = vmatprep.mubr.f32.mxu0 %v348
      %990 = vmatmul.mubr.f32.gmra.mrb[0].mxu0 %v347
      %v991 = vpop.f32.mrb[0].mxu0
      %v992 = vadd.f32 %v498, %v991
      %v993 = vpop.f32.mrb[0].mxu0
      %994 = vmatprep.mubr.f32.mxu0 %v350
      %995 = vmatmul.mubr.f32.gmra.mrb[0].mxu0 %v349
      %v996 = vpop.f32.mrb[0].mxu0
      %v997 = vadd.f32 %v498, %v996
      %v998 = vpop.f32.mrb[0].mxu0
      %999 = vmatprep.mubr.f32.mxu0 %v352
      %1000 = vmatmul.mubr.f32.gmra.mrb[0].mxu0 %v351
      %v1001 = vpop.f32.mrb[0].mxu0
      %v1002 = vadd.f32 %v498, %v1001
      %v1003 = vpop.f32.mrb[0].mxu0
      %1004 = vmatprep.mubr.f32.mxu0 %v354
      %1005 = vmatmul.mubr.f32.gmra.mrb[0].mxu0 %v353
      %v1006 = vpop.f32.mrb[0].mxu0
      %v1007 = vadd.f32 %v498, %v1006
      %v1008 = vpop.f32.mrb[0].mxu0
      %1009 = vmatprep.mubr.f32.mxu0 %v356
      %1010 = vmatmul.mubr.f32.gmra.mrb[0].mxu0 %v355
      %v1011 = vpop.f32.mrb[0].mxu0
      %v1012 = vadd.f32 %v498, %v1011
      %v1013 = vpop.f32.mrb[0].mxu0
      %1014 = vmatprep.mubr.f32.mxu0 %v358
      %1015 = vmatmul.mubr.f32.gmra.mrb[0].mxu0 %v357
      %v1016 = vpop.f32.mrb[0].mxu0
      %v1017 = vadd.f32 %v498, %v1016
      %v1018 = vpop.f32.mrb[0].mxu0
      %1019 = vmatprep.mubr.f32.mxu0 %v360
      %1020 = vmatmul.mubr.f32.gmra.mrb[0].mxu0 %v359
      %v1021 = vpop.f32.mrb[0].mxu0
      %v1022 = vadd.f32 %v498, %v1021
      %v1023 = vpop.f32.mrb[0].mxu0
      %1024 = vmatprep.mubr.f32.mxu0 %v362
      %1025 = vmatmul.mubr.f32.gmra.mrb[0].mxu0 %v361
      %v1026 = vpop.f32.mrb[0].mxu0
      %v1027 = vadd.f32 %v498, %v1026
      %v1028 = vpop.f32.mrb[0].mxu0
      %1029 = vmatprep.mubr.f32.mxu0 %v364
      %1030 = vmatmul.mubr.f32.gmra.mrb[0].mxu0 %v363
      %v1031 = vpop.f32.mrb[0].mxu0
      %v1032 = vadd.f32 %v498, %v1031
      %v1033 = vpop.f32.mrb[0].mxu0
      %1034 = vmatprep.mubr.f32.mxu0 %v366
      %1035 = vmatmul.mubr.f32.gmra.mrb[0].mxu0 %v365
      %v1036 = vpop.f32.mrb[0].mxu0
      %v1037 = vadd.f32 %v498, %v1036
      %v1038 = vpop.f32.mrb[0].mxu0
      %1039 = vmatprep.mubr.f32.mxu0 %v368
      %1040 = vmatmul.mubr.f32.gmra.mrb[0].mxu0 %v367
      %v1041 = vpop.f32.mrb[0].mxu0
      %v1042 = vadd.f32 %v498, %v1041
      %v1043 = vpop.f32.mrb[0].mxu0
      %1044 = vmatprep.mubr.f32.mxu0 %v370
      %1045 = vmatmul.mubr.f32.gmra.mrb[0].mxu0 %v369
      %v1046 = vpop.f32.mrb[0].mxu0
      %v1047 = vadd.f32 %v498, %v1046
      %v1048 = vpop.f32.mrb[0].mxu0
      %1049 = vmatprep.mubr.f32.mxu0 %v372
      %1050 = vmatmul.mubr.f32.gmra.mrb[0].mxu0 %v371
      %v1051 = vpop.f32.mrb[0].mxu0
      %v1052 = vadd.f32 %v498, %v1051
      %v1053 = vpop.f32.mrb[0].mxu0
      %1054 = vmatprep.mubr.f32.mxu0 %v374
      %1055 = vmatmul.mubr.f32.gmra.mrb[0].mxu0 %v373
      %v1056 = vpop.f32.mrb[0].mxu0
      %v1057 = vadd.f32 %v498, %v1056
      %v1058 = vpop.f32.mrb[0].mxu0
      %1059 = vmatprep.mubr.f32.mxu0 %v376
      %1060 = vmatmul.mubr.f32.gmra.mrb[0].mxu0 %v375
      %v1061 = vpop.f32.mrb[0].mxu0
      %v1062 = vadd.f32 %v498, %v1061
      %v1063 = vpop.f32.mrb[0].mxu0
      %1064 = vmatprep.mubr.f32.mxu0 %v378
      %1065 = vmatmul.mubr.f32.gmra.mrb[0].mxu0 %v377
      %v1066 = vpop.f32.mrb[0].mxu0
      %v1067 = vadd.f32 %v498, %v1066
      %v1068 = vpop.f32.mrb[0].mxu0
      %1069 = vmatprep.mubr.f32.mxu0 %v380
      %1070 = vmatmul.mubr.f32.gmra.mrb[0].mxu0 %v379
      %v1071 = vpop.f32.mrb[0].mxu0
      %v1072 = vadd.f32 %v498, %v1071
      %v1073 = vpop.f32.mrb[0].mxu0
      %1074 = vmatprep.mubr.f32.mxu0 %v382
      %1075 = vmatmul.mubr.f32.gmra.mrb[0].mxu0 %v381
      %v1076 = vpop.f32.mrb[0].mxu0
      %v1077 = vadd.f32 %v498, %v1076
      %v1078 = vpop.f32.mrb[0].mxu0
      %1079 = vmatprep.mubr.f32.mxu0 %v384
      %1080 = vmatmul.mubr.f32.gmra.mrb[0].mxu0 %v383
      %v1081 = vpop.f32.mrb[0].mxu0
      %v1082 = vadd.f32 %v498, %v1081
      %v1083 = vpop.f32.mrb[0].mxu0
      %1084 = vmatprep.mubr.f32.mxu0 %v386
      %1085 = vmatmul.mubr.f32.gmra.mrb[0].mxu0 %v385
      %v1086 = vpop.f32.mrb[0].mxu0
      %v1087 = vadd.f32 %v498, %v1086
      %v1088 = vpop.f32.mrb[0].mxu0
      %1089 = vmatprep.mubr.f32.mxu0 %v388
      %1090 = vmatmul.mubr.f32.gmra.mrb[0].mxu0 %v387
      %v1091 = vpop.f32.mrb[0].mxu0
      %v1092 = vadd.f32 %v498, %v1091
      %v1093 = vpop.f32.mrb[0].mxu0
      %1094 = vmatprep.mubr.f32.mxu0 %v390
      %1095 = vmatmul.mubr.f32.gmra.mrb[0].mxu0 %v389
      %v1096 = vpop.f32.mrb[0].mxu0
      %v1097 = vadd.f32 %v498, %v1096
      %v1098 = vpop.f32.mrb[0].mxu0
      %1099 = vmatprep.mubr.f32.mxu0 %v392
      %1100 = vmatmul.mubr.f32.gmra.mrb[0].mxu0 %v391
      %v1101 = vpop.f32.mrb[0].mxu0
      %v1102 = vadd.f32 %v498, %v1101
      %v1103 = vpop.f32.mrb[0].mxu0
      %1104 = vmatprep.mubr.f32.mxu0 %v394
      %1105 = vmatmul.mubr.f32.gmra.mrb[0].mxu0 %v393
      %v1106 = vpop.f32.mrb[0].mxu0
      %v1107 = vadd.f32 %v498, %v1106
      %v1108 = vpop.f32.mrb[0].mxu0
      %1109 = vmatprep.mubr.f32.mxu0 %v396
      %1110 = vmatmul.mubr.f32.gmra.mrb[0].mxu0 %v395
      %v1111 = vpop.f32.mrb[0].mxu0
      %v1112 = vadd.f32 %v498, %v1111
      %v1113 = vpop.f32.mrb[0].mxu0
      %1114 = vmatprep.mubr.f32.mxu0 %v398
      %1115 = vmatmul.mubr.f32.gmra.mrb[0].mxu0 %v397
      %v1116 = vpop.f32.mrb[0].mxu0
      %v1117 = vadd.f32 %v498, %v1116
      %v1118 = vpop.f32.mrb[0].mxu0
      %1119 = vmatprep.mubr.f32.mxu0 %v400
      %1120 = vmatmul.mubr.f32.gmra.mrb[0].mxu0 %v399
      %v1121 = vpop.f32.mrb[0].mxu0
      %v1122 = vadd.f32 %v498, %v1121
      %v1123 = vpop.f32.mrb[0].mxu0
      %1124 = vmatprep.mubr.f32.mxu0 %v402
      %1125 = vmatmul.mubr.f32.gmra.mrb[0].mxu0 %v401
      %v1126 = vpop.f32.mrb[0].mxu0
      %v1127 = vadd.f32 %v498, %v1126
      %v1128 = vpop.f32.mrb[0].mxu0
      %1129 = vmatprep.mubr.f32.mxu0 %v404
      %1130 = vmatmul.mubr.f32.gmra.mrb[0].mxu0 %v403
      %v1131 = vpop.f32.mrb[0].mxu0
      %v1132 = vadd.f32 %v498, %v1131
      %v1133 = vpop.f32.mrb[0].mxu0
      %1134 = vmatprep.mubr.f32.mxu0 %v406
      %1135 = vmatmul.mubr.f32.gmra.mrb[0].mxu0 %v405
      %v1136 = vpop.f32.mrb[0].mxu0
      %v1137 = vadd.f32 %v498, %v1136
      %v1138 = vpop.f32.mrb[0].mxu0
      %1139 = vmatprep.mubr.f32.mxu0 %v408
      %1140 = vmatmul.mubr.f32.gmra.mrb[0].mxu0 %v407
      %v1141 = vpop.f32.mrb[0].mxu0
      %v1142 = vadd.f32 %v498, %v1141
      %v1143 = vpop.f32.mrb[0].mxu0
      %1144 = vmatprep.mubr.f32.mxu0 %v410
      %1145 = vmatmul.mubr.f32.gmra.mrb[0].mxu0 %v409
      %v1146 = vpop.f32.mrb[0].mxu0
      %v1147 = vadd.f32 %v498, %v1146
      %v1148 = vpop.f32.mrb[0].mxu0
      %1149 = vmatprep.mubr.f32.mxu0 %v412
      %1150 = vmatmul.mubr.f32.gmra.mrb[0].mxu0 %v411
      %v1151 = vpop.f32.mrb[0].mxu0
      %v1152 = vadd.f32 %v498, %v1151
      %v1153 = vpop.f32.mrb[0].mxu0
      %1154 = vmatprep.mubr.f32.mxu0 %v414
      %1155 = vmatmul.mubr.f32.gmra.mrb[0].mxu0 %v413
      %v1156 = vpop.f32.mrb[0].mxu0
      %v1157 = vadd.f32 %v498, %v1156
      %v1158 = vpop.f32.mrb[0].mxu0
      %1159 = vmatprep.mubr.f32.mxu0 %v416
      %1160 = vmatmul.mubr.f32.gmra.mrb[0].mxu0 %v415
      %v1161 = vpop.f32.mrb[0].mxu0
      %v1162 = vadd.f32 %v498, %v1161
      %v1163 = vpop.f32.mrb[0].mxu0
      %1164 = vmatprep.mubr.f32.mxu0 %v418
      %1165 = vmatmul.mubr.f32.gmra.mrb[0].mxu0 %v417
      %v1166 = vpop.f32.mrb[0].mxu0
      %v1167 = vadd.f32 %v498, %v1166
      %v1168 = vpop.f32.mrb[0].mxu0
      %1169 = vmatprep.mubr.f32.mxu0 %v420
      %1170 = vmatmul.mubr.f32.gmra.mrb[0].mxu0 %v419
      %v1171 = vpop.f32.mrb[0].mxu0
      %v1172 = vadd.f32 %v498, %v1171
      %v1173 = vpop.f32.mrb[0].mxu0
      %1174 = vmatprep.mubr.f32.mxu0 %v422
      %1175 = vmatmul.mubr.f32.gmra.mrb[0].mxu0 %v421
      %v1176 = vpop.f32.mrb[0].mxu0
      %v1177 = vadd.f32 %v498, %v1176
      %v1178 = vpop.f32.mrb[0].mxu0
      %1179 = vmatprep.mubr.f32.mxu0 %v424
      %1180 = vmatmul.mubr.f32.gmra.mrb[0].mxu0 %v423
      %v1181 = vpop.f32.mrb[0].mxu0
      %v1182 = vadd.f32 %v498, %v1181
      %v1183 = vpop.f32.mrb[0].mxu0
      %1184 = vmatprep.mubr.f32.mxu0 %v426
      %1185 = vmatmul.mubr.f32.gmra.mrb[0].mxu0 %v425
      %v1186 = vpop.f32.mrb[0].mxu0
      %v1187 = vadd.f32 %v498, %v1186
      %v1188 = vpop.f32.mrb[0].mxu0
      %1189 = vmatprep.mubr.f32.mxu0 %v428
      %1190 = vmatmul.mubr.f32.gmra.mrb[0].mxu0 %v427
      %v1191 = vpop.f32.mrb[0].mxu0
      %v1192 = vadd.f32 %v498, %v1191
      %v1193 = vpop.f32.mrb[0].mxu0
      %1194 = vmatprep.mubr.f32.mxu0 %v430
      %1195 = vmatmul.mubr.f32.gmra.mrb[0].mxu0 %v429
      %v1196 = vpop.f32.mrb[0].mxu0
      %v1197 = vadd.f32 %v498, %v1196
      %v1198 = vpop.f32.mrb[0].mxu0
      %1199 = vmatprep.mubr.f32.mxu0 %v432
      %1200 = vmatmul.mubr.f32.gmra.mrb[0].mxu0 %v431
      %v1201 = vpop.f32.mrb[0].mxu0
      %v1202 = vadd.f32 %v498, %v1201
      %v1203 = vpop.f32.mrb[0].mxu0
      %1204 = vmatprep.mubr.f32.mxu0 %v434
      %1205 = vmatmul.mubr.f32.gmra.mrb[0].mxu0 %v433
      %v1206 = vpop.f32.mrb[0].mxu0
      %v1207 = vadd.f32 %v498, %v1206
      %v1208 = vpop.f32.mrb[0].mxu0
      %1209 = vmatprep.mubr.f32.mxu0 %v436
      %1210 = vmatmul.mubr.f32.gmra.mrb[0].mxu0 %v435
      %v1211 = vpop.f32.mrb[0].mxu0
      %v1212 = vadd.f32 %v498, %v1211
      %v1213 = vpop.f32.mrb[0].mxu0
      %1214 = vmatprep.mubr.f32.mxu0 %v438
      %1215 = vmatmul.mubr.f32.gmra.mrb[0].mxu0 %v437
      %v1216 = vpop.f32.mrb[0].mxu0
      %v1217 = vadd.f32 %v498, %v1216
      %v1218 = vpop.f32.mrb[0].mxu0
      %1219 = vmatprep.mubr.f32.mxu0 %v440
      %1220 = vmatmul.mubr.f32.gmra.mrb[0].mxu0 %v439
      %v1221 = vpop.f32.mrb[0].mxu0
      %v1222 = vadd.f32 %v498, %v1221
      %v1223 = vpop.f32.mrb[0].mxu0
      %1224 = vmatprep.mubr.f32.mxu0 %v442
      %1225 = vmatmul.mubr.f32.gmra.mrb[0].mxu0 %v441
      %v1226 = vpop.f32.mrb[0].mxu0
      %v1227 = vadd.f32 %v498, %v1226
      %v1228 = vpop.f32.mrb[0].mxu0
      %1229 = vmatprep.mubr.f32.mxu0 %v444
      %1230 = vmatmul.mubr.f32.gmra.mrb[0].mxu0 %v443
      %v1231 = vpop.f32.mrb[0].mxu0
      %v1232 = vadd.f32 %v498, %v1231
      %v1233 = vpop.f32.mrb[0].mxu0
      %1234 = vmatprep.mubr.f32.mxu0 %v446
      %1235 = vmatmul.mubr.f32.gmra.mrb[0].mxu0 %v445
      %v1236 = vpop.f32.mrb[0].mxu0
      %v1237 = vadd.f32 %v498, %v1236
      %v1238 = vpop.f32.mrb[0].mxu0
      %1239 = vmatprep.mubr.f32.mxu0 %v448
      %1240 = vmatmul.mubr.f32.gmra.mrb[0].mxu0 %v447
      %v1241 = vpop.f32.mrb[0].mxu0
      %v1242 = vadd.f32 %v498, %v1241
      %v1243 = vpop.f32.mrb[0].mxu0
      %1244 = vmatprep.mubr.f32.mxu0 %v450
      %1245 = vmatmul.mubr.f32.gmra.mrb[0].mxu0 %v449
      %v1246 = vpop.f32.mrb[0].mxu0
      %v1247 = vadd.f32 %v498, %v1246
      %v1248 = vpop.f32.mrb[0].mxu0
      %1249 = vmatprep.mubr.f32.mxu0 %v452
      %1250 = vmatmul.mubr.f32.gmra.mrb[0].mxu0 %v451
      %v1251 = vpop.f32.mrb[0].mxu0
      %v1252 = vadd.f32 %v498, %v1251
      %v1253 = vpop.f32.mrb[0].mxu0
      %1254 = vmatprep.mubr.f32.mxu0 %v454
      %1255 = vmatmul.mubr.f32.gmra.mrb[0].mxu0 %v453
      %v1256 = vpop.f32.mrb[0].mxu0
      %v1257 = vadd.f32 %v498, %v1256
      %v1258 = vpop.f32.mrb[0].mxu0
      %1259 = vmatprep.mubr.f32.mxu0 %v456
      %1260 = vmatmul.mubr.f32.gmra.mrb[0].mxu0 %v455
      %v1261 = vpop.f32.mrb[0].mxu0
      %v1262 = vadd.f32 %v498, %v1261
      %v1263 = vpop.f32.mrb[0].mxu0
      %1264 = vmatprep.mubr.f32.mxu0 %v458
      %1265 = vmatmul.mubr.f32.gmra.mrb[0].mxu0 %v457
      %v1266 = vpop.f32.mrb[0].mxu0
      %v1267 = vadd.f32 %v498, %v1266
      %v1268 = vpop.f32.mrb[0].mxu0
      %1269 = vmatprep.mubr.f32.mxu0 %v460
      %1270 = vmatmul.mubr.f32.gmra.mrb[0].mxu0 %v459
      %v1271 = vpop.f32.mrb[0].mxu0
      %v1272 = vadd.f32 %v498, %v1271
      %v1273 = vpop.f32.mrb[0].mxu0
      %1274 = vdwg.mxu0
      %v1275 = vmax.f32 %v567, 0.0
      %v1276 = vmax.f32 %v572, 0.0
      %v1277 = vmax.f32 %v577, 0.0
      %v1278 = vmax.f32 %v582, 0.0
      %v1279 = vmax.f32 %v587, 0.0
      %v1280 = vmax.f32 %v592, 0.0
      %v1281 = vmax.f32 %v597, 0.0
      %v1282 = vmax.f32 %v602, 0.0
      %v1283 = vmax.f32 %v607, 0.0
      %v1284 = vmax.f32 %v612, 0.0
      %v1285 = vmax.f32 %v617, 0.0
      %v1286 = vmax.f32 %v622, 0.0
      %v1287 = vmax.f32 %v627, 0.0
      %v1288 = vmax.f32 %v632, 0.0
      %v1289 = vmax.f32 %v637, 0.0
      %v1290 = vmax.f32 %v642, 0.0
      %v1291 = vmax.f32 %v647, 0.0
      %v1292 = vmax.f32 %v652, 0.0
      %v1293 = vmax.f32 %v657, 0.0
      %v1294 = vmax.f32 %v662, 0.0
      %v1295 = vmax.f32 %v667, 0.0
      %v1296 = vmax.f32 %v672, 0.0
      %v1297 = vmax.f32 %v677, 0.0
      %v1298 = vmax.f32 %v682, 0.0
      %v1299 = vmax.f32 %v687, 0.0
      %v1300 = vmax.f32 %v692, 0.0
      %v1301 = vmax.f32 %v697, 0.0
      %v1302 = vmax.f32 %v702, 0.0
      %v1303 = vmax.f32 %v707, 0.0
      %v1304 = vmax.f32 %v712, 0.0
      %v1305 = vmax.f32 %v717, 0.0
      %v1306 = vmax.f32 %v722, 0.0
      %v1307 = vmax.f32 %v727, 0.0
      %v1308 = vmax.f32 %v732, 0.0
      %v1309 = vmax.f32 %v737, 0.0
      %v1310 = vmax.f32 %v742, 0.0
      %v1311 = vmax.f32 %v747, 0.0
      %v1312 = vmax.f32 %v752, 0.0
      %v1313 = vmax.f32 %v757, 0.0
      %v1314 = vmax.f32 %v762, 0.0
      %v1315 = vmax.f32 %v767, 0.0
      %v1316 = vmax.f32 %v772, 0.0
      %v1317 = vmax.f32 %v777, 0.0
      %v1318 = vmax.f32 %v782, 0.0
      %v1319 = vmax.f32 %v787, 0.0
      %v1320 = vmax.f32 %v792, 0.0
      %v1321 = vmax.f32 %v797, 0.0
      %v1322 = vmax.f32 %v802, 0.0
      %v1323 = vmax.f32 %v807, 0.0
      %v1324 = vmax.f32 %v812, 0.0
      %v1325 = vmax.f32 %v817, 0.0
      %v1326 = vmax.f32 %v822, 0.0
      %v1327 = vmax.f32 %v827, 0.0
      %v1328 = vmax.f32 %v832, 0.0
      %v1329 = vmax.f32 %v837, 0.0
      %v1330 = vmax.f32 %v842, 0.0
      %v1331 = vmax.f32 %v847, 0.0
      %v1332 = vmax.f32 %v852, 0.0
      %v1333 = vmax.f32 %v857, 0.0
      %v1334 = vmax.f32 %v862, 0.0
      %v1335 = vmax.f32 %v867, 0.0
      %v1336 = vmax.f32 %v872, 0.0
      %v1337 = vmax.f32 %v877, 0.0
      %v1338 = vmax.f32 %v882, 0.0
      %v1339 = vmax.f32 %v887, 0.0
      %v1340 = vmax.f32 %v892, 0.0
      %v1341 = vmax.f32 %v897, 0.0
      %v1342 = vmax.f32 %v902, 0.0
      %v1343 = vmax.f32 %v907, 0.0
      %v1344 = vmax.f32 %v912, 0.0
      %v1345 = vmax.f32 %v917, 0.0
      %v1346 = vmax.f32 %v922, 0.0
      %v1347 = vmax.f32 %v927, 0.0
      %v1348 = vmax.f32 %v932, 0.0
      %v1349 = vmax.f32 %v937, 0.0
      %v1350 = vmax.f32 %v942, 0.0
      %v1351 = vmax.f32 %v947, 0.0
      %v1352 = vmax.f32 %v952, 0.0
      %v1353 = vmax.f32 %v957, 0.0
      %v1354 = vmax.f32 %v962, 0.0
      %v1355 = vmax.f32 %v967, 0.0
      %v1356 = vmax.f32 %v972, 0.0
      %v1357 = vmax.f32 %v977, 0.0
      %v1358 = vmax.f32 %v982, 0.0
      %v1359 = vmax.f32 %v987, 0.0
      %v1360 = vmax.f32 %v992, 0.0
      %v1361 = vmax.f32 %v997, 0.0
      %v1362 = vmax.f32 %v1002, 0.0
      %v1363 = vmax.f32 %v1007, 0.0
      %v1364 = vmax.f32 %v1012, 0.0
      %v1365 = vmax.f32 %v1017, 0.0
      %v1366 = vmax.f32 %v1022, 0.0
      %v1367 = vmax.f32 %v1027, 0.0
      %v1368 = vmax.f32 %v1032, 0.0
      %v1369 = vmax.f32 %v1037, 0.0
      %v1370 = vmax.f32 %v1042, 0.0
      %v1371 = vmax.f32 %v1047, 0.0
      %v1372 = vmax.f32 %v1052, 0.0
      %v1373 = vmax.f32 %v1057, 0.0
      %v1374 = vmax.f32 %v1062, 0.0
      %v1375 = vmax.f32 %v1067, 0.0
      %v1376 = vmax.f32 %v1072, 0.0
      %v1377 = vmax.f32 %v1077, 0.0
      %v1378 = vmax.f32 %v1082, 0.0
      %v1379 = vmax.f32 %v1087, 0.0
      %v1380 = vmax.f32 %v1092, 0.0
      %v1381 = vmax.f32 %v1097, 0.0
      %v1382 = vmax.f32 %v1102, 0.0
      %v1383 = vmax.f32 %v1107, 0.0
      %v1384 = vmax.f32 %v1112, 0.0
      %v1385 = vmax.f32 %v1117, 0.0
      %v1386 = vmax.f32 %v1122, 0.0
      %v1387 = vmax.f32 %v1127, 0.0
      %v1388 = vmax.f32 %v1132, 0.0
      %v1389 = vmax.f32 %v1137, 0.0
      %v1390 = vmax.f32 %v1142, 0.0
      %v1391 = vmax.f32 %v1147, 0.0
      %v1392 = vmax.f32 %v1152, 0.0
      %v1393 = vmax.f32 %v1157, 0.0
      %v1394 = vmax.f32 %v1162, 0.0
      %v1395 = vmax.f32 %v1167, 0.0
      %v1396 = vmax.f32 %v1172, 0.0
      %v1397 = vmax.f32 %v1177, 0.0
      %v1398 = vmax.f32 %v1182, 0.0
      %v1399 = vmax.f32 %v1187, 0.0
      %v1400 = vmax.f32 %v1192, 0.0
      %v1401 = vmax.f32 %v1197, 0.0
      %v1402 = vmax.f32 %v1202, 0.0
      %v1403 = vmax.f32 %v1207, 0.0
      %v1404 = vmax.f32 %v1212, 0.0
      %v1405 = vmax.f32 %v1217, 0.0
      %v1406 = vmax.f32 %v1222, 0.0
      %v1407 = vmax.f32 %v1227, 0.0
      %v1408 = vmax.f32 %v1232, 0.0
      %v1409 = vmax.f32 %v1237, 0.0
      %v1410 = vmax.f32 %v1242, 0.0
      %v1411 = vmax.f32 %v1247, 0.0
      %v1412 = vmax.f32 %v1252, 0.0
      %v1413 = vmax.f32 %v1257, 0.0
      %v1414 = vmax.f32 %v1262, 0.0
      %v1415 = vmax.f32 %v1267, 0.0
      %v1416 = vmax.f32 %v1272, 0.0
      %1417 = vst [vmem:[%s175] sm:$0xff] %v1275
      %1418 = vst [vmem:[%s175 + $0x8] sm:$0xff] %v1276
      %1419 = vst [vmem:[%s175 + $0x10] sm:$0xff] %v1277
      %1420 = vst [vmem:[%s175 + $0x18] sm:$0xff] %v1278
      %1421 = vst [vmem:[%s175 + $0x20] sm:$0xff] %v1279
      %1422 = vst [vmem:[%s175 + $0x28] sm:$0xff] %v1280
      %1423 = vst [vmem:[%s175 + $0x30] sm:$0xff] %v1281
      %1424 = vst [vmem:[%s175 + $0x38] sm:$0xff] %v1282
      %1425 = vst [vmem:[%s175 + $0x40] sm:$0xff] %v1283
      %1426 = vst [vmem:[%s175 + $0x48] sm:$0xff] %v1284
      %1427 = vst [vmem:[%s175 + $0x50] sm:$0xff] %v1285
      %1428 = vst [vmem:[%s175 + $0x58] sm:$0xff] %v1286
      %1429 = vst [vmem:[%s175 + $0x60] sm:$0xff] %v1287
      %1430 = vst [vmem:[%s175 + $0x68] sm:$0xff] %v1288
      %1431 = vst [vmem:[%s175 + $0x70] sm:$0xff] %v1289
      %1432 = vst [vmem:[%s175 + $0x78] sm:$0xff] %v1290
      %1433 = vst [vmem:[%s175 + $0x80] sm:$0xff] %v1291
      %1434 = vst [vmem:[%s175 + $0x88] sm:$0xff] %v1292
      %1435 = vst [vmem:[%s175 + $0x90] sm:$0xff] %v1293
      %1436 = vst [vmem:[%s175 + $0x98] sm:$0xff] %v1294
      %1437 = vst [vmem:[%s175 + $0xa0] sm:$0xff] %v1295
      %1438 = vst [vmem:[%s175 + $0xa8] sm:$0xff] %v1296
      %1439 = vst [vmem:[%s175 + $0xb0] sm:$0xff] %v1297
      %1440 = vst [vmem:[%s175 + $0xb8] sm:$0xff] %v1298
      %1441 = vst [vmem:[%s175 + $0xc0] sm:$0xff] %v1299
      %1442 = vst [vmem:[%s175 + $0xc8] sm:$0xff] %v1300
      %1443 = vst [vmem:[%s175 + $0xd0] sm:$0xff] %v1301
      %1444 = vst [vmem:[%s175 + $0xd8] sm:$0xff] %v1302
      %1445 = vst [vmem:[%s175 + $0xe0] sm:$0xff] %v1303
      %1446 = vst [vmem:[%s175 + $0xe8] sm:$0xff] %v1304
      %1447 = vst [vmem:[%s175 + $0xf0] sm:$0xff] %v1305
      %1448 = vst [vmem:[%s175 + $0xf8] sm:$0xff] %v1306
      %1449 = vst [vmem:[%s175 + $0x100] sm:$0xff] %v1307
      %1450 = vst [vmem:[%s175 + $0x108] sm:$0xff] %v1308
      %1451 = vst [vmem:[%s175 + $0x110] sm:$0xff] %v1309
      %1452 = vst [vmem:[%s175 + $0x118] sm:$0xff] %v1310
      %1453 = vst [vmem:[%s175 + $0x120] sm:$0xff] %v1311
      %1454 = vst [vmem:[%s175 + $0x128] sm:$0xff] %v1312
      %1455 = vst [vmem:[%s175 + $0x130] sm:$0xff] %v1313
      %1456 = vst [vmem:[%s175 + $0x138] sm:$0xff] %v1314
      %1457 = vst [vmem:[%s175 + $0x140] sm:$0xff] %v1315
      %1458 = vst [vmem:[%s175 + $0x148] sm:$0xff] %v1316
      %1459 = vst [vmem:[%s175 + $0x150] sm:$0xff] %v1317
      %1460 = vst [vmem:[%s175 + $0x158] sm:$0xff] %v1318
      %1461 = vst [vmem:[%s175 + $0x160] sm:$0xff] %v1319
      %1462 = vst [vmem:[%s175 + $0x168] sm:$0xff] %v1320
      %1463 = vst [vmem:[%s175 + $0x170] sm:$0xff] %v1321
      %1464 = vst [vmem:[%s175 + $0x178] sm:$0xff] %v1322
      %1465 = vst [vmem:[%s175 + $0x180] sm:$0xff] %v1323
      %1466 = vst [vmem:[%s175 + $0x188] sm:$0xff] %v1324
      %1467 = vst [vmem:[%s175 + $0x190] sm:$0xff] %v1325
      %1468 = vst [vmem:[%s175 + $0x198] sm:$0xff] %v1326
      %1469 = vst [vmem:[%s175 + $0x1a0] sm:$0xff] %v1327
      %1470 = vst [vmem:[%s175 + $0x1a8] sm:$0xff] %v1328
      %1471 = vst [vmem:[%s175 + $0x1b0] sm:$0xff] %v1329
      %1472 = vst [vmem:[%s175 + $0x1b8] sm:$0xff] %v1330
      %1473 = vst [vmem:[%s175 + $0x1c0] sm:$0xff] %v1331
      %1474 = vst [vmem:[%s175 + $0x1c8] sm:$0xff] %v1332
      %1475 = vst [vmem:[%s175 + $0x1d0] sm:$0xff] %v1333
      %1476 = vst [vmem:[%s175 + $0x1d8] sm:$0xff] %v1334
      %1477 = vst [vmem:[%s175 + $0x1e0] sm:$0xff] %v1335
      %1478 = vst [vmem:[%s175 + $0x1e8] sm:$0xff] %v1336
      %1479 = vst [vmem:[%s175 + $0x1f0] sm:$0xff] %v1337
      %1480 = vst [vmem:[%s175 + $0x1f8] sm:$0xff] %v1338
      %1481 = vst [vmem:[%s175 + $0x200] sm:$0xff] %v1339
      %1482 = vst [vmem:[%s175 + $0x208] sm:$0xff] %v1340
      %1483 = vst [vmem:[%s175 + $0x210] sm:$0xff] %v1341
      %1484 = vst [vmem:[%s175 + $0x218] sm:$0xff] %v1342
      %1485 = vst [vmem:[%s175 + $0x220] sm:$0xff] %v1343
      %1486 = vst [vmem:[%s175 + $0x228] sm:$0xff] %v1344
      %1487 = vst [vmem:[%s175 + $0x230] sm:$0xff] %v1345
      %1488 = vst [vmem:[%s175 + $0x238] sm:$0xff] %v1346
      %1489 = vst [vmem:[%s175 + $0x240] sm:$0xff] %v1347
      %1490 = vst [vmem:[%s175 + $0x248] sm:$0xff] %v1348
      %1491 = vst [vmem:[%s175 + $0x250] sm:$0xff] %v1349
      %1492 = vst [vmem:[%s175 + $0x258] sm:$0xff] %v1350
      %1493 = vst [vmem:[%s175 + $0x260] sm:$0xff] %v1351
      %1494 = vst [vmem:[%s175 + $0x268] sm:$0xff] %v1352
      %1495 = vst [vmem:[%s175 + $0x270] sm:$0xff] %v1353
      %1496 = vst [vmem:[%s175 + $0x278] sm:$0xff] %v1354
      %1497 = vst [vmem:[%s175 + $0x280] sm:$0xff] %v1355
      %1498 = vst [vmem:[%s175 + $0x288] sm:$0xff] %v1356
      %1499 = vst [vmem:[%s175 + $0x290] sm:$0xff] %v1357
      %1500 = vst [vmem:[%s175 + $0x298] sm:$0xff] %v1358
      %1501 = vst [vmem:[%s175 + $0x2a0] sm:$0xff] %v1359
      %1502 = vst [vmem:[%s175 + $0x2a8] sm:$0xff] %v1360
      %1503 = vst [vmem:[%s175 + $0x2b0] sm:$0xff] %v1361
      %1504 = vst [vmem:[%s175 + $0x2b8] sm:$0xff] %v1362
      %1505 = vst [vmem:[%s175 + $0x2c0] sm:$0xff] %v1363
      %1506 = vst [vmem:[%s175 + $0x2c8] sm:$0xff] %v1364
      %1507 = vst [vmem:[%s175 + $0x2d0] sm:$0xff] %v1365
      %1508 = vst [vmem:[%s175 + $0x2d8] sm:$0xff] %v1366
      %1509 = vst [vmem:[%s175 + $0x2e0] sm:$0xff] %v1367
      %1510 = vst [vmem:[%s175 + $0x2e8] sm:$0xff] %v1368
      %1511 = vst [vmem:[%s175 + $0x2f0] sm:$0xff] %v1369
      %1512 = vst [vmem:[%s175 + $0x2f8] sm:$0xff] %v1370
      %1513 = vst [vmem:[%s175 + $0x300] sm:$0xff] %v1371
      %1514 = vst [vmem:[%s175 + $0x308] sm:$0xff] %v1372
      %1515 = vst [vmem:[%s175 + $0x310] sm:$0xff] %v1373
      %1516 = vst [vmem:[%s175 + $0x318] sm:$0xff] %v1374
      %1517 = vst [vmem:[%s175 + $0x320] sm:$0xff] %v1375
      %1518 = vst [vmem:[%s175 + $0x328] sm:$0xff] %v1376
      %1519 = vst [vmem:[%s175 + $0x330] sm:$0xff] %v1377
      %1520 = vst [vmem:[%s175 + $0x338] sm:$0xff] %v1378
      %1521 = vst [vmem:[%s175 + $0x340] sm:$0xff] %v1379
      %1522 = vst [vmem:[%s175 + $0x348] sm:$0xff] %v1380
      %1523 = vst [vmem:[%s175 + $0x350] sm:$0xff] %v1381
      %1524 = vst [vmem:[%s175 + $0x358] sm:$0xff] %v1382
      %1525 = vst [vmem:[%s175 + $0x360] sm:$0xff] %v1383
      %1526 = vst [vmem:[%s175 + $0x368] sm:$0xff] %v1384
      %1527 = vst [vmem:[%s175 + $0x370] sm:$0xff] %v1385
      %1528 = vst [vmem:[%s175 + $0x378] sm:$0xff] %v1386
      %1529 = vst [vmem:[%s175 + $0x380] sm:$0xff] %v1387
      %1530 = vst [vmem:[%s175 + $0x388] sm:$0xff] %v1388
      %1531 = vst [vmem:[%s175 + $0x390] sm:$0xff] %v1389
      %1532 = vst [vmem:[%s175 + $0x398] sm:$0xff] %v1390
      %1533 = vst [vmem:[%s175 + $0x3a0] sm:$0xff] %v1391
      %1534 = vst [vmem:[%s175 + $0x3a8] sm:$0xff] %v1392
      %1535 = vst [vmem:[%s175 + $0x3b0] sm:$0xff] %v1393
      %1536 = vst [vmem:[%s175 + $0x3b8] sm:$0xff] %v1394
      %1537 = vst [vmem:[%s175 + $0x3c0] sm:$0xff] %v1395
      %1538 = vst [vmem:[%s175 + $0x3c8] sm:$0xff] %v1396
      %1539 = vst [vmem:[%s175 + $0x3d0] sm:$0xff] %v1397
      %1540 = vst [vmem:[%s175 + $0x3d8] sm:$0xff] %v1398
      %1541 = vst [vmem:[%s175 + $0x3e0] sm:$0xff] %v1399
      %1542 = vst [vmem:[%s175 + $0x3e8] sm:$0xff] %v1400
      %1543 = vst [vmem:[%s175 + $0x3f0] sm:$0xff] %v1401
      %1544 = vst [vmem:[%s175 + $0x3f8] sm:$0xff] %v1402
      %1545 = vst [vmem:[%s175 + $0x400] sm:$0xff] %v1403
      %1546 = vst [vmem:[%s175 + $0x408] sm:$0xff] %v1404
      %1547 = vst [vmem:[%s175 + $0x410] sm:$0xff] %v1405
      %1548 = vst [vmem:[%s175 + $0x418] sm:$0xff] %v1406
      %1549 = vst [vmem:[%s175 + $0x420] sm:$0xff] %v1407
      %1550 = vst [vmem:[%s175 + $0x428] sm:$0xff] %v1408
      %1551 = vst [vmem:[%s175 + $0x430] sm:$0xff] %v1409
      %1552 = vst [vmem:[%s175 + $0x438] sm:$0xff] %v1410
      %1553 = vst [vmem:[%s175 + $0x440] sm:$0xff] %v1411
      %1554 = vst [vmem:[%s175 + $0x448] sm:$0xff] %v1412
      %1555 = vst [vmem:[%s175 + $0x450] sm:$0xff] %v1413
      %1556 = vst [vmem:[%s175 + $0x458] sm:$0xff] %v1414
      %1557 = vst [vmem:[%s175 + $0x460] sm:$0xff] %v1415
      %1558 = vst [vmem:[%s175 + $0x468] sm:$0xff] %v1416
      %s1559 = smul.u32 142, %s14
      %p1560 = scmp.lt.s32.totalorder %s1559, 283
      %s1561 = scalar_select %p1560, %s1559, 283
      %s1562 = smul.addr %s1561, 8
      %s1563 = scalar_lea.vmem %s3, %s1562
      // Predicated region
      $region33: #{forward.16} parent=31 // pred_check
        %p1564 = pneg %p100
      $region34: #{forward.16} parent=31 // pred_check_branch
        %1566 = sbr.rel (%p1564) target = $region36
      $region35: #{forward.16} parent=31 // pred_region
        %s1567 = smul.u32 142, %s14
      $region36: #{forward.16} parent=31 // pred_fallthru
        _
    $region32: #{forward.16} parent=5 // pred_fallthru
      _
    %p1568 = scmp.le.s32.totalorder 2, %s9
    // Predicated region
    $region37: #{forward.16} parent=5 // pred_check
      %p1569 = pneg %p1568
    $region38: #{forward.16} parent=5 // pred_check_branch
      %1571 = sbr.rel (%p1569) target = $region40
    $region39: #{forward.16} parent=5 // pred_region
      %s1572 = ssub.s32 %s9, 2
      // Predicated region
      $region41: #{forward.16} parent=39 // pred_check
        %p1573 = pneg %p106
      $region42: #{forward.16} parent=39 // pred_check_branch
        %1575 = sbr.rel (%p1573) target = $region44
      $region43: #{forward.16} parent=39 // pred_region
        %s1576 = smul.u32 142, %s15
        %p1577 = scmp.lt.s32.totalorder %s1576, 283
        %s1578 = scalar_select %p1577, %s1576, 283
        %s1579 = smul.addr %s1578, 8
        %s1580 = scalar_lea.vmem %s3, %s1579
      $region44: #{forward.16} parent=39 // pred_fallthru
        _
    $region40: #{forward.16} parent=5 // pred_fallthru
      _
  $region6: #{forward.16} parent=0 // loop_footer
    %s13 = sadd.s32 1, %s9
  $region7: #{forward.16} parent=0 // loop_footer_branch
    %8 = sbr.rel target = $region3
  $region8: #{forward.16} parent=0 // loop_exit
    _

// kernel: forward.17
$region0: #{forward.17}
  #allocation0 [shape = 'u32[]', space=smem, size = 0x4, offset = 0x4, fixed_abs, tag = 'smem constant byte address 0x4 - core index']
  #allocation1 [shape = 'u32[144,128]{1,0:T(1,128)}', space=vmem, size = 0x12000, scoped, tag = 'internal scratch']
  %s0 = inlined_call_operand.vmem [shape: f32[9600,128], index: 0, kind: input, shape index: {}]
  %s1 = inlined_call_operand.vmem [shape: f32[128,128], index: 1, kind: input, shape index: {}]
  %s2 = inlined_call_operand.vmem [shape: f32[1,128], index: 2, kind: input, shape index: {}]
  %s3 = inlined_call_operand.vmem [shape: f32[9600,128], index: 3, kind: output, shape index: {}]
  %s4 = sld [smem:[#allocation0]]
  $region45: #{forward.17} parent=0
    _
  %s6 = ssub.s32 1, %s4
  %s7 = scalar_select 0, %s6, %s4
  loop: start=0, step=1, limit=7
  $region2: #{forward.17} parent=0 // loop_pre_header
    _
  $region3: #{forward.17} parent=0 // loop_header
    %s9 = sphi 0, %s13
    %p10 = scmp.ge.s32.totalorder %s9, 7
    %s19 = sphi 0, %s21
    %s22 = sphi 0, %s19
    %s23 = sphi 0, %s22
    %s39 = sphi 0, %s23
    %s43 = sphi 0, %s43
    %s45 = sphi 0, %s43
    %s46 = sphi 0, %s45
    %s60 = sphi 0, %s46
    %s64 = sphi 0, %s64
    %s66 = sphi 0, %s64
    %s67 = sphi 0, %s66
    %s81 = sphi 0, %s67
    %s87 = sphi 0, %s89
    %s90 = sphi 0, %s87
    %s91 = sphi 0, %s90
    %s107 = sphi 0, %s91
  $region4: #{forward.17} parent=0 // loop_header_branch
    %12 = sbr.rel (%p10) target = $region8
  $region5: #{forward.17} parent=0 // loop_body
    %s14 = ssub.s32 %s9, 1
    %s15 = ssub.s32 %s9, 2
    %s16 = sadd.s32 %s9, 1
    %s17 = ssub.s32 %s9, %s16
    %p18 = scmp.eq.s32.totalorder %s17, 0
    %s20 = sadd.s32 %s19, 1
    %s21 = scalar_select %p18, %s19, %s20
    %p24 = pneg %p18
    %p25 = scmp.eq.s32.totalorder %s9, 4
    %p26 = por %p24, %p25
    %p27 = scmp.ne.s32.totalorder %s19, %s22
    %p28 = scmp.eq.s32.totalorder %s9, 0
    %p29 = por %p27, %p28
    %p30 = scmp.ne.s32.totalorder %s19, %s22
    %p31 = scmp.eq.s32.totalorder %s14, 4
    %p32 = por %p30, %p31
    %p33 = scmp.ne.s32.totalorder %s22, %s23
    %p34 = scmp.eq.s32.totalorder %s14, 0
    %p35 = por %p33, %p34
    %p36 = scmp.ne.s32.totalorder %s22, %s23
    %p37 = scmp.eq.s32.totalorder %s15, 4
    %p38 = por %p36, %p37
    %p40 = scmp.ne.s32.totalorder %s23, %s39
    %p41 = scmp.eq.s32.totalorder %s15, 0
    %p42 = por %p40, %p41
    %s44 = sadd.s32 %s43, 1
    %p47 = scmp.eq.s32.totalorder %s9, 4
    %p48 = scmp.ne.s32.totalorder %s43, %s45
    %p49 = scmp.eq.s32.totalorder %s9, 0
    %p50 = por %p48, %p49
    %p51 = scmp.ne.s32.totalorder %s43, %s45
    %p52 = scmp.eq.s32.totalorder %s14, 4
    %p53 = por %p51, %p52
    %p54 = scmp.ne.s32.totalorder %s45, %s46
    %p55 = scmp.eq.s32.totalorder %s14, 0
    %p56 = por %p54, %p55
    %p57 = scmp.ne.s32.totalorder %s45, %s46
    %p58 = scmp.eq.s32.totalorder %s15, 4
    %p59 = por %p57, %p58
    %p61 = scmp.ne.s32.totalorder %s46, %s60
    %p62 = scmp.eq.s32.totalorder %s15, 0
    %p63 = por %p61, %p62
    %s65 = sadd.s32 %s64, 1
    %p68 = scmp.eq.s32.totalorder %s9, 4
    %p69 = scmp.ne.s32.totalorder %s64, %s66
    %p70 = scmp.eq.s32.totalorder %s9, 0
    %p71 = por %p69, %p70
    %p72 = scmp.ne.s32.totalorder %s64, %s66
    %p73 = scmp.eq.s32.totalorder %s14, 4
    %p74 = por %p72, %p73
    %p75 = scmp.ne.s32.totalorder %s66, %s67
    %p76 = scmp.eq.s32.totalorder %s14, 0
    %p77 = por %p75, %p76
    %p78 = scmp.ne.s32.totalorder %s66, %s67
    %p79 = scmp.eq.s32.totalorder %s15, 4
    %p80 = por %p78, %p79
    %p82 = scmp.ne.s32.totalorder %s67, %s81
    %p83 = scmp.eq.s32.totalorder %s15, 0
    %p84 = por %p82, %p83
    %s85 = ssub.s32 %s9, %s16
    %p86 = scmp.eq.s32.totalorder %s85, 0
    %s88 = sadd.s32 %s87, 1
    %s89 = scalar_select %p86, %s87, %s88
    %p92 = pneg %p86
    %p93 = scmp.eq.s32.totalorder %s9, 4
    %p94 = por %p92, %p93
    %p95 = scmp.ne.s32.totalorder %s87, %s90
    %p96 = scmp.eq.s32.totalorder %s9, 0
    %p97 = por %p95, %p96
    %p98 = scmp.ne.s32.totalorder %s87, %s90
    %p99 = scmp.eq.s32.totalorder %s14, 4
    %p100 = por %p98, %p99
    %p101 = scmp.ne.s32.totalorder %s90, %s91
    %p102 = scmp.eq.s32.totalorder %s14, 0
    %p103 = por %p101, %p102
    %p104 = scmp.ne.s32.totalorder %s90, %s91
    %p105 = scmp.eq.s32.totalorder %s15, 4
    %p106 = por %p104, %p105
    %p108 = scmp.ne.s32.totalorder %s91, %s107
    %p109 = scmp.eq.s32.totalorder %s15, 0
    %p110 = por %p108, %p109
    %p111 = scmp.le.s32.totalorder 1, %s9
    %p112 = scmp.lt.s32.totalorder %s9, 6
    %p113 = pnand %p111, %p112
    %p114 = pneg %p113
    // Predicated region
    $region9: #{forward.17} parent=5 // pred_check
      _
    $region10: #{forward.17} parent=5 // pred_check_branch
      %116 = sbr.rel (%p113) target = $region12
    $region11: #{forward.17} parent=5 // pred_region
      %s117 = ssub.s32 %s9, 1
      // Predicated region
      $region13: #{forward.17} parent=11 // pred_check
        %p118 = pneg %p56
      $region14: #{forward.17} parent=11 // pred_check_branch
        %120 = sbr.rel (%p118) target = $region16
      $region15: #{forward.17} parent=11 // pred_region
        _
      $region16: #{forward.17} parent=11 // pred_fallthru
        _
      // Predicated region
      $region17: #{forward.17} parent=11 // pred_check
        %p121 = pneg %p77
      $region18: #{forward.17} parent=11 // pred_check_branch
        %123 = sbr.rel (%p121) target = $region20
      $region19: #{forward.17} parent=11 // pred_region
        _
      $region20: #{forward.17} parent=11 // pred_fallthru
        _
    $region12: #{forward.17} parent=5 // pred_fallthru
      _
    %p124 = scmp.lt.s32.totalorder %s9, 5
    // Predicated region
    $region21: #{forward.17} parent=5 // pred_check
      %p125 = pneg %p124
    $region22: #{forward.17} parent=5 // pred_check_branch
      %127 = sbr.rel (%p125) target = $region24
    $region23: #{forward.17} parent=5 // pred_region
      // Predicated region
      $region25: #{forward.17} parent=23 // pred_check
        %p128 = pneg %p29
      $region26: #{forward.17} parent=23 // pred_check_branch
        %130 = sbr.rel (%p128) target = $region28
      $region27: #{forward.17} parent=23 // pred_region
        %s131 = smul.u32 240, %s9
        %p132 = scmp.lt.s32.totalorder %s131, 1199
        %s133 = scalar_select %p132, %s131, 1199
        %s134 = smul.addr %s133, 8
        %s135 = scalar_lea.vmem %s0, %s134
        %s136 = smul.u32 240, %s9
      $region28: #{forward.17} parent=23 // pred_fallthru
        _
    $region24: #{forward.17} parent=5 // pred_fallthru
      _
    %p137 = scmp.le.s32.totalorder 1, %s9
    %p138 = scmp.lt.s32.totalorder %s9, 6
    %p139 = pnand %p137, %p138
    %p140 = pneg %p139
    // Predicated region
    $region29: #{forward.17} parent=5 // pred_check
      _
    $region30: #{forward.17} parent=5 // pred_check_branch
      %142 = sbr.rel (%p139) target = $region32
    $region31: #{forward.17} parent=5 // pred_region
      %s143 = ssub.s32 %s9, 1
      %s144 = smul.u32 240, %s14
      %p145 = scmp.lt.s32.totalorder %s144, 1199
      %s146 = scalar_select %p145, %s144, 1199
      %s147 = smul.addr %s146, 8
      %s148 = scalar_lea.vmem %s0, %s147
      %p149 = pneg %p35
      %p150 = pneg %p32
      %p151 = pneg %p56
      %p152 = pneg %p53
      %p153 = pneg %p77
      %p154 = pneg %p74
      %p155 = pneg %p103
      %p156 = pneg %p100
      %s157 = smul.u32 240, %s14
      %p158 = scmp.lt.s32.totalorder %s157, 1199
      %s159 = scalar_select %p158, %s157, 1199
      %s160 = smul.addr %s159, 8
      %s161 = scalar_lea.vmem %s3, %s160
      %s162 = smul.u32 240, %s14
      %p163 = scmp.lt.s32.totalorder %s162, 1199
      %s164 = scalar_select %p163, %s162, 1199
      %s165 = smul.addr %s164, 8
      %s166 = scalar_lea.vmem %s0, %s165
      %s167 = smul.u32 240, %s14
      %s168 = smul.u32 240, %s14
      %p169 = scmp.lt.s32.totalorder %s168, 1199
      %s170 = scalar_select %p169, %s168, 1199
      %s171 = smul.addr %s170, 8
      %s172 = scalar_lea.vmem %s3, %s171
      %s173 = smul.u32 240, %s14
      %v174 = vld [vmem:[%s166] sm:$0xff]
      %v175 = vld [vmem:[%s166 + $0x8] sm:$0xff]
      %v176 = vld [vmem:[%s166 + $0x10] sm:$0xff]
      %v177 = vld [vmem:[%s166 + $0x18] sm:$0xff]
      %v178 = vld [vmem:[%s166 + $0x20] sm:$0xff]
      %v179 = vld [vmem:[%s166 + $0x28] sm:$0xff]
      %v180 = vld [vmem:[%s166 + $0x30] sm:$0xff]
      %v181 = vld [vmem:[%s166 + $0x38] sm:$0xff]
      %v182 = vld [vmem:[%s166 + $0x40] sm:$0xff]
      %v183 = vld [vmem:[%s166 + $0x48] sm:$0xff]
      %v184 = vld [vmem:[%s166 + $0x50] sm:$0xff]
      %v185 = vld [vmem:[%s166 + $0x58] sm:$0xff]
      %v186 = vld [vmem:[%s166 + $0x60] sm:$0xff]
      %v187 = vld [vmem:[%s166 + $0x68] sm:$0xff]
      %v188 = vld [vmem:[%s166 + $0x70] sm:$0xff]
      %v189 = vld [vmem:[%s166 + $0x78] sm:$0xff]
      %v190 = vld [vmem:[%s166 + $0x80] sm:$0xff]
      %v191 = vld [vmem:[%s166 + $0x88] sm:$0xff]
      %v192 = vld [vmem:[%s166 + $0x90] sm:$0xff]
      %v193 = vld [vmem:[%s166 + $0x98] sm:$0xff]
      %v194 = vld [vmem:[%s166 + $0xa0] sm:$0xff]
      %v195 = vld [vmem:[%s166 + $0xa8] sm:$0xff]
      %v196 = vld [vmem:[%s166 + $0xb0] sm:$0xff]
      %v197 = vld [vmem:[%s166 + $0xb8] sm:$0xff]
      %v198 = vld [vmem:[%s166 + $0xc0] sm:$0xff]
      %v199 = vld [vmem:[%s166 + $0xc8] sm:$0xff]
      %v200 = vld [vmem:[%s166 + $0xd0] sm:$0xff]
      %v201 = vld [vmem:[%s166 + $0xd8] sm:$0xff]
      %v202 = vld [vmem:[%s166 + $0xe0] sm:$0xff]
      %v203 = vld [vmem:[%s166 + $0xe8] sm:$0xff]
      %v204 = vld [vmem:[%s166 + $0xf0] sm:$0xff]
      %v205 = vld [vmem:[%s166 + $0xf8] sm:$0xff]
      %v206 = vld [vmem:[%s166 + $0x100] sm:$0xff]
      %v207 = vld [vmem:[%s166 + $0x108] sm:$0xff]
      %v208 = vld [vmem:[%s166 + $0x110] sm:$0xff]
      %v209 = vld [vmem:[%s166 + $0x118] sm:$0xff]
      %v210 = vld [vmem:[%s166 + $0x120] sm:$0xff]
      %v211 = vld [vmem:[%s166 + $0x128] sm:$0xff]
      %v212 = vld [vmem:[%s166 + $0x130] sm:$0xff]
      %v213 = vld [vmem:[%s166 + $0x138] sm:$0xff]
      %v214 = vld [vmem:[%s166 + $0x140] sm:$0xff]
      %v215 = vld [vmem:[%s166 + $0x148] sm:$0xff]
      %v216 = vld [vmem:[%s166 + $0x150] sm:$0xff]
      %v217 = vld [vmem:[%s166 + $0x158] sm:$0xff]
      %v218 = vld [vmem:[%s166 + $0x160] sm:$0xff]
      %v219 = vld [vmem:[%s166 + $0x168] sm:$0xff]
      %v220 = vld [vmem:[%s166 + $0x170] sm:$0xff]
      %v221 = vld [vmem:[%s166 + $0x178] sm:$0xff]
      %v222 = vld [vmem:[%s166 + $0x180] sm:$0xff]
      %v223 = vld [vmem:[%s166 + $0x188] sm:$0xff]
      %v224 = vld [vmem:[%s166 + $0x190] sm:$0xff]
      %v225 = vld [vmem:[%s166 + $0x198] sm:$0xff]
      %v226 = vld [vmem:[%s166 + $0x1a0] sm:$0xff]
      %v227 = vld [vmem:[%s166 + $0x1a8] sm:$0xff]
      %v228 = vld [vmem:[%s166 + $0x1b0] sm:$0xff]
      %v229 = vld [vmem:[%s166 + $0x1b8] sm:$0xff]
      %v230 = vld [vmem:[%s166 + $0x1c0] sm:$0xff]
      %v231 = vld [vmem:[%s166 + $0x1c8] sm:$0xff]
      %v232 = vld [vmem:[%s166 + $0x1d0] sm:$0xff]
      %v233 = vld [vmem:[%s166 + $0x1d8] sm:$0xff]
      %v234 = vld [vmem:[%s166 + $0x1e0] sm:$0xff]
      %v235 = vld [vmem:[%s166 + $0x1e8] sm:$0xff]
      %v236 = vld [vmem:[%s166 + $0x1f0] sm:$0xff]
      %v237 = vld [vmem:[%s166 + $0x1f8] sm:$0xff]
      %v238 = vld [vmem:[%s166 + $0x200] sm:$0xff]
      %v239 = vld [vmem:[%s166 + $0x208] sm:$0xff]
      %v240 = vld [vmem:[%s166 + $0x210] sm:$0xff]
      %v241 = vld [vmem:[%s166 + $0x218] sm:$0xff]
      %v242 = vld [vmem:[%s166 + $0x220] sm:$0xff]
      %v243 = vld [vmem:[%s166 + $0x228] sm:$0xff]
      %v244 = vld [vmem:[%s166 + $0x230] sm:$0xff]
      %v245 = vld [vmem:[%s166 + $0x238] sm:$0xff]
      %v246 = vld [vmem:[%s166 + $0x240] sm:$0xff]
      %v247 = vld [vmem:[%s166 + $0x248] sm:$0xff]
      %v248 = vld [vmem:[%s166 + $0x250] sm:$0xff]
      %v249 = vld [vmem:[%s166 + $0x258] sm:$0xff]
      %v250 = vld [vmem:[%s166 + $0x260] sm:$0xff]
      %v251 = vld [vmem:[%s166 + $0x268] sm:$0xff]
      %v252 = vld [vmem:[%s166 + $0x270] sm:$0xff]
      %v253 = vld [vmem:[%s166 + $0x278] sm:$0xff]
      %v254 = vld [vmem:[%s166 + $0x280] sm:$0xff]
      %v255 = vld [vmem:[%s166 + $0x288] sm:$0xff]
      %v256 = vld [vmem:[%s166 + $0x290] sm:$0xff]
      %v257 = vld [vmem:[%s166 + $0x298] sm:$0xff]
      %v258 = vld [vmem:[%s166 + $0x2a0] sm:$0xff]
      %v259 = vld [vmem:[%s166 + $0x2a8] sm:$0xff]
      %v260 = vld [vmem:[%s166 + $0x2b0] sm:$0xff]
      %v261 = vld [vmem:[%s166 + $0x2b8] sm:$0xff]
      %v262 = vld [vmem:[%s166 + $0x2c0] sm:$0xff]
      %v263 = vld [vmem:[%s166 + $0x2c8] sm:$0xff]
      %v264 = vld [vmem:[%s166 + $0x2d0] sm:$0xff]
      %v265 = vld [vmem:[%s166 + $0x2d8] sm:$0xff]
      %v266 = vld [vmem:[%s166 + $0x2e0] sm:$0xff]
      %v267 = vld [vmem:[%s166 + $0x2e8] sm:$0xff]
      %v268 = vld [vmem:[%s166 + $0x2f0] sm:$0xff]
      %v269 = vld [vmem:[%s166 + $0x2f8] sm:$0xff]
      %v270 = vld [vmem:[%s166 + $0x300] sm:$0xff]
      %v271 = vld [vmem:[%s166 + $0x308] sm:$0xff]
      %v272 = vld [vmem:[%s166 + $0x310] sm:$0xff]
      %v273 = vld [vmem:[%s166 + $0x318] sm:$0xff]
      %v274 = vld [vmem:[%s166 + $0x320] sm:$0xff]
      %v275 = vld [vmem:[%s166 + $0x328] sm:$0xff]
      %v276 = vld [vmem:[%s166 + $0x330] sm:$0xff]
      %v277 = vld [vmem:[%s166 + $0x338] sm:$0xff]
      %v278 = vld [vmem:[%s166 + $0x340] sm:$0xff]
      %v279 = vld [vmem:[%s166 + $0x348] sm:$0xff]
      %v280 = vld [vmem:[%s166 + $0x350] sm:$0xff]
      %v281 = vld [vmem:[%s166 + $0x358] sm:$0xff]
      %v282 = vld [vmem:[%s166 + $0x360] sm:$0xff]
      %v283 = vld [vmem:[%s166 + $0x368] sm:$0xff]
      %v284 = vld [vmem:[%s166 + $0x370] sm:$0xff]
      %v285 = vld [vmem:[%s166 + $0x378] sm:$0xff]
      %v286 = vld [vmem:[%s166 + $0x380] sm:$0xff]
      %v287 = vld [vmem:[%s166 + $0x388] sm:$0xff]
      %v288 = vld [vmem:[%s166 + $0x390] sm:$0xff]
      %v289 = vld [vmem:[%s166 + $0x398] sm:$0xff]
      %v290 = vld [vmem:[%s166 + $0x3a0] sm:$0xff]
      %v291 = vld [vmem:[%s166 + $0x3a8] sm:$0xff]
      %v292 = vld [vmem:[%s166 + $0x3b0] sm:$0xff]
      %v293 = vld [vmem:[%s166 + $0x3b8] sm:$0xff]
      %v294 = vld [vmem:[%s166 + $0x3c0] sm:$0xff]
      %v295 = vld [vmem:[%s166 + $0x3c8] sm:$0xff]
      %v296 = vld [vmem:[%s166 + $0x3d0] sm:$0xff]
      %v297 = vld [vmem:[%s166 + $0x3d8] sm:$0xff]
      %v298 = vld [vmem:[%s166 + $0x3e0] sm:$0xff]
      %v299 = vld [vmem:[%s166 + $0x3e8] sm:$0xff]
      %v300 = vld [vmem:[%s166 + $0x3f0] sm:$0xff]
      %v301 = vld [vmem:[%s166 + $0x3f8] sm:$0xff]
      %v302 = vld [vmem:[%s166 + $0x400] sm:$0xff]
      %v303 = vld [vmem:[%s166 + $0x408] sm:$0xff]
      %v304 = vld [vmem:[%s166 + $0x410] sm:$0xff]
      %v305 = vld [vmem:[%s166 + $0x418] sm:$0xff]
      %v306 = vld [vmem:[%s166 + $0x420] sm:$0xff]
      %v307 = vld [vmem:[%s166 + $0x428] sm:$0xff]
      %v308 = vld [vmem:[%s166 + $0x430] sm:$0xff]
      %v309 = vld [vmem:[%s166 + $0x438] sm:$0xff]
      %v310 = vld [vmem:[%s166 + $0x440] sm:$0xff]
      %v311 = vld [vmem:[%s166 + $0x448] sm:$0xff]
      %v312 = vld [vmem:[%s166 + $0x450] sm:$0xff]
      %v313 = vld [vmem:[%s166 + $0x458] sm:$0xff]
      %v314 = vld [vmem:[%s166 + $0x460] sm:$0xff]
      %v315 = vld [vmem:[%s166 + $0x468] sm:$0xff]
      %v316 = vld [vmem:[%s166 + $0x470] sm:$0xff]
      %v317 = vld [vmem:[%s166 + $0x478] sm:$0xff]
      %v318 = vld [vmem:[%s166 + $0x480] sm:$0xff]
      %v319 = vld [vmem:[%s166 + $0x488] sm:$0xff]
      %v320 = vld [vmem:[%s166 + $0x490] sm:$0xff]
      %v321 = vld [vmem:[%s166 + $0x498] sm:$0xff]
      %v322 = vld [vmem:[%s166 + $0x4a0] sm:$0xff]
      %v323 = vld [vmem:[%s166 + $0x4a8] sm:$0xff]
      %v324 = vld [vmem:[%s166 + $0x4b0] sm:$0xff]
      %v325 = vld [vmem:[%s166 + $0x4b8] sm:$0xff]
      %v326 = vld [vmem:[%s166 + $0x4c0] sm:$0xff]
      %v327 = vld [vmem:[%s166 + $0x4c8] sm:$0xff]
      %v328 = vld [vmem:[%s166 + $0x4d0] sm:$0xff]
      %v329 = vld [vmem:[%s166 + $0x4d8] sm:$0xff]
      %v330 = vld [vmem:[%s166 + $0x4e0] sm:$0xff]
      %v331 = vld [vmem:[%s166 + $0x4e8] sm:$0xff]
      %v332 = vld [vmem:[%s166 + $0x4f0] sm:$0xff]
      %v333 = vld [vmem:[%s166 + $0x4f8] sm:$0xff]
      %v334 = vld [vmem:[%s166 + $0x500] sm:$0xff]
      %v335 = vld [vmem:[%s166 + $0x508] sm:$0xff]
      %v336 = vld [vmem:[%s166 + $0x510] sm:$0xff]
      %v337 = vld [vmem:[%s166 + $0x518] sm:$0xff]
      %v338 = vld [vmem:[%s166 + $0x520] sm:$0xff]
      %v339 = vld [vmem:[%s166 + $0x528] sm:$0xff]
      %v340 = vld [vmem:[%s166 + $0x530] sm:$0xff]
      %v341 = vld [vmem:[%s166 + $0x538] sm:$0xff]
      %v342 = vld [vmem:[%s166 + $0x540] sm:$0xff]
      %v343 = vld [vmem:[%s166 + $0x548] sm:$0xff]
      %v344 = vld [vmem:[%s166 + $0x550] sm:$0xff]
      %v345 = vld [vmem:[%s166 + $0x558] sm:$0xff]
      %v346 = vld [vmem:[%s166 + $0x560] sm:$0xff]
      %v347 = vld [vmem:[%s166 + $0x568] sm:$0xff]
      %v348 = vld [vmem:[%s166 + $0x570] sm:$0xff]
      %v349 = vld [vmem:[%s166 + $0x578] sm:$0xff]
      %v350 = vld [vmem:[%s166 + $0x580] sm:$0xff]
      %v351 = vld [vmem:[%s166 + $0x588] sm:$0xff]
      %v352 = vld [vmem:[%s166 + $0x590] sm:$0xff]
      %v353 = vld [vmem:[%s166 + $0x598] sm:$0xff]
      %v354 = vld [vmem:[%s166 + $0x5a0] sm:$0xff]
      %v355 = vld [vmem:[%s166 + $0x5a8] sm:$0xff]
      %v356 = vld [vmem:[%s166 + $0x5b0] sm:$0xff]
      %v357 = vld [vmem:[%s166 + $0x5b8] sm:$0xff]
      %v358 = vld [vmem:[%s166 + $0x5c0] sm:$0xff]
      %v359 = vld [vmem:[%s166 + $0x5c8] sm:$0xff]
      %v360 = vld [vmem:[%s166 + $0x5d0] sm:$0xff]
      %v361 = vld [vmem:[%s166 + $0x5d8] sm:$0xff]
      %v362 = vld [vmem:[%s166 + $0x5e0] sm:$0xff]
      %v363 = vld [vmem:[%s166 + $0x5e8] sm:$0xff]
      %v364 = vld [vmem:[%s166 + $0x5f0] sm:$0xff]
      %v365 = vld [vmem:[%s166 + $0x5f8] sm:$0xff]
      %v366 = vld [vmem:[%s166 + $0x600] sm:$0xff]
      %v367 = vld [vmem:[%s166 + $0x608] sm:$0xff]
      %v368 = vld [vmem:[%s166 + $0x610] sm:$0xff]
      %v369 = vld [vmem:[%s166 + $0x618] sm:$0xff]
      %v370 = vld [vmem:[%s166 + $0x620] sm:$0xff]
      %v371 = vld [vmem:[%s166 + $0x628] sm:$0xff]
      %v372 = vld [vmem:[%s166 + $0x630] sm:$0xff]
      %v373 = vld [vmem:[%s166 + $0x638] sm:$0xff]
      %v374 = vld [vmem:[%s166 + $0x640] sm:$0xff]
      %v375 = vld [vmem:[%s166 + $0x648] sm:$0xff]
      %v376 = vld [vmem:[%s166 + $0x650] sm:$0xff]
      %v377 = vld [vmem:[%s166 + $0x658] sm:$0xff]
      %v378 = vld [vmem:[%s166 + $0x660] sm:$0xff]
      %v379 = vld [vmem:[%s166 + $0x668] sm:$0xff]
      %v380 = vld [vmem:[%s166 + $0x670] sm:$0xff]
      %v381 = vld [vmem:[%s166 + $0x678] sm:$0xff]
      %v382 = vld [vmem:[%s166 + $0x680] sm:$0xff]
      %v383 = vld [vmem:[%s166 + $0x688] sm:$0xff]
      %v384 = vld [vmem:[%s166 + $0x690] sm:$0xff]
      %v385 = vld [vmem:[%s166 + $0x698] sm:$0xff]
      %v386 = vld [vmem:[%s166 + $0x6a0] sm:$0xff]
      %v387 = vld [vmem:[%s166 + $0x6a8] sm:$0xff]
      %v388 = vld [vmem:[%s166 + $0x6b0] sm:$0xff]
      %v389 = vld [vmem:[%s166 + $0x6b8] sm:$0xff]
      %v390 = vld [vmem:[%s166 + $0x6c0] sm:$0xff]
      %v391 = vld [vmem:[%s166 + $0x6c8] sm:$0xff]
      %v392 = vld [vmem:[%s166 + $0x6d0] sm:$0xff]
      %v393 = vld [vmem:[%s166 + $0x6d8] sm:$0xff]
      %v394 = vld [vmem:[%s166 + $0x6e0] sm:$0xff]
      %v395 = vld [vmem:[%s166 + $0x6e8] sm:$0xff]
      %v396 = vld [vmem:[%s166 + $0x6f0] sm:$0xff]
      %v397 = vld [vmem:[%s166 + $0x6f8] sm:$0xff]
      %v398 = vld [vmem:[%s166 + $0x700] sm:$0xff]
      %v399 = vld [vmem:[%s166 + $0x708] sm:$0xff]
      %v400 = vld [vmem:[%s166 + $0x710] sm:$0xff]
      %v401 = vld [vmem:[%s166 + $0x718] sm:$0xff]
      %v402 = vld [vmem:[%s166 + $0x720] sm:$0xff]
      %v403 = vld [vmem:[%s166 + $0x728] sm:$0xff]
      %v404 = vld [vmem:[%s166 + $0x730] sm:$0xff]
      %v405 = vld [vmem:[%s166 + $0x738] sm:$0xff]
      %v406 = vld [vmem:[%s166 + $0x740] sm:$0xff]
      %v407 = vld [vmem:[%s166 + $0x748] sm:$0xff]
      %v408 = vld [vmem:[%s166 + $0x750] sm:$0xff]
      %v409 = vld [vmem:[%s166 + $0x758] sm:$0xff]
      %v410 = vld [vmem:[%s166 + $0x760] sm:$0xff]
      %v411 = vld [vmem:[%s166 + $0x768] sm:$0xff]
      %v412 = vld [vmem:[%s166 + $0x770] sm:$0xff]
      %v413 = vld [vmem:[%s166 + $0x778] sm:$0xff]
      %v414 = vld [vmem:[%s1] sm:$0xff]
      %v415 = vld [vmem:[%s1 + $0x8] sm:$0xff]
      %v416 = vld [vmem:[%s1 + $0x10] sm:$0xff]
      %v417 = vld [vmem:[%s1 + $0x18] sm:$0xff]
      %v418 = vld [vmem:[%s1 + $0x20] sm:$0xff]
      %v419 = vld [vmem:[%s1 + $0x28] sm:$0xff]
      %v420 = vld [vmem:[%s1 + $0x30] sm:$0xff]
      %v421 = vld [vmem:[%s1 + $0x38] sm:$0xff]
      %v422 = vld [vmem:[%s1 + $0x40] sm:$0xff]
      %v423 = vld [vmem:[%s1 + $0x48] sm:$0xff]
      %v424 = vld [vmem:[%s1 + $0x50] sm:$0xff]
      %v425 = vld [vmem:[%s1 + $0x58] sm:$0xff]
      %v426 = vld [vmem:[%s1 + $0x60] sm:$0xff]
      %v427 = vld [vmem:[%s1 + $0x68] sm:$0xff]
      %v428 = vld [vmem:[%s1 + $0x70] sm:$0xff]
      %v429 = vld [vmem:[%s1 + $0x78] sm:$0xff]
      %v430 = vld [vmem:[%s2] sm:$0x1]
      %v432 = vlaneseq
      %v433 = vshrl.u32 %v432, 7
      %v434 = vsub.s32 0, %v433
      %v435 = vrot.slane %v430, %v434
      %437 = vmatprep.subr.mxu0 0.0
      %438 = vmatpush1.msra.mxu0 %v414
      %439 = vmatprep.subr.mxu0 0.0
      %440 = vmatpush1.msra.mxu0 %v415
      %441 = vmatprep.subr.mxu0 0.0
      %442 = vmatpush1.msra.mxu0 %v416
      %443 = vmatprep.subr.mxu0 0.0
      %444 = vmatpush1.msra.mxu0 %v417
      %445 = vmatprep.subr.mxu0 0.0
      %446 = vmatpush1.msra.mxu0 %v418
      %447 = vmatprep.subr.mxu0 0.0
      %448 = vmatpush1.msra.mxu0 %v419
      %449 = vmatprep.subr.mxu0 0.0
      %450 = vmatpush1.msra.mxu0 %v420
      %451 = vmatprep.subr.mxu0 0.0
      %452 = vmatpush1.msra.mxu0 %v421
      %453 = vmatprep.subr.mxu0 0.0
      %454 = vmatpush1.msra.mxu0 %v422
      %455 = vmatprep.subr.mxu0 0.0
      %456 = vmatpush1.msra.mxu0 %v423
      %457 = vmatprep.subr.mxu0 0.0
      %458 = vmatpush1.msra.mxu0 %v424
      %459 = vmatprep.subr.mxu0 0.0
      %460 = vmatpush1.msra.mxu0 %v425
      %461 = vmatprep.subr.mxu0 0.0
      %462 = vmatpush1.msra.mxu0 %v426
      %463 = vmatprep.subr.mxu0 0.0
      %464 = vmatpush1.msra.mxu0 %v427
      %465 = vmatprep.subr.mxu0 0.0
      %466 = vmatpush1.msra.mxu0 %v428
      %467 = vmatprep.subr.mxu0 0.0
      %468 = vmatpush1.msra.mxu0 %v429
      %469 = vmatprep.subr.mxu0 0.0
      %470 = vmatpush1.msra.mxu0 0.0
      %471 = vmatprep.subr.mxu0 0.0
      %472 = vmatpush1.msra.mxu0 0.0
      %473 = vmatprep.subr.mxu0 0.0
      %474 = vmatpush1.msra.mxu0 0.0
      %475 = vmatprep.subr.mxu0 0.0
      %476 = vmatpush1.msra.mxu0 0.0
      %477 = vmatprep.subr.mxu0 0.0
      %478 = vmatpush1.msra.mxu0 0.0
      %479 = vmatprep.subr.mxu0 0.0
      %480 = vmatpush1.msra.mxu0 0.0
      %481 = vmatprep.subr.mxu0 0.0
      %482 = vmatpush1.msra.mxu0 0.0
      %483 = vmatprep.subr.mxu0 0.0
      %484 = vmatpush1.msra.mxu0 0.0
      %485 = vmatprep.subr.mxu0 0.0
      %486 = vmatpush1.msra.mxu0 0.0
      %487 = vmatprep.subr.mxu0 0.0
      %488 = vmatpush1.msra.mxu0 0.0
      %489 = vmatprep.subr.mxu0 0.0
      %490 = vmatpush1.msra.mxu0 0.0
      %491 = vmatprep.subr.mxu0 0.0
      %492 = vmatpush1.msra.mxu0 0.0
      %493 = vmatprep.subr.mxu0 0.0
      %494 = vmatpush1.msra.mxu0 0.0
      %495 = vmatprep.subr.mxu0 0.0
      %496 = vmatpush1.msra.mxu0 0.0
      %497 = vmatprep.subr.mxu0 0.0
      %498 = vmatpush1.msra.mxu0 0.0
      %499 = vmatprep.subr.mxu0 0.0
      %500 = vmatpush1.msra.mxu0 0.0
      %501 = vmatprep.mubr.f32.mxu0 0.0
      %502 = vmatmul.mubr.f32.gmra.mrb[0].mxu0 %v174
      %v503 = vpop.f32.mrb[0].mxu0
      %v504 = vadd.f32 %v435, %v503
      %v505 = vpop.f32.mrb[0].mxu0
      %506 = vmatprep.mubr.f32.mxu0 0.0
      %507 = vmatmul.mubr.f32.gmra.mrb[0].mxu0 %v175
      %v508 = vpop.f32.mrb[0].mxu0
      %v509 = vadd.f32 %v435, %v508
      %v510 = vpop.f32.mrb[0].mxu0
      %511 = vmatprep.mubr.f32.mxu0 0.0
      %512 = vmatmul.mubr.f32.gmra.mrb[0].mxu0 %v176
      %v513 = vpop.f32.mrb[0].mxu0
      %v514 = vadd.f32 %v435, %v513
      %v515 = vpop.f32.mrb[0].mxu0
      %516 = vmatprep.mubr.f32.mxu0 0.0
      %517 = vmatmul.mubr.f32.gmra.mrb[0].mxu0 %v177
      %v518 = vpop.f32.mrb[0].mxu0
      %v519 = vadd.f32 %v435, %v518
      %v520 = vpop.f32.mrb[0].mxu0
      %521 = vmatprep.mubr.f32.mxu0 0.0
      %522 = vmatmul.mubr.f32.gmra.mrb[0].mxu0 %v178
      %v523 = vpop.f32.mrb[0].mxu0
      %v524 = vadd.f32 %v435, %v523
      %v525 = vpop.f32.mrb[0].mxu0
      %526 = vmatprep.mubr.f32.mxu0 0.0
      %527 = vmatmul.mubr.f32.gmra.mrb[0].mxu0 %v179
      %v528 = vpop.f32.mrb[0].mxu0
      %v529 = vadd.f32 %v435, %v528
      %v530 = vpop.f32.mrb[0].mxu0
      %531 = vmatprep.mubr.f32.mxu0 0.0
      %532 = vmatmul.mubr.f32.gmra.mrb[0].mxu0 %v180
      %v533 = vpop.f32.mrb[0].mxu0
      %v534 = vadd.f32 %v435, %v533
      %v535 = vpop.f32.mrb[0].mxu0
      %536 = vmatprep.mubr.f32.mxu0 0.0
      %537 = vmatmul.mubr.f32.gmra.mrb[0].mxu0 %v181
      %v538 = vpop.f32.mrb[0].mxu0
      %v539 = vadd.f32 %v435, %v538
      %v540 = vpop.f32.mrb[0].mxu0
      %541 = vmatprep.mubr.f32.mxu0 0.0
      %542 = vmatmul.mubr.f32.gmra.mrb[0].mxu0 %v182
      %v543 = vpop.f32.mrb[0].mxu0
      %v544 = vadd.f32 %v435, %v543
      %v545 = vpop.f32.mrb[0].mxu0
      %546 = vmatprep.mubr.f32.mxu0 0.0
      %547 = vmatmul.mubr.f32.gmra.mrb[0].mxu0 %v183
      %v548 = vpop.f32.mrb[0].mxu0
      %v549 = vadd.f32 %v435, %v548
      %v550 = vpop.f32.mrb[0].mxu0
      %551 = vmatprep.mubr.f32.mxu0 0.0
      %552 = vmatmul.mubr.f32.gmra.mrb[0].mxu0 %v184
      %v553 = vpop.f32.mrb[0].mxu0
      %v554 = vadd.f32 %v435, %v553
      %v555 = vpop.f32.mrb[0].mxu0
      %556 = vmatprep.mubr.f32.mxu0 0.0
      %557 = vmatmul.mubr.f32.gmra.mrb[0].mxu0 %v185
      %v558 = vpop.f32.mrb[0].mxu0
      %v559 = vadd.f32 %v435, %v558
      %v560 = vpop.f32.mrb[0].mxu0
      %561 = vmatprep.mubr.f32.mxu0 0.0
      %562 = vmatmul.mubr.f32.gmra.mrb[0].mxu0 %v186
      %v563 = vpop.f32.mrb[0].mxu0
      %v564 = vadd.f32 %v435, %v563
      %v565 = vpop.f32.mrb[0].mxu0
      %566 = vmatprep.mubr.f32.mxu0 0.0
      %567 = vmatmul.mubr.f32.gmra.mrb[0].mxu0 %v187
      %v568 = vpop.f32.mrb[0].mxu0
      %v569 = vadd.f32 %v435, %v568
      %v570 = vpop.f32.mrb[0].mxu0
      %571 = vmatprep.mubr.f32.mxu0 0.0
      %572 = vmatmul.mubr.f32.gmra.mrb[0].mxu0 %v188
      %v573 = vpop.f32.mrb[0].mxu0
      %v574 = vadd.f32 %v435, %v573
      %v575 = vpop.f32.mrb[0].mxu0
      %576 = vmatprep.mubr.f32.mxu0 0.0
      %577 = vmatmul.mubr.f32.gmra.mrb[0].mxu0 %v189
      %v578 = vpop.f32.mrb[0].mxu0
      %v579 = vadd.f32 %v435, %v578
      %v580 = vpop.f32.mrb[0].mxu0
      %581 = vmatprep.mubr.f32.mxu0 0.0
      %582 = vmatmul.mubr.f32.gmra.mrb[0].mxu0 %v190
      %v583 = vpop.f32.mrb[0].mxu0
      %v584 = vadd.f32 %v435, %v583
      %v585 = vpop.f32.mrb[0].mxu0
      %586 = vmatprep.mubr.f32.mxu0 0.0
      %587 = vmatmul.mubr.f32.gmra.mrb[0].mxu0 %v191
      %v588 = vpop.f32.mrb[0].mxu0
      %v589 = vadd.f32 %v435, %v588
      %v590 = vpop.f32.mrb[0].mxu0
      %591 = vmatprep.mubr.f32.mxu0 0.0
      %592 = vmatmul.mubr.f32.gmra.mrb[0].mxu0 %v192
      %v593 = vpop.f32.mrb[0].mxu0
      %v594 = vadd.f32 %v435, %v593
      %v595 = vpop.f32.mrb[0].mxu0
      %596 = vmatprep.mubr.f32.mxu0 0.0
      %597 = vmatmul.mubr.f32.gmra.mrb[0].mxu0 %v193
      %v598 = vpop.f32.mrb[0].mxu0
      %v599 = vadd.f32 %v435, %v598
      %v600 = vpop.f32.mrb[0].mxu0
      %601 = vmatprep.mubr.f32.mxu0 0.0
      %602 = vmatmul.mubr.f32.gmra.mrb[0].mxu0 %v194
      %v603 = vpop.f32.mrb[0].mxu0
      %v604 = vadd.f32 %v435, %v603
      %v605 = vpop.f32.mrb[0].mxu0
      %606 = vmatprep.mubr.f32.mxu0 0.0
      %607 = vmatmul.mubr.f32.gmra.mrb[0].mxu0 %v195
      %v608 = vpop.f32.mrb[0].mxu0
      %v609 = vadd.f32 %v435, %v608
      %v610 = vpop.f32.mrb[0].mxu0
      %611 = vmatprep.mubr.f32.mxu0 0.0
      %612 = vmatmul.mubr.f32.gmra.mrb[0].mxu0 %v196
      %v613 = vpop.f32.mrb[0].mxu0
      %v614 = vadd.f32 %v435, %v613
      %v615 = vpop.f32.mrb[0].mxu0
      %616 = vmatprep.mubr.f32.mxu0 0.0
      %617 = vmatmul.mubr.f32.gmra.mrb[0].mxu0 %v197
      %v618 = vpop.f32.mrb[0].mxu0
      %v619 = vadd.f32 %v435, %v618
      %v620 = vpop.f32.mrb[0].mxu0
      %621 = vmatprep.mubr.f32.mxu0 0.0
      %622 = vmatmul.mubr.f32.gmra.mrb[0].mxu0 %v198
      %v623 = vpop.f32.mrb[0].mxu0
      %v624 = vadd.f32 %v435, %v623
      %v625 = vpop.f32.mrb[0].mxu0
      %626 = vmatprep.mubr.f32.mxu0 0.0
      %627 = vmatmul.mubr.f32.gmra.mrb[0].mxu0 %v199
      %v628 = vpop.f32.mrb[0].mxu0
      %v629 = vadd.f32 %v435, %v628
      %v630 = vpop.f32.mrb[0].mxu0
      %631 = vmatprep.mubr.f32.mxu0 0.0
      %632 = vmatmul.mubr.f32.gmra.mrb[0].mxu0 %v200
      %v633 = vpop.f32.mrb[0].mxu0
      %v634 = vadd.f32 %v435, %v633
      %v635 = vpop.f32.mrb[0].mxu0
      %636 = vmatprep.mubr.f32.mxu0 0.0
      %637 = vmatmul.mubr.f32.gmra.mrb[0].mxu0 %v201
      %v638 = vpop.f32.mrb[0].mxu0
      %v639 = vadd.f32 %v435, %v638
      %v640 = vpop.f32.mrb[0].mxu0
      %641 = vmatprep.mubr.f32.mxu0 0.0
      %642 = vmatmul.mubr.f32.gmra.mrb[0].mxu0 %v202
      %v643 = vpop.f32.mrb[0].mxu0
      %v644 = vadd.f32 %v435, %v643
      %v645 = vpop.f32.mrb[0].mxu0
      %646 = vmatprep.mubr.f32.mxu0 0.0
      %647 = vmatmul.mubr.f32.gmra.mrb[0].mxu0 %v203
      %v648 = vpop.f32.mrb[0].mxu0
      %v649 = vadd.f32 %v435, %v648
      %v650 = vpop.f32.mrb[0].mxu0
      %651 = vmatprep.mubr.f32.mxu0 0.0
      %652 = vmatmul.mubr.f32.gmra.mrb[0].mxu0 %v204
      %v653 = vpop.f32.mrb[0].mxu0
      %v654 = vadd.f32 %v435, %v653
      %v655 = vpop.f32.mrb[0].mxu0
      %656 = vmatprep.mubr.f32.mxu0 0.0
      %657 = vmatmul.mubr.f32.gmra.mrb[0].mxu0 %v205
      %v658 = vpop.f32.mrb[0].mxu0
      %v659 = vadd.f32 %v435, %v658
      %v660 = vpop.f32.mrb[0].mxu0
      %661 = vmatprep.mubr.f32.mxu0 0.0
      %662 = vmatmul.mubr.f32.gmra.mrb[0].mxu0 %v206
      %v663 = vpop.f32.mrb[0].mxu0
      %v664 = vadd.f32 %v435, %v663
      %v665 = vpop.f32.mrb[0].mxu0
      %666 = vmatprep.mubr.f32.mxu0 0.0
      %667 = vmatmul.mubr.f32.gmra.mrb[0].mxu0 %v207
      %v668 = vpop.f32.mrb[0].mxu0
      %v669 = vadd.f32 %v435, %v668
      %v670 = vpop.f32.mrb[0].mxu0
      %671 = vmatprep.mubr.f32.mxu0 0.0
      %672 = vmatmul.mubr.f32.gmra.mrb[0].mxu0 %v208
      %v673 = vpop.f32.mrb[0].mxu0
      %v674 = vadd.f32 %v435, %v673
      %v675 = vpop.f32.mrb[0].mxu0
      %676 = vmatprep.mubr.f32.mxu0 0.0
      %677 = vmatmul.mubr.f32.gmra.mrb[0].mxu0 %v209
      %v678 = vpop.f32.mrb[0].mxu0
      %v679 = vadd.f32 %v435, %v678
      %v680 = vpop.f32.mrb[0].mxu0
      %681 = vmatprep.mubr.f32.mxu0 0.0
      %682 = vmatmul.mubr.f32.gmra.mrb[0].mxu0 %v210
      %v683 = vpop.f32.mrb[0].mxu0
      %v684 = vadd.f32 %v435, %v683
      %v685 = vpop.f32.mrb[0].mxu0
      %686 = vmatprep.mubr.f32.mxu0 0.0
      %687 = vmatmul.mubr.f32.gmra.mrb[0].mxu0 %v211
      %v688 = vpop.f32.mrb[0].mxu0
      %v689 = vadd.f32 %v435, %v688
      %v690 = vpop.f32.mrb[0].mxu0
      %691 = vmatprep.mubr.f32.mxu0 0.0
      %692 = vmatmul.mubr.f32.gmra.mrb[0].mxu0 %v212
      %v693 = vpop.f32.mrb[0].mxu0
      %v694 = vadd.f32 %v435, %v693
      %v695 = vpop.f32.mrb[0].mxu0
      %696 = vmatprep.mubr.f32.mxu0 0.0
      %697 = vmatmul.mubr.f32.gmra.mrb[0].mxu0 %v213
      %v698 = vpop.f32.mrb[0].mxu0
      %v699 = vadd.f32 %v435, %v698
      %v700 = vpop.f32.mrb[0].mxu0
      %701 = vmatprep.mubr.f32.mxu0 0.0
      %702 = vmatmul.mubr.f32.gmra.mrb[0].mxu0 %v214
      %v703 = vpop.f32.mrb[0].mxu0
      %v704 = vadd.f32 %v435, %v703
      %v705 = vpop.f32.mrb[0].mxu0
      %706 = vmatprep.mubr.f32.mxu0 0.0
      %707 = vmatmul.mubr.f32.gmra.mrb[0].mxu0 %v215
      %v708 = vpop.f32.mrb[0].mxu0
      %v709 = vadd.f32 %v435, %v708
      %v710 = vpop.f32.mrb[0].mxu0
      %711 = vmatprep.mubr.f32.mxu0 0.0
      %712 = vmatmul.mubr.f32.gmra.mrb[0].mxu0 %v216
      %v713 = vpop.f32.mrb[0].mxu0
      %v714 = vadd.f32 %v435, %v713
      %v715 = vpop.f32.mrb[0].mxu0
      %716 = vmatprep.mubr.f32.mxu0 0.0
      %717 = vmatmul.mubr.f32.gmra.mrb[0].mxu0 %v217
      %v718 = vpop.f32.mrb[0].mxu0
      %v719 = vadd.f32 %v435, %v718
      %v720 = vpop.f32.mrb[0].mxu0
      %721 = vmatprep.mubr.f32.mxu0 0.0
      %722 = vmatmul.mubr.f32.gmra.mrb[0].mxu0 %v218
      %v723 = vpop.f32.mrb[0].mxu0
      %v724 = vadd.f32 %v435, %v723
      %v725 = vpop.f32.mrb[0].mxu0
      %726 = vmatprep.mubr.f32.mxu0 0.0
      %727 = vmatmul.mubr.f32.gmra.mrb[0].mxu0 %v219
      %v728 = vpop.f32.mrb[0].mxu0
      %v729 = vadd.f32 %v435, %v728
      %v730 = vpop.f32.mrb[0].mxu0
      %731 = vmatprep.mubr.f32.mxu0 0.0
      %732 = vmatmul.mubr.f32.gmra.mrb[0].mxu0 %v220
      %v733 = vpop.f32.mrb[0].mxu0
      %v734 = vadd.f32 %v435, %v733
      %v735 = vpop.f32.mrb[0].mxu0
      %736 = vmatprep.mubr.f32.mxu0 0.0
      %737 = vmatmul.mubr.f32.gmra.mrb[0].mxu0 %v221
      %v738 = vpop.f32.mrb[0].mxu0
      %v739 = vadd.f32 %v435, %v738
      %v740 = vpop.f32.mrb[0].mxu0
      %741 = vmatprep.mubr.f32.mxu0 0.0
      %742 = vmatmul.mubr.f32.gmra.mrb[0].mxu0 %v222
      %v743 = vpop.f32.mrb[0].mxu0
      %v744 = vadd.f32 %v435, %v743
      %v745 = vpop.f32.mrb[0].mxu0
      %746 = vmatprep.mubr.f32.mxu0 0.0
      %747 = vmatmul.mubr.f32.gmra.mrb[0].mxu0 %v223
      %v748 = vpop.f32.mrb[0].mxu0
      %v749 = vadd.f32 %v435, %v748
      %v750 = vpop.f32.mrb[0].mxu0
      %751 = vmatprep.mubr.f32.mxu0 0.0
      %752 = vmatmul.mubr.f32.gmra.mrb[0].mxu0 %v224
      %v753 = vpop.f32.mrb[0].mxu0
      %v754 = vadd.f32 %v435, %v753
      %v755 = vpop.f32.mrb[0].mxu0
      %756 = vmatprep.mubr.f32.mxu0 0.0
      %757 = vmatmul.mubr.f32.gmra.mrb[0].mxu0 %v225
      %v758 = vpop.f32.mrb[0].mxu0
      %v759 = vadd.f32 %v435, %v758
      %v760 = vpop.f32.mrb[0].mxu0
      %761 = vmatprep.mubr.f32.mxu0 0.0
      %762 = vmatmul.mubr.f32.gmra.mrb[0].mxu0 %v226
      %v763 = vpop.f32.mrb[0].mxu0
      %v764 = vadd.f32 %v435, %v763
      %v765 = vpop.f32.mrb[0].mxu0
      %766 = vmatprep.mubr.f32.mxu0 0.0
      %767 = vmatmul.mubr.f32.gmra.mrb[0].mxu0 %v227
      %v768 = vpop.f32.mrb[0].mxu0
      %v769 = vadd.f32 %v435, %v768
      %v770 = vpop.f32.mrb[0].mxu0
      %771 = vmatprep.mubr.f32.mxu0 0.0
      %772 = vmatmul.mubr.f32.gmra.mrb[0].mxu0 %v228
      %v773 = vpop.f32.mrb[0].mxu0
      %v774 = vadd.f32 %v435, %v773
      %v775 = vpop.f32.mrb[0].mxu0
      %776 = vmatprep.mubr.f32.mxu0 0.0
      %777 = vmatmul.mubr.f32.gmra.mrb[0].mxu0 %v229
      %v778 = vpop.f32.mrb[0].mxu0
      %v779 = vadd.f32 %v435, %v778
      %v780 = vpop.f32.mrb[0].mxu0
      %781 = vmatprep.mubr.f32.mxu0 0.0
      %782 = vmatmul.mubr.f32.gmra.mrb[0].mxu0 %v230
      %v783 = vpop.f32.mrb[0].mxu0
      %v784 = vadd.f32 %v435, %v783
      %v785 = vpop.f32.mrb[0].mxu0
      %786 = vmatprep.mubr.f32.mxu0 0.0
      %787 = vmatmul.mubr.f32.gmra.mrb[0].mxu0 %v231
      %v788 = vpop.f32.mrb[0].mxu0
      %v789 = vadd.f32 %v435, %v788
      %v790 = vpop.f32.mrb[0].mxu0
      %791 = vmatprep.mubr.f32.mxu0 0.0
      %792 = vmatmul.mubr.f32.gmra.mrb[0].mxu0 %v232
      %v793 = vpop.f32.mrb[0].mxu0
      %v794 = vadd.f32 %v435, %v793
      %v795 = vpop.f32.mrb[0].mxu0
      %796 = vmatprep.mubr.f32.mxu0 0.0
      %797 = vmatmul.mubr.f32.gmra.mrb[0].mxu0 %v233
      %v798 = vpop.f32.mrb[0].mxu0
      %v799 = vadd.f32 %v435, %v798
      %v800 = vpop.f32.mrb[0].mxu0
      %801 = vmatprep.mubr.f32.mxu0 0.0
      %802 = vmatmul.mubr.f32.gmra.mrb[0].mxu0 %v234
      %v803 = vpop.f32.mrb[0].mxu0
      %v804 = vadd.f32 %v435, %v803
      %v805 = vpop.f32.mrb[0].mxu0
      %806 = vmatprep.mubr.f32.mxu0 0.0
      %807 = vmatmul.mubr.f32.gmra.mrb[0].mxu0 %v235
      %v808 = vpop.f32.mrb[0].mxu0
      %v809 = vadd.f32 %v435, %v808
      %v810 = vpop.f32.mrb[0].mxu0
      %811 = vmatprep.mubr.f32.mxu0 0.0
      %812 = vmatmul.mubr.f32.gmra.mrb[0].mxu0 %v236
      %v813 = vpop.f32.mrb[0].mxu0
      %v814 = vadd.f32 %v435, %v813
      %v815 = vpop.f32.mrb[0].mxu0
      %816 = vmatprep.mubr.f32.mxu0 0.0
      %817 = vmatmul.mubr.f32.gmra.mrb[0].mxu0 %v237
      %v818 = vpop.f32.mrb[0].mxu0
      %v819 = vadd.f32 %v435, %v818
      %v820 = vpop.f32.mrb[0].mxu0
      %821 = vmatprep.mubr.f32.mxu0 0.0
      %822 = vmatmul.mubr.f32.gmra.mrb[0].mxu0 %v238
      %v823 = vpop.f32.mrb[0].mxu0
      %v824 = vadd.f32 %v435, %v823
      %v825 = vpop.f32.mrb[0].mxu0
      %826 = vmatprep.mubr.f32.mxu0 0.0
      %827 = vmatmul.mubr.f32.gmra.mrb[0].mxu0 %v239
      %v828 = vpop.f32.mrb[0].mxu0
      %v829 = vadd.f32 %v435, %v828
      %v830 = vpop.f32.mrb[0].mxu0
      %831 = vmatprep.mubr.f32.mxu0 0.0
      %832 = vmatmul.mubr.f32.gmra.mrb[0].mxu0 %v240
      %v833 = vpop.f32.mrb[0].mxu0
      %v834 = vadd.f32 %v435, %v833
      %v835 = vpop.f32.mrb[0].mxu0
      %836 = vmatprep.mubr.f32.mxu0 0.0
      %837 = vmatmul.mubr.f32.gmra.mrb[0].mxu0 %v241
      %v838 = vpop.f32.mrb[0].mxu0
      %v839 = vadd.f32 %v435, %v838
      %v840 = vpop.f32.mrb[0].mxu0
      %841 = vmatprep.mubr.f32.mxu0 0.0
      %842 = vmatmul.mubr.f32.gmra.mrb[0].mxu0 %v242
      %v843 = vpop.f32.mrb[0].mxu0
      %v844 = vadd.f32 %v435, %v843
      %v845 = vpop.f32.mrb[0].mxu0
      %846 = vmatprep.mubr.f32.mxu0 0.0
      %847 = vmatmul.mubr.f32.gmra.mrb[0].mxu0 %v243
      %v848 = vpop.f32.mrb[0].mxu0
      %v849 = vadd.f32 %v435, %v848
      %v850 = vpop.f32.mrb[0].mxu0
      %851 = vmatprep.mubr.f32.mxu0 0.0
      %852 = vmatmul.mubr.f32.gmra.mrb[0].mxu0 %v244
      %v853 = vpop.f32.mrb[0].mxu0
      %v854 = vadd.f32 %v435, %v853
      %v855 = vpop.f32.mrb[0].mxu0
      %856 = vmatprep.mubr.f32.mxu0 0.0
      %857 = vmatmul.mubr.f32.gmra.mrb[0].mxu0 %v245
      %v858 = vpop.f32.mrb[0].mxu0
      %v859 = vadd.f32 %v435, %v858
      %v860 = vpop.f32.mrb[0].mxu0
      %861 = vmatprep.mubr.f32.mxu0 0.0
      %862 = vmatmul.mubr.f32.gmra.mrb[0].mxu0 %v246
      %v863 = vpop.f32.mrb[0].mxu0
      %v864 = vadd.f32 %v435, %v863
      %v865 = vpop.f32.mrb[0].mxu0
      %866 = vmatprep.mubr.f32.mxu0 0.0
      %867 = vmatmul.mubr.f32.gmra.mrb[0].mxu0 %v247
      %v868 = vpop.f32.mrb[0].mxu0
      %v869 = vadd.f32 %v435, %v868
      %v870 = vpop.f32.mrb[0].mxu0
      %871 = vmatprep.mubr.f32.mxu0 0.0
      %872 = vmatmul.mubr.f32.gmra.mrb[0].mxu0 %v248
      %v873 = vpop.f32.mrb[0].mxu0
      %v874 = vadd.f32 %v435, %v873
      %v875 = vpop.f32.mrb[0].mxu0
      %876 = vmatprep.mubr.f32.mxu0 0.0
      %877 = vmatmul.mubr.f32.gmra.mrb[0].mxu0 %v249
      %v878 = vpop.f32.mrb[0].mxu0
      %v879 = vadd.f32 %v435, %v878
      %v880 = vpop.f32.mrb[0].mxu0
      %881 = vmatprep.mubr.f32.mxu0 0.0
      %882 = vmatmul.mubr.f32.gmra.mrb[0].mxu0 %v250
      %v883 = vpop.f32.mrb[0].mxu0
      %v884 = vadd.f32 %v435, %v883
      %v885 = vpop.f32.mrb[0].mxu0
      %886 = vmatprep.mubr.f32.mxu0 0.0
      %887 = vmatmul.mubr.f32.gmra.mrb[0].mxu0 %v251
      %v888 = vpop.f32.mrb[0].mxu0
      %v889 = vadd.f32 %v435, %v888
      %v890 = vpop.f32.mrb[0].mxu0
      %891 = vmatprep.mubr.f32.mxu0 0.0
      %892 = vmatmul.mubr.f32.gmra.mrb[0].mxu0 %v252
      %v893 = vpop.f32.mrb[0].mxu0
      %v894 = vadd.f32 %v435, %v893
      %v895 = vpop.f32.mrb[0].mxu0
      %896 = vmatprep.mubr.f32.mxu0 0.0
      %897 = vmatmul.mubr.f32.gmra.mrb[0].mxu0 %v253
      %v898 = vpop.f32.mrb[0].mxu0
      %v899 = vadd.f32 %v435, %v898
      %v900 = vpop.f32.mrb[0].mxu0
      %901 = vmatprep.mubr.f32.mxu0 0.0
      %902 = vmatmul.mubr.f32.gmra.mrb[0].mxu0 %v254
      %v903 = vpop.f32.mrb[0].mxu0
      %v904 = vadd.f32 %v435, %v903
      %v905 = vpop.f32.mrb[0].mxu0
      %906 = vmatprep.mubr.f32.mxu0 0.0
      %907 = vmatmul.mubr.f32.gmra.mrb[0].mxu0 %v255
      %v908 = vpop.f32.mrb[0].mxu0
      %v909 = vadd.f32 %v435, %v908
      %v910 = vpop.f32.mrb[0].mxu0
      %911 = vmatprep.mubr.f32.mxu0 0.0
      %912 = vmatmul.mubr.f32.gmra.mrb[0].mxu0 %v256
      %v913 = vpop.f32.mrb[0].mxu0
      %v914 = vadd.f32 %v435, %v913
      %v915 = vpop.f32.mrb[0].mxu0
      %916 = vmatprep.mubr.f32.mxu0 0.0
      %917 = vmatmul.mubr.f32.gmra.mrb[0].mxu0 %v257
      %v918 = vpop.f32.mrb[0].mxu0
      %v919 = vadd.f32 %v435, %v918
      %v920 = vpop.f32.mrb[0].mxu0
      %921 = vmatprep.mubr.f32.mxu0 0.0
      %922 = vmatmul.mubr.f32.gmra.mrb[0].mxu0 %v258
      %v923 = vpop.f32.mrb[0].mxu0
      %v924 = vadd.f32 %v435, %v923
      %v925 = vpop.f32.mrb[0].mxu0
      %926 = vmatprep.mubr.f32.mxu0 0.0
      %927 = vmatmul.mubr.f32.gmra.mrb[0].mxu0 %v259
      %v928 = vpop.f32.mrb[0].mxu0
      %v929 = vadd.f32 %v435, %v928
      %v930 = vpop.f32.mrb[0].mxu0
      %931 = vmatprep.mubr.f32.mxu0 0.0
      %932 = vmatmul.mubr.f32.gmra.mrb[0].mxu0 %v260
      %v933 = vpop.f32.mrb[0].mxu0
      %v934 = vadd.f32 %v435, %v933
      %v935 = vpop.f32.mrb[0].mxu0
      %936 = vmatprep.mubr.f32.mxu0 0.0
      %937 = vmatmul.mubr.f32.gmra.mrb[0].mxu0 %v261
      %v938 = vpop.f32.mrb[0].mxu0
      %v939 = vadd.f32 %v435, %v938
      %v940 = vpop.f32.mrb[0].mxu0
      %941 = vmatprep.mubr.f32.mxu0 0.0
      %942 = vmatmul.mubr.f32.gmra.mrb[0].mxu0 %v262
      %v943 = vpop.f32.mrb[0].mxu0
      %v944 = vadd.f32 %v435, %v943
      %v945 = vpop.f32.mrb[0].mxu0
      %946 = vmatprep.mubr.f32.mxu0 0.0
      %947 = vmatmul.mubr.f32.gmra.mrb[0].mxu0 %v263
      %v948 = vpop.f32.mrb[0].mxu0
      %v949 = vadd.f32 %v435, %v948
      %v950 = vpop.f32.mrb[0].mxu0
      %951 = vmatprep.mubr.f32.mxu0 0.0
      %952 = vmatmul.mubr.f32.gmra.mrb[0].mxu0 %v264
      %v953 = vpop.f32.mrb[0].mxu0
      %v954 = vadd.f32 %v435, %v953
      %v955 = vpop.f32.mrb[0].mxu0
      %956 = vmatprep.mubr.f32.mxu0 0.0
      %957 = vmatmul.mubr.f32.gmra.mrb[0].mxu0 %v265
      %v958 = vpop.f32.mrb[0].mxu0
      %v959 = vadd.f32 %v435, %v958
      %v960 = vpop.f32.mrb[0].mxu0
      %961 = vmatprep.mubr.f32.mxu0 0.0
      %962 = vmatmul.mubr.f32.gmra.mrb[0].mxu0 %v266
      %v963 = vpop.f32.mrb[0].mxu0
      %v964 = vadd.f32 %v435, %v963
      %v965 = vpop.f32.mrb[0].mxu0
      %966 = vmatprep.mubr.f32.mxu0 0.0
      %967 = vmatmul.mubr.f32.gmra.mrb[0].mxu0 %v267
      %v968 = vpop.f32.mrb[0].mxu0
      %v969 = vadd.f32 %v435, %v968
      %v970 = vpop.f32.mrb[0].mxu0
      %971 = vmatprep.mubr.f32.mxu0 0.0
      %972 = vmatmul.mubr.f32.gmra.mrb[0].mxu0 %v268
      %v973 = vpop.f32.mrb[0].mxu0
      %v974 = vadd.f32 %v435, %v973
      %v975 = vpop.f32.mrb[0].mxu0
      %976 = vmatprep.mubr.f32.mxu0 0.0
      %977 = vmatmul.mubr.f32.gmra.mrb[0].mxu0 %v269
      %v978 = vpop.f32.mrb[0].mxu0
      %v979 = vadd.f32 %v435, %v978
      %v980 = vpop.f32.mrb[0].mxu0
      %981 = vmatprep.mubr.f32.mxu0 0.0
      %982 = vmatmul.mubr.f32.gmra.mrb[0].mxu0 %v270
      %v983 = vpop.f32.mrb[0].mxu0
      %v984 = vadd.f32 %v435, %v983
      %v985 = vpop.f32.mrb[0].mxu0
      %986 = vmatprep.mubr.f32.mxu0 0.0
      %987 = vmatmul.mubr.f32.gmra.mrb[0].mxu0 %v271
      %v988 = vpop.f32.mrb[0].mxu0
      %v989 = vadd.f32 %v435, %v988
      %v990 = vpop.f32.mrb[0].mxu0
      %991 = vmatprep.mubr.f32.mxu0 0.0
      %992 = vmatmul.mubr.f32.gmra.mrb[0].mxu0 %v272
      %v993 = vpop.f32.mrb[0].mxu0
      %v994 = vadd.f32 %v435, %v993
      %v995 = vpop.f32.mrb[0].mxu0
      %996 = vmatprep.mubr.f32.mxu0 0.0
      %997 = vmatmul.mubr.f32.gmra.mrb[0].mxu0 %v273
      %v998 = vpop.f32.mrb[0].mxu0
      %v999 = vadd.f32 %v435, %v998
      %v1000 = vpop.f32.mrb[0].mxu0
      %1001 = vmatprep.mubr.f32.mxu0 0.0
      %1002 = vmatmul.mubr.f32.gmra.mrb[0].mxu0 %v274
      %v1003 = vpop.f32.mrb[0].mxu0
      %v1004 = vadd.f32 %v435, %v1003
      %v1005 = vpop.f32.mrb[0].mxu0
      %1006 = vmatprep.mubr.f32.mxu0 0.0
      %1007 = vmatmul.mubr.f32.gmra.mrb[0].mxu0 %v275
      %v1008 = vpop.f32.mrb[0].mxu0
      %v1009 = vadd.f32 %v435, %v1008
      %v1010 = vpop.f32.mrb[0].mxu0
      %1011 = vmatprep.mubr.f32.mxu0 0.0
      %1012 = vmatmul.mubr.f32.gmra.mrb[0].mxu0 %v276
      %v1013 = vpop.f32.mrb[0].mxu0
      %v1014 = vadd.f32 %v435, %v1013
      %v1015 = vpop.f32.mrb[0].mxu0
      %1016 = vmatprep.mubr.f32.mxu0 0.0
      %1017 = vmatmul.mubr.f32.gmra.mrb[0].mxu0 %v277
      %v1018 = vpop.f32.mrb[0].mxu0
      %v1019 = vadd.f32 %v435, %v1018
      %v1020 = vpop.f32.mrb[0].mxu0
      %1021 = vmatprep.mubr.f32.mxu0 0.0
      %1022 = vmatmul.mubr.f32.gmra.mrb[0].mxu0 %v278
      %v1023 = vpop.f32.mrb[0].mxu0
      %v1024 = vadd.f32 %v435, %v1023
      %v1025 = vpop.f32.mrb[0].mxu0
      %1026 = vmatprep.mubr.f32.mxu0 0.0
      %1027 = vmatmul.mubr.f32.gmra.mrb[0].mxu0 %v279
      %v1028 = vpop.f32.mrb[0].mxu0
      %v1029 = vadd.f32 %v435, %v1028
      %v1030 = vpop.f32.mrb[0].mxu0
      %1031 = vmatprep.mubr.f32.mxu0 0.0
      %1032 = vmatmul.mubr.f32.gmra.mrb[0].mxu0 %v280
      %v1033 = vpop.f32.mrb[0].mxu0
      %v1034 = vadd.f32 %v435, %v1033
      %v1035 = vpop.f32.mrb[0].mxu0
      %1036 = vmatprep.mubr.f32.mxu0 0.0
      %1037 = vmatmul.mubr.f32.gmra.mrb[0].mxu0 %v281
      %v1038 = vpop.f32.mrb[0].mxu0
      %v1039 = vadd.f32 %v435, %v1038
      %v1040 = vpop.f32.mrb[0].mxu0
      %1041 = vmatprep.mubr.f32.mxu0 0.0
      %1042 = vmatmul.mubr.f32.gmra.mrb[0].mxu0 %v282
      %v1043 = vpop.f32.mrb[0].mxu0
      %v1044 = vadd.f32 %v435, %v1043
      %v1045 = vpop.f32.mrb[0].mxu0
      %1046 = vmatprep.mubr.f32.mxu0 0.0
      %1047 = vmatmul.mubr.f32.gmra.mrb[0].mxu0 %v283
      %v1048 = vpop.f32.mrb[0].mxu0
      %v1049 = vadd.f32 %v435, %v1048
      %v1050 = vpop.f32.mrb[0].mxu0
      %1051 = vmatprep.mubr.f32.mxu0 0.0
      %1052 = vmatmul.mubr.f32.gmra.mrb[0].mxu0 %v284
      %v1053 = vpop.f32.mrb[0].mxu0
      %v1054 = vadd.f32 %v435, %v1053
      %v1055 = vpop.f32.mrb[0].mxu0
      %1056 = vmatprep.mubr.f32.mxu0 0.0
      %1057 = vmatmul.mubr.f32.gmra.mrb[0].mxu0 %v285
      %v1058 = vpop.f32.mrb[0].mxu0
      %v1059 = vadd.f32 %v435, %v1058
      %v1060 = vpop.f32.mrb[0].mxu0
      %1061 = vmatprep.mubr.f32.mxu0 0.0
      %1062 = vmatmul.mubr.f32.gmra.mrb[0].mxu0 %v286
      %v1063 = vpop.f32.mrb[0].mxu0
      %v1064 = vadd.f32 %v435, %v1063
      %v1065 = vpop.f32.mrb[0].mxu0
      %1066 = vmatprep.mubr.f32.mxu0 0.0
      %1067 = vmatmul.mubr.f32.gmra.mrb[0].mxu0 %v287
      %v1068 = vpop.f32.mrb[0].mxu0
      %v1069 = vadd.f32 %v435, %v1068
      %v1070 = vpop.f32.mrb[0].mxu0
      %1071 = vmatprep.mubr.f32.mxu0 0.0
      %1072 = vmatmul.mubr.f32.gmra.mrb[0].mxu0 %v288
      %v1073 = vpop.f32.mrb[0].mxu0
      %v1074 = vadd.f32 %v435, %v1073
      %v1075 = vpop.f32.mrb[0].mxu0
      %1076 = vmatprep.mubr.f32.mxu0 0.0
      %1077 = vmatmul.mubr.f32.gmra.mrb[0].mxu0 %v289
      %v1078 = vpop.f32.mrb[0].mxu0
      %v1079 = vadd.f32 %v435, %v1078
      %v1080 = vpop.f32.mrb[0].mxu0
      %1081 = vmatprep.mubr.f32.mxu0 0.0
      %1082 = vmatmul.mubr.f32.gmra.mrb[0].mxu0 %v290
      %v1083 = vpop.f32.mrb[0].mxu0
      %v1084 = vadd.f32 %v435, %v1083
      %v1085 = vpop.f32.mrb[0].mxu0
      %1086 = vmatprep.mubr.f32.mxu0 0.0
      %1087 = vmatmul.mubr.f32.gmra.mrb[0].mxu0 %v291
      %v1088 = vpop.f32.mrb[0].mxu0
      %v1089 = vadd.f32 %v435, %v1088
      %v1090 = vpop.f32.mrb[0].mxu0
      %1091 = vmatprep.mubr.f32.mxu0 0.0
      %1092 = vmatmul.mubr.f32.gmra.mrb[0].mxu0 %v292
      %v1093 = vpop.f32.mrb[0].mxu0
      %v1094 = vadd.f32 %v435, %v1093
      %v1095 = vpop.f32.mrb[0].mxu0
      %1096 = vmatprep.mubr.f32.mxu0 0.0
      %1097 = vmatmul.mubr.f32.gmra.mrb[0].mxu0 %v293
      %v1098 = vpop.f32.mrb[0].mxu0
      %v1099 = vadd.f32 %v435, %v1098
      %v1100 = vpop.f32.mrb[0].mxu0
      %1101 = vmatprep.mubr.f32.mxu0 0.0
      %1102 = vmatmul.mubr.f32.gmra.mrb[0].mxu0 %v294
      %v1103 = vpop.f32.mrb[0].mxu0
      %v1104 = vadd.f32 %v435, %v1103
      %v1105 = vpop.f32.mrb[0].mxu0
      %1106 = vmatprep.mubr.f32.mxu0 0.0
      %1107 = vmatmul.mubr.f32.gmra.mrb[0].mxu0 %v295
      %v1108 = vpop.f32.mrb[0].mxu0
      %v1109 = vadd.f32 %v435, %v1108
      %v1110 = vpop.f32.mrb[0].mxu0
      %1111 = vmatprep.mubr.f32.mxu0 0.0
      %1112 = vmatmul.mubr.f32.gmra.mrb[0].mxu0 %v296
      %v1113 = vpop.f32.mrb[0].mxu0
      %v1114 = vadd.f32 %v435, %v1113
      %v1115 = vpop.f32.mrb[0].mxu0
      %1116 = vmatprep.mubr.f32.mxu0 0.0
      %1117 = vmatmul.mubr.f32.gmra.mrb[0].mxu0 %v297
      %v1118 = vpop.f32.mrb[0].mxu0
      %v1119 = vadd.f32 %v435, %v1118
      %v1120 = vpop.f32.mrb[0].mxu0
      %1121 = vmatprep.mubr.f32.mxu0 0.0
      %1122 = vmatmul.mubr.f32.gmra.mrb[0].mxu0 %v298
      %v1123 = vpop.f32.mrb[0].mxu0
      %v1124 = vadd.f32 %v435, %v1123
      %v1125 = vpop.f32.mrb[0].mxu0
      %1126 = vmatprep.mubr.f32.mxu0 0.0
      %1127 = vmatmul.mubr.f32.gmra.mrb[0].mxu0 %v299
      %v1128 = vpop.f32.mrb[0].mxu0
      %v1129 = vadd.f32 %v435, %v1128
      %v1130 = vpop.f32.mrb[0].mxu0
      %1131 = vmatprep.mubr.f32.mxu0 0.0
      %1132 = vmatmul.mubr.f32.gmra.mrb[0].mxu0 %v300
      %v1133 = vpop.f32.mrb[0].mxu0
      %v1134 = vadd.f32 %v435, %v1133
      %v1135 = vpop.f32.mrb[0].mxu0
      %1136 = vmatprep.mubr.f32.mxu0 0.0
      %1137 = vmatmul.mubr.f32.gmra.mrb[0].mxu0 %v301
      %v1138 = vpop.f32.mrb[0].mxu0
      %v1139 = vadd.f32 %v435, %v1138
      %v1140 = vpop.f32.mrb[0].mxu0
      %1141 = vmatprep.mubr.f32.mxu0 0.0
      %1142 = vmatmul.mubr.f32.gmra.mrb[0].mxu0 %v302
      %v1143 = vpop.f32.mrb[0].mxu0
      %v1144 = vadd.f32 %v435, %v1143
      %v1145 = vpop.f32.mrb[0].mxu0
      %1146 = vmatprep.mubr.f32.mxu0 0.0
      %1147 = vmatmul.mubr.f32.gmra.mrb[0].mxu0 %v303
      %v1148 = vpop.f32.mrb[0].mxu0
      %v1149 = vadd.f32 %v435, %v1148
      %v1150 = vpop.f32.mrb[0].mxu0
      %1151 = vmatprep.mubr.f32.mxu0 0.0
      %1152 = vmatmul.mubr.f32.gmra.mrb[0].mxu0 %v304
      %v1153 = vpop.f32.mrb[0].mxu0
      %v1154 = vadd.f32 %v435, %v1153
      %v1155 = vpop.f32.mrb[0].mxu0
      %1156 = vmatprep.mubr.f32.mxu0 0.0
      %1157 = vmatmul.mubr.f32.gmra.mrb[0].mxu0 %v305
      %v1158 = vpop.f32.mrb[0].mxu0
      %v1159 = vadd.f32 %v435, %v1158
      %v1160 = vpop.f32.mrb[0].mxu0
      %1161 = vmatprep.mubr.f32.mxu0 0.0
      %1162 = vmatmul.mubr.f32.gmra.mrb[0].mxu0 %v306
      %v1163 = vpop.f32.mrb[0].mxu0
      %v1164 = vadd.f32 %v435, %v1163
      %v1165 = vpop.f32.mrb[0].mxu0
      %1166 = vmatprep.mubr.f32.mxu0 0.0
      %1167 = vmatmul.mubr.f32.gmra.mrb[0].mxu0 %v307
      %v1168 = vpop.f32.mrb[0].mxu0
      %v1169 = vadd.f32 %v435, %v1168
      %v1170 = vpop.f32.mrb[0].mxu0
      %1171 = vmatprep.mubr.f32.mxu0 0.0
      %1172 = vmatmul.mubr.f32.gmra.mrb[0].mxu0 %v308
      %v1173 = vpop.f32.mrb[0].mxu0
      %v1174 = vadd.f32 %v435, %v1173
      %v1175 = vpop.f32.mrb[0].mxu0
      %1176 = vmatprep.mubr.f32.mxu0 0.0
      %1177 = vmatmul.mubr.f32.gmra.mrb[0].mxu0 %v309
      %v1178 = vpop.f32.mrb[0].mxu0
      %v1179 = vadd.f32 %v435, %v1178
      %v1180 = vpop.f32.mrb[0].mxu0
      %1181 = vmatprep.mubr.f32.mxu0 0.0
      %1182 = vmatmul.mubr.f32.gmra.mrb[0].mxu0 %v310
      %v1183 = vpop.f32.mrb[0].mxu0
      %v1184 = vadd.f32 %v435, %v1183
      %v1185 = vpop.f32.mrb[0].mxu0
      %1186 = vmatprep.mubr.f32.mxu0 0.0
      %1187 = vmatmul.mubr.f32.gmra.mrb[0].mxu0 %v311
      %v1188 = vpop.f32.mrb[0].mxu0
      %v1189 = vadd.f32 %v435, %v1188
      %v1190 = vpop.f32.mrb[0].mxu0
      %1191 = vmatprep.mubr.f32.mxu0 0.0
      %1192 = vmatmul.mubr.f32.gmra.mrb[0].mxu0 %v312
      %v1193 = vpop.f32.mrb[0].mxu0
      %v1194 = vadd.f32 %v435, %v1193
      %v1195 = vpop.f32.mrb[0].mxu0
      %1196 = vmatprep.mubr.f32.mxu0 0.0
      %1197 = vmatmul.mubr.f32.gmra.mrb[0].mxu0 %v313
      %v1198 = vpop.f32.mrb[0].mxu0
      %v1199 = vadd.f32 %v435, %v1198
      %v1200 = vpop.f32.mrb[0].mxu0
      %1201 = vmatprep.mubr.f32.mxu0 0.0
      %1202 = vmatmul.mubr.f32.gmra.mrb[0].mxu0 %v314
      %v1203 = vpop.f32.mrb[0].mxu0
      %v1204 = vadd.f32 %v435, %v1203
      %v1205 = vpop.f32.mrb[0].mxu0
      %1206 = vmatprep.mubr.f32.mxu0 0.0
      %1207 = vmatmul.mubr.f32.gmra.mrb[0].mxu0 %v315
      %v1208 = vpop.f32.mrb[0].mxu0
      %v1209 = vadd.f32 %v435, %v1208
      %v1210 = vpop.f32.mrb[0].mxu0
      %1211 = vmatprep.mubr.f32.mxu0 0.0
      %1212 = vmatmul.mubr.f32.gmra.mrb[0].mxu0 %v316
      %v1213 = vpop.f32.mrb[0].mxu0
      %v1214 = vadd.f32 %v435, %v1213
      %v1215 = vpop.f32.mrb[0].mxu0
      %1216 = vmatprep.mubr.f32.mxu0 0.0
      %1217 = vmatmul.mubr.f32.gmra.mrb[0].mxu0 %v317
      %v1218 = vpop.f32.mrb[0].mxu0
      %v1219 = vadd.f32 %v435, %v1218
      %v1220 = vpop.f32.mrb[0].mxu0
      %1221 = vmatprep.mubr.f32.mxu0 0.0
      %1222 = vmatmul.mubr.f32.gmra.mrb[0].mxu0 %v318
      %v1223 = vpop.f32.mrb[0].mxu0
      %v1224 = vadd.f32 %v435, %v1223
      %v1225 = vpop.f32.mrb[0].mxu0
      %1226 = vmatprep.mubr.f32.mxu0 0.0
      %1227 = vmatmul.mubr.f32.gmra.mrb[0].mxu0 %v319
      %v1228 = vpop.f32.mrb[0].mxu0
      %v1229 = vadd.f32 %v435, %v1228
      %v1230 = vpop.f32.mrb[0].mxu0
      %1231 = vmatprep.mubr.f32.mxu0 0.0
      %1232 = vmatmul.mubr.f32.gmra.mrb[0].mxu0 %v320
      %v1233 = vpop.f32.mrb[0].mxu0
      %v1234 = vadd.f32 %v435, %v1233
      %v1235 = vpop.f32.mrb[0].mxu0
      %1236 = vmatprep.mubr.f32.mxu0 0.0
      %1237 = vmatmul.mubr.f32.gmra.mrb[0].mxu0 %v321
      %v1238 = vpop.f32.mrb[0].mxu0
      %v1239 = vadd.f32 %v435, %v1238
      %v1240 = vpop.f32.mrb[0].mxu0
      %1241 = vmatprep.mubr.f32.mxu0 0.0
      %1242 = vmatmul.mubr.f32.gmra.mrb[0].mxu0 %v322
      %v1243 = vpop.f32.mrb[0].mxu0
      %v1244 = vadd.f32 %v435, %v1243
      %v1245 = vpop.f32.mrb[0].mxu0
      %1246 = vmatprep.mubr.f32.mxu0 0.0
      %1247 = vmatmul.mubr.f32.gmra.mrb[0].mxu0 %v323
      %v1248 = vpop.f32.mrb[0].mxu0
      %v1249 = vadd.f32 %v435, %v1248
      %v1250 = vpop.f32.mrb[0].mxu0
      %1251 = vmatprep.mubr.f32.mxu0 0.0
      %1252 = vmatmul.mubr.f32.gmra.mrb[0].mxu0 %v324
      %v1253 = vpop.f32.mrb[0].mxu0
      %v1254 = vadd.f32 %v435, %v1253
      %v1255 = vpop.f32.mrb[0].mxu0
      %1256 = vmatprep.mubr.f32.mxu0 0.0
      %1257 = vmatmul.mubr.f32.gmra.mrb[0].mxu0 %v325
      %v1258 = vpop.f32.mrb[0].mxu0
      %v1259 = vadd.f32 %v435, %v1258
      %v1260 = vpop.f32.mrb[0].mxu0
      %1261 = vmatprep.mubr.f32.mxu0 0.0
      %1262 = vmatmul.mubr.f32.gmra.mrb[0].mxu0 %v326
      %v1263 = vpop.f32.mrb[0].mxu0
      %v1264 = vadd.f32 %v435, %v1263
      %v1265 = vpop.f32.mrb[0].mxu0
      %1266 = vmatprep.mubr.f32.mxu0 0.0
      %1267 = vmatmul.mubr.f32.gmra.mrb[0].mxu0 %v327
      %v1268 = vpop.f32.mrb[0].mxu0
      %v1269 = vadd.f32 %v435, %v1268
      %v1270 = vpop.f32.mrb[0].mxu0
      %1271 = vmatprep.mubr.f32.mxu0 0.0
      %1272 = vmatmul.mubr.f32.gmra.mrb[0].mxu0 %v328
      %v1273 = vpop.f32.mrb[0].mxu0
      %v1274 = vadd.f32 %v435, %v1273
      %v1275 = vpop.f32.mrb[0].mxu0
      %1276 = vmatprep.mubr.f32.mxu0 0.0
      %1277 = vmatmul.mubr.f32.gmra.mrb[0].mxu0 %v329
      %v1278 = vpop.f32.mrb[0].mxu0
      %v1279 = vadd.f32 %v435, %v1278
      %v1280 = vpop.f32.mrb[0].mxu0
      %1281 = vmatprep.mubr.f32.mxu0 0.0
      %1282 = vmatmul.mubr.f32.gmra.mrb[0].mxu0 %v330
      %v1283 = vpop.f32.mrb[0].mxu0
      %v1284 = vadd.f32 %v435, %v1283
      %v1285 = vpop.f32.mrb[0].mxu0
      %1286 = vmatprep.mubr.f32.mxu0 0.0
      %1287 = vmatmul.mubr.f32.gmra.mrb[0].mxu0 %v331
      %v1288 = vpop.f32.mrb[0].mxu0
      %v1289 = vadd.f32 %v435, %v1288
      %v1290 = vpop.f32.mrb[0].mxu0
      %1291 = vmatprep.mubr.f32.mxu0 0.0
      %1292 = vmatmul.mubr.f32.gmra.mrb[0].mxu0 %v332
      %v1293 = vpop.f32.mrb[0].mxu0
      %v1294 = vadd.f32 %v435, %v1293
      %v1295 = vpop.f32.mrb[0].mxu0
      %1296 = vmatprep.mubr.f32.mxu0 0.0
      %1297 = vmatmul.mubr.f32.gmra.mrb[0].mxu0 %v333
      %v1298 = vpop.f32.mrb[0].mxu0
      %v1299 = vadd.f32 %v435, %v1298
      %v1300 = vpop.f32.mrb[0].mxu0
      %1301 = vmatprep.mubr.f32.mxu0 0.0
      %1302 = vmatmul.mubr.f32.gmra.mrb[0].mxu0 %v334
      %v1303 = vpop.f32.mrb[0].mxu0
      %v1304 = vadd.f32 %v435, %v1303
      %v1305 = vpop.f32.mrb[0].mxu0
      %1306 = vmatprep.mubr.f32.mxu0 0.0
      %1307 = vmatmul.mubr.f32.gmra.mrb[0].mxu0 %v335
      %v1308 = vpop.f32.mrb[0].mxu0
      %v1309 = vadd.f32 %v435, %v1308
      %v1310 = vpop.f32.mrb[0].mxu0
      %1311 = vmatprep.mubr.f32.mxu0 0.0
      %1312 = vmatmul.mubr.f32.gmra.mrb[0].mxu0 %v336
      %v1313 = vpop.f32.mrb[0].mxu0
      %v1314 = vadd.f32 %v435, %v1313
      %v1315 = vpop.f32.mrb[0].mxu0
      %1316 = vmatprep.mubr.f32.mxu0 0.0
      %1317 = vmatmul.mubr.f32.gmra.mrb[0].mxu0 %v337
      %v1318 = vpop.f32.mrb[0].mxu0
      %v1319 = vadd.f32 %v435, %v1318
      %v1320 = vpop.f32.mrb[0].mxu0
      %1321 = vmatprep.mubr.f32.mxu0 0.0
      %1322 = vmatmul.mubr.f32.gmra.mrb[0].mxu0 %v338
      %v1323 = vpop.f32.mrb[0].mxu0
      %v1324 = vadd.f32 %v435, %v1323
      %v1325 = vpop.f32.mrb[0].mxu0
      %1326 = vmatprep.mubr.f32.mxu0 0.0
      %1327 = vmatmul.mubr.f32.gmra.mrb[0].mxu0 %v339
      %v1328 = vpop.f32.mrb[0].mxu0
      %v1329 = vadd.f32 %v435, %v1328
      %v1330 = vpop.f32.mrb[0].mxu0
      %1331 = vmatprep.mubr.f32.mxu0 0.0
      %1332 = vmatmul.mubr.f32.gmra.mrb[0].mxu0 %v340
      %v1333 = vpop.f32.mrb[0].mxu0
      %v1334 = vadd.f32 %v435, %v1333
      %v1335 = vpop.f32.mrb[0].mxu0
      %1336 = vmatprep.mubr.f32.mxu0 0.0
      %1337 = vmatmul.mubr.f32.gmra.mrb[0].mxu0 %v341
      %v1338 = vpop.f32.mrb[0].mxu0
      %v1339 = vadd.f32 %v435, %v1338
      %v1340 = vpop.f32.mrb[0].mxu0
      %1341 = vmatprep.mubr.f32.mxu0 0.0
      %1342 = vmatmul.mubr.f32.gmra.mrb[0].mxu0 %v342
      %v1343 = vpop.f32.mrb[0].mxu0
      %v1344 = vadd.f32 %v435, %v1343
      %v1345 = vpop.f32.mrb[0].mxu0
      %1346 = vmatprep.mubr.f32.mxu0 0.0
      %1347 = vmatmul.mubr.f32.gmra.mrb[0].mxu0 %v343
      %v1348 = vpop.f32.mrb[0].mxu0
      %v1349 = vadd.f32 %v435, %v1348
      %v1350 = vpop.f32.mrb[0].mxu0
      %1351 = vmatprep.mubr.f32.mxu0 0.0
      %1352 = vmatmul.mubr.f32.gmra.mrb[0].mxu0 %v344
      %v1353 = vpop.f32.mrb[0].mxu0
      %v1354 = vadd.f32 %v435, %v1353
      %v1355 = vpop.f32.mrb[0].mxu0
      %1356 = vmatprep.mubr.f32.mxu0 0.0
      %1357 = vmatmul.mubr.f32.gmra.mrb[0].mxu0 %v345
      %v1358 = vpop.f32.mrb[0].mxu0
      %v1359 = vadd.f32 %v435, %v1358
      %v1360 = vpop.f32.mrb[0].mxu0
      %1361 = vmatprep.mubr.f32.mxu0 0.0
      %1362 = vmatmul.mubr.f32.gmra.mrb[0].mxu0 %v346
      %v1363 = vpop.f32.mrb[0].mxu0
      %v1364 = vadd.f32 %v435, %v1363
      %v1365 = vpop.f32.mrb[0].mxu0
      %1366 = vmatprep.mubr.f32.mxu0 0.0
      %1367 = vmatmul.mubr.f32.gmra.mrb[0].mxu0 %v347
      %v1368 = vpop.f32.mrb[0].mxu0
      %v1369 = vadd.f32 %v435, %v1368
      %v1370 = vpop.f32.mrb[0].mxu0
      %1371 = vmatprep.mubr.f32.mxu0 0.0
      %1372 = vmatmul.mubr.f32.gmra.mrb[0].mxu0 %v348
      %v1373 = vpop.f32.mrb[0].mxu0
      %v1374 = vadd.f32 %v435, %v1373
      %v1375 = vpop.f32.mrb[0].mxu0
      %1376 = vmatprep.mubr.f32.mxu0 0.0
      %1377 = vmatmul.mubr.f32.gmra.mrb[0].mxu0 %v349
      %v1378 = vpop.f32.mrb[0].mxu0
      %v1379 = vadd.f32 %v435, %v1378
      %v1380 = vpop.f32.mrb[0].mxu0
      %1381 = vmatprep.mubr.f32.mxu0 0.0
      %1382 = vmatmul.mubr.f32.gmra.mrb[0].mxu0 %v350
      %v1383 = vpop.f32.mrb[0].mxu0
      %v1384 = vadd.f32 %v435, %v1383
      %v1385 = vpop.f32.mrb[0].mxu0
      %1386 = vmatprep.mubr.f32.mxu0 0.0
      %1387 = vmatmul.mubr.f32.gmra.mrb[0].mxu0 %v351
      %v1388 = vpop.f32.mrb[0].mxu0
      %v1389 = vadd.f32 %v435, %v1388
      %v1390 = vpop.f32.mrb[0].mxu0
      %1391 = vmatprep.mubr.f32.mxu0 0.0
      %1392 = vmatmul.mubr.f32.gmra.mrb[0].mxu0 %v352
      %v1393 = vpop.f32.mrb[0].mxu0
      %v1394 = vadd.f32 %v435, %v1393
      %v1395 = vpop.f32.mrb[0].mxu0
      %1396 = vmatprep.mubr.f32.mxu0 0.0
      %1397 = vmatmul.mubr.f32.gmra.mrb[0].mxu0 %v353
      %v1398 = vpop.f32.mrb[0].mxu0
      %v1399 = vadd.f32 %v435, %v1398
      %v1400 = vpop.f32.mrb[0].mxu0
      %1401 = vmatprep.mubr.f32.mxu0 0.0
      %1402 = vmatmul.mubr.f32.gmra.mrb[0].mxu0 %v354
      %v1403 = vpop.f32.mrb[0].mxu0
      %v1404 = vadd.f32 %v435, %v1403
      %v1405 = vpop.f32.mrb[0].mxu0
      %1406 = vmatprep.mubr.f32.mxu0 0.0
      %1407 = vmatmul.mubr.f32.gmra.mrb[0].mxu0 %v355
      %v1408 = vpop.f32.mrb[0].mxu0
      %v1409 = vadd.f32 %v435, %v1408
      %v1410 = vpop.f32.mrb[0].mxu0
      %1411 = vmatprep.mubr.f32.mxu0 0.0
      %1412 = vmatmul.mubr.f32.gmra.mrb[0].mxu0 %v356
      %v1413 = vpop.f32.mrb[0].mxu0
      %v1414 = vadd.f32 %v435, %v1413
      %v1415 = vpop.f32.mrb[0].mxu0
      %1416 = vmatprep.mubr.f32.mxu0 0.0
      %1417 = vmatmul.mubr.f32.gmra.mrb[0].mxu0 %v357
      %v1418 = vpop.f32.mrb[0].mxu0
      %v1419 = vadd.f32 %v435, %v1418
      %v1420 = vpop.f32.mrb[0].mxu0
      %1421 = vmatprep.mubr.f32.mxu0 0.0
      %1422 = vmatmul.mubr.f32.gmra.mrb[0].mxu0 %v358
      %v1423 = vpop.f32.mrb[0].mxu0
      %v1424 = vadd.f32 %v435, %v1423
      %v1425 = vpop.f32.mrb[0].mxu0
      %1426 = vmatprep.mubr.f32.mxu0 0.0
      %1427 = vmatmul.mubr.f32.gmra.mrb[0].mxu0 %v359
      %v1428 = vpop.f32.mrb[0].mxu0
      %v1429 = vadd.f32 %v435, %v1428
      %v1430 = vpop.f32.mrb[0].mxu0
      %1431 = vmatprep.mubr.f32.mxu0 0.0
      %1432 = vmatmul.mubr.f32.gmra.mrb[0].mxu0 %v360
      %v1433 = vpop.f32.mrb[0].mxu0
      %v1434 = vadd.f32 %v435, %v1433
      %v1435 = vpop.f32.mrb[0].mxu0
      %1436 = vmatprep.mubr.f32.mxu0 0.0
      %1437 = vmatmul.mubr.f32.gmra.mrb[0].mxu0 %v361
      %v1438 = vpop.f32.mrb[0].mxu0
      %v1439 = vadd.f32 %v435, %v1438
      %v1440 = vpop.f32.mrb[0].mxu0
      %1441 = vmatprep.mubr.f32.mxu0 0.0
      %1442 = vmatmul.mubr.f32.gmra.mrb[0].mxu0 %v362
      %v1443 = vpop.f32.mrb[0].mxu0
      %v1444 = vadd.f32 %v435, %v1443
      %v1445 = vpop.f32.mrb[0].mxu0
      %1446 = vmatprep.mubr.f32.mxu0 0.0
      %1447 = vmatmul.mubr.f32.gmra.mrb[0].mxu0 %v363
      %v1448 = vpop.f32.mrb[0].mxu0
      %v1449 = vadd.f32 %v435, %v1448
      %v1450 = vpop.f32.mrb[0].mxu0
      %1451 = vmatprep.mubr.f32.mxu0 0.0
      %1452 = vmatmul.mubr.f32.gmra.mrb[0].mxu0 %v364
      %v1453 = vpop.f32.mrb[0].mxu0
      %v1454 = vadd.f32 %v435, %v1453
      %v1455 = vpop.f32.mrb[0].mxu0
      %1456 = vmatprep.mubr.f32.mxu0 0.0
      %1457 = vmatmul.mubr.f32.gmra.mrb[0].mxu0 %v365
      %v1458 = vpop.f32.mrb[0].mxu0
      %v1459 = vadd.f32 %v435, %v1458
      %v1460 = vpop.f32.mrb[0].mxu0
      %1461 = vmatprep.mubr.f32.mxu0 0.0
      %1462 = vmatmul.mubr.f32.gmra.mrb[0].mxu0 %v366
      %v1463 = vpop.f32.mrb[0].mxu0
      %v1464 = vadd.f32 %v435, %v1463
      %v1465 = vpop.f32.mrb[0].mxu0
      %1466 = vmatprep.mubr.f32.mxu0 0.0
      %1467 = vmatmul.mubr.f32.gmra.mrb[0].mxu0 %v367
      %v1468 = vpop.f32.mrb[0].mxu0
      %v1469 = vadd.f32 %v435, %v1468
      %v1470 = vpop.f32.mrb[0].mxu0
      %1471 = vmatprep.mubr.f32.mxu0 0.0
      %1472 = vmatmul.mubr.f32.gmra.mrb[0].mxu0 %v368
      %v1473 = vpop.f32.mrb[0].mxu0
      %v1474 = vadd.f32 %v435, %v1473
      %v1475 = vpop.f32.mrb[0].mxu0
      %1476 = vmatprep.mubr.f32.mxu0 0.0
      %1477 = vmatmul.mubr.f32.gmra.mrb[0].mxu0 %v369
      %v1478 = vpop.f32.mrb[0].mxu0
      %v1479 = vadd.f32 %v435, %v1478
      %v1480 = vpop.f32.mrb[0].mxu0
      %1481 = vmatprep.mubr.f32.mxu0 0.0
      %1482 = vmatmul.mubr.f32.gmra.mrb[0].mxu0 %v370
      %v1483 = vpop.f32.mrb[0].mxu0
      %v1484 = vadd.f32 %v435, %v1483
      %v1485 = vpop.f32.mrb[0].mxu0
      %1486 = vmatprep.mubr.f32.mxu0 0.0
      %1487 = vmatmul.mubr.f32.gmra.mrb[0].mxu0 %v371
      %v1488 = vpop.f32.mrb[0].mxu0
      %v1489 = vadd.f32 %v435, %v1488
      %v1490 = vpop.f32.mrb[0].mxu0
      %1491 = vmatprep.mubr.f32.mxu0 0.0
      %1492 = vmatmul.mubr.f32.gmra.mrb[0].mxu0 %v372
      %v1493 = vpop.f32.mrb[0].mxu0
      %v1494 = vadd.f32 %v435, %v1493
      %v1495 = vpop.f32.mrb[0].mxu0
      %1496 = vmatprep.mubr.f32.mxu0 0.0
      %1497 = vmatmul.mubr.f32.gmra.mrb[0].mxu0 %v373
      %v1498 = vpop.f32.mrb[0].mxu0
      %v1499 = vadd.f32 %v435, %v1498
      %v1500 = vpop.f32.mrb[0].mxu0
      %1501 = vmatprep.mubr.f32.mxu0 0.0
      %1502 = vmatmul.mubr.f32.gmra.mrb[0].mxu0 %v374
      %v1503 = vpop.f32.mrb[0].mxu0
      %v1504 = vadd.f32 %v435, %v1503
      %v1505 = vpop.f32.mrb[0].mxu0
      %1506 = vmatprep.mubr.f32.mxu0 0.0
      %1507 = vmatmul.mubr.f32.gmra.mrb[0].mxu0 %v375
      %v1508 = vpop.f32.mrb[0].mxu0
      %v1509 = vadd.f32 %v435, %v1508
      %v1510 = vpop.f32.mrb[0].mxu0
      %1511 = vmatprep.mubr.f32.mxu0 0.0
      %1512 = vmatmul.mubr.f32.gmra.mrb[0].mxu0 %v376
      %v1513 = vpop.f32.mrb[0].mxu0
      %v1514 = vadd.f32 %v435, %v1513
      %v1515 = vpop.f32.mrb[0].mxu0
      %1516 = vmatprep.mubr.f32.mxu0 0.0
      %1517 = vmatmul.mubr.f32.gmra.mrb[0].mxu0 %v377
      %v1518 = vpop.f32.mrb[0].mxu0
      %v1519 = vadd.f32 %v435, %v1518
      %v1520 = vpop.f32.mrb[0].mxu0
      %1521 = vmatprep.mubr.f32.mxu0 0.0
      %1522 = vmatmul.mubr.f32.gmra.mrb[0].mxu0 %v378
      %v1523 = vpop.f32.mrb[0].mxu0
      %v1524 = vadd.f32 %v435, %v1523
      %v1525 = vpop.f32.mrb[0].mxu0
      %1526 = vmatprep.mubr.f32.mxu0 0.0
      %1527 = vmatmul.mubr.f32.gmra.mrb[0].mxu0 %v379
      %v1528 = vpop.f32.mrb[0].mxu0
      %v1529 = vadd.f32 %v435, %v1528
      %v1530 = vpop.f32.mrb[0].mxu0
      %1531 = vmatprep.mubr.f32.mxu0 0.0
      %1532 = vmatmul.mubr.f32.gmra.mrb[0].mxu0 %v380
      %v1533 = vpop.f32.mrb[0].mxu0
      %v1534 = vadd.f32 %v435, %v1533
      %v1535 = vpop.f32.mrb[0].mxu0
      %1536 = vmatprep.mubr.f32.mxu0 0.0
      %1537 = vmatmul.mubr.f32.gmra.mrb[0].mxu0 %v381
      %v1538 = vpop.f32.mrb[0].mxu0
      %v1539 = vadd.f32 %v435, %v1538
      %v1540 = vpop.f32.mrb[0].mxu0
      %1541 = vmatprep.mubr.f32.mxu0 0.0
      %1542 = vmatmul.mubr.f32.gmra.mrb[0].mxu0 %v382
      %v1543 = vpop.f32.mrb[0].mxu0
      %v1544 = vadd.f32 %v435, %v1543
      %v1545 = vpop.f32.mrb[0].mxu0
      %1546 = vmatprep.mubr.f32.mxu0 0.0
      %1547 = vmatmul.mubr.f32.gmra.mrb[0].mxu0 %v383
      %v1548 = vpop.f32.mrb[0].mxu0
      %v1549 = vadd.f32 %v435, %v1548
      %v1550 = vpop.f32.mrb[0].mxu0
      %1551 = vmatprep.mubr.f32.mxu0 0.0
      %1552 = vmatmul.mubr.f32.gmra.mrb[0].mxu0 %v384
      %v1553 = vpop.f32.mrb[0].mxu0
      %v1554 = vadd.f32 %v435, %v1553
      %v1555 = vpop.f32.mrb[0].mxu0
      %1556 = vmatprep.mubr.f32.mxu0 0.0
      %1557 = vmatmul.mubr.f32.gmra.mrb[0].mxu0 %v385
      %v1558 = vpop.f32.mrb[0].mxu0
      %v1559 = vadd.f32 %v435, %v1558
      %v1560 = vpop.f32.mrb[0].mxu0
      %1561 = vmatprep.mubr.f32.mxu0 0.0
      %1562 = vmatmul.mubr.f32.gmra.mrb[0].mxu0 %v386
      %v1563 = vpop.f32.mrb[0].mxu0
      %v1564 = vadd.f32 %v435, %v1563
      %v1565 = vpop.f32.mrb[0].mxu0
      %1566 = vmatprep.mubr.f32.mxu0 0.0
      %1567 = vmatmul.mubr.f32.gmra.mrb[0].mxu0 %v387
      %v1568 = vpop.f32.mrb[0].mxu0
      %v1569 = vadd.f32 %v435, %v1568
      %v1570 = vpop.f32.mrb[0].mxu0
      %1571 = vmatprep.mubr.f32.mxu0 0.0
      %1572 = vmatmul.mubr.f32.gmra.mrb[0].mxu0 %v388
      %v1573 = vpop.f32.mrb[0].mxu0
      %v1574 = vadd.f32 %v435, %v1573
      %v1575 = vpop.f32.mrb[0].mxu0
      %1576 = vmatprep.mubr.f32.mxu0 0.0
      %1577 = vmatmul.mubr.f32.gmra.mrb[0].mxu0 %v389
      %v1578 = vpop.f32.mrb[0].mxu0
      %v1579 = vadd.f32 %v435, %v1578
      %v1580 = vpop.f32.mrb[0].mxu0
      %1581 = vmatprep.mubr.f32.mxu0 0.0
      %1582 = vmatmul.mubr.f32.gmra.mrb[0].mxu0 %v390
      %v1583 = vpop.f32.mrb[0].mxu0
      %v1584 = vadd.f32 %v435, %v1583
      %v1585 = vpop.f32.mrb[0].mxu0
      %1586 = vmatprep.mubr.f32.mxu0 0.0
      %1587 = vmatmul.mubr.f32.gmra.mrb[0].mxu0 %v391
      %v1588 = vpop.f32.mrb[0].mxu0
      %v1589 = vadd.f32 %v435, %v1588
      %v1590 = vpop.f32.mrb[0].mxu0
      %1591 = vmatprep.mubr.f32.mxu0 0.0
      %1592 = vmatmul.mubr.f32.gmra.mrb[0].mxu0 %v392
      %v1593 = vpop.f32.mrb[0].mxu0
      %v1594 = vadd.f32 %v435, %v1593
      %v1595 = vpop.f32.mrb[0].mxu0
      %1596 = vmatprep.mubr.f32.mxu0 0.0
      %1597 = vmatmul.mubr.f32.gmra.mrb[0].mxu0 %v393
      %v1598 = vpop.f32.mrb[0].mxu0
      %v1599 = vadd.f32 %v435, %v1598
      %v1600 = vpop.f32.mrb[0].mxu0
      %1601 = vmatprep.mubr.f32.mxu0 0.0
      %1602 = vmatmul.mubr.f32.gmra.mrb[0].mxu0 %v394
      %v1603 = vpop.f32.mrb[0].mxu0
      %v1604 = vadd.f32 %v435, %v1603
      %v1605 = vpop.f32.mrb[0].mxu0
      %1606 = vmatprep.mubr.f32.mxu0 0.0
      %1607 = vmatmul.mubr.f32.gmra.mrb[0].mxu0 %v395
      %v1608 = vpop.f32.mrb[0].mxu0
      %v1609 = vadd.f32 %v435, %v1608
      %v1610 = vpop.f32.mrb[0].mxu0
      %1611 = vmatprep.mubr.f32.mxu0 0.0
      %1612 = vmatmul.mubr.f32.gmra.mrb[0].mxu0 %v396
      %v1613 = vpop.f32.mrb[0].mxu0
      %v1614 = vadd.f32 %v435, %v1613
      %v1615 = vpop.f32.mrb[0].mxu0
      %1616 = vmatprep.mubr.f32.mxu0 0.0
      %1617 = vmatmul.mubr.f32.gmra.mrb[0].mxu0 %v397
      %v1618 = vpop.f32.mrb[0].mxu0
      %v1619 = vadd.f32 %v435, %v1618
      %v1620 = vpop.f32.mrb[0].mxu0
      %1621 = vmatprep.mubr.f32.mxu0 0.0
      %1622 = vmatmul.mubr.f32.gmra.mrb[0].mxu0 %v398
      %v1623 = vpop.f32.mrb[0].mxu0
      %v1624 = vadd.f32 %v435, %v1623
      %v1625 = vpop.f32.mrb[0].mxu0
      %1626 = vmatprep.mubr.f32.mxu0 0.0
      %1627 = vmatmul.mubr.f32.gmra.mrb[0].mxu0 %v399
      %v1628 = vpop.f32.mrb[0].mxu0
      %v1629 = vadd.f32 %v435, %v1628
      %v1630 = vpop.f32.mrb[0].mxu0
      %1631 = vmatprep.mubr.f32.mxu0 0.0
      %1632 = vmatmul.mubr.f32.gmra.mrb[0].mxu0 %v400
      %v1633 = vpop.f32.mrb[0].mxu0
      %v1634 = vadd.f32 %v435, %v1633
      %v1635 = vpop.f32.mrb[0].mxu0
      %1636 = vmatprep.mubr.f32.mxu0 0.0
      %1637 = vmatmul.mubr.f32.gmra.mrb[0].mxu0 %v401
      %v1638 = vpop.f32.mrb[0].mxu0
      %v1639 = vadd.f32 %v435, %v1638
      %v1640 = vpop.f32.mrb[0].mxu0
      %1641 = vmatprep.mubr.f32.mxu0 0.0
      %1642 = vmatmul.mubr.f32.gmra.mrb[0].mxu0 %v402
      %v1643 = vpop.f32.mrb[0].mxu0
      %v1644 = vadd.f32 %v435, %v1643
      %v1645 = vpop.f32.mrb[0].mxu0
      %1646 = vmatprep.mubr.f32.mxu0 0.0
      %1647 = vmatmul.mubr.f32.gmra.mrb[0].mxu0 %v403
      %v1648 = vpop.f32.mrb[0].mxu0
      %v1649 = vadd.f32 %v435, %v1648
      %v1650 = vpop.f32.mrb[0].mxu0
      %1651 = vmatprep.mubr.f32.mxu0 0.0
      %1652 = vmatmul.mubr.f32.gmra.mrb[0].mxu0 %v404
      %v1653 = vpop.f32.mrb[0].mxu0
      %v1654 = vadd.f32 %v435, %v1653
      %v1655 = vpop.f32.mrb[0].mxu0
      %1656 = vmatprep.mubr.f32.mxu0 0.0
      %1657 = vmatmul.mubr.f32.gmra.mrb[0].mxu0 %v405
      %v1658 = vpop.f32.mrb[0].mxu0
      %v1659 = vadd.f32 %v435, %v1658
      %v1660 = vpop.f32.mrb[0].mxu0
      %1661 = vmatprep.mubr.f32.mxu0 0.0
      %1662 = vmatmul.mubr.f32.gmra.mrb[0].mxu0 %v406
      %v1663 = vpop.f32.mrb[0].mxu0
      %v1664 = vadd.f32 %v435, %v1663
      %v1665 = vpop.f32.mrb[0].mxu0
      %1666 = vmatprep.mubr.f32.mxu0 0.0
      %1667 = vmatmul.mubr.f32.gmra.mrb[0].mxu0 %v407
      %v1668 = vpop.f32.mrb[0].mxu0
      %v1669 = vadd.f32 %v435, %v1668
      %v1670 = vpop.f32.mrb[0].mxu0
      %1671 = vmatprep.mubr.f32.mxu0 0.0
      %1672 = vmatmul.mubr.f32.gmra.mrb[0].mxu0 %v408
      %v1673 = vpop.f32.mrb[0].mxu0
      %v1674 = vadd.f32 %v435, %v1673
      %v1675 = vpop.f32.mrb[0].mxu0
      %1676 = vmatprep.mubr.f32.mxu0 0.0
      %1677 = vmatmul.mubr.f32.gmra.mrb[0].mxu0 %v409
      %v1678 = vpop.f32.mrb[0].mxu0
      %v1679 = vadd.f32 %v435, %v1678
      %v1680 = vpop.f32.mrb[0].mxu0
      %1681 = vmatprep.mubr.f32.mxu0 0.0
      %1682 = vmatmul.mubr.f32.gmra.mrb[0].mxu0 %v410
      %v1683 = vpop.f32.mrb[0].mxu0
      %v1684 = vadd.f32 %v435, %v1683
      %v1685 = vpop.f32.mrb[0].mxu0
      %1686 = vmatprep.mubr.f32.mxu0 0.0
      %1687 = vmatmul.mubr.f32.gmra.mrb[0].mxu0 %v411
      %v1688 = vpop.f32.mrb[0].mxu0
      %v1689 = vadd.f32 %v435, %v1688
      %v1690 = vpop.f32.mrb[0].mxu0
      %1691 = vmatprep.mubr.f32.mxu0 0.0
      %1692 = vmatmul.mubr.f32.gmra.mrb[0].mxu0 %v412
      %v1693 = vpop.f32.mrb[0].mxu0
      %v1694 = vadd.f32 %v435, %v1693
      %v1695 = vpop.f32.mrb[0].mxu0
      %1696 = vmatprep.mubr.f32.mxu0 0.0
      %1697 = vmatmul.mubr.f32.gmra.mrb[0].mxu0 %v413
      %v1698 = vpop.f32.mrb[0].mxu0
      %v1699 = vadd.f32 %v435, %v1698
      %v1700 = vpop.f32.mrb[0].mxu0
      %1701 = vdwg.mxu0
      %1702 = vst [vmem:[%s172] sm:$0xff] %v504
      %1703 = vst [vmem:[%s172 + $0x8] sm:$0xff] %v509
      %1704 = vst [vmem:[%s172 + $0x10] sm:$0xff] %v514
      %1705 = vst [vmem:[%s172 + $0x18] sm:$0xff] %v519
      %1706 = vst [vmem:[%s172 + $0x20] sm:$0xff] %v524
      %1707 = vst [vmem:[%s172 + $0x28] sm:$0xff] %v529
      %1708 = vst [vmem:[%s172 + $0x30] sm:$0xff] %v534
      %1709 = vst [vmem:[%s172 + $0x38] sm:$0xff] %v539
      %1710 = vst [vmem:[%s172 + $0x40] sm:$0xff] %v544
      %1711 = vst [vmem:[%s172 + $0x48] sm:$0xff] %v549
      %1712 = vst [vmem:[%s172 + $0x50] sm:$0xff] %v554
      %1713 = vst [vmem:[%s172 + $0x58] sm:$0xff] %v559
      %1714 = vst [vmem:[%s172 + $0x60] sm:$0xff] %v564
      %1715 = vst [vmem:[%s172 + $0x68] sm:$0xff] %v569
      %1716 = vst [vmem:[%s172 + $0x70] sm:$0xff] %v574
      %1717 = vst [vmem:[%s172 + $0x78] sm:$0xff] %v579
      %1718 = vst [vmem:[%s172 + $0x80] sm:$0xff] %v584
      %1719 = vst [vmem:[%s172 + $0x88] sm:$0xff] %v589
      %1720 = vst [vmem:[%s172 + $0x90] sm:$0xff] %v594
      %1721 = vst [vmem:[%s172 + $0x98] sm:$0xff] %v599
      %1722 = vst [vmem:[%s172 + $0xa0] sm:$0xff] %v604
      %1723 = vst [vmem:[%s172 + $0xa8] sm:$0xff] %v609
      %1724 = vst [vmem:[%s172 + $0xb0] sm:$0xff] %v614
      %1725 = vst [vmem:[%s172 + $0xb8] sm:$0xff] %v619
      %1726 = vst [vmem:[%s172 + $0xc0] sm:$0xff] %v624
      %1727 = vst [vmem:[%s172 + $0xc8] sm:$0xff] %v629
      %1728 = vst [vmem:[%s172 + $0xd0] sm:$0xff] %v634
      %1729 = vst [vmem:[%s172 + $0xd8] sm:$0xff] %v639
      %1730 = vst [vmem:[%s172 + $0xe0] sm:$0xff] %v644
      %1731 = vst [vmem:[%s172 + $0xe8] sm:$0xff] %v649
      %1732 = vst [vmem:[%s172 + $0xf0] sm:$0xff] %v654
      %1733 = vst [vmem:[%s172 + $0xf8] sm:$0xff] %v659
      %1734 = vst [vmem:[%s172 + $0x100] sm:$0xff] %v664
      %1735 = vst [vmem:[%s172 + $0x108] sm:$0xff] %v669
      %1736 = vst [vmem:[%s172 + $0x110] sm:$0xff] %v674
      %1737 = vst [vmem:[%s172 + $0x118] sm:$0xff] %v679
      %1738 = vst [vmem:[%s172 + $0x120] sm:$0xff] %v684
      %1739 = vst [vmem:[%s172 + $0x128] sm:$0xff] %v689
      %1740 = vst [vmem:[%s172 + $0x130] sm:$0xff] %v694
      %1741 = vst [vmem:[%s172 + $0x138] sm:$0xff] %v699
      %1742 = vst [vmem:[%s172 + $0x140] sm:$0xff] %v704
      %1743 = vst [vmem:[%s172 + $0x148] sm:$0xff] %v709
      %1744 = vst [vmem:[%s172 + $0x150] sm:$0xff] %v714
      %1745 = vst [vmem:[%s172 + $0x158] sm:$0xff] %v719
      %1746 = vst [vmem:[%s172 + $0x160] sm:$0xff] %v724
      %1747 = vst [vmem:[%s172 + $0x168] sm:$0xff] %v729
      %1748 = vst [vmem:[%s172 + $0x170] sm:$0xff] %v734
      %1749 = vst [vmem:[%s172 + $0x178] sm:$0xff] %v739
      %1750 = vst [vmem:[%s172 + $0x180] sm:$0xff] %v744
      %1751 = vst [vmem:[%s172 + $0x188] sm:$0xff] %v749
      %1752 = vst [vmem:[%s172 + $0x190] sm:$0xff] %v754
      %1753 = vst [vmem:[%s172 + $0x198] sm:$0xff] %v759
      %1754 = vst [vmem:[%s172 + $0x1a0] sm:$0xff] %v764
      %1755 = vst [vmem:[%s172 + $0x1a8] sm:$0xff] %v769
      %1756 = vst [vmem:[%s172 + $0x1b0] sm:$0xff] %v774
      %1757 = vst [vmem:[%s172 + $0x1b8] sm:$0xff] %v779
      %1758 = vst [vmem:[%s172 + $0x1c0] sm:$0xff] %v784
      %1759 = vst [vmem:[%s172 + $0x1c8] sm:$0xff] %v789
      %1760 = vst [vmem:[%s172 + $0x1d0] sm:$0xff] %v794
      %1761 = vst [vmem:[%s172 + $0x1d8] sm:$0xff] %v799
      %1762 = vst [vmem:[%s172 + $0x1e0] sm:$0xff] %v804
      %1763 = vst [vmem:[%s172 + $0x1e8] sm:$0xff] %v809
      %1764 = vst [vmem:[%s172 + $0x1f0] sm:$0xff] %v814
      %1765 = vst [vmem:[%s172 + $0x1f8] sm:$0xff] %v819
      %1766 = vst [vmem:[%s172 + $0x200] sm:$0xff] %v824
      %1767 = vst [vmem:[%s172 + $0x208] sm:$0xff] %v829
      %1768 = vst [vmem:[%s172 + $0x210] sm:$0xff] %v834
      %1769 = vst [vmem:[%s172 + $0x218] sm:$0xff] %v839
      %1770 = vst [vmem:[%s172 + $0x220] sm:$0xff] %v844
      %1771 = vst [vmem:[%s172 + $0x228] sm:$0xff] %v849
      %1772 = vst [vmem:[%s172 + $0x230] sm:$0xff] %v854
      %1773 = vst [vmem:[%s172 + $0x238] sm:$0xff] %v859
      %1774 = vst [vmem:[%s172 + $0x240] sm:$0xff] %v864
      %1775 = vst [vmem:[%s172 + $0x248] sm:$0xff] %v869
      %1776 = vst [vmem:[%s172 + $0x250] sm:$0xff] %v874
      %1777 = vst [vmem:[%s172 + $0x258] sm:$0xff] %v879
      %1778 = vst [vmem:[%s172 + $0x260] sm:$0xff] %v884
      %1779 = vst [vmem:[%s172 + $0x268] sm:$0xff] %v889
      %1780 = vst [vmem:[%s172 + $0x270] sm:$0xff] %v894
      %1781 = vst [vmem:[%s172 + $0x278] sm:$0xff] %v899
      %1782 = vst [vmem:[%s172 + $0x280] sm:$0xff] %v904
      %1783 = vst [vmem:[%s172 + $0x288] sm:$0xff] %v909
      %1784 = vst [vmem:[%s172 + $0x290] sm:$0xff] %v914
      %1785 = vst [vmem:[%s172 + $0x298] sm:$0xff] %v919
      %1786 = vst [vmem:[%s172 + $0x2a0] sm:$0xff] %v924
      %1787 = vst [vmem:[%s172 + $0x2a8] sm:$0xff] %v929
      %1788 = vst [vmem:[%s172 + $0x2b0] sm:$0xff] %v934
      %1789 = vst [vmem:[%s172 + $0x2b8] sm:$0xff] %v939
      %1790 = vst [vmem:[%s172 + $0x2c0] sm:$0xff] %v944
      %1791 = vst [vmem:[%s172 + $0x2c8] sm:$0xff] %v949
      %1792 = vst [vmem:[%s172 + $0x2d0] sm:$0xff] %v954
      %1793 = vst [vmem:[%s172 + $0x2d8] sm:$0xff] %v959
      %1794 = vst [vmem:[%s172 + $0x2e0] sm:$0xff] %v964
      %1795 = vst [vmem:[%s172 + $0x2e8] sm:$0xff] %v969
      %1796 = vst [vmem:[%s172 + $0x2f0] sm:$0xff] %v974
      %1797 = vst [vmem:[%s172 + $0x2f8] sm:$0xff] %v979
      %1798 = vst [vmem:[%s172 + $0x300] sm:$0xff] %v984
      %1799 = vst [vmem:[%s172 + $0x308] sm:$0xff] %v989
      %1800 = vst [vmem:[%s172 + $0x310] sm:$0xff] %v994
      %1801 = vst [vmem:[%s172 + $0x318] sm:$0xff] %v999
      %1802 = vst [vmem:[%s172 + $0x320] sm:$0xff] %v1004
      %1803 = vst [vmem:[%s172 + $0x328] sm:$0xff] %v1009
      %1804 = vst [vmem:[%s172 + $0x330] sm:$0xff] %v1014
      %1805 = vst [vmem:[%s172 + $0x338] sm:$0xff] %v1019
      %1806 = vst [vmem:[%s172 + $0x340] sm:$0xff] %v1024
      %1807 = vst [vmem:[%s172 + $0x348] sm:$0xff] %v1029
      %1808 = vst [vmem:[%s172 + $0x350] sm:$0xff] %v1034
      %1809 = vst [vmem:[%s172 + $0x358] sm:$0xff] %v1039
      %1810 = vst [vmem:[%s172 + $0x360] sm:$0xff] %v1044
      %1811 = vst [vmem:[%s172 + $0x368] sm:$0xff] %v1049
      %1812 = vst [vmem:[%s172 + $0x370] sm:$0xff] %v1054
      %1813 = vst [vmem:[%s172 + $0x378] sm:$0xff] %v1059
      %1814 = vst [vmem:[%s172 + $0x380] sm:$0xff] %v1064
      %1815 = vst [vmem:[%s172 + $0x388] sm:$0xff] %v1069
      %1816 = vst [vmem:[%s172 + $0x390] sm:$0xff] %v1074
      %1817 = vst [vmem:[%s172 + $0x398] sm:$0xff] %v1079
      %1818 = vst [vmem:[%s172 + $0x3a0] sm:$0xff] %v1084
      %1819 = vst [vmem:[%s172 + $0x3a8] sm:$0xff] %v1089
      %1820 = vst [vmem:[%s172 + $0x3b0] sm:$0xff] %v1094
      %1821 = vst [vmem:[%s172 + $0x3b8] sm:$0xff] %v1099
      %1822 = vst [vmem:[%s172 + $0x3c0] sm:$0xff] %v1104
      %1823 = vst [vmem:[%s172 + $0x3c8] sm:$0xff] %v1109
      %1824 = vst [vmem:[%s172 + $0x3d0] sm:$0xff] %v1114
      %1825 = vst [vmem:[%s172 + $0x3d8] sm:$0xff] %v1119
      %1826 = vst [vmem:[%s172 + $0x3e0] sm:$0xff] %v1124
      %1827 = vst [vmem:[%s172 + $0x3e8] sm:$0xff] %v1129
      %1828 = vst [vmem:[%s172 + $0x3f0] sm:$0xff] %v1134
      %1829 = vst [vmem:[%s172 + $0x3f8] sm:$0xff] %v1139
      %1830 = vst [vmem:[%s172 + $0x400] sm:$0xff] %v1144
      %1831 = vst [vmem:[%s172 + $0x408] sm:$0xff] %v1149
      %1832 = vst [vmem:[%s172 + $0x410] sm:$0xff] %v1154
      %1833 = vst [vmem:[%s172 + $0x418] sm:$0xff] %v1159
      %1834 = vst [vmem:[%s172 + $0x420] sm:$0xff] %v1164
      %1835 = vst [vmem:[%s172 + $0x428] sm:$0xff] %v1169
      %1836 = vst [vmem:[%s172 + $0x430] sm:$0xff] %v1174
      %1837 = vst [vmem:[%s172 + $0x438] sm:$0xff] %v1179
      %1838 = vst [vmem:[%s172 + $0x440] sm:$0xff] %v1184
      %1839 = vst [vmem:[%s172 + $0x448] sm:$0xff] %v1189
      %1840 = vst [vmem:[%s172 + $0x450] sm:$0xff] %v1194
      %1841 = vst [vmem:[%s172 + $0x458] sm:$0xff] %v1199
      %1842 = vst [vmem:[%s172 + $0x460] sm:$0xff] %v1204
      %1843 = vst [vmem:[%s172 + $0x468] sm:$0xff] %v1209
      %1844 = vst [vmem:[%s172 + $0x470] sm:$0xff] %v1214
      %1845 = vst [vmem:[%s172 + $0x478] sm:$0xff] %v1219
      %1846 = vst [vmem:[%s172 + $0x480] sm:$0xff] %v1224
      %1847 = vst [vmem:[%s172 + $0x488] sm:$0xff] %v1229
      %1848 = vst [vmem:[%s172 + $0x490] sm:$0xff] %v1234
      %1849 = vst [vmem:[%s172 + $0x498] sm:$0xff] %v1239
      %1850 = vst [vmem:[%s172 + $0x4a0] sm:$0xff] %v1244
      %1851 = vst [vmem:[%s172 + $0x4a8] sm:$0xff] %v1249
      %1852 = vst [vmem:[%s172 + $0x4b0] sm:$0xff] %v1254
      %1853 = vst [vmem:[%s172 + $0x4b8] sm:$0xff] %v1259
      %1854 = vst [vmem:[%s172 + $0x4c0] sm:$0xff] %v1264
      %1855 = vst [vmem:[%s172 + $0x4c8] sm:$0xff] %v1269
      %1856 = vst [vmem:[%s172 + $0x4d0] sm:$0xff] %v1274
      %1857 = vst [vmem:[%s172 + $0x4d8] sm:$0xff] %v1279
      %1858 = vst [vmem:[%s172 + $0x4e0] sm:$0xff] %v1284
      %1859 = vst [vmem:[%s172 + $0x4e8] sm:$0xff] %v1289
      %1860 = vst [vmem:[%s172 + $0x4f0] sm:$0xff] %v1294
      %1861 = vst [vmem:[%s172 + $0x4f8] sm:$0xff] %v1299
      %1862 = vst [vmem:[%s172 + $0x500] sm:$0xff] %v1304
      %1863 = vst [vmem:[%s172 + $0x508] sm:$0xff] %v1309
      %1864 = vst [vmem:[%s172 + $0x510] sm:$0xff] %v1314
      %1865 = vst [vmem:[%s172 + $0x518] sm:$0xff] %v1319
      %1866 = vst [vmem:[%s172 + $0x520] sm:$0xff] %v1324
      %1867 = vst [vmem:[%s172 + $0x528] sm:$0xff] %v1329
      %1868 = vst [vmem:[%s172 + $0x530] sm:$0xff] %v1334
      %1869 = vst [vmem:[%s172 + $0x538] sm:$0xff] %v1339
      %1870 = vst [vmem:[%s172 + $0x540] sm:$0xff] %v1344
      %1871 = vst [vmem:[%s172 + $0x548] sm:$0xff] %v1349
      %1872 = vst [vmem:[%s172 + $0x550] sm:$0xff] %v1354
      %1873 = vst [vmem:[%s172 + $0x558] sm:$0xff] %v1359
      %1874 = vst [vmem:[%s172 + $0x560] sm:$0xff] %v1364
      %1875 = vst [vmem:[%s172 + $0x568] sm:$0xff] %v1369
      %1876 = vst [vmem:[%s172 + $0x570] sm:$0xff] %v1374
      %1877 = vst [vmem:[%s172 + $0x578] sm:$0xff] %v1379
      %1878 = vst [vmem:[%s172 + $0x580] sm:$0xff] %v1384
      %1879 = vst [vmem:[%s172 + $0x588] sm:$0xff] %v1389
      %1880 = vst [vmem:[%s172 + $0x590] sm:$0xff] %v1394
      %1881 = vst [vmem:[%s172 + $0x598] sm:$0xff] %v1399
      %1882 = vst [vmem:[%s172 + $0x5a0] sm:$0xff] %v1404
      %1883 = vst [vmem:[%s172 + $0x5a8] sm:$0xff] %v1409
      %1884 = vst [vmem:[%s172 + $0x5b0] sm:$0xff] %v1414
      %1885 = vst [vmem:[%s172 + $0x5b8] sm:$0xff] %v1419
      %1886 = vst [vmem:[%s172 + $0x5c0] sm:$0xff] %v1424
      %1887 = vst [vmem:[%s172 + $0x5c8] sm:$0xff] %v1429
      %1888 = vst [vmem:[%s172 + $0x5d0] sm:$0xff] %v1434
      %1889 = vst [vmem:[%s172 + $0x5d8] sm:$0xff] %v1439
      %1890 = vst [vmem:[%s172 + $0x5e0] sm:$0xff] %v1444
      %1891 = vst [vmem:[%s172 + $0x5e8] sm:$0xff] %v1449
      %1892 = vst [vmem:[%s172 + $0x5f0] sm:$0xff] %v1454
      %1893 = vst [vmem:[%s172 + $0x5f8] sm:$0xff] %v1459
      %1894 = vst [vmem:[%s172 + $0x600] sm:$0xff] %v1464
      %1895 = vst [vmem:[%s172 + $0x608] sm:$0xff] %v1469
      %1896 = vst [vmem:[%s172 + $0x610] sm:$0xff] %v1474
      %1897 = vst [vmem:[%s172 + $0x618] sm:$0xff] %v1479
      %1898 = vst [vmem:[%s172 + $0x620] sm:$0xff] %v1484
      %1899 = vst [vmem:[%s172 + $0x628] sm:$0xff] %v1489
      %1900 = vst [vmem:[%s172 + $0x630] sm:$0xff] %v1494
      %1901 = vst [vmem:[%s172 + $0x638] sm:$0xff] %v1499
      %1902 = vst [vmem:[%s172 + $0x640] sm:$0xff] %v1504
      %1903 = vst [vmem:[%s172 + $0x648] sm:$0xff] %v1509
      %1904 = vst [vmem:[%s172 + $0x650] sm:$0xff] %v1514
      %1905 = vst [vmem:[%s172 + $0x658] sm:$0xff] %v1519
      %1906 = vst [vmem:[%s172 + $0x660] sm:$0xff] %v1524
      %1907 = vst [vmem:[%s172 + $0x668] sm:$0xff] %v1529
      %1908 = vst [vmem:[%s172 + $0x670] sm:$0xff] %v1534
      %1909 = vst [vmem:[%s172 + $0x678] sm:$0xff] %v1539
      %1910 = vst [vmem:[%s172 + $0x680] sm:$0xff] %v1544
      %1911 = vst [vmem:[%s172 + $0x688] sm:$0xff] %v1549
      %1912 = vst [vmem:[%s172 + $0x690] sm:$0xff] %v1554
      %1913 = vst [vmem:[%s172 + $0x698] sm:$0xff] %v1559
      %1914 = vst [vmem:[%s172 + $0x6a0] sm:$0xff] %v1564
      %1915 = vst [vmem:[%s172 + $0x6a8] sm:$0xff] %v1569
      %1916 = vst [vmem:[%s172 + $0x6b0] sm:$0xff] %v1574
      %1917 = vst [vmem:[%s172 + $0x6b8] sm:$0xff] %v1579
      %1918 = vst [vmem:[%s172 + $0x6c0] sm:$0xff] %v1584
      %1919 = vst [vmem:[%s172 + $0x6c8] sm:$0xff] %v1589
      %1920 = vst [vmem:[%s172 + $0x6d0] sm:$0xff] %v1594
      %1921 = vst [vmem:[%s172 + $0x6d8] sm:$0xff] %v1599
      %1922 = vst [vmem:[%s172 + $0x6e0] sm:$0xff] %v1604
      %1923 = vst [vmem:[%s172 + $0x6e8] sm:$0xff] %v1609
      %1924 = vst [vmem:[%s172 + $0x6f0] sm:$0xff] %v1614
      %1925 = vst [vmem:[%s172 + $0x6f8] sm:$0xff] %v1619
      %1926 = vst [vmem:[%s172 + $0x700] sm:$0xff] %v1624
      %1927 = vst [vmem:[%s172 + $0x708] sm:$0xff] %v1629
      %1928 = vst [vmem:[%s172 + $0x710] sm:$0xff] %v1634
      %1929 = vst [vmem:[%s172 + $0x718] sm:$0xff] %v1639
      %1930 = vst [vmem:[%s172 + $0x720] sm:$0xff] %v1644
      %1931 = vst [vmem:[%s172 + $0x728] sm:$0xff] %v1649
      %1932 = vst [vmem:[%s172 + $0x730] sm:$0xff] %v1654
      %1933 = vst [vmem:[%s172 + $0x738] sm:$0xff] %v1659
      %1934 = vst [vmem:[%s172 + $0x740] sm:$0xff] %v1664
      %1935 = vst [vmem:[%s172 + $0x748] sm:$0xff] %v1669
      %1936 = vst [vmem:[%s172 + $0x750] sm:$0xff] %v1674
      %1937 = vst [vmem:[%s172 + $0x758] sm:$0xff] %v1679
      %1938 = vst [vmem:[%s172 + $0x760] sm:$0xff] %v1684
      %1939 = vst [vmem:[%s172 + $0x768] sm:$0xff] %v1689
      %1940 = vst [vmem:[%s172 + $0x770] sm:$0xff] %v1694
      %1941 = vst [vmem:[%s172 + $0x778] sm:$0xff] %v1699
      %s1942 = smul.u32 240, %s14
      %p1943 = scmp.lt.s32.totalorder %s1942, 1199
      %s1944 = scalar_select %p1943, %s1942, 1199
      %s1945 = smul.addr %s1944, 8
      %s1946 = scalar_lea.vmem %s3, %s1945
      // Predicated region
      $region33: #{forward.17} parent=31 // pred_check
        %p1947 = pneg %p100
      $region34: #{forward.17} parent=31 // pred_check_branch
        %1949 = sbr.rel (%p1947) target = $region36
      $region35: #{forward.17} parent=31 // pred_region
        %s1950 = smul.u32 240, %s14
      $region36: #{forward.17} parent=31 // pred_fallthru
        _
    $region32: #{forward.17} parent=5 // pred_fallthru
      _
    %p1951 = scmp.le.s32.totalorder 2, %s9
    // Predicated region
    $region37: #{forward.17} parent=5 // pred_check
      %p1952 = pneg %p1951
    $region38: #{forward.17} parent=5 // pred_check_branch
      %1954 = sbr.rel (%p1952) target = $region40
    $region39: #{forward.17} parent=5 // pred_region
      %s1955 = ssub.s32 %s9, 2
      // Predicated region
      $region41: #{forward.17} parent=39 // pred_check
        %p1956 = pneg %p106
      $region42: #{forward.17} parent=39 // pred_check_branch
        %1958 = sbr.rel (%p1956) target = $region44
      $region43: #{forward.17} parent=39 // pred_region
        %s1959 = smul.u32 240, %s15
        %p1960 = scmp.lt.s32.totalorder %s1959, 1199
        %s1961 = scalar_select %p1960, %s1959, 1199
        %s1962 = smul.addr %s1961, 8
        %s1963 = scalar_lea.vmem %s3, %s1962
      $region44: #{forward.17} parent=39 // pred_fallthru
        _
    $region40: #{forward.17} parent=5 // pred_fallthru
      _
  $region6: #{forward.17} parent=0 // loop_footer
    %s13 = sadd.s32 1, %s9
  $region7: #{forward.17} parent=0 // loop_footer_branch
    %8 = sbr.rel target = $region3
  $region8: #{forward.17} parent=0 // loop_exit
    _

</llo_original>
